<compile_context>
chip_gen: v7x
topology: tpu7x:2x2x1
jax: 0.10.0
libtpu: 0.0.40
codegen_flags: <defaults>
</compile_context>

<pallas_src>
import jax
import jax.numpy as jnp
from jax.experimental import pallas as pl
from jax.experimental.pallas import tpu as pltpu

OUT_PAD = 128  # final logits channel dim (2) padded to a full lane tile


def _pointnet_seg_kernel(
    pts_ref, ohb_ref,
    w1, b1, w2, b2, w3, b3, w4, b4, w5, b5,
    dw1a, dw1b,
    dw2, db2, dw3, db3, dw4, db4, dw5, db5,
    out_ref,
):
    # pts_ref : (B_TILE, n_pts, n_channel)  bf16
    # ohb_ref : (B_TILE, 1, 512)            f32  (one_hot @ dw1c + db1, precomputed)
    # out_ref : (B_TILE, n_pts, OUT_PAD)    f32
    bt, n_pts, n_ch = pts_ref.shape

    def layer(h, w_ref, b_ref):
        y = jnp.dot(h, w_ref[...], preferred_element_type=jnp.float32) + b_ref[...]
        return jnp.maximum(y, 0.0).astype(jnp.bfloat16)

    x = pts_ref[...].reshape(bt * n_pts, n_ch)                      # (M, C) bf16

    out1 = layer(x, w1, b1)        # (M, 64)
    out2 = layer(out1, w2, b2)     # (M, 64)
    out3 = layer(out2, w3, b3)     # (M, 64)
    out4 = layer(out3, w4, b4)     # (M, 128)
    out5 = layer(out4, w5, b5)     # (M, 1024)

    # global max-pool over points, per batch element (torch.max(out5, 2))
    gfeat = jnp.max(out5.reshape(bt, n_pts, 1024), axis=1)          # (bt, 1024) bf16

    # dconv1 over concat([out2, global_feat, one_hot]) == sum of three matmuls;
    # the one_hot matmul + dconv1 bias arrive precomputed via ohb_ref.
    glob = (jnp.dot(gfeat, dw1b[...], preferred_element_type=jnp.float32)
            .reshape(bt, 1, 512) + ohb_ref[...])                    # (bt, 1, 512) f32
    x1 = jnp.dot(out2, dw1a[...], preferred_element_type=jnp.float32)
    x1 = x1.reshape(bt, n_pts, 512) + glob
    x1 = jnp.maximum(x1, 0.0).astype(jnp.bfloat16).reshape(bt * n_pts, 512)

    x2 = layer(x1, dw2, db2)       # (M, 256)
    x3 = layer(x2, dw3, db3)       # (M, 128)
    x4 = layer(x3, dw4, db4)       # (M, 128)

    # dropout: eval-mode identity
    logits = jnp.dot(x4, dw5[...], preferred_element_type=jnp.float32) + db5[...]
    out_ref[...] = logits.reshape(bt, n_pts, OUT_PAD)


def _vmem_limit_bytes():
    """Scoped VMEM limit that is safe on v7x (64 MiB physical) as well as v5e/v6e."""
    try:
        cap = pltpu.get_tpu_info().vmem_capacity_bytes
        return int(min(cap * 3 // 4, 96 * 1024 * 1024))
    except Exception:
        return 48 * 1024 * 1024


def pointnet_instance_seg(pts, one_hot, params, *, b_tile=2):
    """pts: (bs, n_channel, n_pts) f32 (torch NCW layout); one_hot: (bs, n_classes) f32.

    Returns seg_pred: (bs, n_pts, 2) f32 (== x.transpose(2, 1) in the torch model).
    Eval-mode only (BatchNorm folded, dropout identity).
    """
    bs, n_ch, n_pts = pts.shape
    b_tile = min(b_tile, bs)
    assert bs % b_tile == 0, "bs must be divisible by b_tile"
    n_blocks = bs // b_tile

    # channels-last, bf16 activations
    pts_nlc = jnp.transpose(pts, (0, 2, 1)).astype(jnp.bfloat16)

    # per-batch one_hot contribution of dconv1 + its (folded) bias, in f32
    ohb = one_hot.astype(jnp.float32) @ params["dw1c"] + params["db1"]   # (bs, 512)
    ohb = ohb.reshape(bs, 1, 512)

    # flat kernel-argument order (must match _pointnet_seg_kernel exactly):
    #   w1,b1 ... w5,b5, dw1a, dw1b, dw2,db2, dw3,db3, dw4,db4, dw5,db5
    weight_args = []
    for w, b in zip(params["conv_w"], params["conv_b"]):
        weight_args += [w, b]
    weight_args += [params["dw1a"], params["dw1b"]]
    for w, b in zip(params["dconv_w"], params["dconv_b"]):
        weight_args += [w, b]
    assert len(weight_args) == 20, "kernel weight/bias packing mismatch"

    # Constant weights: full-array blocks, constant index map.
    # (pl.Buffered(1) on these would trim the unused second buffer; negligible here.)
    def const_spec(a):
        return pl.BlockSpec(a.shape, lambda g, nd=a.ndim: (0,) * nd)

    in_specs = [
        pl.BlockSpec((b_tile, n_pts, n_ch), lambda g: (g, 0, 0)),    # pts
        pl.BlockSpec((b_tile, 1, 512), lambda g: (g, 0, 0)),         # one_hot bias
    ] + [const_spec(a) for a in weight_args]

    out_spec = pl.BlockSpec((b_tile, n_pts, OUT_PAD), lambda g: (g, 0, 0))

    out_padded = pl.pallas_call(
        _pointnet_seg_kernel,
        out_shape=jax.ShapeDtypeStruct((bs, n_pts, OUT_PAD), jnp.float32),
        grid_spec=pltpu.PrefetchScalarGridSpec(
            num_scalar_prefetch=0,
            grid=(n_blocks,),
            in_specs=in_specs,
            out_specs=out_spec,
        ),
        compiler_params=pltpu.CompilerParams(
            dimension_semantics=("parallel",),
            vmem_limit_bytes=_vmem_limit_bytes(),
        ),
    )(pts_nlc, ohb, *weight_args)

    return out_padded[..., :2]


def _fold_bn(w, b, gamma, beta, mean, var, eps=1e-5):
    """Fold eval-mode BatchNorm1d into a (C_in, C_out) weight and (C_out,) bias."""
    scale = gamma / jnp.sqrt(var + eps)
    return w * scale[None, :], (b - mean) * scale + beta


def init_params(key, n_channel=4, n_classes=3):
    """Deterministic synthetic parameters (PyTorch Conv1d (Cout,Cin,1) -> (Cin,Cout))."""
    layer_dims = [
        (n_channel, 64), (64, 64), (64, 64), (64, 128), (128, 1024),          # conv1..conv5
        (64 + 1024 + n_classes, 512), (512, 256), (256, 128), (128, 128),     # dconv1..dconv4
        (128, 2),                                                             # dconv5 (no BN)
    ]
    keys = jax.random.split(key, 6 * len(layer_dims))
    folded = []
    ki = 0
    for i, (cin, cout) in enumerate(layer_dims):
        w = jax.random.normal(keys[ki], (cin, cout), jnp.float32) / jnp.sqrt(cin); ki += 1
        b = 0.05 * jax.random.normal(keys[ki], (cout,), jnp.float32); ki += 1
        gamma = 1.0 + 0.1 * jax.random.normal(keys[ki], (cout,), jnp.float32); ki += 1
        beta = 0.05 * jax.random.normal(keys[ki], (cout,), jnp.float32); ki += 1
        mean = 0.1 * jax.random.normal(keys[ki], (cout,), jnp.float32); ki += 1
        var = 1.0 + 0.1 * jax.random.uniform(keys[ki], (cout,), jnp.float32); ki += 1
        if i == len(layer_dims) - 1:
            folded.append((w, b))                                   # dconv5: no BN
        else:
            folded.append(_fold_bn(w, b, gamma, beta, mean, var))

    bf16, f32 = jnp.bfloat16, jnp.float32

    conv_w = [folded[i][0].astype(bf16) for i in range(5)]
    conv_b = [folded[i][1].reshape(1, -1).astype(f32) for i in range(5)]

    dw1, db1 = folded[5]                        # (64 + 1024 + n_classes, 512)
    dw1a = dw1[:64, :].astype(bf16)             # multiplies out2
    dw1b = dw1[64:64 + 1024, :].astype(bf16)    # multiplies global_feat
    dw1c = dw1[64 + 1024:, :].astype(f32)       # multiplies one_hot (used in wrapper)
    db1 = db1.reshape(1, -1).astype(f32)

    dconv_w = [folded[i][0].astype(bf16) for i in range(6, 9)]
    dconv_b = [folded[i][1].reshape(1, -1).astype(f32) for i in range(6, 9)]

    # dconv5: pad the 2 output channels to OUT_PAD for a lane-dense store.
    w5_raw, b5_raw = folded[9]
    dw5 = jnp.zeros((128, OUT_PAD), f32).at[:, :2].set(w5_raw).astype(bf16)
    db5 = jnp.zeros((1, OUT_PAD), f32).at[:, :2].set(b5_raw.reshape(1, -1))
    dconv_w.append(dw5)
    dconv_b.append(db5)

    return {
        "conv_w": conv_w, "conv_b": conv_b,
        "dw1a": dw1a, "dw1b": dw1b, "dw1c": dw1c, "db1": db1,
        "dconv_w": dconv_w, "dconv_b": dconv_b,
    }


def _reference_forward(pts, one_hot, params):
    """Plain-JAX reference with the same folded params and the same bf16 rounding points."""
    f32, bf16 = jnp.float32, jnp.bfloat16

    def layer(h, w, b):
        y = h @ w.astype(f32) + b
        return jnp.maximum(y, 0.0).astype(bf16).astype(f32)

    x = jnp.transpose(pts, (0, 2, 1)).astype(bf16).astype(f32)      # (bs, n_pts, C)
    out1 = layer(x, params["conv_w"][0], params["conv_b"][0])
    out2 = layer(out1, params["conv_w"][1], params["conv_b"][1])
    out3 = layer(out2, params["conv_w"][2], params["conv_b"][2])
    out4 = layer(out3, params["conv_w"][3], params["conv_b"][3])
    out5 = layer(out4, params["conv_w"][4], params["conv_b"][4])

    gfeat = jnp.max(out5, axis=1)                                   # (bs, 1024)
    ohb = one_hot.astype(f32) @ params["dw1c"] + params["db1"]      # (bs, 512)
    glob = gfeat @ params["dw1b"].astype(f32) + ohb                 # (bs, 512)

    x1 = out2 @ params["dw1a"].astype(f32) + glob[:, None, :]
    x1 = jnp.maximum(x1, 0.0).astype(bf16).astype(f32)
    x2 = layer(x1, params["dconv_w"][0], params["dconv_b"][0])
    x3 = layer(x2, params["dconv_w"][1], params["dconv_b"][1])
    x4 = layer(x3, params["dconv_w"][2], params["dconv_b"][2])
    logits = x4 @ params["dconv_w"][3].astype(f32) + params["dconv_b"][3]
    return logits[..., :2]


if __name__ == "__main__":
    bs, n_pts, n_channel, n_classes = 2, 128, 4, 3

    key = jax.random.PRNGKey(0)
    k_pts, k_oh, k_param = jax.random.split(key, 3)

    pts = jax.random.normal(k_pts, (bs, n_channel, n_pts), jnp.float32)   # torch NCW layout
    cls_idx = jax.random.randint(k_oh, (bs,), 0, n_classes)
    one_hot = jax.nn.one_hot(cls_idx, n_classes, dtype=jnp.float32)       # (bs, 3)

    params = init_params(k_param, n_channel=n_channel, n_classes=n_classes)

    seg_pred = pointnet_instance_seg(pts, one_hot, params, b_tile=2)      # (bs, n_pts, 2)
    seg_pred = jax.block_until_ready(seg_pred)

    ref = _reference_forward(pts, one_hot, params)
    assert seg_pred.shape == (bs, n_pts, 2)
    max_err = float(jnp.max(jnp.abs(seg_pred - ref)))
    assert jnp.allclose(seg_pred, ref, atol=2e-2, rtol=2e-2), (
        f"mismatch vs reference (max abs err {max_err})")

    print("KERNEL_OK")
</pallas_src>

<mosaic_0001>
module attributes {stable_mosaic.version = 11 : i64} {
  func.func @_pointnet_seg_kernel(%arg0: i32, %arg1: memref<2x128x4xbf16, #tpu.memory_space<vmem>>, %arg2: memref<2x1x512xf32, #tpu.memory_space<vmem>>, %arg3: memref<4x64xbf16, #tpu.memory_space<vmem>>, %arg4: memref<1x64xf32, #tpu.memory_space<vmem>>, %arg5: memref<64x64xbf16, #tpu.memory_space<vmem>>, %arg6: memref<1x64xf32, #tpu.memory_space<vmem>>, %arg7: memref<64x64xbf16, #tpu.memory_space<vmem>>, %arg8: memref<1x64xf32, #tpu.memory_space<vmem>>, %arg9: memref<64x128xbf16, #tpu.memory_space<vmem>>, %arg10: memref<1x128xf32, #tpu.memory_space<vmem>>, %arg11: memref<128x1024xbf16, #tpu.memory_space<vmem>>, %arg12: memref<1x1024xf32, #tpu.memory_space<vmem>>, %arg13: memref<64x512xbf16, #tpu.memory_space<vmem>>, %arg14: memref<1024x512xbf16, #tpu.memory_space<vmem>>, %arg15: memref<512x256xbf16, #tpu.memory_space<vmem>>, %arg16: memref<1x256xf32, #tpu.memory_space<vmem>>, %arg17: memref<256x128xbf16, #tpu.memory_space<vmem>>, %arg18: memref<1x128xf32, #tpu.memory_space<vmem>>, %arg19: memref<128x128xbf16, #tpu.memory_space<vmem>>, %arg20: memref<1x128xf32, #tpu.memory_space<vmem>>, %arg21: memref<128x128xbf16, #tpu.memory_space<vmem>>, %arg22: memref<1x128xf32, #tpu.memory_space<vmem>>, %arg23: memref<2x128x128xf32, #tpu.memory_space<vmem>>) attributes {dimension_semantics = [#tpu.dimension_semantics<parallel>], iteration_bounds = array<i64: 1>, scalar_prefetch = 0 : i64, scratch_operands = 0 : i64, tpu.core_type = #tpu.core_type<tc>, window_params = [{transform_indices = @transform_0, window_bounds = array<i64: 2, 128, 4>}, {transform_indices = @transform_1, window_bounds = array<i64: 2, 1, 512>}, {pipeline_mode = #tpu.pipeline_mode<synchronous>, transform_indices = @transform_2, window_bounds = array<i64: 4, 64>}, {pipeline_mode = #tpu.pipeline_mode<synchronous>, transform_indices = @transform_3, window_bounds = array<i64: 1, 64>}, {pipeline_mode = #tpu.pipeline_mode<synchronous>, transform_indices = @transform_4, window_bounds = array<i64: 64, 64>}, {pipeline_mode = #tpu.pipeline_mode<synchronous>, transform_indices = @transform_5, window_bounds = array<i64: 1, 64>}, {pipeline_mode = #tpu.pipeline_mode<synchronous>, transform_indices = @transform_6, window_bounds = array<i64: 64, 64>}, {pipeline_mode = #tpu.pipeline_mode<synchronous>, transform_indices = @transform_7, window_bounds = array<i64: 1, 64>}, {pipeline_mode = #tpu.pipeline_mode<synchronous>, transform_indices = @transform_8, window_bounds = array<i64: 64, 128>}, {pipeline_mode = #tpu.pipeline_mode<synchronous>, transform_indices = @transform_9, window_bounds = array<i64: 1, 128>}, {pipeline_mode = #tpu.pipeline_mode<synchronous>, transform_indices = @transform_10, window_bounds = array<i64: 128, 1024>}, {pipeline_mode = #tpu.pipeline_mode<synchronous>, transform_indices = @transform_11, window_bounds = array<i64: 1, 1024>}, {pipeline_mode = #tpu.pipeline_mode<synchronous>, transform_indices = @transform_12, window_bounds = array<i64: 64, 512>}, {pipeline_mode = #tpu.pipeline_mode<synchronous>, transform_indices = @transform_13, window_bounds = array<i64: 1024, 512>}, {pipeline_mode = #tpu.pipeline_mode<synchronous>, transform_indices = @transform_14, window_bounds = array<i64: 512, 256>}, {pipeline_mode = #tpu.pipeline_mode<synchronous>, transform_indices = @transform_15, window_bounds = array<i64: 1, 256>}, {pipeline_mode = #tpu.pipeline_mode<synchronous>, transform_indices = @transform_16, window_bounds = array<i64: 256, 128>}, {pipeline_mode = #tpu.pipeline_mode<synchronous>, transform_indices = @transform_17, window_bounds = array<i64: 1, 128>}, {pipeline_mode = #tpu.pipeline_mode<synchronous>, transform_indices = @transform_18, window_bounds = array<i64: 128, 128>}, {pipeline_mode = #tpu.pipeline_mode<synchronous>, transform_indices = @transform_19, window_bounds = array<i64: 1, 128>}, {pipeline_mode = #tpu.pipeline_mode<synchronous>, transform_indices = @transform_20, window_bounds = array<i64: 128, 128>}, {pipeline_mode = #tpu.pipeline_mode<synchronous>, transform_indices = @transform_21, window_bounds = array<i64: 1, 128>}, {transform_indices = @transform_22, window_bounds = array<i64: 2, 128, 128>}]} {
    %c0 = arith.constant 0 : index
    %c0_0 = arith.constant 0 : index
    %c0_1 = arith.constant 0 : index
    %0 = vector.load %arg1[%c0, %c0_0, %c0_1] : memref<2x128x4xbf16, #tpu.memory_space<vmem>>, vector<2x128x4xbf16>
    %1 = vector.shape_cast %0 : vector<2x128x4xbf16> to vector<256x4xbf16>
    %c0_2 = arith.constant 0 : index
    %c0_3 = arith.constant 0 : index
    %2 = vector.load %arg3[%c0_2, %c0_3] : memref<4x64xbf16, #tpu.memory_space<vmem>>, vector<4x64xbf16>
    %cst = arith.constant dense<0.000000e+00> : vector<256x64xf32>
    %3 = tpu.matmul %1, %2, %cst {dimension_numbers = #tpu.dot_dimension_numbers<[1], [0], [0], [1], [0, 0, 1, 1], [], []>} : vector<256x4xbf16>, vector<4x64xbf16>, vector<256x64xf32> -> vector<256x64xf32>
    %c0_4 = arith.constant 0 : index
    %c0_5 = arith.constant 0 : index
    %4 = vector.load %arg4[%c0_4, %c0_5] : memref<1x64xf32, #tpu.memory_space<vmem>>, vector<1x64xf32>
    %5 = vector.broadcast %4 : vector<1x64xf32> to vector<256x64xf32>
    %6 = arith.addf %3, %5 : vector<256x64xf32>
    %cst_6 = arith.constant 0.000000e+00 : f32
    %7 = vector.broadcast %cst_6 : f32 to vector<256x64xf32>
    %8 = arith.maximumf %6, %7 : vector<256x64xf32>
    %9 = arith.truncf %8 : vector<256x64xf32> to vector<256x64xbf16>
    %c0_7 = arith.constant 0 : index
    %c0_8 = arith.constant 0 : index
    %10 = vector.load %arg5[%c0_7, %c0_8] : memref<64x64xbf16, #tpu.memory_space<vmem>>, vector<64x64xbf16>
    %cst_9 = arith.constant dense<0.000000e+00> : vector<256x64xf32>
    %11 = tpu.matmul %9, %10, %cst_9 {dimension_numbers = #tpu.dot_dimension_numbers<[1], [0], [0], [1], [0, 0, 1, 1], [], []>} : vector<256x64xbf16>, vector<64x64xbf16>, vector<256x64xf32> -> vector<256x64xf32>
    %c0_10 = arith.constant 0 : index
    %c0_11 = arith.constant 0 : index
    %12 = vector.load %arg6[%c0_10, %c0_11] : memref<1x64xf32, #tpu.memory_space<vmem>>, vector<1x64xf32>
    %13 = vector.broadcast %12 : vector<1x64xf32> to vector<256x64xf32>
    %14 = arith.addf %11, %13 : vector<256x64xf32>
    %cst_12 = arith.constant 0.000000e+00 : f32
    %15 = vector.broadcast %cst_12 : f32 to vector<256x64xf32>
    %16 = arith.maximumf %14, %15 : vector<256x64xf32>
    %17 = arith.truncf %16 : vector<256x64xf32> to vector<256x64xbf16>
    %c0_13 = arith.constant 0 : index
    %c0_14 = arith.constant 0 : index
    %18 = vector.load %arg7[%c0_13, %c0_14] : memref<64x64xbf16, #tpu.memory_space<vmem>>, vector<64x64xbf16>
    %cst_15 = arith.constant dense<0.000000e+00> : vector<256x64xf32>
    %19 = tpu.matmul %17, %18, %cst_15 {dimension_numbers = #tpu.dot_dimension_numbers<[1], [0], [0], [1], [0, 0, 1, 1], [], []>} : vector<256x64xbf16>, vector<64x64xbf16>, vector<256x64xf32> -> vector<256x64xf32>
    %c0_16 = arith.constant 0 : index
    %c0_17 = arith.constant 0 : index
    %20 = vector.load %arg8[%c0_16, %c0_17] : memref<1x64xf32, #tpu.memory_space<vmem>>, vector<1x64xf32>
    %21 = vector.broadcast %20 : vector<1x64xf32> to vector<256x64xf32>
    %22 = arith.addf %19, %21 : vector<256x64xf32>
    %cst_18 = arith.constant 0.000000e+00 : f32
    %23 = vector.broadcast %cst_18 : f32 to vector<256x64xf32>
    %24 = arith.maximumf %22, %23 : vector<256x64xf32>
    %25 = arith.truncf %24 : vector<256x64xf32> to vector<256x64xbf16>
    %c0_19 = arith.constant 0 : index
    %c0_20 = arith.constant 0 : index
    %26 = vector.load %arg9[%c0_19, %c0_20] : memref<64x128xbf16, #tpu.memory_space<vmem>>, vector<64x128xbf16>
    %cst_21 = arith.constant dense<0.000000e+00> : vector<256x128xf32>
    %27 = tpu.matmul %25, %26, %cst_21 {dimension_numbers = #tpu.dot_dimension_numbers<[1], [0], [0], [1], [0, 0, 1, 1], [], []>} : vector<256x64xbf16>, vector<64x128xbf16>, vector<256x128xf32> -> vector<256x128xf32>
    %c0_22 = arith.constant 0 : index
    %c0_23 = arith.constant 0 : index
    %28 = vector.load %arg10[%c0_22, %c0_23] : memref<1x128xf32, #tpu.memory_space<vmem>>, vector<1x128xf32>
    %29 = vector.broadcast %28 : vector<1x128xf32> to vector<256x128xf32>
    %30 = arith.addf %27, %29 : vector<256x128xf32>
    %cst_24 = arith.constant 0.000000e+00 : f32
    %31 = vector.broadcast %cst_24 : f32 to vector<256x128xf32>
    %32 = arith.maximumf %30, %31 : vector<256x128xf32>
    %33 = arith.truncf %32 : vector<256x128xf32> to vector<256x128xbf16>
    %c0_25 = arith.constant 0 : index
    %c0_26 = arith.constant 0 : index
    %34 = vector.load %arg11[%c0_25, %c0_26] : memref<128x1024xbf16, #tpu.memory_space<vmem>>, vector<128x1024xbf16>
    %cst_27 = arith.constant dense<0.000000e+00> : vector<256x1024xf32>
    %35 = tpu.matmul %33, %34, %cst_27 {dimension_numbers = #tpu.dot_dimension_numbers<[1], [0], [0], [1], [0, 0, 1, 1], [], []>} : vector<256x128xbf16>, vector<128x1024xbf16>, vector<256x1024xf32> -> vector<256x1024xf32>
    %c0_28 = arith.constant 0 : index
    %c0_29 = arith.constant 0 : index
    %36 = vector.load %arg12[%c0_28, %c0_29] : memref<1x1024xf32, #tpu.memory_space<vmem>>, vector<1x1024xf32>
    %37 = vector.broadcast %36 : vector<1x1024xf32> to vector<256x1024xf32>
    %38 = arith.addf %35, %37 : vector<256x1024xf32>
    %cst_30 = arith.constant 0.000000e+00 : f32
    %39 = vector.broadcast %cst_30 : f32 to vector<256x1024xf32>
    %40 = arith.maximumf %38, %39 : vector<256x1024xf32>
    %41 = arith.truncf %40 : vector<256x1024xf32> to vector<256x1024xbf16>
    %42 = vector.shape_cast %41 : vector<256x1024xbf16> to vector<2x128x1024xbf16>
    %cst_31 = arith.constant dense<0xFF80> : vector<2x1024xbf16>
    %43 = vector.multi_reduction <maximumf>, %42, %cst_31 [1] : vector<2x128x1024xbf16> to vector<2x1024xbf16>
    %c0_32 = arith.constant 0 : index
    %c0_33 = arith.constant 0 : index
    %44 = vector.load %arg14[%c0_32, %c0_33] : memref<1024x512xbf16, #tpu.memory_space<vmem>>, vector<1024x512xbf16>
    %cst_34 = arith.constant dense<0.000000e+00> : vector<2x512xf32>
    %45 = tpu.matmul %43, %44, %cst_34 {dimension_numbers = #tpu.dot_dimension_numbers<[1], [0], [0], [1], [0, 0, 1, 1], [], []>} : vector<2x1024xbf16>, vector<1024x512xbf16>, vector<2x512xf32> -> vector<2x512xf32>
    %46 = vector.shape_cast %45 : vector<2x512xf32> to vector<2x1x512xf32>
    %c0_35 = arith.constant 0 : index
    %c0_36 = arith.constant 0 : index
    %c0_37 = arith.constant 0 : index
    %47 = vector.load %arg2[%c0_35, %c0_36, %c0_37] : memref<2x1x512xf32, #tpu.memory_space<vmem>>, vector<2x1x512xf32>
    %48 = arith.addf %46, %47 : vector<2x1x512xf32>
    %c0_38 = arith.constant 0 : index
    %c0_39 = arith.constant 0 : index
    %49 = vector.load %arg13[%c0_38, %c0_39] : memref<64x512xbf16, #tpu.memory_space<vmem>>, vector<64x512xbf16>
    %cst_40 = arith.constant dense<0.000000e+00> : vector<256x512xf32>
    %50 = tpu.matmul %17, %49, %cst_40 {dimension_numbers = #tpu.dot_dimension_numbers<[1], [0], [0], [1], [0, 0, 1, 1], [], []>} : vector<256x64xbf16>, vector<64x512xbf16>, vector<256x512xf32> -> vector<256x512xf32>
    %51 = vector.shape_cast %50 : vector<256x512xf32> to vector<2x128x512xf32>
    %52 = vector.broadcast %48 : vector<2x1x512xf32> to vector<2x128x512xf32>
    %53 = arith.addf %51, %52 : vector<2x128x512xf32>
    %cst_41 = arith.constant 0.000000e+00 : f32
    %54 = vector.broadcast %cst_41 : f32 to vector<2x128x512xf32>
    %55 = arith.maximumf %53, %54 : vector<2x128x512xf32>
    %56 = arith.truncf %55 : vector<2x128x512xf32> to vector<2x128x512xbf16>
    %57 = vector.shape_cast %56 : vector<2x128x512xbf16> to vector<256x512xbf16>
    %c0_42 = arith.constant 0 : index
    %c0_43 = arith.constant 0 : index
    %58 = vector.load %arg15[%c0_42, %c0_43] : memref<512x256xbf16, #tpu.memory_space<vmem>>, vector<512x256xbf16>
    %cst_44 = arith.constant dense<0.000000e+00> : vector<256x256xf32>
    %59 = tpu.matmul %57, %58, %cst_44 {dimension_numbers = #tpu.dot_dimension_numbers<[1], [0], [0], [1], [0, 0, 1, 1], [], []>} : vector<256x512xbf16>, vector<512x256xbf16>, vector<256x256xf32> -> vector<256x256xf32>
    %c0_45 = arith.constant 0 : index
    %c0_46 = arith.constant 0 : index
    %60 = vector.load %arg16[%c0_45, %c0_46] : memref<1x256xf32, #tpu.memory_space<vmem>>, vector<1x256xf32>
    %61 = vector.broadcast %60 : vector<1x256xf32> to vector<256x256xf32>
    %62 = arith.addf %59, %61 : vector<256x256xf32>
    %cst_47 = arith.constant 0.000000e+00 : f32
    %63 = vector.broadcast %cst_47 : f32 to vector<256x256xf32>
    %64 = arith.maximumf %62, %63 : vector<256x256xf32>
    %65 = arith.truncf %64 : vector<256x256xf32> to vector<256x256xbf16>
    %c0_48 = arith.constant 0 : index
    %c0_49 = arith.constant 0 : index
    %66 = vector.load %arg17[%c0_48, %c0_49] : memref<256x128xbf16, #tpu.memory_space<vmem>>, vector<256x128xbf16>
    %cst_50 = arith.constant dense<0.000000e+00> : vector<256x128xf32>
    %67 = tpu.matmul %65, %66, %cst_50 {dimension_numbers = #tpu.dot_dimension_numbers<[1], [0], [0], [1], [0, 0, 1, 1], [], []>} : vector<256x256xbf16>, vector<256x128xbf16>, vector<256x128xf32> -> vector<256x128xf32>
    %c0_51 = arith.constant 0 : index
    %c0_52 = arith.constant 0 : index
    %68 = vector.load %arg18[%c0_51, %c0_52] : memref<1x128xf32, #tpu.memory_space<vmem>>, vector<1x128xf32>
    %69 = vector.broadcast %68 : vector<1x128xf32> to vector<256x128xf32>
    %70 = arith.addf %67, %69 : vector<256x128xf32>
    %cst_53 = arith.constant 0.000000e+00 : f32
    %71 = vector.broadcast %cst_53 : f32 to vector<256x128xf32>
    %72 = arith.maximumf %70, %71 : vector<256x128xf32>
    %73 = arith.truncf %72 : vector<256x128xf32> to vector<256x128xbf16>
    %c0_54 = arith.constant 0 : index
    %c0_55 = arith.constant 0 : index
    %74 = vector.load %arg19[%c0_54, %c0_55] : memref<128x128xbf16, #tpu.memory_space<vmem>>, vector<128x128xbf16>
    %cst_56 = arith.constant dense<0.000000e+00> : vector<256x128xf32>
    %75 = tpu.matmul %73, %74, %cst_56 {dimension_numbers = #tpu.dot_dimension_numbers<[1], [0], [0], [1], [0, 0, 1, 1], [], []>} : vector<256x128xbf16>, vector<128x128xbf16>, vector<256x128xf32> -> vector<256x128xf32>
    %c0_57 = arith.constant 0 : index
    %c0_58 = arith.constant 0 : index
    %76 = vector.load %arg20[%c0_57, %c0_58] : memref<1x128xf32, #tpu.memory_space<vmem>>, vector<1x128xf32>
    %77 = vector.broadcast %76 : vector<1x128xf32> to vector<256x128xf32>
    %78 = arith.addf %75, %77 : vector<256x128xf32>
    %cst_59 = arith.constant 0.000000e+00 : f32
    %79 = vector.broadcast %cst_59 : f32 to vector<256x128xf32>
    %80 = arith.maximumf %78, %79 : vector<256x128xf32>
    %81 = arith.truncf %80 : vector<256x128xf32> to vector<256x128xbf16>
    %c0_60 = arith.constant 0 : index
    %c0_61 = arith.constant 0 : index
    %82 = vector.load %arg21[%c0_60, %c0_61] : memref<128x128xbf16, #tpu.memory_space<vmem>>, vector<128x128xbf16>
    %cst_62 = arith.constant dense<0.000000e+00> : vector<256x128xf32>
    %83 = tpu.matmul %81, %82, %cst_62 {dimension_numbers = #tpu.dot_dimension_numbers<[1], [0], [0], [1], [0, 0, 1, 1], [], []>} : vector<256x128xbf16>, vector<128x128xbf16>, vector<256x128xf32> -> vector<256x128xf32>
    %c0_63 = arith.constant 0 : index
    %c0_64 = arith.constant 0 : index
    %84 = vector.load %arg22[%c0_63, %c0_64] : memref<1x128xf32, #tpu.memory_space<vmem>>, vector<1x128xf32>
    %85 = vector.broadcast %84 : vector<1x128xf32> to vector<256x128xf32>
    %86 = arith.addf %83, %85 : vector<256x128xf32>
    %87 = vector.shape_cast %86 : vector<256x128xf32> to vector<2x128x128xf32>
    %c0_65 = arith.constant 0 : index
    %c0_66 = arith.constant 0 : index
    %c0_67 = arith.constant 0 : index
    %88 = vector.load %arg23[%c0_65, %c0_66, %c0_67] : memref<2x128x128xf32, #tpu.memory_space<vmem>>, vector<2x128x128xf32>
    tpu.vector_store %arg23[%c0_65, %c0_66, %c0_67], %87 {strides = array<i32>} : memref<2x128x128xf32, #tpu.memory_space<vmem>>, vector<2x128x128xf32>,
    return
  }
  func.func @transform_0(%arg0: i32) -> (i32, i32, i32) {
    %c0_i32 = arith.constant 0 : i32
    %c0_i32_0 = arith.constant 0 : i32
    %c0_i32_1 = arith.constant 0 : i32
    return %arg0, %c0_i32, %c0_i32_0 : i32, i32, i32
  }
  func.func @transform_1(%arg0: i32) -> (i32, i32, i32) {
    %c0_i32 = arith.constant 0 : i32
    %c0_i32_0 = arith.constant 0 : i32
    %c0_i32_1 = arith.constant 0 : i32
    return %arg0, %c0_i32, %c0_i32_0 : i32, i32, i32
  }
  func.func @transform_2(%arg0: i32) -> (i32, i32) {
    %c0_i32 = arith.constant 0 : i32
    %c0_i32_0 = arith.constant 0 : i32
    %c0_i32_1 = arith.constant 0 : i32
    return %c0_i32, %c0_i32_0 : i32, i32
  }
  func.func @transform_3(%arg0: i32) -> (i32, i32) {
    %c0_i32 = arith.constant 0 : i32
    %c0_i32_0 = arith.constant 0 : i32
    %c0_i32_1 = arith.constant 0 : i32
    return %c0_i32, %c0_i32_0 : i32, i32
  }
  func.func @transform_4(%arg0: i32) -> (i32, i32) {
    %c0_i32 = arith.constant 0 : i32
    %c0_i32_0 = arith.constant 0 : i32
    %c0_i32_1 = arith.constant 0 : i32
    return %c0_i32, %c0_i32_0 : i32, i32
  }
  func.func @transform_5(%arg0: i32) -> (i32, i32) {
    %c0_i32 = arith.constant 0 : i32
    %c0_i32_0 = arith.constant 0 : i32
    %c0_i32_1 = arith.constant 0 : i32
    return %c0_i32, %c0_i32_0 : i32, i32
  }
  func.func @transform_6(%arg0: i32) -> (i32, i32) {
    %c0_i32 = arith.constant 0 : i32
    %c0_i32_0 = arith.constant 0 : i32
    %c0_i32_1 = arith.constant 0 : i32
    return %c0_i32, %c0_i32_0 : i32, i32
  }
  func.func @transform_7(%arg0: i32) -> (i32, i32) {
    %c0_i32 = arith.constant 0 : i32
    %c0_i32_0 = arith.constant 0 : i32
    %c0_i32_1 = arith.constant 0 : i32
    return %c0_i32, %c0_i32_0 : i32, i32
  }
  func.func @transform_8(%arg0: i32) -> (i32, i32) {
    %c0_i32 = arith.constant 0 : i32
    %c0_i32_0 = arith.constant 0 : i32
    %c0_i32_1 = arith.constant 0 : i32
    return %c0_i32, %c0_i32_0 : i32, i32
  }
  func.func @transform_9(%arg0: i32) -> (i32, i32) {
    %c0_i32 = arith.constant 0 : i32
    %c0_i32_0 = arith.constant 0 : i32
    %c0_i32_1 = arith.constant 0 : i32
    return %c0_i32, %c0_i32_0 : i32, i32
  }
  func.func @transform_10(%arg0: i32) -> (i32, i32) {
    %c0_i32 = arith.constant 0 : i32
    %c0_i32_0 = arith.constant 0 : i32
    %c0_i32_1 = arith.constant 0 : i32
    return %c0_i32, %c0_i32_0 : i32, i32
  }
  func.func @transform_11(%arg0: i32) -> (i32, i32) {
    %c0_i32 = arith.constant 0 : i32
    %c0_i32_0 = arith.constant 0 : i32
    %c0_i32_1 = arith.constant 0 : i32
    return %c0_i32, %c0_i32_0 : i32, i32
  }
  func.func @transform_12(%arg0: i32) -> (i32, i32) {
    %c0_i32 = arith.constant 0 : i32
    %c0_i32_0 = arith.constant 0 : i32
    %c0_i32_1 = arith.constant 0 : i32
    return %c0_i32, %c0_i32_0 : i32, i32
  }
  func.func @transform_13(%arg0: i32) -> (i32, i32) {
    %c0_i32 = arith.constant 0 : i32
    %c0_i32_0 = arith.constant 0 : i32
    %c0_i32_1 = arith.constant 0 : i32
    return %c0_i32, %c0_i32_0 : i32, i32
  }
  func.func @transform_14(%arg0: i32) -> (i32, i32) {
    %c0_i32 = arith.constant 0 : i32
    %c0_i32_0 = arith.constant 0 : i32
    %c0_i32_1 = arith.constant 0 : i32
    return %c0_i32, %c0_i32_0 : i32, i32
  }
  func.func @transform_15(%arg0: i32) -> (i32, i32) {
    %c0_i32 = arith.constant 0 : i32
    %c0_i32_0 = arith.constant 0 : i32
    %c0_i32_1 = arith.constant 0 : i32
    return %c0_i32, %c0_i32_0 : i32, i32
  }
  func.func @transform_16(%arg0: i32) -> (i32, i32) {
    %c0_i32 = arith.constant 0 : i32
    %c0_i32_0 = arith.constant 0 : i32
    %c0_i32_1 = arith.constant 0 : i32
    return %c0_i32, %c0_i32_0 : i32, i32
  }
  func.func @transform_17(%arg0: i32) -> (i32, i32) {
    %c0_i32 = arith.constant 0 : i32
    %c0_i32_0 = arith.constant 0 : i32
    %c0_i32_1 = arith.constant 0 : i32
    return %c0_i32, %c0_i32_0 : i32, i32
  }
  func.func @transform_18(%arg0: i32) -> (i32, i32) {
    %c0_i32 = arith.constant 0 : i32
    %c0_i32_0 = arith.constant 0 : i32
    %c0_i32_1 = arith.constant 0 : i32
    return %c0_i32, %c0_i32_0 : i32, i32
  }
  func.func @transform_19(%arg0: i32) -> (i32, i32) {
    %c0_i32 = arith.constant 0 : i32
    %c0_i32_0 = arith.constant 0 : i32
    %c0_i32_1 = arith.constant 0 : i32
    return %c0_i32, %c0_i32_0 : i32, i32
  }
  func.func @transform_20(%arg0: i32) -> (i32, i32) {
    %c0_i32 = arith.constant 0 : i32
    %c0_i32_0 = arith.constant 0 : i32
    %c0_i32_1 = arith.constant 0 : i32
    return %c0_i32, %c0_i32_0 : i32, i32
  }
  func.func @transform_21(%arg0: i32) -> (i32, i32) {
    %c0_i32 = arith.constant 0 : i32
    %c0_i32_0 = arith.constant 0 : i32
    %c0_i32_1 = arith.constant 0 : i32
    return %c0_i32, %c0_i32_0 : i32, i32
  }
  func.func @transform_22(%arg0: i32) -> (i32, i32, i32) {
    %c0_i32 = arith.constant 0 : i32
    %c0_i32_0 = arith.constant 0 : i32
    %c0_i32_1 = arith.constant 0 : i32
    return %arg0, %c0_i32, %c0_i32_0 : i32, i32, i32
  }
}

</mosaic_0001>

<llo_original>
// kernel: tpu_custom_call.1
$region0: #{tpu_custom_call.1}
  #allocation0 [shape = 'u32[]', space=smem, size = 0x4, offset = 0x4, fixed_abs, tag = 'smem constant byte address 0x4 - core index']
  #allocation1 [shape = 'u32[144,128]{1,0:T(1,128)}', space=vmem, size = 0x12000, scoped, tag = 'internal scratch']
  %s0 = inlined_call_operand.vmem [shape: bf16[2,128,4], index: 0, kind: input, shape index: {}]
  %s1 = inlined_call_operand.hbm [shape: f32[2,1,512], index: 1, kind: input, shape index: {}]
  %s2 = inlined_call_operand.hbm [shape: bf16[4,64], index: 2, kind: input, shape index: {}]
  %s3 = inlined_call_operand.hbm [shape: f32[1,64], index: 3, kind: input, shape index: {}]
  %s4 = inlined_call_operand.hbm [shape: bf16[64,64], index: 4, kind: input, shape index: {}]
  %s5 = inlined_call_operand.hbm [shape: f32[1,64], index: 5, kind: input, shape index: {}]
  %s6 = inlined_call_operand.hbm [shape: bf16[64,64], index: 6, kind: input, shape index: {}]
  %s7 = inlined_call_operand.hbm [shape: f32[1,64], index: 7, kind: input, shape index: {}]
  %s8 = inlined_call_operand.hbm [shape: bf16[64,128], index: 8, kind: input, shape index: {}]
  %s9 = inlined_call_operand.hbm [shape: f32[1,128], index: 9, kind: input, shape index: {}]
  %s10 = inlined_call_operand.hbm [shape: bf16[128,1024], index: 10, kind: input, shape index: {}]
  %s11 = inlined_call_operand.hbm [shape: f32[1,1024], index: 11, kind: input, shape index: {}]
  %s12 = inlined_call_operand.vmem [shape: bf16[64,512], index: 12, kind: input, shape index: {}]
  %s13 = inlined_call_operand.hbm [shape: bf16[1024,512], index: 13, kind: input, shape index: {}]
  %s14 = inlined_call_operand.hbm [shape: bf16[512,256], index: 14, kind: input, shape index: {}]
  %s15 = inlined_call_operand.hbm [shape: f32[1,256], index: 15, kind: input, shape index: {}]
  %s16 = inlined_call_operand.hbm [shape: bf16[256,128], index: 16, kind: input, shape index: {}]
  %s17 = inlined_call_operand.vmem [shape: f32[1,128], index: 17, kind: input, shape index: {}]
  %s18 = inlined_call_operand.vmem [shape: bf16[128,128], index: 18, kind: input, shape index: {}]
  %s19 = inlined_call_operand.vmem [shape: f32[1,128], index: 19, kind: input, shape index: {}]
  %s20 = inlined_call_operand.hbm [shape: bf16[128,128], index: 20, kind: input, shape index: {}]
  %s21 = inlined_call_operand.vmem [shape: f32[1,128], index: 21, kind: input, shape index: {}]
  %s22 = inlined_call_operand.hbm [shape: f32[2,128,128], index: 22, kind: output, shape index: {}]
  %s23 = sld [smem:[#allocation0]]
  $region162: #{tpu_custom_call.1} parent=0
    _
  %s25 = ssub.s32 1, %s23
  %s26 = scalar_select 0, %s25, %s23
  $region1: #{tpu_custom_call.1} parent=0
    #allocation2 [shape = 'u8[4096]{0}', space=vmem, size = 0x1000, scoped, tag = 'input window, operand 1, single buffered']
    #allocation3 [shape = 's32[1]{0}', space=sflag, size = 0x4, scoped, tag = 'scoped memory for tpu_custom_call.1']
    #allocation4 [shape = 's32[1]{0}', space=sflag, size = 0x4, scoped, tag = 'scoped memory for tpu_custom_call.1']
    #allocation5 [shape = 'u8[1024]{0}', space=vmem, size = 0x400, scoped, tag = 'input window, operand 2, single buffered']
    #allocation6 [shape = 's32[1]{0}', space=sflag, size = 0x4, scoped, tag = 'scoped memory for tpu_custom_call.1']
    #allocation7 [shape = 'u8[512]{0}', space=vmem, size = 0x400, scoped, tag = 'input window, operand 3, single buffered']
    #allocation8 [shape = 'u8[16384]{0}', space=vmem, size = 0x4000, scoped, tag = 'input window, operand 4, single buffered']
    #allocation9 [shape = 's32[1]{0}', space=sflag, size = 0x4, scoped, tag = 'scoped memory for tpu_custom_call.1']
    #allocation10 [shape = 'u8[512]{0}', space=vmem, size = 0x400, scoped, tag = 'input window, operand 5, single buffered']
    #allocation11 [shape = 'u8[16384]{0}', space=vmem, size = 0x4000, scoped, tag = 'input window, operand 6, single buffered']
    #allocation12 [shape = 's32[1]{0}', space=sflag, size = 0x4, scoped, tag = 'scoped memory for tpu_custom_call.1']
    #allocation13 [shape = 'u8[512]{0}', space=vmem, size = 0x400, scoped, tag = 'input window, operand 7, single buffered']
    #allocation14 [shape = 'u8[16384]{0}', space=vmem, size = 0x4000, scoped, tag = 'input window, operand 8, single buffered']
    #allocation15 [shape = 's32[1]{0}', space=sflag, size = 0x4, scoped, tag = 'scoped memory for tpu_custom_call.1']
    #allocation16 [shape = 'u8[512]{0}', space=vmem, size = 0x400, scoped, tag = 'input window, operand 9, single buffered']
    #allocation17 [shape = 'u8[262144]{0}', space=vmem, size = 0x40000, scoped, tag = 'input window, operand 10, single buffered']
    #allocation18 [shape = 's32[1]{0}', space=sflag, size = 0x4, scoped, tag = 'scoped memory for tpu_custom_call.1']
    #allocation19 [shape = 'u8[4096]{0}', space=vmem, size = 0x1000, scoped, tag = 'input window, operand 11, single buffered']
    #allocation20 [shape = 'u8[1048576]{0}', space=vmem, size = 0x100000, scoped, tag = 'input window, operand 13, single buffered']
    #allocation21 [shape = 's32[1]{0}', space=sflag, size = 0x4, scoped, tag = 'scoped memory for tpu_custom_call.1']
    #allocation22 [shape = 'u8[262144]{0}', space=vmem, size = 0x40000, scoped, tag = 'input window, operand 14, single buffered']
    #allocation23 [shape = 'u8[1024]{0}', space=vmem, size = 0x400, scoped, tag = 'input window, operand 15, single buffered']
    #allocation24 [shape = 's32[1]{0}', space=sflag, size = 0x4, scoped, tag = 'scoped memory for tpu_custom_call.1']
    #allocation25 [shape = 'u8[65536]{0}', space=vmem, size = 0x10000, scoped, tag = 'input window, operand 16, single buffered']
    #allocation26 [shape = 'u8[32768]{0}', space=vmem, size = 0x8000, scoped, tag = 'input window, operand 20, single buffered']
    #allocation27 [shape = 's32[1]{0}', space=sflag, size = 0x4, scoped, tag = 'scoped memory for tpu_custom_call.1']
    #allocation28 [shape = 'u8[131072]{0}', space=vmem, size = 0x20000, scoped, tag = 'output window, operand 0, single buffered']
    %27 = vsyncpa [#allocation3], 0
    %28 = vsyncpa [#allocation6], 0
    %29 = vsyncpa [#allocation9], 0
    %30 = vsyncpa [#allocation12], 0
    %31 = vsyncpa [#allocation15], 0
    %32 = vsyncpa [#allocation18], 0
    %33 = vsyncpa [#allocation21], 0
    %34 = vsyncpa [#allocation24], 0
    %35 = vsyncpa [#allocation27], 0
    %36 = vsyncpa [#allocation4], 0
    // Predicated region
    $region2: #{tpu_custom_call.1} parent=1 // pred_check
      _
    $region3: #{tpu_custom_call.1} parent=1 // pred_check_branch
      %38 = sbr.rel (0) target = $region5
    $region4: #{tpu_custom_call.1} parent=1 // pred_region
      _
    $region5: #{tpu_custom_call.1} parent=1 // pred_fallthru
      _
    // Predicated region
    $region6: #{tpu_custom_call.1} parent=1 // pred_check
      _
    $region7: #{tpu_custom_call.1} parent=1 // pred_check_branch
      %40 = sbr.rel (0) target = $region9
    $region8: #{tpu_custom_call.1} parent=1 // pred_region
      %s42 = ssub.s32 128, 128
      %43 = vsyncadd [#allocation3], %s42
      %s44 = sshll.u32 [#allocation2], 4
      %s45 = int_to_ptr.vmem [resolvable:$true] %s44
      %50 = dma.hbm_to_vmem [thread:$0]  %s1, 128, %s45, [#allocation3], 64, 64, 4
    $region9: #{tpu_custom_call.1} parent=1 // pred_fallthru
      _
    // Predicated region
    $region10: #{tpu_custom_call.1} parent=1 // pred_check
      _
    $region11: #{tpu_custom_call.1} parent=1 // pred_check_branch
      %52 = sbr.rel (0) target = $region13
    $region12: #{tpu_custom_call.1} parent=1 // pred_region
      %s54 = ssub.s32 32, 32
      %55 = vsyncadd [#allocation6], %s54
      %s57 = sshll.u32 [#allocation5], 4
      %s58 = int_to_ptr.vmem [resolvable:$true] %s57
      %60 = dma.hbm_to_vmem [thread:$0]  %s2, 32, %s58, [#allocation6]
    $region13: #{tpu_custom_call.1} parent=1 // pred_fallthru
      _
    // Predicated region
    $region14: #{tpu_custom_call.1} parent=1 // pred_check
      _
    $region15: #{tpu_custom_call.1} parent=1 // pred_check_branch
      %62 = sbr.rel (0) target = $region17
    $region16: #{tpu_custom_call.1} parent=1 // pred_region
      %s64 = ssub.s32 16, 16
      %65 = vsyncadd [#allocation6], %s64
      %s67 = sshll.u32 [#allocation7], 4
      %s68 = int_to_ptr.vmem [resolvable:$true] %s67
      %70 = dma.hbm_to_vmem [thread:$0]  %s3, 16, %s68, [#allocation6]
    $region17: #{tpu_custom_call.1} parent=1 // pred_fallthru
      _
    // Predicated region
    $region18: #{tpu_custom_call.1} parent=1 // pred_check
      _
    $region19: #{tpu_custom_call.1} parent=1 // pred_check_branch
      %72 = sbr.rel (0) target = $region21
    $region20: #{tpu_custom_call.1} parent=1 // pred_region
      %s74 = ssub.s32 512, 512
      %75 = vsyncadd [#allocation9], %s74
      %s76 = sshll.u32 [#allocation8], 4
      %s77 = int_to_ptr.vmem [resolvable:$true] %s76
      %82 = dma.hbm_to_vmem [thread:$0]  %s4, 512, %s77, [#allocation9], 64, 64, 4
    $region21: #{tpu_custom_call.1} parent=1 // pred_fallthru
      _
    // Predicated region
    $region22: #{tpu_custom_call.1} parent=1 // pred_check
      _
    $region23: #{tpu_custom_call.1} parent=1 // pred_check_branch
      %84 = sbr.rel (0) target = $region25
    $region24: #{tpu_custom_call.1} parent=1 // pred_region
      %s86 = ssub.s32 16, 16
      %87 = vsyncadd [#allocation9], %s86
      %s89 = sshll.u32 [#allocation10], 4
      %s90 = int_to_ptr.vmem [resolvable:$true] %s89
      %92 = dma.hbm_to_vmem [thread:$0]  %s5, 16, %s90, [#allocation9]
    $region25: #{tpu_custom_call.1} parent=1 // pred_fallthru
      _
    // Predicated region
    $region26: #{tpu_custom_call.1} parent=1 // pred_check
      _
    $region27: #{tpu_custom_call.1} parent=1 // pred_check_branch
      %94 = sbr.rel (0) target = $region29
    $region28: #{tpu_custom_call.1} parent=1 // pred_region
      %s96 = ssub.s32 512, 512
      %97 = vsyncadd [#allocation12], %s96
      %s98 = sshll.u32 [#allocation11], 4
      %s99 = int_to_ptr.vmem [resolvable:$true] %s98
      %104 = dma.hbm_to_vmem [thread:$0]  %s6, 512, %s99, [#allocation12], 64, 64, 4
    $region29: #{tpu_custom_call.1} parent=1 // pred_fallthru
      _
    // Predicated region
    $region30: #{tpu_custom_call.1} parent=1 // pred_check
      _
    $region31: #{tpu_custom_call.1} parent=1 // pred_check_branch
      %106 = sbr.rel (0) target = $region33
    $region32: #{tpu_custom_call.1} parent=1 // pred_region
      %s108 = ssub.s32 16, 16
      %109 = vsyncadd [#allocation12], %s108
      %s111 = sshll.u32 [#allocation13], 4
      %s112 = int_to_ptr.vmem [resolvable:$true] %s111
      %114 = dma.hbm_to_vmem [thread:$0]  %s7, 16, %s112, [#allocation12]
    $region33: #{tpu_custom_call.1} parent=1 // pred_fallthru
      _
    // Predicated region
    $region34: #{tpu_custom_call.1} parent=1 // pred_check
      _
    $region35: #{tpu_custom_call.1} parent=1 // pred_check_branch
      %116 = sbr.rel (0) target = $region37
    $region36: #{tpu_custom_call.1} parent=1 // pred_region
      %s118 = ssub.s32 512, 512
      %119 = vsyncadd [#allocation15], %s118
      %s120 = sshll.u32 [#allocation14], 4
      %s121 = int_to_ptr.vmem [resolvable:$true] %s120
      %126 = dma.hbm_to_vmem [thread:$0]  %s8, 512, %s121, [#allocation15], 64, 64, 4
    $region37: #{tpu_custom_call.1} parent=1 // pred_fallthru
      _
    // Predicated region
    $region38: #{tpu_custom_call.1} parent=1 // pred_check
      _
    $region39: #{tpu_custom_call.1} parent=1 // pred_check_branch
      %128 = sbr.rel (0) target = $region41
    $region40: #{tpu_custom_call.1} parent=1 // pred_region
      %s130 = ssub.s32 16, 16
      %131 = vsyncadd [#allocation15], %s130
      %s133 = sshll.u32 [#allocation16], 4
      %s134 = int_to_ptr.vmem [resolvable:$true] %s133
      %136 = dma.hbm_to_vmem [thread:$0]  %s9, 16, %s134, [#allocation15]
    $region41: #{tpu_custom_call.1} parent=1 // pred_fallthru
      _
    // Predicated region
    $region42: #{tpu_custom_call.1} parent=1 // pred_check
      _
    $region43: #{tpu_custom_call.1} parent=1 // pred_check_branch
      %138 = sbr.rel (0) target = $region45
    $region44: #{tpu_custom_call.1} parent=1 // pred_region
      %s140 = ssub.s32 8192, 8192
      %141 = vsyncadd [#allocation18], %s140
      %s142 = sshll.u32 [#allocation17], 4
      %s143 = int_to_ptr.vmem [resolvable:$true] %s142
      %148 = dma.hbm_to_vmem [thread:$0]  %s10, 8192, %s143, [#allocation18], 512, 512, 32
    $region45: #{tpu_custom_call.1} parent=1 // pred_fallthru
      _
    // Predicated region
    $region46: #{tpu_custom_call.1} parent=1 // pred_check
      _
    $region47: #{tpu_custom_call.1} parent=1 // pred_check_branch
      %150 = sbr.rel (0) target = $region49
    $region48: #{tpu_custom_call.1} parent=1 // pred_region
      %s152 = ssub.s32 128, 128
      %153 = vsyncadd [#allocation18], %s152
      %s155 = sshll.u32 [#allocation19], 4
      %s156 = int_to_ptr.vmem [resolvable:$true] %s155
      %158 = dma.hbm_to_vmem [thread:$0]  %s11, 128, %s156, [#allocation18]
    $region49: #{tpu_custom_call.1} parent=1 // pred_fallthru
      _
    // Predicated region
    $region50: #{tpu_custom_call.1} parent=1 // pred_check
      _
    $region51: #{tpu_custom_call.1} parent=1 // pred_check_branch
      %160 = sbr.rel (0) target = $region53
    $region52: #{tpu_custom_call.1} parent=1 // pred_region
      _
    $region53: #{tpu_custom_call.1} parent=1 // pred_fallthru
      _
    // Predicated region
    $region54: #{tpu_custom_call.1} parent=1 // pred_check
      _
    $region55: #{tpu_custom_call.1} parent=1 // pred_check_branch
      %162 = sbr.rel (0) target = $region57
    $region56: #{tpu_custom_call.1} parent=1 // pred_region
      %s164 = ssub.s32 32768, 32768
      %165 = vsyncadd [#allocation21], %s164
      %s166 = sshll.u32 [#allocation20], 4
      %s167 = int_to_ptr.vmem [resolvable:$true] %s166
      %172 = dma.hbm_to_vmem [thread:$0]  %s13, 32768, %s167, [#allocation21], 256, 256, 16
    $region57: #{tpu_custom_call.1} parent=1 // pred_fallthru
      _
    // Predicated region
    $region58: #{tpu_custom_call.1} parent=1 // pred_check
      _
    $region59: #{tpu_custom_call.1} parent=1 // pred_check_branch
      %174 = sbr.rel (0) target = $region61
    $region60: #{tpu_custom_call.1} parent=1 // pred_region
      %s176 = ssub.s32 8192, 8192
      %177 = vsyncadd [#allocation21], %s176
      %s178 = sshll.u32 [#allocation22], 4
      %s179 = int_to_ptr.vmem [resolvable:$true] %s178
      %184 = dma.hbm_to_vmem [thread:$0]  %s14, 8192, %s179, [#allocation21], 128, 128, 8
    $region61: #{tpu_custom_call.1} parent=1 // pred_fallthru
      _
    // Predicated region
    $region62: #{tpu_custom_call.1} parent=1 // pred_check
      _
    $region63: #{tpu_custom_call.1} parent=1 // pred_check_branch
      %186 = sbr.rel (0) target = $region65
    $region64: #{tpu_custom_call.1} parent=1 // pred_region
      %s188 = ssub.s32 32, 32
      %189 = vsyncadd [#allocation24], %s188
      %s191 = sshll.u32 [#allocation23], 4
      %s192 = int_to_ptr.vmem [resolvable:$true] %s191
      %194 = dma.hbm_to_vmem [thread:$0]  %s15, 32, %s192, [#allocation24]
    $region65: #{tpu_custom_call.1} parent=1 // pred_fallthru
      _
    // Predicated region
    $region66: #{tpu_custom_call.1} parent=1 // pred_check
      _
    $region67: #{tpu_custom_call.1} parent=1 // pred_check_branch
      %196 = sbr.rel (0) target = $region69
    $region68: #{tpu_custom_call.1} parent=1 // pred_region
      %s198 = ssub.s32 2048, 2048
      %199 = vsyncadd [#allocation24], %s198
      %s200 = sshll.u32 [#allocation25], 4
      %s201 = int_to_ptr.vmem [resolvable:$true] %s200
      %206 = dma.hbm_to_vmem [thread:$0]  %s16, 2048, %s201, [#allocation24], 64, 64, 4
    $region69: #{tpu_custom_call.1} parent=1 // pred_fallthru
      _
    // Predicated region
    $region70: #{tpu_custom_call.1} parent=1 // pred_check
      _
    $region71: #{tpu_custom_call.1} parent=1 // pred_check_branch
      %208 = sbr.rel (0) target = $region73
    $region72: #{tpu_custom_call.1} parent=1 // pred_region
      _
    $region73: #{tpu_custom_call.1} parent=1 // pred_fallthru
      _
    // Predicated region
    $region74: #{tpu_custom_call.1} parent=1 // pred_check
      _
    $region75: #{tpu_custom_call.1} parent=1 // pred_check_branch
      %210 = sbr.rel (0) target = $region77
    $region76: #{tpu_custom_call.1} parent=1 // pred_region
      _
    $region77: #{tpu_custom_call.1} parent=1 // pred_fallthru
      _
    // Predicated region
    $region78: #{tpu_custom_call.1} parent=1 // pred_check
      _
    $region79: #{tpu_custom_call.1} parent=1 // pred_check_branch
      %212 = sbr.rel (0) target = $region81
    $region80: #{tpu_custom_call.1} parent=1 // pred_region
      _
    $region81: #{tpu_custom_call.1} parent=1 // pred_fallthru
      _
    // Predicated region
    $region82: #{tpu_custom_call.1} parent=1 // pred_check
      _
    $region83: #{tpu_custom_call.1} parent=1 // pred_check_branch
      %214 = sbr.rel (0) target = $region85
    $region84: #{tpu_custom_call.1} parent=1 // pred_region
      %s216 = ssub.s32 1024, 1024
      %217 = vsyncadd [#allocation27], %s216
      %s218 = sshll.u32 [#allocation26], 4
      %s219 = int_to_ptr.vmem [resolvable:$true] %s218
      %224 = dma.hbm_to_vmem [thread:$0]  %s20, 1024, %s219, [#allocation27], 64, 64, 4
    $region85: #{tpu_custom_call.1} parent=1 // pred_fallthru
      _
    // Predicated region
    $region86: #{tpu_custom_call.1} parent=1 // pred_check
      _
    $region87: #{tpu_custom_call.1} parent=1 // pred_check_branch
      %226 = sbr.rel (0) target = $region89
    $region88: #{tpu_custom_call.1} parent=1 // pred_region
      _
    $region89: #{tpu_custom_call.1} parent=1 // pred_fallthru
      _
    // Predicated region
    $region90: #{tpu_custom_call.1} parent=1 // pred_check
      _
    $region91: #{tpu_custom_call.1} parent=1 // pred_check_branch
      %228 = sbr.rel (0) target = $region93
    $region92: #{tpu_custom_call.1} parent=1 // pred_region
      %229 = dma.done [#allocation3], 128
    $region93: #{tpu_custom_call.1} parent=1 // pred_fallthru
      _
    // Predicated region
    $region94: #{tpu_custom_call.1} parent=1 // pred_check
      _
    $region95: #{tpu_custom_call.1} parent=1 // pred_check_branch
      %231 = sbr.rel (0) target = $region97
    $region96: #{tpu_custom_call.1} parent=1 // pred_region
      %232 = dma.done [#allocation6], 32
    $region97: #{tpu_custom_call.1} parent=1 // pred_fallthru
      _
    // Predicated region
    $region98: #{tpu_custom_call.1} parent=1 // pred_check
      _
    $region99: #{tpu_custom_call.1} parent=1 // pred_check_branch
      %234 = sbr.rel (0) target = $region101
    $region100: #{tpu_custom_call.1} parent=1 // pred_region
      %235 = dma.done [#allocation6], 16
    $region101: #{tpu_custom_call.1} parent=1 // pred_fallthru
      _
    // Predicated region
    $region102: #{tpu_custom_call.1} parent=1 // pred_check
      _
    $region103: #{tpu_custom_call.1} parent=1 // pred_check_branch
      %237 = sbr.rel (0) target = $region105
    $region104: #{tpu_custom_call.1} parent=1 // pred_region
      %238 = dma.done [#allocation9], 512
    $region105: #{tpu_custom_call.1} parent=1 // pred_fallthru
      _
    // Predicated region
    $region106: #{tpu_custom_call.1} parent=1 // pred_check
      _
    $region107: #{tpu_custom_call.1} parent=1 // pred_check_branch
      %240 = sbr.rel (0) target = $region109
    $region108: #{tpu_custom_call.1} parent=1 // pred_region
      %241 = dma.done [#allocation9], 16
    $region109: #{tpu_custom_call.1} parent=1 // pred_fallthru
      _
    // Predicated region
    $region110: #{tpu_custom_call.1} parent=1 // pred_check
      _
    $region111: #{tpu_custom_call.1} parent=1 // pred_check_branch
      %243 = sbr.rel (0) target = $region113
    $region112: #{tpu_custom_call.1} parent=1 // pred_region
      %244 = dma.done [#allocation12], 512
    $region113: #{tpu_custom_call.1} parent=1 // pred_fallthru
      _
    // Predicated region
    $region114: #{tpu_custom_call.1} parent=1 // pred_check
      _
    $region115: #{tpu_custom_call.1} parent=1 // pred_check_branch
      %246 = sbr.rel (0) target = $region117
    $region116: #{tpu_custom_call.1} parent=1 // pred_region
      %247 = dma.done [#allocation12], 16
    $region117: #{tpu_custom_call.1} parent=1 // pred_fallthru
      _
    // Predicated region
    $region118: #{tpu_custom_call.1} parent=1 // pred_check
      _
    $region119: #{tpu_custom_call.1} parent=1 // pred_check_branch
      %249 = sbr.rel (0) target = $region121
    $region120: #{tpu_custom_call.1} parent=1 // pred_region
      %250 = dma.done [#allocation15], 512
    $region121: #{tpu_custom_call.1} parent=1 // pred_fallthru
      _
    // Predicated region
    $region122: #{tpu_custom_call.1} parent=1 // pred_check
      _
    $region123: #{tpu_custom_call.1} parent=1 // pred_check_branch
      %252 = sbr.rel (0) target = $region125
    $region124: #{tpu_custom_call.1} parent=1 // pred_region
      %253 = dma.done [#allocation15], 16
    $region125: #{tpu_custom_call.1} parent=1 // pred_fallthru
      _
    // Predicated region
    $region126: #{tpu_custom_call.1} parent=1 // pred_check
      _
    $region127: #{tpu_custom_call.1} parent=1 // pred_check_branch
      %255 = sbr.rel (0) target = $region129
    $region128: #{tpu_custom_call.1} parent=1 // pred_region
      %256 = dma.done [#allocation18], 8192
    $region129: #{tpu_custom_call.1} parent=1 // pred_fallthru
      _
    // Predicated region
    $region130: #{tpu_custom_call.1} parent=1 // pred_check
      _
    $region131: #{tpu_custom_call.1} parent=1 // pred_check_branch
      %258 = sbr.rel (0) target = $region133
    $region132: #{tpu_custom_call.1} parent=1 // pred_region
      %259 = dma.done [#allocation18], 128
    $region133: #{tpu_custom_call.1} parent=1 // pred_fallthru
      _
    // Predicated region
    $region134: #{tpu_custom_call.1} parent=1 // pred_check
      _
    $region135: #{tpu_custom_call.1} parent=1 // pred_check_branch
      %261 = sbr.rel (0) target = $region137
    $region136: #{tpu_custom_call.1} parent=1 // pred_region
      %262 = dma.done [#allocation21], 32768
    $region137: #{tpu_custom_call.1} parent=1 // pred_fallthru
      _
    // Predicated region
    $region138: #{tpu_custom_call.1} parent=1 // pred_check
      _
    $region139: #{tpu_custom_call.1} parent=1 // pred_check_branch
      %264 = sbr.rel (0) target = $region141
    $region140: #{tpu_custom_call.1} parent=1 // pred_region
      %265 = dma.done [#allocation21], 8192
    $region141: #{tpu_custom_call.1} parent=1 // pred_fallthru
      _
    // Predicated region
    $region142: #{tpu_custom_call.1} parent=1 // pred_check
      _
    $region143: #{tpu_custom_call.1} parent=1 // pred_check_branch
      %267 = sbr.rel (0) target = $region145
    $region144: #{tpu_custom_call.1} parent=1 // pred_region
      %268 = dma.done [#allocation24], 32
    $region145: #{tpu_custom_call.1} parent=1 // pred_fallthru
      _
    // Predicated region
    $region146: #{tpu_custom_call.1} parent=1 // pred_check
      _
    $region147: #{tpu_custom_call.1} parent=1 // pred_check_branch
      %270 = sbr.rel (0) target = $region149
    $region148: #{tpu_custom_call.1} parent=1 // pred_region
      %271 = dma.done [#allocation24], 2048
    $region149: #{tpu_custom_call.1} parent=1 // pred_fallthru
      _
    // Predicated region
    $region150: #{tpu_custom_call.1} parent=1 // pred_check
      _
    $region151: #{tpu_custom_call.1} parent=1 // pred_check_branch
      %273 = sbr.rel (0) target = $region153
    $region152: #{tpu_custom_call.1} parent=1 // pred_region
      %274 = dma.done [#allocation27], 1024
    $region153: #{tpu_custom_call.1} parent=1 // pred_fallthru
      _
    %v276 = vld [vmem:[%s0] sm:$0xf]
    %v277 = vld [vmem:[%s0 + $0x4] sm:$0xf]
    %v278 = vld [vmem:[%s0 + $0x8] sm:$0xf]
    %v279 = vld [vmem:[%s0 + $0xc] sm:$0xf]
    %v280 = vld [vmem:[%s0 + $0x10] sm:$0xf]
    %v281 = vld [vmem:[%s0 + $0x14] sm:$0xf]
    %v282 = vld [vmem:[%s0 + $0x18] sm:$0xf]
    %v283 = vld [vmem:[%s0 + $0x1c] sm:$0xf]
    %v284 = vld [vmem:[%s0 + $0x20] sm:$0xf]
    %v285 = vld [vmem:[%s0 + $0x24] sm:$0xf]
    %v286 = vld [vmem:[%s0 + $0x28] sm:$0xf]
    %v287 = vld [vmem:[%s0 + $0x2c] sm:$0xf]
    %v288 = vld [vmem:[%s0 + $0x30] sm:$0xf]
    %v289 = vld [vmem:[%s0 + $0x34] sm:$0xf]
    %v290 = vld [vmem:[%s0 + $0x38] sm:$0xf]
    %v291 = vld [vmem:[%s0 + $0x3c] sm:$0xf]
    %v292 = vld [vmem:[%s0 + $0x40] sm:$0xf]
    %v293 = vld [vmem:[%s0 + $0x44] sm:$0xf]
    %v294 = vld [vmem:[%s0 + $0x48] sm:$0xf]
    %v295 = vld [vmem:[%s0 + $0x4c] sm:$0xf]
    %v296 = vld [vmem:[%s0 + $0x50] sm:$0xf]
    %v297 = vld [vmem:[%s0 + $0x54] sm:$0xf]
    %v298 = vld [vmem:[%s0 + $0x58] sm:$0xf]
    %v299 = vld [vmem:[%s0 + $0x5c] sm:$0xf]
    %v300 = vld [vmem:[%s0 + $0x60] sm:$0xf]
    %v301 = vld [vmem:[%s0 + $0x64] sm:$0xf]
    %v302 = vld [vmem:[%s0 + $0x68] sm:$0xf]
    %v303 = vld [vmem:[%s0 + $0x6c] sm:$0xf]
    %v304 = vld [vmem:[%s0 + $0x70] sm:$0xf]
    %v305 = vld [vmem:[%s0 + $0x74] sm:$0xf]
    %v306 = vld [vmem:[%s0 + $0x78] sm:$0xf]
    %v307 = vld [vmem:[%s0 + $0x7c] sm:$0xf]
    %v308 = vld [vmem:[#allocation5] sm:$0x3]
    %v309 = vld [vmem:[#allocation7] sm:$0x1]
    %v311 = vlaneseq
    %v312 = vshrl.u32 %v311, 7
    %v313 = vsub.s32 0, %v312
    %v314 = vrot.slane %v309, %v313
    %v348 = vunpack.c.l.b16 %v276
    %v349 = vunpack.c.l.b16 %v277
    %v350 = vunpack.c.l.b16 %v278
    %v351 = vunpack.c.l.b16 %v279
    %v352 = vunpack.c.l.b16 %v280
    %v353 = vunpack.c.l.b16 %v281
    %v354 = vunpack.c.l.b16 %v282
    %v355 = vunpack.c.l.b16 %v283
    %v356 = vunpack.c.l.b16 %v284
    %v357 = vunpack.c.l.b16 %v285
    %v358 = vunpack.c.l.b16 %v286
    %v359 = vunpack.c.l.b16 %v287
    %v360 = vunpack.c.l.b16 %v288
    %v361 = vunpack.c.l.b16 %v289
    %v362 = vunpack.c.l.b16 %v290
    %v363 = vunpack.c.l.b16 %v291
    %v364 = vunpack.c.l.b16 %v292
    %v365 = vunpack.c.l.b16 %v293
    %v366 = vunpack.c.l.b16 %v294
    %v367 = vunpack.c.l.b16 %v295
    %v368 = vunpack.c.l.b16 %v296
    %v369 = vunpack.c.l.b16 %v297
    %v370 = vunpack.c.l.b16 %v298
    %v371 = vunpack.c.l.b16 %v299
    %v372 = vunpack.c.l.b16 %v300
    %v373 = vunpack.c.l.b16 %v301
    %v374 = vunpack.c.l.b16 %v302
    %v375 = vunpack.c.l.b16 %v303
    %v376 = vunpack.c.l.b16 %v304
    %v377 = vunpack.c.l.b16 %v305
    %v378 = vunpack.c.l.b16 %v306
    %v379 = vunpack.c.l.b16 %v307
    %v380 = vpack.c.b16 %v349, %v348
    %v381 = vpack.c.b16 %v351, %v350
    %v382 = vpack.c.b16 %v353, %v352
    %v383 = vpack.c.b16 %v355, %v354
    %v384 = vpack.c.b16 %v357, %v356
    %v385 = vpack.c.b16 %v359, %v358
    %v386 = vpack.c.b16 %v361, %v360
    %v387 = vpack.c.b16 %v363, %v362
    %v388 = vpack.c.b16 %v365, %v364
    %v389 = vpack.c.b16 %v367, %v366
    %v390 = vpack.c.b16 %v369, %v368
    %v391 = vpack.c.b16 %v371, %v370
    %v392 = vpack.c.b16 %v373, %v372
    %v393 = vpack.c.b16 %v375, %v374
    %v394 = vpack.c.b16 %v377, %v376
    %v395 = vpack.c.b16 %v379, %v378
    %vm396 = vcmask 31744
    %v398 = vsel %vm396, %v380, 0
    %v401 = vsel %vm396, %v381, 0
    %v404 = vsel %vm396, %v382, 0
    %v407 = vsel %vm396, %v383, 0
    %v410 = vsel %vm396, %v384, 0
    %v413 = vsel %vm396, %v385, 0
    %v416 = vsel %vm396, %v386, 0
    %v419 = vsel %vm396, %v387, 0
    %v422 = vsel %vm396, %v388, 0
    %v425 = vsel %vm396, %v389, 0
    %v428 = vsel %vm396, %v390, 0
    %v431 = vsel %vm396, %v391, 0
    %v434 = vsel %vm396, %v392, 0
    %v437 = vsel %vm396, %v393, 0
    %v440 = vsel %vm396, %v394, 0
    %v443 = vsel %vm396, %v395, 0
    %vm445 = vcmask 1041408
    %v447 = vsel %vm445, %v308, 0
    %449 = vmatprep.subr.bf16.mxu0 0
    %450 = vmatpush1.bf16.msra.mxu0 %v447
    %451 = vmatprep.subr.bf16.mxu0 0
    %452 = vmatpush1.bf16.msra.mxu0 0
    %453 = vmatprep.subr.bf16.mxu0 0
    %454 = vmatpush1.bf16.msra.mxu0 0
    %455 = vmatprep.subr.bf16.mxu0 0
    %456 = vmatpush1.bf16.msra.mxu0 0
    %457 = vmatprep.subr.bf16.mxu0 0
    %458 = vmatpush1.bf16.msra.mxu0 0
    %459 = vmatprep.subr.bf16.mxu0 0
    %460 = vmatpush1.bf16.msra.mxu0 0
    %461 = vmatprep.subr.bf16.mxu0 0
    %462 = vmatpush1.bf16.msra.mxu0 0
    %463 = vmatprep.subr.bf16.mxu0 0
    %464 = vmatpush1.bf16.msra.mxu0 0
    %465 = vmatprep.subr.bf16.mxu0 0
    %466 = vmatpush1.bf16.msra.mxu0 0
    %467 = vmatprep.subr.bf16.mxu0 0
    %468 = vmatpush1.bf16.msra.mxu0 0
    %469 = vmatprep.subr.bf16.mxu0 0
    %470 = vmatpush1.bf16.msra.mxu0 0
    %471 = vmatprep.subr.bf16.mxu0 0
    %472 = vmatpush1.bf16.msra.mxu0 0
    %473 = vmatprep.subr.bf16.mxu0 0
    %474 = vmatpush1.bf16.msra.mxu0 0
    %475 = vmatprep.subr.bf16.mxu0 0
    %476 = vmatpush1.bf16.msra.mxu0 0
    %477 = vmatprep.subr.bf16.mxu0 0
    %478 = vmatpush1.bf16.msra.mxu0 0
    %479 = vmatprep.subr.bf16.mxu0 0
    %480 = vmatpush1.bf16.msra.mxu0 0
    %481 = vmatprep.mubr.bf16.mxu0 0
    %482 = vmatmul.mubr.bf16.gmra.mrb[0].mxu0 %v398
    %v483 = vpop.f32.mrb[0].mxu0
    %v484 = vadd.f32 %v314, %v483
    %v485 = vpop.f32.mrb[0].mxu0
    %v486 = vpop.f32.mrb[0].mxu0
    %v487 = vadd.f32 %v314, %v486
    %v488 = vpop.f32.mrb[0].mxu0
    %489 = vmatprep.mubr.bf16.mxu0 0
    %490 = vmatmul.mubr.bf16.gmra.mrb[0].mxu0 %v401
    %v491 = vpop.f32.mrb[0].mxu0
    %v492 = vadd.f32 %v314, %v491
    %v493 = vpop.f32.mrb[0].mxu0
    %v494 = vpop.f32.mrb[0].mxu0
    %v495 = vadd.f32 %v314, %v494
    %v496 = vpop.f32.mrb[0].mxu0
    %497 = vmatprep.mubr.bf16.mxu0 0
    %498 = vmatmul.mubr.bf16.gmra.mrb[0].mxu0 %v404
    %v499 = vpop.f32.mrb[0].mxu0
    %v500 = vadd.f32 %v314, %v499
    %v501 = vpop.f32.mrb[0].mxu0
    %v502 = vpop.f32.mrb[0].mxu0
    %v503 = vadd.f32 %v314, %v502
    %v504 = vpop.f32.mrb[0].mxu0
    %505 = vmatprep.mubr.bf16.mxu0 0
    %506 = vmatmul.mubr.bf16.gmra.mrb[0].mxu0 %v407
    %v507 = vpop.f32.mrb[0].mxu0
    %v508 = vadd.f32 %v314, %v507
    %v509 = vpop.f32.mrb[0].mxu0
    %v510 = vpop.f32.mrb[0].mxu0
    %v511 = vadd.f32 %v314, %v510
    %v512 = vpop.f32.mrb[0].mxu0
    %513 = vmatprep.mubr.bf16.mxu0 0
    %514 = vmatmul.mubr.bf16.gmra.mrb[0].mxu0 %v410
    %v515 = vpop.f32.mrb[0].mxu0
    %v516 = vadd.f32 %v314, %v515
    %v517 = vpop.f32.mrb[0].mxu0
    %v518 = vpop.f32.mrb[0].mxu0
    %v519 = vadd.f32 %v314, %v518
    %v520 = vpop.f32.mrb[0].mxu0
    %521 = vmatprep.mubr.bf16.mxu0 0
    %522 = vmatmul.mubr.bf16.gmra.mrb[0].mxu0 %v413
    %v523 = vpop.f32.mrb[0].mxu0
    %v524 = vadd.f32 %v314, %v523
    %v525 = vpop.f32.mrb[0].mxu0
    %v526 = vpop.f32.mrb[0].mxu0
    %v527 = vadd.f32 %v314, %v526
    %v528 = vpop.f32.mrb[0].mxu0
    %529 = vmatprep.mubr.bf16.mxu0 0
    %530 = vmatmul.mubr.bf16.gmra.mrb[0].mxu0 %v416
    %v531 = vpop.f32.mrb[0].mxu0
    %v532 = vadd.f32 %v314, %v531
    %v533 = vpop.f32.mrb[0].mxu0
    %v534 = vpop.f32.mrb[0].mxu0
    %v535 = vadd.f32 %v314, %v534
    %v536 = vpop.f32.mrb[0].mxu0
    %537 = vmatprep.mubr.bf16.mxu0 0
    %538 = vmatmul.mubr.bf16.gmra.mrb[0].mxu0 %v419
    %v539 = vpop.f32.mrb[0].mxu0
    %v540 = vadd.f32 %v314, %v539
    %v541 = vpop.f32.mrb[0].mxu0
    %v542 = vpop.f32.mrb[0].mxu0
    %v543 = vadd.f32 %v314, %v542
    %v544 = vpop.f32.mrb[0].mxu0
    %545 = vmatprep.mubr.bf16.mxu0 0
    %546 = vmatmul.mubr.bf16.gmra.mrb[0].mxu0 %v422
    %v547 = vpop.f32.mrb[0].mxu0
    %v548 = vadd.f32 %v314, %v547
    %v549 = vpop.f32.mrb[0].mxu0
    %v550 = vpop.f32.mrb[0].mxu0
    %v551 = vadd.f32 %v314, %v550
    %v552 = vpop.f32.mrb[0].mxu0
    %553 = vmatprep.mubr.bf16.mxu0 0
    %554 = vmatmul.mubr.bf16.gmra.mrb[0].mxu0 %v425
    %v555 = vpop.f32.mrb[0].mxu0
    %v556 = vadd.f32 %v314, %v555
    %v557 = vpop.f32.mrb[0].mxu0
    %v558 = vpop.f32.mrb[0].mxu0
    %v559 = vadd.f32 %v314, %v558
    %v560 = vpop.f32.mrb[0].mxu0
    %561 = vmatprep.mubr.bf16.mxu0 0
    %562 = vmatmul.mubr.bf16.gmra.mrb[0].mxu0 %v428
    %v563 = vpop.f32.mrb[0].mxu0
    %v564 = vadd.f32 %v314, %v563
    %v565 = vpop.f32.mrb[0].mxu0
    %v566 = vpop.f32.mrb[0].mxu0
    %v567 = vadd.f32 %v314, %v566
    %v568 = vpop.f32.mrb[0].mxu0
    %569 = vmatprep.mubr.bf16.mxu0 0
    %570 = vmatmul.mubr.bf16.gmra.mrb[0].mxu0 %v431
    %v571 = vpop.f32.mrb[0].mxu0
    %v572 = vadd.f32 %v314, %v571
    %v573 = vpop.f32.mrb[0].mxu0
    %v574 = vpop.f32.mrb[0].mxu0
    %v575 = vadd.f32 %v314, %v574
    %v576 = vpop.f32.mrb[0].mxu0
    %577 = vmatprep.mubr.bf16.mxu0 0
    %578 = vmatmul.mubr.bf16.gmra.mrb[0].mxu0 %v434
    %v579 = vpop.f32.mrb[0].mxu0
    %v580 = vadd.f32 %v314, %v579
    %v581 = vpop.f32.mrb[0].mxu0
    %v582 = vpop.f32.mrb[0].mxu0
    %v583 = vadd.f32 %v314, %v582
    %v584 = vpop.f32.mrb[0].mxu0
    %585 = vmatprep.mubr.bf16.mxu0 0
    %586 = vmatmul.mubr.bf16.gmra.mrb[0].mxu0 %v437
    %v587 = vpop.f32.mrb[0].mxu0
    %v588 = vadd.f32 %v314, %v587
    %v589 = vpop.f32.mrb[0].mxu0
    %v590 = vpop.f32.mrb[0].mxu0
    %v591 = vadd.f32 %v314, %v590
    %v592 = vpop.f32.mrb[0].mxu0
    %593 = vmatprep.mubr.bf16.mxu0 0
    %594 = vmatmul.mubr.bf16.gmra.mrb[0].mxu0 %v440
    %v595 = vpop.f32.mrb[0].mxu0
    %v596 = vadd.f32 %v314, %v595
    %v597 = vpop.f32.mrb[0].mxu0
    %v598 = vpop.f32.mrb[0].mxu0
    %v599 = vadd.f32 %v314, %v598
    %v600 = vpop.f32.mrb[0].mxu0
    %601 = vmatprep.mubr.bf16.mxu0 0
    %602 = vmatmul.mubr.bf16.gmra.mrb[0].mxu0 %v443
    %v603 = vpop.f32.mrb[0].mxu0
    %v604 = vadd.f32 %v314, %v603
    %v605 = vpop.f32.mrb[0].mxu0
    %v606 = vpop.f32.mrb[0].mxu0
    %v607 = vadd.f32 %v314, %v606
    %v608 = vpop.f32.mrb[0].mxu0
    %609 = vdwg.mxu0
    %v610 = vmax.f32 %v484, 0.0
    %v611 = vmax.f32 %v487, 0.0
    %v612 = vmax.f32 %v492, 0.0
    %v613 = vmax.f32 %v495, 0.0
    %v614 = vmax.f32 %v500, 0.0
    %v615 = vmax.f32 %v503, 0.0
    %v616 = vmax.f32 %v508, 0.0
    %v617 = vmax.f32 %v511, 0.0
    %v618 = vmax.f32 %v516, 0.0
    %v619 = vmax.f32 %v519, 0.0
    %v620 = vmax.f32 %v524, 0.0
    %v621 = vmax.f32 %v527, 0.0
    %v622 = vmax.f32 %v532, 0.0
    %v623 = vmax.f32 %v535, 0.0
    %v624 = vmax.f32 %v540, 0.0
    %v625 = vmax.f32 %v543, 0.0
    %v626 = vmax.f32 %v548, 0.0
    %v627 = vmax.f32 %v551, 0.0
    %v628 = vmax.f32 %v556, 0.0
    %v629 = vmax.f32 %v559, 0.0
    %v630 = vmax.f32 %v564, 0.0
    %v631 = vmax.f32 %v567, 0.0
    %v632 = vmax.f32 %v572, 0.0
    %v633 = vmax.f32 %v575, 0.0
    %v634 = vmax.f32 %v580, 0.0
    %v635 = vmax.f32 %v583, 0.0
    %v636 = vmax.f32 %v588, 0.0
    %v637 = vmax.f32 %v591, 0.0
    %v638 = vmax.f32 %v596, 0.0
    %v639 = vmax.f32 %v599, 0.0
    %v640 = vmax.f32 %v604, 0.0
    %v641 = vmax.f32 %v607, 0.0
    %v642 = vpack.c.bf16 %v611, %v610
    %v643 = vpack.c.bf16 %v613, %v612
    %v644 = vpack.c.bf16 %v615, %v614
    %v645 = vpack.c.bf16 %v617, %v616
    %v646 = vpack.c.bf16 %v619, %v618
    %v647 = vpack.c.bf16 %v621, %v620
    %v648 = vpack.c.bf16 %v623, %v622
    %v649 = vpack.c.bf16 %v625, %v624
    %v650 = vpack.c.bf16 %v627, %v626
    %v651 = vpack.c.bf16 %v629, %v628
    %v652 = vpack.c.bf16 %v631, %v630
    %v653 = vpack.c.bf16 %v633, %v632
    %v654 = vpack.c.bf16 %v635, %v634
    %v655 = vpack.c.bf16 %v637, %v636
    %v656 = vpack.c.bf16 %v639, %v638
    %v657 = vpack.c.bf16 %v641, %v640
    %v658 = vld [vmem:[#allocation8] sm:$0xf]
    %v659 = vld [vmem:[#allocation8 + $0x4] sm:$0xf]
    %v660 = vld [vmem:[#allocation8 + $0x8] sm:$0xf]
    %v661 = vld [vmem:[#allocation8 + $0xc] sm:$0xf]
    %v662 = vld [vmem:[#allocation8 + $0x10] sm:$0xf]
    %v663 = vld [vmem:[#allocation8 + $0x14] sm:$0xf]
    %v664 = vld [vmem:[#allocation8 + $0x18] sm:$0xf]
    %v665 = vld [vmem:[#allocation8 + $0x1c] sm:$0xf]
    %v666 = vld [vmem:[#allocation10] sm:$0x1]
    %v668 = vlaneseq
    %v669 = vshrl.u32 %v668, 7
    %v670 = vsub.s32 0, %v669
    %v671 = vrot.slane %v666, %v670
    %v681 = vunpack.c.l.b16 %v658
    %v682 = vunpack.c.l.b16 %v659
    %v683 = vunpack.c.l.b16 %v660
    %v684 = vunpack.c.l.b16 %v661
    %v685 = vunpack.c.l.b16 %v662
    %v686 = vunpack.c.l.b16 %v663
    %v687 = vunpack.c.l.b16 %v664
    %v688 = vunpack.c.l.b16 %v665
    %v689 = vpack.c.b16 %v682, %v681
    %v690 = vpack.c.b16 %v684, %v683
    %v691 = vpack.c.b16 %v686, %v685
    %v692 = vpack.c.b16 %v688, %v687
    %vm697 = vcmask 523264
    %v699 = vsel %vm697, %v642, 0
    %v702 = vsel %vm697, %v643, 0
    %v705 = vsel %vm697, %v644, 0
    %v708 = vsel %vm697, %v645, 0
    %v711 = vsel %vm697, %v646, 0
    %v714 = vsel %vm697, %v647, 0
    %v717 = vsel %vm697, %v648, 0
    %v720 = vsel %vm697, %v649, 0
    %v723 = vsel %vm697, %v650, 0
    %v726 = vsel %vm697, %v651, 0
    %v729 = vsel %vm697, %v652, 0
    %v732 = vsel %vm697, %v653, 0
    %v735 = vsel %vm697, %v654, 0
    %v738 = vsel %vm697, %v655, 0
    %v741 = vsel %vm697, %v656, 0
    %v744 = vsel %vm697, %v657, 0
    %746 = vmatprep.subr.bf16.mxu0 0
    %747 = vmatpush1.bf16.msra.mxu0 %v689
    %748 = vmatprep.subr.bf16.mxu0 0
    %749 = vmatpush1.bf16.msra.mxu0 %v690
    %750 = vmatprep.subr.bf16.mxu0 0
    %751 = vmatpush1.bf16.msra.mxu0 %v691
    %752 = vmatprep.subr.bf16.mxu0 0
    %753 = vmatpush1.bf16.msra.mxu0 %v692
    %754 = vmatprep.subr.bf16.mxu0 0
    %755 = vmatpush1.bf16.msra.mxu0 0
    %756 = vmatprep.subr.bf16.mxu0 0
    %757 = vmatpush1.bf16.msra.mxu0 0
    %758 = vmatprep.subr.bf16.mxu0 0
    %759 = vmatpush1.bf16.msra.mxu0 0
    %760 = vmatprep.subr.bf16.mxu0 0
    %761 = vmatpush1.bf16.msra.mxu0 0
    %762 = vmatprep.subr.bf16.mxu0 0
    %763 = vmatpush1.bf16.msra.mxu0 0
    %764 = vmatprep.subr.bf16.mxu0 0
    %765 = vmatpush1.bf16.msra.mxu0 0
    %766 = vmatprep.subr.bf16.mxu0 0
    %767 = vmatpush1.bf16.msra.mxu0 0
    %768 = vmatprep.subr.bf16.mxu0 0
    %769 = vmatpush1.bf16.msra.mxu0 0
    %770 = vmatprep.subr.bf16.mxu0 0
    %771 = vmatpush1.bf16.msra.mxu0 0
    %772 = vmatprep.subr.bf16.mxu0 0
    %773 = vmatpush1.bf16.msra.mxu0 0
    %774 = vmatprep.subr.bf16.mxu0 0
    %775 = vmatpush1.bf16.msra.mxu0 0
    %776 = vmatprep.subr.bf16.mxu0 0
    %777 = vmatpush1.bf16.msra.mxu0 0
    %778 = vmatprep.mubr.bf16.mxu0 0
    %779 = vmatmul.mubr.bf16.gmra.mrb[0].mxu0 %v699
    %v780 = vpop.f32.mrb[0].mxu0
    %v781 = vadd.f32 %v671, %v780
    %v782 = vpop.f32.mrb[0].mxu0
    %v783 = vpop.f32.mrb[0].mxu0
    %v784 = vadd.f32 %v671, %v783
    %v785 = vpop.f32.mrb[0].mxu0
    %786 = vmatprep.mubr.bf16.mxu0 0
    %787 = vmatmul.mubr.bf16.gmra.mrb[0].mxu0 %v702
    %v788 = vpop.f32.mrb[0].mxu0
    %v789 = vadd.f32 %v671, %v788
    %v790 = vpop.f32.mrb[0].mxu0
    %v791 = vpop.f32.mrb[0].mxu0
    %v792 = vadd.f32 %v671, %v791
    %v793 = vpop.f32.mrb[0].mxu0
    %794 = vmatprep.mubr.bf16.mxu0 0
    %795 = vmatmul.mubr.bf16.gmra.mrb[0].mxu0 %v705
    %v796 = vpop.f32.mrb[0].mxu0
    %v797 = vadd.f32 %v671, %v796
    %v798 = vpop.f32.mrb[0].mxu0
    %v799 = vpop.f32.mrb[0].mxu0
    %v800 = vadd.f32 %v671, %v799
    %v801 = vpop.f32.mrb[0].mxu0
    %802 = vmatprep.mubr.bf16.mxu0 0
    %803 = vmatmul.mubr.bf16.gmra.mrb[0].mxu0 %v708
    %v804 = vpop.f32.mrb[0].mxu0
    %v805 = vadd.f32 %v671, %v804
    %v806 = vpop.f32.mrb[0].mxu0
    %v807 = vpop.f32.mrb[0].mxu0
    %v808 = vadd.f32 %v671, %v807
    %v809 = vpop.f32.mrb[0].mxu0
    %810 = vmatprep.mubr.bf16.mxu0 0
    %811 = vmatmul.mubr.bf16.gmra.mrb[0].mxu0 %v711
    %v812 = vpop.f32.mrb[0].mxu0
    %v813 = vadd.f32 %v671, %v812
    %v814 = vpop.f32.mrb[0].mxu0
    %v815 = vpop.f32.mrb[0].mxu0
    %v816 = vadd.f32 %v671, %v815
    %v817 = vpop.f32.mrb[0].mxu0
    %818 = vmatprep.mubr.bf16.mxu0 0
    %819 = vmatmul.mubr.bf16.gmra.mrb[0].mxu0 %v714
    %v820 = vpop.f32.mrb[0].mxu0
    %v821 = vadd.f32 %v671, %v820
    %v822 = vpop.f32.mrb[0].mxu0
    %v823 = vpop.f32.mrb[0].mxu0
    %v824 = vadd.f32 %v671, %v823
    %v825 = vpop.f32.mrb[0].mxu0
    %826 = vmatprep.mubr.bf16.mxu0 0
    %827 = vmatmul.mubr.bf16.gmra.mrb[0].mxu0 %v717
    %v828 = vpop.f32.mrb[0].mxu0
    %v829 = vadd.f32 %v671, %v828
    %v830 = vpop.f32.mrb[0].mxu0
    %v831 = vpop.f32.mrb[0].mxu0
    %v832 = vadd.f32 %v671, %v831
    %v833 = vpop.f32.mrb[0].mxu0
    %834 = vmatprep.mubr.bf16.mxu0 0
    %835 = vmatmul.mubr.bf16.gmra.mrb[0].mxu0 %v720
    %v836 = vpop.f32.mrb[0].mxu0
    %v837 = vadd.f32 %v671, %v836
    %v838 = vpop.f32.mrb[0].mxu0
    %v839 = vpop.f32.mrb[0].mxu0
    %v840 = vadd.f32 %v671, %v839
    %v841 = vpop.f32.mrb[0].mxu0
    %842 = vmatprep.mubr.bf16.mxu0 0
    %843 = vmatmul.mubr.bf16.gmra.mrb[0].mxu0 %v723
    %v844 = vpop.f32.mrb[0].mxu0
    %v845 = vadd.f32 %v671, %v844
    %v846 = vpop.f32.mrb[0].mxu0
    %v847 = vpop.f32.mrb[0].mxu0
    %v848 = vadd.f32 %v671, %v847
    %v849 = vpop.f32.mrb[0].mxu0
    %850 = vmatprep.mubr.bf16.mxu0 0
    %851 = vmatmul.mubr.bf16.gmra.mrb[0].mxu0 %v726
    %v852 = vpop.f32.mrb[0].mxu0
    %v853 = vadd.f32 %v671, %v852
    %v854 = vpop.f32.mrb[0].mxu0
    %v855 = vpop.f32.mrb[0].mxu0
    %v856 = vadd.f32 %v671, %v855
    %v857 = vpop.f32.mrb[0].mxu0
    %858 = vmatprep.mubr.bf16.mxu0 0
    %859 = vmatmul.mubr.bf16.gmra.mrb[0].mxu0 %v729
    %v860 = vpop.f32.mrb[0].mxu0
    %v861 = vadd.f32 %v671, %v860
    %v862 = vpop.f32.mrb[0].mxu0
    %v863 = vpop.f32.mrb[0].mxu0
    %v864 = vadd.f32 %v671, %v863
    %v865 = vpop.f32.mrb[0].mxu0
    %866 = vmatprep.mubr.bf16.mxu0 0
    %867 = vmatmul.mubr.bf16.gmra.mrb[0].mxu0 %v732
    %v868 = vpop.f32.mrb[0].mxu0
    %v869 = vadd.f32 %v671, %v868
    %v870 = vpop.f32.mrb[0].mxu0
    %v871 = vpop.f32.mrb[0].mxu0
    %v872 = vadd.f32 %v671, %v871
    %v873 = vpop.f32.mrb[0].mxu0
    %874 = vmatprep.mubr.bf16.mxu0 0
    %875 = vmatmul.mubr.bf16.gmra.mrb[0].mxu0 %v735
    %v876 = vpop.f32.mrb[0].mxu0
    %v877 = vadd.f32 %v671, %v876
    %v878 = vpop.f32.mrb[0].mxu0
    %v879 = vpop.f32.mrb[0].mxu0
    %v880 = vadd.f32 %v671, %v879
    %v881 = vpop.f32.mrb[0].mxu0
    %882 = vmatprep.mubr.bf16.mxu0 0
    %883 = vmatmul.mubr.bf16.gmra.mrb[0].mxu0 %v738
    %v884 = vpop.f32.mrb[0].mxu0
    %v885 = vadd.f32 %v671, %v884
    %v886 = vpop.f32.mrb[0].mxu0
    %v887 = vpop.f32.mrb[0].mxu0
    %v888 = vadd.f32 %v671, %v887
    %v889 = vpop.f32.mrb[0].mxu0
    %890 = vmatprep.mubr.bf16.mxu0 0
    %891 = vmatmul.mubr.bf16.gmra.mrb[0].mxu0 %v741
    %v892 = vpop.f32.mrb[0].mxu0
    %v893 = vadd.f32 %v671, %v892
    %v894 = vpop.f32.mrb[0].mxu0
    %v895 = vpop.f32.mrb[0].mxu0
    %v896 = vadd.f32 %v671, %v895
    %v897 = vpop.f32.mrb[0].mxu0
    %898 = vmatprep.mubr.bf16.mxu0 0
    %899 = vmatmul.mubr.bf16.gmra.mrb[0].mxu0 %v744
    %v900 = vpop.f32.mrb[0].mxu0
    %v901 = vadd.f32 %v671, %v900
    %v902 = vpop.f32.mrb[0].mxu0
    %v903 = vpop.f32.mrb[0].mxu0
    %v904 = vadd.f32 %v671, %v903
    %v905 = vpop.f32.mrb[0].mxu0
    %906 = vdwg.mxu0
    %v907 = vmax.f32 %v781, 0.0
    %v908 = vmax.f32 %v784, 0.0
    %v909 = vmax.f32 %v789, 0.0
    %v910 = vmax.f32 %v792, 0.0
    %v911 = vmax.f32 %v797, 0.0
    %v912 = vmax.f32 %v800, 0.0
    %v913 = vmax.f32 %v805, 0.0
    %v914 = vmax.f32 %v808, 0.0
    %v915 = vmax.f32 %v813, 0.0
    %v916 = vmax.f32 %v816, 0.0
    %v917 = vmax.f32 %v821, 0.0
    %v918 = vmax.f32 %v824, 0.0
    %v919 = vmax.f32 %v829, 0.0
    %v920 = vmax.f32 %v832, 0.0
    %v921 = vmax.f32 %v837, 0.0
    %v922 = vmax.f32 %v840, 0.0
    %v923 = vmax.f32 %v845, 0.0
    %v924 = vmax.f32 %v848, 0.0
    %v925 = vmax.f32 %v853, 0.0
    %v926 = vmax.f32 %v856, 0.0
    %v927 = vmax.f32 %v861, 0.0
    %v928 = vmax.f32 %v864, 0.0
    %v929 = vmax.f32 %v869, 0.0
    %v930 = vmax.f32 %v872, 0.0
    %v931 = vmax.f32 %v877, 0.0
    %v932 = vmax.f32 %v880, 0.0
    %v933 = vmax.f32 %v885, 0.0
    %v934 = vmax.f32 %v888, 0.0
    %v935 = vmax.f32 %v893, 0.0
    %v936 = vmax.f32 %v896, 0.0
    %v937 = vmax.f32 %v901, 0.0
    %v938 = vmax.f32 %v904, 0.0
    %v939 = vpack.c.bf16 %v908, %v907
    %v940 = vpack.c.bf16 %v910, %v909
    %v941 = vpack.c.bf16 %v912, %v911
    %v942 = vpack.c.bf16 %v914, %v913
    %v943 = vpack.c.bf16 %v916, %v915
    %v944 = vpack.c.bf16 %v918, %v917
    %v945 = vpack.c.bf16 %v920, %v919
    %v946 = vpack.c.bf16 %v922, %v921
    %v947 = vpack.c.bf16 %v924, %v923
    %v948 = vpack.c.bf16 %v926, %v925
    %v949 = vpack.c.bf16 %v928, %v927
    %v950 = vpack.c.bf16 %v930, %v929
    %v951 = vpack.c.bf16 %v932, %v931
    %v952 = vpack.c.bf16 %v934, %v933
    %v953 = vpack.c.bf16 %v936, %v935
    %v954 = vpack.c.bf16 %v938, %v937
    %v955 = vld [vmem:[#allocation11] sm:$0xf]
    %v956 = vld [vmem:[#allocation11 + $0x4] sm:$0xf]
    %v957 = vld [vmem:[#allocation11 + $0x8] sm:$0xf]
    %v958 = vld [vmem:[#allocation11 + $0xc] sm:$0xf]
    %v959 = vld [vmem:[#allocation11 + $0x10] sm:$0xf]
    %v960 = vld [vmem:[#allocation11 + $0x14] sm:$0xf]
    %v961 = vld [vmem:[#allocation11 + $0x18] sm:$0xf]
    %v962 = vld [vmem:[#allocation11 + $0x1c] sm:$0xf]
    %v963 = vld [vmem:[#allocation13] sm:$0x1]
    %v965 = vlaneseq
    %v966 = vshrl.u32 %v965, 7
    %v967 = vsub.s32 0, %v966
    %v968 = vrot.slane %v963, %v967
    %v978 = vunpack.c.l.b16 %v955
    %v979 = vunpack.c.l.b16 %v956
    %v980 = vunpack.c.l.b16 %v957
    %v981 = vunpack.c.l.b16 %v958
    %v982 = vunpack.c.l.b16 %v959
    %v983 = vunpack.c.l.b16 %v960
    %v984 = vunpack.c.l.b16 %v961
    %v985 = vunpack.c.l.b16 %v962
    %v986 = vpack.c.b16 %v979, %v978
    %v987 = vpack.c.b16 %v981, %v980
    %v988 = vpack.c.b16 %v983, %v982
    %v989 = vpack.c.b16 %v985, %v984
    %v995 = vsel %vm697, %v939, 0
    %v998 = vsel %vm697, %v940, 0
    %v1001 = vsel %vm697, %v941, 0
    %v1004 = vsel %vm697, %v942, 0
    %v1007 = vsel %vm697, %v943, 0
    %v1010 = vsel %vm697, %v944, 0
    %v1013 = vsel %vm697, %v945, 0
    %v1016 = vsel %vm697, %v946, 0
    %v1019 = vsel %vm697, %v947, 0
    %v1022 = vsel %vm697, %v948, 0
    %v1025 = vsel %vm697, %v949, 0
    %v1028 = vsel %vm697, %v950, 0
    %v1031 = vsel %vm697, %v951, 0
    %v1034 = vsel %vm697, %v952, 0
    %v1037 = vsel %vm697, %v953, 0
    %v1040 = vsel %vm697, %v954, 0
    %1042 = vmatprep.subr.bf16.mxu0 0
    %1043 = vmatpush1.bf16.msra.mxu0 %v986
    %1044 = vmatprep.subr.bf16.mxu0 0
    %1045 = vmatpush1.bf16.msra.mxu0 %v987
    %1046 = vmatprep.subr.bf16.mxu0 0
    %1047 = vmatpush1.bf16.msra.mxu0 %v988
    %1048 = vmatprep.subr.bf16.mxu0 0
    %1049 = vmatpush1.bf16.msra.mxu0 %v989
    %1050 = vmatprep.subr.bf16.mxu0 0
    %1051 = vmatpush1.bf16.msra.mxu0 0
    %1052 = vmatprep.subr.bf16.mxu0 0
    %1053 = vmatpush1.bf16.msra.mxu0 0
    %1054 = vmatprep.subr.bf16.mxu0 0
    %1055 = vmatpush1.bf16.msra.mxu0 0
    %1056 = vmatprep.subr.bf16.mxu0 0
    %1057 = vmatpush1.bf16.msra.mxu0 0
    %1058 = vmatprep.subr.bf16.mxu0 0
    %1059 = vmatpush1.bf16.msra.mxu0 0
    %1060 = vmatprep.subr.bf16.mxu0 0
    %1061 = vmatpush1.bf16.msra.mxu0 0
    %1062 = vmatprep.subr.bf16.mxu0 0
    %1063 = vmatpush1.bf16.msra.mxu0 0
    %1064 = vmatprep.subr.bf16.mxu0 0
    %1065 = vmatpush1.bf16.msra.mxu0 0
    %1066 = vmatprep.subr.bf16.mxu0 0
    %1067 = vmatpush1.bf16.msra.mxu0 0
    %1068 = vmatprep.subr.bf16.mxu0 0
    %1069 = vmatpush1.bf16.msra.mxu0 0
    %1070 = vmatprep.subr.bf16.mxu0 0
    %1071 = vmatpush1.bf16.msra.mxu0 0
    %1072 = vmatprep.subr.bf16.mxu0 0
    %1073 = vmatpush1.bf16.msra.mxu0 0
    %1074 = vmatprep.mubr.bf16.mxu0 0
    %1075 = vmatmul.mubr.bf16.gmra.mrb[0].mxu0 %v995
    %v1076 = vpop.f32.mrb[0].mxu0
    %v1077 = vadd.f32 %v968, %v1076
    %v1078 = vpop.f32.mrb[0].mxu0
    %v1079 = vpop.f32.mrb[0].mxu0
    %v1080 = vadd.f32 %v968, %v1079
    %v1081 = vpop.f32.mrb[0].mxu0
    %1082 = vmatprep.mubr.bf16.mxu0 0
    %1083 = vmatmul.mubr.bf16.gmra.mrb[0].mxu0 %v998
    %v1084 = vpop.f32.mrb[0].mxu0
    %v1085 = vadd.f32 %v968, %v1084
    %v1086 = vpop.f32.mrb[0].mxu0
    %v1087 = vpop.f32.mrb[0].mxu0
    %v1088 = vadd.f32 %v968, %v1087
    %v1089 = vpop.f32.mrb[0].mxu0
    %1090 = vmatprep.mubr.bf16.mxu0 0
    %1091 = vmatmul.mubr.bf16.gmra.mrb[0].mxu0 %v1001
    %v1092 = vpop.f32.mrb[0].mxu0
    %v1093 = vadd.f32 %v968, %v1092
    %v1094 = vpop.f32.mrb[0].mxu0
    %v1095 = vpop.f32.mrb[0].mxu0
    %v1096 = vadd.f32 %v968, %v1095
    %v1097 = vpop.f32.mrb[0].mxu0
    %1098 = vmatprep.mubr.bf16.mxu0 0
    %1099 = vmatmul.mubr.bf16.gmra.mrb[0].mxu0 %v1004
    %v1100 = vpop.f32.mrb[0].mxu0
    %v1101 = vadd.f32 %v968, %v1100
    %v1102 = vpop.f32.mrb[0].mxu0
    %v1103 = vpop.f32.mrb[0].mxu0
    %v1104 = vadd.f32 %v968, %v1103
    %v1105 = vpop.f32.mrb[0].mxu0
    %1106 = vmatprep.mubr.bf16.mxu0 0
    %1107 = vmatmul.mubr.bf16.gmra.mrb[0].mxu0 %v1007
    %v1108 = vpop.f32.mrb[0].mxu0
    %v1109 = vadd.f32 %v968, %v1108
    %v1110 = vpop.f32.mrb[0].mxu0
    %v1111 = vpop.f32.mrb[0].mxu0
    %v1112 = vadd.f32 %v968, %v1111
    %v1113 = vpop.f32.mrb[0].mxu0
    %1114 = vmatprep.mubr.bf16.mxu0 0
    %1115 = vmatmul.mubr.bf16.gmra.mrb[0].mxu0 %v1010
    %v1116 = vpop.f32.mrb[0].mxu0
    %v1117 = vadd.f32 %v968, %v1116
    %v1118 = vpop.f32.mrb[0].mxu0
    %v1119 = vpop.f32.mrb[0].mxu0
    %v1120 = vadd.f32 %v968, %v1119
    %v1121 = vpop.f32.mrb[0].mxu0
    %1122 = vmatprep.mubr.bf16.mxu0 0
    %1123 = vmatmul.mubr.bf16.gmra.mrb[0].mxu0 %v1013
    %v1124 = vpop.f32.mrb[0].mxu0
    %v1125 = vadd.f32 %v968, %v1124
    %v1126 = vpop.f32.mrb[0].mxu0
    %v1127 = vpop.f32.mrb[0].mxu0
    %v1128 = vadd.f32 %v968, %v1127
    %v1129 = vpop.f32.mrb[0].mxu0
    %1130 = vmatprep.mubr.bf16.mxu0 0
    %1131 = vmatmul.mubr.bf16.gmra.mrb[0].mxu0 %v1016
    %v1132 = vpop.f32.mrb[0].mxu0
    %v1133 = vadd.f32 %v968, %v1132
    %v1134 = vpop.f32.mrb[0].mxu0
    %v1135 = vpop.f32.mrb[0].mxu0
    %v1136 = vadd.f32 %v968, %v1135
    %v1137 = vpop.f32.mrb[0].mxu0
    %1138 = vmatprep.mubr.bf16.mxu0 0
    %1139 = vmatmul.mubr.bf16.gmra.mrb[0].mxu0 %v1019
    %v1140 = vpop.f32.mrb[0].mxu0
    %v1141 = vadd.f32 %v968, %v1140
    %v1142 = vpop.f32.mrb[0].mxu0
    %v1143 = vpop.f32.mrb[0].mxu0
    %v1144 = vadd.f32 %v968, %v1143
    %v1145 = vpop.f32.mrb[0].mxu0
    %1146 = vmatprep.mubr.bf16.mxu0 0
    %1147 = vmatmul.mubr.bf16.gmra.mrb[0].mxu0 %v1022
    %v1148 = vpop.f32.mrb[0].mxu0
    %v1149 = vadd.f32 %v968, %v1148
    %v1150 = vpop.f32.mrb[0].mxu0
    %v1151 = vpop.f32.mrb[0].mxu0
    %v1152 = vadd.f32 %v968, %v1151
    %v1153 = vpop.f32.mrb[0].mxu0
    %1154 = vmatprep.mubr.bf16.mxu0 0
    %1155 = vmatmul.mubr.bf16.gmra.mrb[0].mxu0 %v1025
    %v1156 = vpop.f32.mrb[0].mxu0
    %v1157 = vadd.f32 %v968, %v1156
    %v1158 = vpop.f32.mrb[0].mxu0
    %v1159 = vpop.f32.mrb[0].mxu0
    %v1160 = vadd.f32 %v968, %v1159
    %v1161 = vpop.f32.mrb[0].mxu0
    %1162 = vmatprep.mubr.bf16.mxu0 0
    %1163 = vmatmul.mubr.bf16.gmra.mrb[0].mxu0 %v1028
    %v1164 = vpop.f32.mrb[0].mxu0
    %v1165 = vadd.f32 %v968, %v1164
    %v1166 = vpop.f32.mrb[0].mxu0
    %v1167 = vpop.f32.mrb[0].mxu0
    %v1168 = vadd.f32 %v968, %v1167
    %v1169 = vpop.f32.mrb[0].mxu0
    %1170 = vmatprep.mubr.bf16.mxu0 0
    %1171 = vmatmul.mubr.bf16.gmra.mrb[0].mxu0 %v1031
    %v1172 = vpop.f32.mrb[0].mxu0
    %v1173 = vadd.f32 %v968, %v1172
    %v1174 = vpop.f32.mrb[0].mxu0
    %v1175 = vpop.f32.mrb[0].mxu0
    %v1176 = vadd.f32 %v968, %v1175
    %v1177 = vpop.f32.mrb[0].mxu0
    %1178 = vmatprep.mubr.bf16.mxu0 0
    %1179 = vmatmul.mubr.bf16.gmra.mrb[0].mxu0 %v1034
    %v1180 = vpop.f32.mrb[0].mxu0
    %v1181 = vadd.f32 %v968, %v1180
    %v1182 = vpop.f32.mrb[0].mxu0
    %v1183 = vpop.f32.mrb[0].mxu0
    %v1184 = vadd.f32 %v968, %v1183
    %v1185 = vpop.f32.mrb[0].mxu0
    %1186 = vmatprep.mubr.bf16.mxu0 0
    %1187 = vmatmul.mubr.bf16.gmra.mrb[0].mxu0 %v1037
    %v1188 = vpop.f32.mrb[0].mxu0
    %v1189 = vadd.f32 %v968, %v1188
    %v1190 = vpop.f32.mrb[0].mxu0
    %v1191 = vpop.f32.mrb[0].mxu0
    %v1192 = vadd.f32 %v968, %v1191
    %v1193 = vpop.f32.mrb[0].mxu0
    %1194 = vmatprep.mubr.bf16.mxu0 0
    %1195 = vmatmul.mubr.bf16.gmra.mrb[0].mxu0 %v1040
    %v1196 = vpop.f32.mrb[0].mxu0
    %v1197 = vadd.f32 %v968, %v1196
    %v1198 = vpop.f32.mrb[0].mxu0
    %v1199 = vpop.f32.mrb[0].mxu0
    %v1200 = vadd.f32 %v968, %v1199
    %v1201 = vpop.f32.mrb[0].mxu0
    %1202 = vdwg.mxu0
    %v1203 = vmax.f32 %v1077, 0.0
    %v1204 = vmax.f32 %v1080, 0.0
    %v1205 = vmax.f32 %v1085, 0.0
    %v1206 = vmax.f32 %v1088, 0.0
    %v1207 = vmax.f32 %v1093, 0.0
    %v1208 = vmax.f32 %v1096, 0.0
    %v1209 = vmax.f32 %v1101, 0.0
    %v1210 = vmax.f32 %v1104, 0.0
    %v1211 = vmax.f32 %v1109, 0.0
    %v1212 = vmax.f32 %v1112, 0.0
    %v1213 = vmax.f32 %v1117, 0.0
    %v1214 = vmax.f32 %v1120, 0.0
    %v1215 = vmax.f32 %v1125, 0.0
    %v1216 = vmax.f32 %v1128, 0.0
    %v1217 = vmax.f32 %v1133, 0.0
    %v1218 = vmax.f32 %v1136, 0.0
    %v1219 = vmax.f32 %v1141, 0.0
    %v1220 = vmax.f32 %v1144, 0.0
    %v1221 = vmax.f32 %v1149, 0.0
    %v1222 = vmax.f32 %v1152, 0.0
    %v1223 = vmax.f32 %v1157, 0.0
    %v1224 = vmax.f32 %v1160, 0.0
    %v1225 = vmax.f32 %v1165, 0.0
    %v1226 = vmax.f32 %v1168, 0.0
    %v1227 = vmax.f32 %v1173, 0.0
    %v1228 = vmax.f32 %v1176, 0.0
    %v1229 = vmax.f32 %v1181, 0.0
    %v1230 = vmax.f32 %v1184, 0.0
    %v1231 = vmax.f32 %v1189, 0.0
    %v1232 = vmax.f32 %v1192, 0.0
    %v1233 = vmax.f32 %v1197, 0.0
    %v1234 = vmax.f32 %v1200, 0.0
    %v1235 = vpack.c.bf16 %v1204, %v1203
    %v1236 = vpack.c.bf16 %v1206, %v1205
    %v1237 = vpack.c.bf16 %v1208, %v1207
    %v1238 = vpack.c.bf16 %v1210, %v1209
    %v1239 = vpack.c.bf16 %v1212, %v1211
    %v1240 = vpack.c.bf16 %v1214, %v1213
    %v1241 = vpack.c.bf16 %v1216, %v1215
    %v1242 = vpack.c.bf16 %v1218, %v1217
    %v1243 = vpack.c.bf16 %v1220, %v1219
    %v1244 = vpack.c.bf16 %v1222, %v1221
    %v1245 = vpack.c.bf16 %v1224, %v1223
    %v1246 = vpack.c.bf16 %v1226, %v1225
    %v1247 = vpack.c.bf16 %v1228, %v1227
    %v1248 = vpack.c.bf16 %v1230, %v1229
    %v1249 = vpack.c.bf16 %v1232, %v1231
    %v1250 = vpack.c.bf16 %v1234, %v1233
    %v1251 = vld [vmem:[#allocation14] sm:$0xf]
    %v1252 = vld [vmem:[#allocation14 + $0x4] sm:$0xf]
    %v1253 = vld [vmem:[#allocation14 + $0x8] sm:$0xf]
    %v1254 = vld [vmem:[#allocation14 + $0xc] sm:$0xf]
    %v1255 = vld [vmem:[#allocation14 + $0x10] sm:$0xf]
    %v1256 = vld [vmem:[#allocation14 + $0x14] sm:$0xf]
    %v1257 = vld [vmem:[#allocation14 + $0x18] sm:$0xf]
    %v1258 = vld [vmem:[#allocation14 + $0x1c] sm:$0xf]
    %v1259 = vld [vmem:[#allocation16] sm:$0x1]
    %v1261 = vlaneseq
    %v1262 = vshrl.u32 %v1261, 7
    %v1263 = vsub.s32 0, %v1262
    %v1264 = vrot.slane %v1259, %v1263
    %v1274 = vunpack.c.l.b16 %v1251
    %v1275 = vunpack.c.l.b16 %v1252
    %v1276 = vunpack.c.l.b16 %v1253
    %v1277 = vunpack.c.l.b16 %v1254
    %v1278 = vunpack.c.l.b16 %v1255
    %v1279 = vunpack.c.l.b16 %v1256
    %v1280 = vunpack.c.l.b16 %v1257
    %v1281 = vunpack.c.l.b16 %v1258
    %v1282 = vpack.c.b16 %v1275, %v1274
    %v1283 = vpack.c.b16 %v1277, %v1276
    %v1284 = vpack.c.b16 %v1279, %v1278
    %v1285 = vpack.c.b16 %v1281, %v1280
    %v1291 = vsel %vm697, %v1235, 0
    %v1294 = vsel %vm697, %v1236, 0
    %v1297 = vsel %vm697, %v1237, 0
    %v1300 = vsel %vm697, %v1238, 0
    %v1303 = vsel %vm697, %v1239, 0
    %v1306 = vsel %vm697, %v1240, 0
    %v1309 = vsel %vm697, %v1241, 0
    %v1312 = vsel %vm697, %v1242, 0
    %v1315 = vsel %vm697, %v1243, 0
    %v1318 = vsel %vm697, %v1244, 0
    %v1321 = vsel %vm697, %v1245, 0
    %v1324 = vsel %vm697, %v1246, 0
    %v1327 = vsel %vm697, %v1247, 0
    %v1330 = vsel %vm697, %v1248, 0
    %v1333 = vsel %vm697, %v1249, 0
    %v1336 = vsel %vm697, %v1250, 0
    %1338 = vmatprep.subr.bf16.mxu0 0
    %1339 = vmatpush1.bf16.msra.mxu0 %v1282
    %1340 = vmatprep.subr.bf16.mxu0 0
    %1341 = vmatpush1.bf16.msra.mxu0 %v1283
    %1342 = vmatprep.subr.bf16.mxu0 0
    %1343 = vmatpush1.bf16.msra.mxu0 %v1284
    %1344 = vmatprep.subr.bf16.mxu0 0
    %1345 = vmatpush1.bf16.msra.mxu0 %v1285
    %1346 = vmatprep.subr.bf16.mxu0 0
    %1347 = vmatpush1.bf16.msra.mxu0 0
    %1348 = vmatprep.subr.bf16.mxu0 0
    %1349 = vmatpush1.bf16.msra.mxu0 0
    %1350 = vmatprep.subr.bf16.mxu0 0
    %1351 = vmatpush1.bf16.msra.mxu0 0
    %1352 = vmatprep.subr.bf16.mxu0 0
    %1353 = vmatpush1.bf16.msra.mxu0 0
    %1354 = vmatprep.subr.bf16.mxu0 0
    %1355 = vmatpush1.bf16.msra.mxu0 0
    %1356 = vmatprep.subr.bf16.mxu0 0
    %1357 = vmatpush1.bf16.msra.mxu0 0
    %1358 = vmatprep.subr.bf16.mxu0 0
    %1359 = vmatpush1.bf16.msra.mxu0 0
    %1360 = vmatprep.subr.bf16.mxu0 0
    %1361 = vmatpush1.bf16.msra.mxu0 0
    %1362 = vmatprep.subr.bf16.mxu0 0
    %1363 = vmatpush1.bf16.msra.mxu0 0
    %1364 = vmatprep.subr.bf16.mxu0 0
    %1365 = vmatpush1.bf16.msra.mxu0 0
    %1366 = vmatprep.subr.bf16.mxu0 0
    %1367 = vmatpush1.bf16.msra.mxu0 0
    %1368 = vmatprep.subr.bf16.mxu0 0
    %1369 = vmatpush1.bf16.msra.mxu0 0
    %1370 = vmatprep.mubr.bf16.mxu0 0
    %1371 = vmatmul.mubr.bf16.gmra.mrb[0].mxu0 %v1291
    %v1372 = vpop.f32.mrb[0].mxu0
    %v1373 = vadd.f32 %v1264, %v1372
    %v1374 = vpop.f32.mrb[0].mxu0
    %v1375 = vpop.f32.mrb[0].mxu0
    %v1376 = vadd.f32 %v1264, %v1375
    %v1377 = vpop.f32.mrb[0].mxu0
    %1378 = vmatprep.mubr.bf16.mxu0 0
    %1379 = vmatmul.mubr.bf16.gmra.mrb[0].mxu0 %v1294
    %v1380 = vpop.f32.mrb[0].mxu0
    %v1381 = vadd.f32 %v1264, %v1380
    %v1382 = vpop.f32.mrb[0].mxu0
    %v1383 = vpop.f32.mrb[0].mxu0
    %v1384 = vadd.f32 %v1264, %v1383
    %v1385 = vpop.f32.mrb[0].mxu0
    %1386 = vmatprep.mubr.bf16.mxu0 0
    %1387 = vmatmul.mubr.bf16.gmra.mrb[0].mxu0 %v1297
    %v1388 = vpop.f32.mrb[0].mxu0
    %v1389 = vadd.f32 %v1264, %v1388
    %v1390 = vpop.f32.mrb[0].mxu0
    %v1391 = vpop.f32.mrb[0].mxu0
    %v1392 = vadd.f32 %v1264, %v1391
    %v1393 = vpop.f32.mrb[0].mxu0
    %1394 = vmatprep.mubr.bf16.mxu0 0
    %1395 = vmatmul.mubr.bf16.gmra.mrb[0].mxu0 %v1300
    %v1396 = vpop.f32.mrb[0].mxu0
    %v1397 = vadd.f32 %v1264, %v1396
    %v1398 = vpop.f32.mrb[0].mxu0
    %v1399 = vpop.f32.mrb[0].mxu0
    %v1400 = vadd.f32 %v1264, %v1399
    %v1401 = vpop.f32.mrb[0].mxu0
    %1402 = vmatprep.mubr.bf16.mxu0 0
    %1403 = vmatmul.mubr.bf16.gmra.mrb[0].mxu0 %v1303
    %v1404 = vpop.f32.mrb[0].mxu0
    %v1405 = vadd.f32 %v1264, %v1404
    %v1406 = vpop.f32.mrb[0].mxu0
    %v1407 = vpop.f32.mrb[0].mxu0
    %v1408 = vadd.f32 %v1264, %v1407
    %v1409 = vpop.f32.mrb[0].mxu0
    %1410 = vmatprep.mubr.bf16.mxu0 0
    %1411 = vmatmul.mubr.bf16.gmra.mrb[0].mxu0 %v1306
    %v1412 = vpop.f32.mrb[0].mxu0
    %v1413 = vadd.f32 %v1264, %v1412
    %v1414 = vpop.f32.mrb[0].mxu0
    %v1415 = vpop.f32.mrb[0].mxu0
    %v1416 = vadd.f32 %v1264, %v1415
    %v1417 = vpop.f32.mrb[0].mxu0
    %1418 = vmatprep.mubr.bf16.mxu0 0
    %1419 = vmatmul.mubr.bf16.gmra.mrb[0].mxu0 %v1309
    %v1420 = vpop.f32.mrb[0].mxu0
    %v1421 = vadd.f32 %v1264, %v1420
    %v1422 = vpop.f32.mrb[0].mxu0
    %v1423 = vpop.f32.mrb[0].mxu0
    %v1424 = vadd.f32 %v1264, %v1423
    %v1425 = vpop.f32.mrb[0].mxu0
    %1426 = vmatprep.mubr.bf16.mxu0 0
    %1427 = vmatmul.mubr.bf16.gmra.mrb[0].mxu0 %v1312
    %v1428 = vpop.f32.mrb[0].mxu0
    %v1429 = vadd.f32 %v1264, %v1428
    %v1430 = vpop.f32.mrb[0].mxu0
    %v1431 = vpop.f32.mrb[0].mxu0
    %v1432 = vadd.f32 %v1264, %v1431
    %v1433 = vpop.f32.mrb[0].mxu0
    %1434 = vmatprep.mubr.bf16.mxu0 0
    %1435 = vmatmul.mubr.bf16.gmra.mrb[0].mxu0 %v1315
    %v1436 = vpop.f32.mrb[0].mxu0
    %v1437 = vadd.f32 %v1264, %v1436
    %v1438 = vpop.f32.mrb[0].mxu0
    %v1439 = vpop.f32.mrb[0].mxu0
    %v1440 = vadd.f32 %v1264, %v1439
    %v1441 = vpop.f32.mrb[0].mxu0
    %1442 = vmatprep.mubr.bf16.mxu0 0
    %1443 = vmatmul.mubr.bf16.gmra.mrb[0].mxu0 %v1318
    %v1444 = vpop.f32.mrb[0].mxu0
    %v1445 = vadd.f32 %v1264, %v1444
    %v1446 = vpop.f32.mrb[0].mxu0
    %v1447 = vpop.f32.mrb[0].mxu0
    %v1448 = vadd.f32 %v1264, %v1447
    %v1449 = vpop.f32.mrb[0].mxu0
    %1450 = vmatprep.mubr.bf16.mxu0 0
    %1451 = vmatmul.mubr.bf16.gmra.mrb[0].mxu0 %v1321
    %v1452 = vpop.f32.mrb[0].mxu0
    %v1453 = vadd.f32 %v1264, %v1452
    %v1454 = vpop.f32.mrb[0].mxu0
    %v1455 = vpop.f32.mrb[0].mxu0
    %v1456 = vadd.f32 %v1264, %v1455
    %v1457 = vpop.f32.mrb[0].mxu0
    %1458 = vmatprep.mubr.bf16.mxu0 0
    %1459 = vmatmul.mubr.bf16.gmra.mrb[0].mxu0 %v1324
    %v1460 = vpop.f32.mrb[0].mxu0
    %v1461 = vadd.f32 %v1264, %v1460
    %v1462 = vpop.f32.mrb[0].mxu0
    %v1463 = vpop.f32.mrb[0].mxu0
    %v1464 = vadd.f32 %v1264, %v1463
    %v1465 = vpop.f32.mrb[0].mxu0
    %1466 = vmatprep.mubr.bf16.mxu0 0
    %1467 = vmatmul.mubr.bf16.gmra.mrb[0].mxu0 %v1327
    %v1468 = vpop.f32.mrb[0].mxu0
    %v1469 = vadd.f32 %v1264, %v1468
    %v1470 = vpop.f32.mrb[0].mxu0
    %v1471 = vpop.f32.mrb[0].mxu0
    %v1472 = vadd.f32 %v1264, %v1471
    %v1473 = vpop.f32.mrb[0].mxu0
    %1474 = vmatprep.mubr.bf16.mxu0 0
    %1475 = vmatmul.mubr.bf16.gmra.mrb[0].mxu0 %v1330
    %v1476 = vpop.f32.mrb[0].mxu0
    %v1477 = vadd.f32 %v1264, %v1476
    %v1478 = vpop.f32.mrb[0].mxu0
    %v1479 = vpop.f32.mrb[0].mxu0
    %v1480 = vadd.f32 %v1264, %v1479
    %v1481 = vpop.f32.mrb[0].mxu0
    %1482 = vmatprep.mubr.bf16.mxu0 0
    %1483 = vmatmul.mubr.bf16.gmra.mrb[0].mxu0 %v1333
    %v1484 = vpop.f32.mrb[0].mxu0
    %v1485 = vadd.f32 %v1264, %v1484
    %v1486 = vpop.f32.mrb[0].mxu0
    %v1487 = vpop.f32.mrb[0].mxu0
    %v1488 = vadd.f32 %v1264, %v1487
    %v1489 = vpop.f32.mrb[0].mxu0
    %1490 = vmatprep.mubr.bf16.mxu0 0
    %1491 = vmatmul.mubr.bf16.gmra.mrb[0].mxu0 %v1336
    %v1492 = vpop.f32.mrb[0].mxu0
    %v1493 = vadd.f32 %v1264, %v1492
    %v1494 = vpop.f32.mrb[0].mxu0
    %v1495 = vpop.f32.mrb[0].mxu0
    %v1496 = vadd.f32 %v1264, %v1495
    %v1497 = vpop.f32.mrb[0].mxu0
    %1498 = vdwg.mxu0
    %v1499 = vmax.f32 %v1373, 0.0
    %v1500 = vmax.f32 %v1376, 0.0
    %v1501 = vmax.f32 %v1381, 0.0
    %v1502 = vmax.f32 %v1384, 0.0
    %v1503 = vmax.f32 %v1389, 0.0
    %v1504 = vmax.f32 %v1392, 0.0
    %v1505 = vmax.f32 %v1397, 0.0
    %v1506 = vmax.f32 %v1400, 0.0
    %v1507 = vmax.f32 %v1405, 0.0
    %v1508 = vmax.f32 %v1408, 0.0
    %v1509 = vmax.f32 %v1413, 0.0
    %v1510 = vmax.f32 %v1416, 0.0
    %v1511 = vmax.f32 %v1421, 0.0
    %v1512 = vmax.f32 %v1424, 0.0
    %v1513 = vmax.f32 %v1429, 0.0
    %v1514 = vmax.f32 %v1432, 0.0
    %v1515 = vmax.f32 %v1437, 0.0
    %v1516 = vmax.f32 %v1440, 0.0
    %v1517 = vmax.f32 %v1445, 0.0
    %v1518 = vmax.f32 %v1448, 0.0
    %v1519 = vmax.f32 %v1453, 0.0
    %v1520 = vmax.f32 %v1456, 0.0
    %v1521 = vmax.f32 %v1461, 0.0
    %v1522 = vmax.f32 %v1464, 0.0
    %v1523 = vmax.f32 %v1469, 0.0
    %v1524 = vmax.f32 %v1472, 0.0
    %v1525 = vmax.f32 %v1477, 0.0
    %v1526 = vmax.f32 %v1480, 0.0
    %v1527 = vmax.f32 %v1485, 0.0
    %v1528 = vmax.f32 %v1488, 0.0
    %v1529 = vmax.f32 %v1493, 0.0
    %v1530 = vmax.f32 %v1496, 0.0
    %v1531 = vpack.c.bf16 %v1500, %v1499
    %v1532 = vpack.c.bf16 %v1502, %v1501
    %v1533 = vpack.c.bf16 %v1504, %v1503
    %v1534 = vpack.c.bf16 %v1506, %v1505
    %v1535 = vpack.c.bf16 %v1508, %v1507
    %v1536 = vpack.c.bf16 %v1510, %v1509
    %v1537 = vpack.c.bf16 %v1512, %v1511
    %v1538 = vpack.c.bf16 %v1514, %v1513
    %v1539 = vpack.c.bf16 %v1516, %v1515
    %v1540 = vpack.c.bf16 %v1518, %v1517
    %v1541 = vpack.c.bf16 %v1520, %v1519
    %v1542 = vpack.c.bf16 %v1522, %v1521
    %v1543 = vpack.c.bf16 %v1524, %v1523
    %v1544 = vpack.c.bf16 %v1526, %v1525
    %v1545 = vpack.c.bf16 %v1528, %v1527
    %v1546 = vpack.c.bf16 %v1530, %v1529
    %v1547 = vld [vmem:[#allocation17] sm:$0xff]
    %v1548 = vld [vmem:[#allocation17 + $0x8] sm:$0xff]
    %v1549 = vld [vmem:[#allocation17 + $0x10] sm:$0xff]
    %v1550 = vld [vmem:[#allocation17 + $0x18] sm:$0xff]
    %v1551 = vld [vmem:[#allocation17 + $0x20] sm:$0xff]
    %v1552 = vld [vmem:[#allocation17 + $0x28] sm:$0xff]
    %v1553 = vld [vmem:[#allocation17 + $0x30] sm:$0xff]
    %v1554 = vld [vmem:[#allocation17 + $0x38] sm:$0xff]
    %v1555 = vld [vmem:[#allocation17 + $0x40] sm:$0xff]
    %v1556 = vld [vmem:[#allocation17 + $0x48] sm:$0xff]
    %v1557 = vld [vmem:[#allocation17 + $0x50] sm:$0xff]
    %v1558 = vld [vmem:[#allocation17 + $0x58] sm:$0xff]
    %v1559 = vld [vmem:[#allocation17 + $0x60] sm:$0xff]
    %v1560 = vld [vmem:[#allocation17 + $0x68] sm:$0xff]
    %v1561 = vld [vmem:[#allocation17 + $0x70] sm:$0xff]
    %v1562 = vld [vmem:[#allocation17 + $0x78] sm:$0xff]
    %v1563 = vld [vmem:[#allocation17 + $0x80] sm:$0xff]
    %v1564 = vld [vmem:[#allocation17 + $0x88] sm:$0xff]
    %v1565 = vld [vmem:[#allocation17 + $0x90] sm:$0xff]
    %v1566 = vld [vmem:[#allocation17 + $0x98] sm:$0xff]
    %v1567 = vld [vmem:[#allocation17 + $0xa0] sm:$0xff]
    %v1568 = vld [vmem:[#allocation17 + $0xa8] sm:$0xff]
    %v1569 = vld [vmem:[#allocation17 + $0xb0] sm:$0xff]
    %v1570 = vld [vmem:[#allocation17 + $0xb8] sm:$0xff]
    %v1571 = vld [vmem:[#allocation17 + $0xc0] sm:$0xff]
    %v1572 = vld [vmem:[#allocation17 + $0xc8] sm:$0xff]
    %v1573 = vld [vmem:[#allocation17 + $0xd0] sm:$0xff]
    %v1574 = vld [vmem:[#allocation17 + $0xd8] sm:$0xff]
    %v1575 = vld [vmem:[#allocation17 + $0xe0] sm:$0xff]
    %v1576 = vld [vmem:[#allocation17 + $0xe8] sm:$0xff]
    %v1577 = vld [vmem:[#allocation17 + $0xf0] sm:$0xff]
    %v1578 = vld [vmem:[#allocation17 + $0xf8] sm:$0xff]
    %v1579 = vld [vmem:[#allocation17 + $0x100] sm:$0xff]
    %v1580 = vld [vmem:[#allocation17 + $0x108] sm:$0xff]
    %v1581 = vld [vmem:[#allocation17 + $0x110] sm:$0xff]
    %v1582 = vld [vmem:[#allocation17 + $0x118] sm:$0xff]
    %v1583 = vld [vmem:[#allocation17 + $0x120] sm:$0xff]
    %v1584 = vld [vmem:[#allocation17 + $0x128] sm:$0xff]
    %v1585 = vld [vmem:[#allocation17 + $0x130] sm:$0xff]
    %v1586 = vld [vmem:[#allocation17 + $0x138] sm:$0xff]
    %v1587 = vld [vmem:[#allocation17 + $0x140] sm:$0xff]
    %v1588 = vld [vmem:[#allocation17 + $0x148] sm:$0xff]
    %v1589 = vld [vmem:[#allocation17 + $0x150] sm:$0xff]
    %v1590 = vld [vmem:[#allocation17 + $0x158] sm:$0xff]
    %v1591 = vld [vmem:[#allocation17 + $0x160] sm:$0xff]
    %v1592 = vld [vmem:[#allocation17 + $0x168] sm:$0xff]
    %v1593 = vld [vmem:[#allocation17 + $0x170] sm:$0xff]
    %v1594 = vld [vmem:[#allocation17 + $0x178] sm:$0xff]
    %v1595 = vld [vmem:[#allocation17 + $0x180] sm:$0xff]
    %v1596 = vld [vmem:[#allocation17 + $0x188] sm:$0xff]
    %v1597 = vld [vmem:[#allocation17 + $0x190] sm:$0xff]
    %v1598 = vld [vmem:[#allocation17 + $0x198] sm:$0xff]
    %v1599 = vld [vmem:[#allocation17 + $0x1a0] sm:$0xff]
    %v1600 = vld [vmem:[#allocation17 + $0x1a8] sm:$0xff]
    %v1601 = vld [vmem:[#allocation17 + $0x1b0] sm:$0xff]
    %v1602 = vld [vmem:[#allocation17 + $0x1b8] sm:$0xff]
    %v1603 = vld [vmem:[#allocation17 + $0x1c0] sm:$0xff]
    %v1604 = vld [vmem:[#allocation17 + $0x1c8] sm:$0xff]
    %v1605 = vld [vmem:[#allocation17 + $0x1d0] sm:$0xff]
    %v1606 = vld [vmem:[#allocation17 + $0x1d8] sm:$0xff]
    %v1607 = vld [vmem:[#allocation17 + $0x1e0] sm:$0xff]
    %v1608 = vld [vmem:[#allocation17 + $0x1e8] sm:$0xff]
    %v1609 = vld [vmem:[#allocation17 + $0x1f0] sm:$0xff]
    %v1610 = vld [vmem:[#allocation17 + $0x1f8] sm:$0xff]
    %v1611 = vld [vmem:[#allocation19] sm:$0xff]
    %v1613 = vlaneseq
    %v1614 = vshrl.u32 %v1613, 7
    %v1615 = vsub.s32 0, %v1614
    %v1616 = vrot.slane %v1611, %v1615
    %v1617 = vlaneseq
    %v1618 = vshrl.u32 %v1617, 7
    %v1619 = vsub.s32 1, %v1618
    %v1620 = vrot.slane %v1611, %v1619
    %v1621 = vlaneseq
    %v1622 = vshrl.u32 %v1621, 7
    %v1623 = vsub.s32 2, %v1622
    %v1624 = vrot.slane %v1611, %v1623
    %v1625 = vlaneseq
    %v1626 = vshrl.u32 %v1625, 7
    %v1627 = vsub.s32 3, %v1626
    %v1628 = vrot.slane %v1611, %v1627
    %v1629 = vlaneseq
    %v1630 = vshrl.u32 %v1629, 7
    %v1631 = vsub.s32 4, %v1630
    %v1632 = vrot.slane %v1611, %v1631
    %v1633 = vlaneseq
    %v1634 = vshrl.u32 %v1633, 7
    %v1635 = vsub.s32 5, %v1634
    %v1636 = vrot.slane %v1611, %v1635
    %v1637 = vlaneseq
    %v1638 = vshrl.u32 %v1637, 7
    %v1639 = vsub.s32 6, %v1638
    %v1640 = vrot.slane %v1611, %v1639
    %v1641 = vlaneseq
    %v1642 = vshrl.u32 %v1641, 7
    %v1643 = vsub.s32 7, %v1642
    %v1644 = vrot.slane %v1611, %v1643
    %v1717 = vunpack.c.l.b16 %v1547
    %v1718 = vunpack.c.h.b16 %v1547
    %v1719 = vunpack.c.l.b16 %v1548
    %v1720 = vunpack.c.h.b16 %v1548
    %v1721 = vunpack.c.l.b16 %v1549
    %v1722 = vunpack.c.h.b16 %v1549
    %v1723 = vunpack.c.l.b16 %v1550
    %v1724 = vunpack.c.h.b16 %v1550
    %v1725 = vunpack.c.l.b16 %v1551
    %v1726 = vunpack.c.h.b16 %v1551
    %v1727 = vunpack.c.l.b16 %v1552
    %v1728 = vunpack.c.h.b16 %v1552
    %v1729 = vunpack.c.l.b16 %v1553
    %v1730 = vunpack.c.h.b16 %v1553
    %v1731 = vunpack.c.l.b16 %v1554
    %v1732 = vunpack.c.h.b16 %v1554
    %v1733 = vunpack.c.l.b16 %v1555
    %v1734 = vunpack.c.h.b16 %v1555
    %v1735 = vunpack.c.l.b16 %v1556
    %v1736 = vunpack.c.h.b16 %v1556
    %v1737 = vunpack.c.l.b16 %v1557
    %v1738 = vunpack.c.h.b16 %v1557
    %v1739 = vunpack.c.l.b16 %v1558
    %v1740 = vunpack.c.h.b16 %v1558
    %v1741 = vunpack.c.l.b16 %v1559
    %v1742 = vunpack.c.h.b16 %v1559
    %v1743 = vunpack.c.l.b16 %v1560
    %v1744 = vunpack.c.h.b16 %v1560
    %v1745 = vunpack.c.l.b16 %v1561
    %v1746 = vunpack.c.h.b16 %v1561
    %v1747 = vunpack.c.l.b16 %v1562
    %v1748 = vunpack.c.h.b16 %v1562
    %v1749 = vunpack.c.l.b16 %v1563
    %v1750 = vunpack.c.h.b16 %v1563
    %v1751 = vunpack.c.l.b16 %v1564
    %v1752 = vunpack.c.h.b16 %v1564
    %v1753 = vunpack.c.l.b16 %v1565
    %v1754 = vunpack.c.h.b16 %v1565
    %v1755 = vunpack.c.l.b16 %v1566
    %v1756 = vunpack.c.h.b16 %v1566
    %v1757 = vunpack.c.l.b16 %v1567
    %v1758 = vunpack.c.h.b16 %v1567
    %v1759 = vunpack.c.l.b16 %v1568
    %v1760 = vunpack.c.h.b16 %v1568
    %v1761 = vunpack.c.l.b16 %v1569
    %v1762 = vunpack.c.h.b16 %v1569
    %v1763 = vunpack.c.l.b16 %v1570
    %v1764 = vunpack.c.h.b16 %v1570
    %v1765 = vunpack.c.l.b16 %v1571
    %v1766 = vunpack.c.h.b16 %v1571
    %v1767 = vunpack.c.l.b16 %v1572
    %v1768 = vunpack.c.h.b16 %v1572
    %v1769 = vunpack.c.l.b16 %v1573
    %v1770 = vunpack.c.h.b16 %v1573
    %v1771 = vunpack.c.l.b16 %v1574
    %v1772 = vunpack.c.h.b16 %v1574
    %v1773 = vunpack.c.l.b16 %v1575
    %v1774 = vunpack.c.h.b16 %v1575
    %v1775 = vunpack.c.l.b16 %v1576
    %v1776 = vunpack.c.h.b16 %v1576
    %v1777 = vunpack.c.l.b16 %v1577
    %v1778 = vunpack.c.h.b16 %v1577
    %v1779 = vunpack.c.l.b16 %v1578
    %v1780 = vunpack.c.h.b16 %v1578
    %v1781 = vunpack.c.l.b16 %v1579
    %v1782 = vunpack.c.h.b16 %v1579
    %v1783 = vunpack.c.l.b16 %v1580
    %v1784 = vunpack.c.h.b16 %v1580
    %v1785 = vunpack.c.l.b16 %v1581
    %v1786 = vunpack.c.h.b16 %v1581
    %v1787 = vunpack.c.l.b16 %v1582
    %v1788 = vunpack.c.h.b16 %v1582
    %v1789 = vunpack.c.l.b16 %v1583
    %v1790 = vunpack.c.h.b16 %v1583
    %v1791 = vunpack.c.l.b16 %v1584
    %v1792 = vunpack.c.h.b16 %v1584
    %v1793 = vunpack.c.l.b16 %v1585
    %v1794 = vunpack.c.h.b16 %v1585
    %v1795 = vunpack.c.l.b16 %v1586
    %v1796 = vunpack.c.h.b16 %v1586
    %v1797 = vunpack.c.l.b16 %v1587
    %v1798 = vunpack.c.h.b16 %v1587
    %v1799 = vunpack.c.l.b16 %v1588
    %v1800 = vunpack.c.h.b16 %v1588
    %v1801 = vunpack.c.l.b16 %v1589
    %v1802 = vunpack.c.h.b16 %v1589
    %v1803 = vunpack.c.l.b16 %v1590
    %v1804 = vunpack.c.h.b16 %v1590
    %v1805 = vunpack.c.l.b16 %v1591
    %v1806 = vunpack.c.h.b16 %v1591
    %v1807 = vunpack.c.l.b16 %v1592
    %v1808 = vunpack.c.h.b16 %v1592
    %v1809 = vunpack.c.l.b16 %v1593
    %v1810 = vunpack.c.h.b16 %v1593
    %v1811 = vunpack.c.l.b16 %v1594
    %v1812 = vunpack.c.h.b16 %v1594
    %v1813 = vunpack.c.l.b16 %v1595
    %v1814 = vunpack.c.h.b16 %v1595
    %v1815 = vunpack.c.l.b16 %v1596
    %v1816 = vunpack.c.h.b16 %v1596
    %v1817 = vunpack.c.l.b16 %v1597
    %v1818 = vunpack.c.h.b16 %v1597
    %v1819 = vunpack.c.l.b16 %v1598
    %v1820 = vunpack.c.h.b16 %v1598
    %v1821 = vunpack.c.l.b16 %v1599
    %v1822 = vunpack.c.h.b16 %v1599
    %v1823 = vunpack.c.l.b16 %v1600
    %v1824 = vunpack.c.h.b16 %v1600
    %v1825 = vunpack.c.l.b16 %v1601
    %v1826 = vunpack.c.h.b16 %v1601
    %v1827 = vunpack.c.l.b16 %v1602
    %v1828 = vunpack.c.h.b16 %v1602
    %v1829 = vunpack.c.l.b16 %v1603
    %v1830 = vunpack.c.h.b16 %v1603
    %v1831 = vunpack.c.l.b16 %v1604
    %v1832 = vunpack.c.h.b16 %v1604
    %v1833 = vunpack.c.l.b16 %v1605
    %v1834 = vunpack.c.h.b16 %v1605
    %v1835 = vunpack.c.l.b16 %v1606
    %v1836 = vunpack.c.h.b16 %v1606
    %v1837 = vunpack.c.l.b16 %v1607
    %v1838 = vunpack.c.h.b16 %v1607
    %v1839 = vunpack.c.l.b16 %v1608
    %v1840 = vunpack.c.h.b16 %v1608
    %v1841 = vunpack.c.l.b16 %v1609
    %v1842 = vunpack.c.h.b16 %v1609
    %v1843 = vunpack.c.l.b16 %v1610
    %v1844 = vunpack.c.h.b16 %v1610
    %v1845 = vpack.c.b16 %v1725, %v1717
    %v1846 = vpack.c.b16 %v1726, %v1718
    %v1847 = vpack.c.b16 %v1727, %v1719
    %v1848 = vpack.c.b16 %v1728, %v1720
    %v1849 = vpack.c.b16 %v1729, %v1721
    %v1850 = vpack.c.b16 %v1730, %v1722
    %v1851 = vpack.c.b16 %v1731, %v1723
    %v1852 = vpack.c.b16 %v1732, %v1724
    %v1853 = vpack.c.b16 %v1741, %v1733
    %v1854 = vpack.c.b16 %v1742, %v1734
    %v1855 = vpack.c.b16 %v1743, %v1735
    %v1856 = vpack.c.b16 %v1744, %v1736
    %v1857 = vpack.c.b16 %v1745, %v1737
    %v1858 = vpack.c.b16 %v1746, %v1738
    %v1859 = vpack.c.b16 %v1747, %v1739
    %v1860 = vpack.c.b16 %v1748, %v1740
    %v1861 = vpack.c.b16 %v1757, %v1749
    %v1862 = vpack.c.b16 %v1758, %v1750
    %v1863 = vpack.c.b16 %v1759, %v1751
    %v1864 = vpack.c.b16 %v1760, %v1752
    %v1865 = vpack.c.b16 %v1761, %v1753
    %v1866 = vpack.c.b16 %v1762, %v1754
    %v1867 = vpack.c.b16 %v1763, %v1755
    %v1868 = vpack.c.b16 %v1764, %v1756
    %v1869 = vpack.c.b16 %v1773, %v1765
    %v1870 = vpack.c.b16 %v1774, %v1766
    %v1871 = vpack.c.b16 %v1775, %v1767
    %v1872 = vpack.c.b16 %v1776, %v1768
    %v1873 = vpack.c.b16 %v1777, %v1769
    %v1874 = vpack.c.b16 %v1778, %v1770
    %v1875 = vpack.c.b16 %v1779, %v1771
    %v1876 = vpack.c.b16 %v1780, %v1772
    %v1877 = vpack.c.b16 %v1789, %v1781
    %v1878 = vpack.c.b16 %v1790, %v1782
    %v1879 = vpack.c.b16 %v1791, %v1783
    %v1880 = vpack.c.b16 %v1792, %v1784
    %v1881 = vpack.c.b16 %v1793, %v1785
    %v1882 = vpack.c.b16 %v1794, %v1786
    %v1883 = vpack.c.b16 %v1795, %v1787
    %v1884 = vpack.c.b16 %v1796, %v1788
    %v1885 = vpack.c.b16 %v1805, %v1797
    %v1886 = vpack.c.b16 %v1806, %v1798
    %v1887 = vpack.c.b16 %v1807, %v1799
    %v1888 = vpack.c.b16 %v1808, %v1800
    %v1889 = vpack.c.b16 %v1809, %v1801
    %v1890 = vpack.c.b16 %v1810, %v1802
    %v1891 = vpack.c.b16 %v1811, %v1803
    %v1892 = vpack.c.b16 %v1812, %v1804
    %v1893 = vpack.c.b16 %v1821, %v1813
    %v1894 = vpack.c.b16 %v1822, %v1814
    %v1895 = vpack.c.b16 %v1823, %v1815
    %v1896 = vpack.c.b16 %v1824, %v1816
    %v1897 = vpack.c.b16 %v1825, %v1817
    %v1898 = vpack.c.b16 %v1826, %v1818
    %v1899 = vpack.c.b16 %v1827, %v1819
    %v1900 = vpack.c.b16 %v1828, %v1820
    %v1901 = vpack.c.b16 %v1837, %v1829
    %v1902 = vpack.c.b16 %v1838, %v1830
    %v1903 = vpack.c.b16 %v1839, %v1831
    %v1904 = vpack.c.b16 %v1840, %v1832
    %v1905 = vpack.c.b16 %v1841, %v1833
    %v1906 = vpack.c.b16 %v1842, %v1834
    %v1907 = vpack.c.b16 %v1843, %v1835
    %v1908 = vpack.c.b16 %v1844, %v1836
    %1973 = vmatprep.subr.bf16.mxu0 %v1846
    %1974 = vmatpush1.bf16.msra.mxu0 %v1845
    %1975 = vmatprep.subr.bf16.mxu0 %v1854
    %1976 = vmatpush1.bf16.msra.mxu0 %v1853
    %1977 = vmatprep.subr.bf16.mxu0 %v1862
    %1978 = vmatpush1.bf16.msra.mxu0 %v1861
    %1979 = vmatprep.subr.bf16.mxu0 %v1870
    %1980 = vmatpush1.bf16.msra.mxu0 %v1869
    %1981 = vmatprep.subr.bf16.mxu0 %v1878
    %1982 = vmatpush1.bf16.msra.mxu0 %v1877
    %1983 = vmatprep.subr.bf16.mxu0 %v1886
    %1984 = vmatpush1.bf16.msra.mxu0 %v1885
    %1985 = vmatprep.subr.bf16.mxu0 %v1894
    %1986 = vmatpush1.bf16.msra.mxu0 %v1893
    %1987 = vmatprep.subr.bf16.mxu0 %v1902
    %1988 = vmatpush1.bf16.msra.mxu0 %v1901
    %1989 = vmatprep.subr.bf16.mxu0 0
    %1990 = vmatpush1.bf16.msra.mxu0 0
    %1991 = vmatprep.subr.bf16.mxu0 0
    %1992 = vmatpush1.bf16.msra.mxu0 0
    %1993 = vmatprep.subr.bf16.mxu0 0
    %1994 = vmatpush1.bf16.msra.mxu0 0
    %1995 = vmatprep.subr.bf16.mxu0 0
    %1996 = vmatpush1.bf16.msra.mxu0 0
    %1997 = vmatprep.subr.bf16.mxu0 0
    %1998 = vmatpush1.bf16.msra.mxu0 0
    %1999 = vmatprep.subr.bf16.mxu0 0
    %2000 = vmatpush1.bf16.msra.mxu0 0
    %2001 = vmatprep.subr.bf16.mxu0 0
    %2002 = vmatpush1.bf16.msra.mxu0 0
    %2003 = vmatprep.subr.bf16.mxu0 0
    %2004 = vmatpush1.bf16.msra.mxu0 0
    %2005 = vmatprep.mubr.bf16.mxu0 0
    %2006 = vmatmul.mubr.bf16.gmra.mrb[0].mxu0 %v1531
    %v2007 = vpop.f32.mrb[0].mxu0
    %v2008 = vadd.f32 %v1616, %v2007
    %v2009 = vpop.f32.mrb[0].mxu0
    %v2010 = vadd.f32 %v1620, %v2009
    %v2011 = vpop.f32.mrb[0].mxu0
    %v2012 = vadd.f32 %v1616, %v2011
    %v2013 = vpop.f32.mrb[0].mxu0
    %v2014 = vadd.f32 %v1620, %v2013
    %2015 = vmatprep.mubr.bf16.mxu0 0
    %2016 = vmatmul.mubr.bf16.gmra.mrb[0].mxu0 %v1532
    %v2017 = vpop.f32.mrb[0].mxu0
    %v2018 = vadd.f32 %v1616, %v2017
    %v2019 = vpop.f32.mrb[0].mxu0
    %v2020 = vadd.f32 %v1620, %v2019
    %v2021 = vpop.f32.mrb[0].mxu0
    %v2022 = vadd.f32 %v1616, %v2021
    %v2023 = vpop.f32.mrb[0].mxu0
    %v2024 = vadd.f32 %v1620, %v2023
    %2025 = vmatprep.mubr.bf16.mxu0 0
    %2026 = vmatmul.mubr.bf16.gmra.mrb[0].mxu0 %v1533
    %v2027 = vpop.f32.mrb[0].mxu0
    %v2028 = vadd.f32 %v1616, %v2027
    %v2029 = vpop.f32.mrb[0].mxu0
    %v2030 = vadd.f32 %v1620, %v2029
    %v2031 = vpop.f32.mrb[0].mxu0
    %v2032 = vadd.f32 %v1616, %v2031
    %v2033 = vpop.f32.mrb[0].mxu0
    %v2034 = vadd.f32 %v1620, %v2033
    %2035 = vmatprep.mubr.bf16.mxu0 0
    %2036 = vmatmul.mubr.bf16.gmra.mrb[0].mxu0 %v1534
    %v2037 = vpop.f32.mrb[0].mxu0
    %v2038 = vadd.f32 %v1616, %v2037
    %v2039 = vpop.f32.mrb[0].mxu0
    %v2040 = vadd.f32 %v1620, %v2039
    %v2041 = vpop.f32.mrb[0].mxu0
    %v2042 = vadd.f32 %v1616, %v2041
    %v2043 = vpop.f32.mrb[0].mxu0
    %v2044 = vadd.f32 %v1620, %v2043
    %2045 = vmatprep.mubr.bf16.mxu0 0
    %2046 = vmatmul.mubr.bf16.gmra.mrb[0].mxu0 %v1535
    %v2047 = vpop.f32.mrb[0].mxu0
    %v2048 = vadd.f32 %v1616, %v2047
    %v2049 = vpop.f32.mrb[0].mxu0
    %v2050 = vadd.f32 %v1620, %v2049
    %v2051 = vpop.f32.mrb[0].mxu0
    %v2052 = vadd.f32 %v1616, %v2051
    %v2053 = vpop.f32.mrb[0].mxu0
    %v2054 = vadd.f32 %v1620, %v2053
    %2055 = vmatprep.mubr.bf16.mxu0 0
    %2056 = vmatmul.mubr.bf16.gmra.mrb[0].mxu0 %v1536
    %v2057 = vpop.f32.mrb[0].mxu0
    %v2058 = vadd.f32 %v1616, %v2057
    %v2059 = vpop.f32.mrb[0].mxu0
    %v2060 = vadd.f32 %v1620, %v2059
    %v2061 = vpop.f32.mrb[0].mxu0
    %v2062 = vadd.f32 %v1616, %v2061
    %v2063 = vpop.f32.mrb[0].mxu0
    %v2064 = vadd.f32 %v1620, %v2063
    %2065 = vmatprep.mubr.bf16.mxu0 0
    %2066 = vmatmul.mubr.bf16.gmra.mrb[0].mxu0 %v1537
    %v2067 = vpop.f32.mrb[0].mxu0
    %v2068 = vadd.f32 %v1616, %v2067
    %v2069 = vpop.f32.mrb[0].mxu0
    %v2070 = vadd.f32 %v1620, %v2069
    %v2071 = vpop.f32.mrb[0].mxu0
    %v2072 = vadd.f32 %v1616, %v2071
    %v2073 = vpop.f32.mrb[0].mxu0
    %v2074 = vadd.f32 %v1620, %v2073
    %2075 = vmatprep.mubr.bf16.mxu0 0
    %2076 = vmatmul.mubr.bf16.gmra.mrb[0].mxu0 %v1538
    %v2077 = vpop.f32.mrb[0].mxu0
    %v2078 = vadd.f32 %v1616, %v2077
    %v2079 = vpop.f32.mrb[0].mxu0
    %v2080 = vadd.f32 %v1620, %v2079
    %v2081 = vpop.f32.mrb[0].mxu0
    %v2082 = vadd.f32 %v1616, %v2081
    %v2083 = vpop.f32.mrb[0].mxu0
    %v2084 = vadd.f32 %v1620, %v2083
    %2085 = vmatprep.mubr.bf16.mxu0 0
    %2086 = vmatmul.mubr.bf16.gmra.mrb[0].mxu0 %v1539
    %v2087 = vpop.f32.mrb[0].mxu0
    %v2088 = vadd.f32 %v1616, %v2087
    %v2089 = vpop.f32.mrb[0].mxu0
    %v2090 = vadd.f32 %v1620, %v2089
    %v2091 = vpop.f32.mrb[0].mxu0
    %v2092 = vadd.f32 %v1616, %v2091
    %v2093 = vpop.f32.mrb[0].mxu0
    %v2094 = vadd.f32 %v1620, %v2093
    %2095 = vmatprep.mubr.bf16.mxu0 0
    %2096 = vmatmul.mubr.bf16.gmra.mrb[0].mxu0 %v1540
    %v2097 = vpop.f32.mrb[0].mxu0
    %v2098 = vadd.f32 %v1616, %v2097
    %v2099 = vpop.f32.mrb[0].mxu0
    %v2100 = vadd.f32 %v1620, %v2099
    %v2101 = vpop.f32.mrb[0].mxu0
    %v2102 = vadd.f32 %v1616, %v2101
    %v2103 = vpop.f32.mrb[0].mxu0
    %v2104 = vadd.f32 %v1620, %v2103
    %2105 = vmatprep.mubr.bf16.mxu0 0
    %2106 = vmatmul.mubr.bf16.gmra.mrb[0].mxu0 %v1541
    %v2107 = vpop.f32.mrb[0].mxu0
    %v2108 = vadd.f32 %v1616, %v2107
    %v2109 = vpop.f32.mrb[0].mxu0
    %v2110 = vadd.f32 %v1620, %v2109
    %v2111 = vpop.f32.mrb[0].mxu0
    %v2112 = vadd.f32 %v1616, %v2111
    %v2113 = vpop.f32.mrb[0].mxu0
    %v2114 = vadd.f32 %v1620, %v2113
    %2115 = vmatprep.mubr.bf16.mxu0 0
    %2116 = vmatmul.mubr.bf16.gmra.mrb[0].mxu0 %v1542
    %v2117 = vpop.f32.mrb[0].mxu0
    %v2118 = vadd.f32 %v1616, %v2117
    %v2119 = vpop.f32.mrb[0].mxu0
    %v2120 = vadd.f32 %v1620, %v2119
    %v2121 = vpop.f32.mrb[0].mxu0
    %v2122 = vadd.f32 %v1616, %v2121
    %v2123 = vpop.f32.mrb[0].mxu0
    %v2124 = vadd.f32 %v1620, %v2123
    %2125 = vmatprep.mubr.bf16.mxu0 0
    %2126 = vmatmul.mubr.bf16.gmra.mrb[0].mxu0 %v1543
    %v2127 = vpop.f32.mrb[0].mxu0
    %v2128 = vadd.f32 %v1616, %v2127
    %v2129 = vpop.f32.mrb[0].mxu0
    %v2130 = vadd.f32 %v1620, %v2129
    %v2131 = vpop.f32.mrb[0].mxu0
    %v2132 = vadd.f32 %v1616, %v2131
    %v2133 = vpop.f32.mrb[0].mxu0
    %v2134 = vadd.f32 %v1620, %v2133
    %2135 = vmatprep.mubr.bf16.mxu0 0
    %2136 = vmatmul.mubr.bf16.gmra.mrb[0].mxu0 %v1544
    %v2137 = vpop.f32.mrb[0].mxu0
    %v2138 = vadd.f32 %v1616, %v2137
    %v2139 = vpop.f32.mrb[0].mxu0
    %v2140 = vadd.f32 %v1620, %v2139
    %v2141 = vpop.f32.mrb[0].mxu0
    %v2142 = vadd.f32 %v1616, %v2141
    %v2143 = vpop.f32.mrb[0].mxu0
    %v2144 = vadd.f32 %v1620, %v2143
    %2145 = vmatprep.mubr.bf16.mxu0 0
    %2146 = vmatmul.mubr.bf16.gmra.mrb[0].mxu0 %v1545
    %v2147 = vpop.f32.mrb[0].mxu0
    %v2148 = vadd.f32 %v1616, %v2147
    %v2149 = vpop.f32.mrb[0].mxu0
    %v2150 = vadd.f32 %v1620, %v2149
    %v2151 = vpop.f32.mrb[0].mxu0
    %v2152 = vadd.f32 %v1616, %v2151
    %v2153 = vpop.f32.mrb[0].mxu0
    %v2154 = vadd.f32 %v1620, %v2153
    %2155 = vmatprep.mubr.bf16.mxu0 0
    %2156 = vmatmul.mubr.bf16.gmra.mrb[0].mxu0 %v1546
    %v2157 = vpop.f32.mrb[0].mxu0
    %v2158 = vadd.f32 %v1616, %v2157
    %v2159 = vpop.f32.mrb[0].mxu0
    %v2160 = vadd.f32 %v1620, %v2159
    %v2161 = vpop.f32.mrb[0].mxu0
    %v2162 = vadd.f32 %v1616, %v2161
    %v2163 = vpop.f32.mrb[0].mxu0
    %v2164 = vadd.f32 %v1620, %v2163
    %2165 = vdwg.mxu0
    %2166 = vmatprep.subr.bf16.mxu0 %v1848
    %2167 = vmatpush1.bf16.msra.mxu0 %v1847
    %2168 = vmatprep.subr.bf16.mxu0 %v1856
    %2169 = vmatpush1.bf16.msra.mxu0 %v1855
    %2170 = vmatprep.subr.bf16.mxu0 %v1864
    %2171 = vmatpush1.bf16.msra.mxu0 %v1863
    %2172 = vmatprep.subr.bf16.mxu0 %v1872
    %2173 = vmatpush1.bf16.msra.mxu0 %v1871
    %2174 = vmatprep.subr.bf16.mxu0 %v1880
    %2175 = vmatpush1.bf16.msra.mxu0 %v1879
    %2176 = vmatprep.subr.bf16.mxu0 %v1888
    %2177 = vmatpush1.bf16.msra.mxu0 %v1887
    %2178 = vmatprep.subr.bf16.mxu0 %v1896
    %2179 = vmatpush1.bf16.msra.mxu0 %v1895
    %2180 = vmatprep.subr.bf16.mxu0 %v1904
    %2181 = vmatpush1.bf16.msra.mxu0 %v1903
    %2182 = vmatprep.subr.bf16.mxu0 0
    %2183 = vmatpush1.bf16.msra.mxu0 0
    %2184 = vmatprep.subr.bf16.mxu0 0
    %2185 = vmatpush1.bf16.msra.mxu0 0
    %2186 = vmatprep.subr.bf16.mxu0 0
    %2187 = vmatpush1.bf16.msra.mxu0 0
    %2188 = vmatprep.subr.bf16.mxu0 0
    %2189 = vmatpush1.bf16.msra.mxu0 0
    %2190 = vmatprep.subr.bf16.mxu0 0
    %2191 = vmatpush1.bf16.msra.mxu0 0
    %2192 = vmatprep.subr.bf16.mxu0 0
    %2193 = vmatpush1.bf16.msra.mxu0 0
    %2194 = vmatprep.subr.bf16.mxu0 0
    %2195 = vmatpush1.bf16.msra.mxu0 0
    %2196 = vmatprep.subr.bf16.mxu0 0
    %2197 = vmatpush1.bf16.msra.mxu0 0
    %2198 = vmatprep.mubr.bf16.mxu0 0
    %2199 = vmatmul.mubr.bf16.gmra.mrb[0].mxu0 %v1531
    %v2200 = vpop.f32.mrb[0].mxu0
    %v2201 = vadd.f32 %v1624, %v2200
    %v2202 = vpop.f32.mrb[0].mxu0
    %v2203 = vadd.f32 %v1628, %v2202
    %v2204 = vpop.f32.mrb[0].mxu0
    %v2205 = vadd.f32 %v1624, %v2204
    %v2206 = vpop.f32.mrb[0].mxu0
    %v2207 = vadd.f32 %v1628, %v2206
    %2208 = vmatprep.mubr.bf16.mxu0 0
    %2209 = vmatmul.mubr.bf16.gmra.mrb[0].mxu0 %v1532
    %v2210 = vpop.f32.mrb[0].mxu0
    %v2211 = vadd.f32 %v1624, %v2210
    %v2212 = vpop.f32.mrb[0].mxu0
    %v2213 = vadd.f32 %v1628, %v2212
    %v2214 = vpop.f32.mrb[0].mxu0
    %v2215 = vadd.f32 %v1624, %v2214
    %v2216 = vpop.f32.mrb[0].mxu0
    %v2217 = vadd.f32 %v1628, %v2216
    %2218 = vmatprep.mubr.bf16.mxu0 0
    %2219 = vmatmul.mubr.bf16.gmra.mrb[0].mxu0 %v1533
    %v2220 = vpop.f32.mrb[0].mxu0
    %v2221 = vadd.f32 %v1624, %v2220
    %v2222 = vpop.f32.mrb[0].mxu0
    %v2223 = vadd.f32 %v1628, %v2222
    %v2224 = vpop.f32.mrb[0].mxu0
    %v2225 = vadd.f32 %v1624, %v2224
    %v2226 = vpop.f32.mrb[0].mxu0
    %v2227 = vadd.f32 %v1628, %v2226
    %2228 = vmatprep.mubr.bf16.mxu0 0
    %2229 = vmatmul.mubr.bf16.gmra.mrb[0].mxu0 %v1534
    %v2230 = vpop.f32.mrb[0].mxu0
    %v2231 = vadd.f32 %v1624, %v2230
    %v2232 = vpop.f32.mrb[0].mxu0
    %v2233 = vadd.f32 %v1628, %v2232
    %v2234 = vpop.f32.mrb[0].mxu0
    %v2235 = vadd.f32 %v1624, %v2234
    %v2236 = vpop.f32.mrb[0].mxu0
    %v2237 = vadd.f32 %v1628, %v2236
    %2238 = vmatprep.mubr.bf16.mxu0 0
    %2239 = vmatmul.mubr.bf16.gmra.mrb[0].mxu0 %v1535
    %v2240 = vpop.f32.mrb[0].mxu0
    %v2241 = vadd.f32 %v1624, %v2240
    %v2242 = vpop.f32.mrb[0].mxu0
    %v2243 = vadd.f32 %v1628, %v2242
    %v2244 = vpop.f32.mrb[0].mxu0
    %v2245 = vadd.f32 %v1624, %v2244
    %v2246 = vpop.f32.mrb[0].mxu0
    %v2247 = vadd.f32 %v1628, %v2246
    %2248 = vmatprep.mubr.bf16.mxu0 0
    %2249 = vmatmul.mubr.bf16.gmra.mrb[0].mxu0 %v1536
    %v2250 = vpop.f32.mrb[0].mxu0
    %v2251 = vadd.f32 %v1624, %v2250
    %v2252 = vpop.f32.mrb[0].mxu0
    %v2253 = vadd.f32 %v1628, %v2252
    %v2254 = vpop.f32.mrb[0].mxu0
    %v2255 = vadd.f32 %v1624, %v2254
    %v2256 = vpop.f32.mrb[0].mxu0
    %v2257 = vadd.f32 %v1628, %v2256
    %2258 = vmatprep.mubr.bf16.mxu0 0
    %2259 = vmatmul.mubr.bf16.gmra.mrb[0].mxu0 %v1537
    %v2260 = vpop.f32.mrb[0].mxu0
    %v2261 = vadd.f32 %v1624, %v2260
    %v2262 = vpop.f32.mrb[0].mxu0
    %v2263 = vadd.f32 %v1628, %v2262
    %v2264 = vpop.f32.mrb[0].mxu0
    %v2265 = vadd.f32 %v1624, %v2264
    %v2266 = vpop.f32.mrb[0].mxu0
    %v2267 = vadd.f32 %v1628, %v2266
    %2268 = vmatprep.mubr.bf16.mxu0 0
    %2269 = vmatmul.mubr.bf16.gmra.mrb[0].mxu0 %v1538
    %v2270 = vpop.f32.mrb[0].mxu0
    %v2271 = vadd.f32 %v1624, %v2270
    %v2272 = vpop.f32.mrb[0].mxu0
    %v2273 = vadd.f32 %v1628, %v2272
    %v2274 = vpop.f32.mrb[0].mxu0
    %v2275 = vadd.f32 %v1624, %v2274
    %v2276 = vpop.f32.mrb[0].mxu0
    %v2277 = vadd.f32 %v1628, %v2276
    %2278 = vmatprep.mubr.bf16.mxu0 0
    %2279 = vmatmul.mubr.bf16.gmra.mrb[0].mxu0 %v1539
    %v2280 = vpop.f32.mrb[0].mxu0
    %v2281 = vadd.f32 %v1624, %v2280
    %v2282 = vpop.f32.mrb[0].mxu0
    %v2283 = vadd.f32 %v1628, %v2282
    %v2284 = vpop.f32.mrb[0].mxu0
    %v2285 = vadd.f32 %v1624, %v2284
    %v2286 = vpop.f32.mrb[0].mxu0
    %v2287 = vadd.f32 %v1628, %v2286
    %2288 = vmatprep.mubr.bf16.mxu0 0
    %2289 = vmatmul.mubr.bf16.gmra.mrb[0].mxu0 %v1540
    %v2290 = vpop.f32.mrb[0].mxu0
    %v2291 = vadd.f32 %v1624, %v2290
    %v2292 = vpop.f32.mrb[0].mxu0
    %v2293 = vadd.f32 %v1628, %v2292
    %v2294 = vpop.f32.mrb[0].mxu0
    %v2295 = vadd.f32 %v1624, %v2294
    %v2296 = vpop.f32.mrb[0].mxu0
    %v2297 = vadd.f32 %v1628, %v2296
    %2298 = vmatprep.mubr.bf16.mxu0 0
    %2299 = vmatmul.mubr.bf16.gmra.mrb[0].mxu0 %v1541
    %v2300 = vpop.f32.mrb[0].mxu0
    %v2301 = vadd.f32 %v1624, %v2300
    %v2302 = vpop.f32.mrb[0].mxu0
    %v2303 = vadd.f32 %v1628, %v2302
    %v2304 = vpop.f32.mrb[0].mxu0
    %v2305 = vadd.f32 %v1624, %v2304
    %v2306 = vpop.f32.mrb[0].mxu0
    %v2307 = vadd.f32 %v1628, %v2306
    %2308 = vmatprep.mubr.bf16.mxu0 0
    %2309 = vmatmul.mubr.bf16.gmra.mrb[0].mxu0 %v1542
    %v2310 = vpop.f32.mrb[0].mxu0
    %v2311 = vadd.f32 %v1624, %v2310
    %v2312 = vpop.f32.mrb[0].mxu0
    %v2313 = vadd.f32 %v1628, %v2312
    %v2314 = vpop.f32.mrb[0].mxu0
    %v2315 = vadd.f32 %v1624, %v2314
    %v2316 = vpop.f32.mrb[0].mxu0
    %v2317 = vadd.f32 %v1628, %v2316
    %2318 = vmatprep.mubr.bf16.mxu0 0
    %2319 = vmatmul.mubr.bf16.gmra.mrb[0].mxu0 %v1543
    %v2320 = vpop.f32.mrb[0].mxu0
    %v2321 = vadd.f32 %v1624, %v2320
    %v2322 = vpop.f32.mrb[0].mxu0
    %v2323 = vadd.f32 %v1628, %v2322
    %v2324 = vpop.f32.mrb[0].mxu0
    %v2325 = vadd.f32 %v1624, %v2324
    %v2326 = vpop.f32.mrb[0].mxu0
    %v2327 = vadd.f32 %v1628, %v2326
    %2328 = vmatprep.mubr.bf16.mxu0 0
    %2329 = vmatmul.mubr.bf16.gmra.mrb[0].mxu0 %v1544
    %v2330 = vpop.f32.mrb[0].mxu0
    %v2331 = vadd.f32 %v1624, %v2330
    %v2332 = vpop.f32.mrb[0].mxu0
    %v2333 = vadd.f32 %v1628, %v2332
    %v2334 = vpop.f32.mrb[0].mxu0
    %v2335 = vadd.f32 %v1624, %v2334
    %v2336 = vpop.f32.mrb[0].mxu0
    %v2337 = vadd.f32 %v1628, %v2336
    %2338 = vmatprep.mubr.bf16.mxu0 0
    %2339 = vmatmul.mubr.bf16.gmra.mrb[0].mxu0 %v1545
    %v2340 = vpop.f32.mrb[0].mxu0
    %v2341 = vadd.f32 %v1624, %v2340
    %v2342 = vpop.f32.mrb[0].mxu0
    %v2343 = vadd.f32 %v1628, %v2342
    %v2344 = vpop.f32.mrb[0].mxu0
    %v2345 = vadd.f32 %v1624, %v2344
    %v2346 = vpop.f32.mrb[0].mxu0
    %v2347 = vadd.f32 %v1628, %v2346
    %2348 = vmatprep.mubr.bf16.mxu0 0
    %2349 = vmatmul.mubr.bf16.gmra.mrb[0].mxu0 %v1546
    %v2350 = vpop.f32.mrb[0].mxu0
    %v2351 = vadd.f32 %v1624, %v2350
    %v2352 = vpop.f32.mrb[0].mxu0
    %v2353 = vadd.f32 %v1628, %v2352
    %v2354 = vpop.f32.mrb[0].mxu0
    %v2355 = vadd.f32 %v1624, %v2354
    %v2356 = vpop.f32.mrb[0].mxu0
    %v2357 = vadd.f32 %v1628, %v2356
    %2358 = vdwg.mxu0
    %2359 = vmatprep.subr.bf16.mxu0 %v1850
    %2360 = vmatpush1.bf16.msra.mxu0 %v1849
    %2361 = vmatprep.subr.bf16.mxu0 %v1858
    %2362 = vmatpush1.bf16.msra.mxu0 %v1857
    %2363 = vmatprep.subr.bf16.mxu0 %v1866
    %2364 = vmatpush1.bf16.msra.mxu0 %v1865
    %2365 = vmatprep.subr.bf16.mxu0 %v1874
    %2366 = vmatpush1.bf16.msra.mxu0 %v1873
    %2367 = vmatprep.subr.bf16.mxu0 %v1882
    %2368 = vmatpush1.bf16.msra.mxu0 %v1881
    %2369 = vmatprep.subr.bf16.mxu0 %v1890
    %2370 = vmatpush1.bf16.msra.mxu0 %v1889
    %2371 = vmatprep.subr.bf16.mxu0 %v1898
    %2372 = vmatpush1.bf16.msra.mxu0 %v1897
    %2373 = vmatprep.subr.bf16.mxu0 %v1906
    %2374 = vmatpush1.bf16.msra.mxu0 %v1905
    %2375 = vmatprep.subr.bf16.mxu0 0
    %2376 = vmatpush1.bf16.msra.mxu0 0
    %2377 = vmatprep.subr.bf16.mxu0 0
    %2378 = vmatpush1.bf16.msra.mxu0 0
    %2379 = vmatprep.subr.bf16.mxu0 0
    %2380 = vmatpush1.bf16.msra.mxu0 0
    %2381 = vmatprep.subr.bf16.mxu0 0
    %2382 = vmatpush1.bf16.msra.mxu0 0
    %2383 = vmatprep.subr.bf16.mxu0 0
    %2384 = vmatpush1.bf16.msra.mxu0 0
    %2385 = vmatprep.subr.bf16.mxu0 0
    %2386 = vmatpush1.bf16.msra.mxu0 0
    %2387 = vmatprep.subr.bf16.mxu0 0
    %2388 = vmatpush1.bf16.msra.mxu0 0
    %2389 = vmatprep.subr.bf16.mxu0 0
    %2390 = vmatpush1.bf16.msra.mxu0 0
    %2391 = vmatprep.mubr.bf16.mxu0 0
    %2392 = vmatmul.mubr.bf16.gmra.mrb[0].mxu0 %v1531
    %v2393 = vpop.f32.mrb[0].mxu0
    %v2394 = vadd.f32 %v1632, %v2393
    %v2395 = vpop.f32.mrb[0].mxu0
    %v2396 = vadd.f32 %v1636, %v2395
    %v2397 = vpop.f32.mrb[0].mxu0
    %v2398 = vadd.f32 %v1632, %v2397
    %v2399 = vpop.f32.mrb[0].mxu0
    %v2400 = vadd.f32 %v1636, %v2399
    %2401 = vmatprep.mubr.bf16.mxu0 0
    %2402 = vmatmul.mubr.bf16.gmra.mrb[0].mxu0 %v1532
    %v2403 = vpop.f32.mrb[0].mxu0
    %v2404 = vadd.f32 %v1632, %v2403
    %v2405 = vpop.f32.mrb[0].mxu0
    %v2406 = vadd.f32 %v1636, %v2405
    %v2407 = vpop.f32.mrb[0].mxu0
    %v2408 = vadd.f32 %v1632, %v2407
    %v2409 = vpop.f32.mrb[0].mxu0
    %v2410 = vadd.f32 %v1636, %v2409
    %2411 = vmatprep.mubr.bf16.mxu0 0
    %2412 = vmatmul.mubr.bf16.gmra.mrb[0].mxu0 %v1533
    %v2413 = vpop.f32.mrb[0].mxu0
    %v2414 = vadd.f32 %v1632, %v2413
    %v2415 = vpop.f32.mrb[0].mxu0
    %v2416 = vadd.f32 %v1636, %v2415
    %v2417 = vpop.f32.mrb[0].mxu0
    %v2418 = vadd.f32 %v1632, %v2417
    %v2419 = vpop.f32.mrb[0].mxu0
    %v2420 = vadd.f32 %v1636, %v2419
    %2421 = vmatprep.mubr.bf16.mxu0 0
    %2422 = vmatmul.mubr.bf16.gmra.mrb[0].mxu0 %v1534
    %v2423 = vpop.f32.mrb[0].mxu0
    %v2424 = vadd.f32 %v1632, %v2423
    %v2425 = vpop.f32.mrb[0].mxu0
    %v2426 = vadd.f32 %v1636, %v2425
    %v2427 = vpop.f32.mrb[0].mxu0
    %v2428 = vadd.f32 %v1632, %v2427
    %v2429 = vpop.f32.mrb[0].mxu0
    %v2430 = vadd.f32 %v1636, %v2429
    %2431 = vmatprep.mubr.bf16.mxu0 0
    %2432 = vmatmul.mubr.bf16.gmra.mrb[0].mxu0 %v1535
    %v2433 = vpop.f32.mrb[0].mxu0
    %v2434 = vadd.f32 %v1632, %v2433
    %v2435 = vpop.f32.mrb[0].mxu0
    %v2436 = vadd.f32 %v1636, %v2435
    %v2437 = vpop.f32.mrb[0].mxu0
    %v2438 = vadd.f32 %v1632, %v2437
    %v2439 = vpop.f32.mrb[0].mxu0
    %v2440 = vadd.f32 %v1636, %v2439
    %2441 = vmatprep.mubr.bf16.mxu0 0
    %2442 = vmatmul.mubr.bf16.gmra.mrb[0].mxu0 %v1536
    %v2443 = vpop.f32.mrb[0].mxu0
    %v2444 = vadd.f32 %v1632, %v2443
    %v2445 = vpop.f32.mrb[0].mxu0
    %v2446 = vadd.f32 %v1636, %v2445
    %v2447 = vpop.f32.mrb[0].mxu0
    %v2448 = vadd.f32 %v1632, %v2447
    %v2449 = vpop.f32.mrb[0].mxu0
    %v2450 = vadd.f32 %v1636, %v2449
    %2451 = vmatprep.mubr.bf16.mxu0 0
    %2452 = vmatmul.mubr.bf16.gmra.mrb[0].mxu0 %v1537
    %v2453 = vpop.f32.mrb[0].mxu0
    %v2454 = vadd.f32 %v1632, %v2453
    %v2455 = vpop.f32.mrb[0].mxu0
    %v2456 = vadd.f32 %v1636, %v2455
    %v2457 = vpop.f32.mrb[0].mxu0
    %v2458 = vadd.f32 %v1632, %v2457
    %v2459 = vpop.f32.mrb[0].mxu0
    %v2460 = vadd.f32 %v1636, %v2459
    %2461 = vmatprep.mubr.bf16.mxu0 0
    %2462 = vmatmul.mubr.bf16.gmra.mrb[0].mxu0 %v1538
    %v2463 = vpop.f32.mrb[0].mxu0
    %v2464 = vadd.f32 %v1632, %v2463
    %v2465 = vpop.f32.mrb[0].mxu0
    %v2466 = vadd.f32 %v1636, %v2465
    %v2467 = vpop.f32.mrb[0].mxu0
    %v2468 = vadd.f32 %v1632, %v2467
    %v2469 = vpop.f32.mrb[0].mxu0
    %v2470 = vadd.f32 %v1636, %v2469
    %2471 = vmatprep.mubr.bf16.mxu0 0
    %2472 = vmatmul.mubr.bf16.gmra.mrb[0].mxu0 %v1539
    %v2473 = vpop.f32.mrb[0].mxu0
    %v2474 = vadd.f32 %v1632, %v2473
    %v2475 = vpop.f32.mrb[0].mxu0
    %v2476 = vadd.f32 %v1636, %v2475
    %v2477 = vpop.f32.mrb[0].mxu0
    %v2478 = vadd.f32 %v1632, %v2477
    %v2479 = vpop.f32.mrb[0].mxu0
    %v2480 = vadd.f32 %v1636, %v2479
    %2481 = vmatprep.mubr.bf16.mxu0 0
    %2482 = vmatmul.mubr.bf16.gmra.mrb[0].mxu0 %v1540
    %v2483 = vpop.f32.mrb[0].mxu0
    %v2484 = vadd.f32 %v1632, %v2483
    %v2485 = vpop.f32.mrb[0].mxu0
    %v2486 = vadd.f32 %v1636, %v2485
    %v2487 = vpop.f32.mrb[0].mxu0
    %v2488 = vadd.f32 %v1632, %v2487
    %v2489 = vpop.f32.mrb[0].mxu0
    %v2490 = vadd.f32 %v1636, %v2489
    %2491 = vmatprep.mubr.bf16.mxu0 0
    %2492 = vmatmul.mubr.bf16.gmra.mrb[0].mxu0 %v1541
    %v2493 = vpop.f32.mrb[0].mxu0
    %v2494 = vadd.f32 %v1632, %v2493
    %v2495 = vpop.f32.mrb[0].mxu0
    %v2496 = vadd.f32 %v1636, %v2495
    %v2497 = vpop.f32.mrb[0].mxu0
    %v2498 = vadd.f32 %v1632, %v2497
    %v2499 = vpop.f32.mrb[0].mxu0
    %v2500 = vadd.f32 %v1636, %v2499
    %2501 = vmatprep.mubr.bf16.mxu0 0
    %2502 = vmatmul.mubr.bf16.gmra.mrb[0].mxu0 %v1542
    %v2503 = vpop.f32.mrb[0].mxu0
    %v2504 = vadd.f32 %v1632, %v2503
    %v2505 = vpop.f32.mrb[0].mxu0
    %v2506 = vadd.f32 %v1636, %v2505
    %v2507 = vpop.f32.mrb[0].mxu0
    %v2508 = vadd.f32 %v1632, %v2507
    %v2509 = vpop.f32.mrb[0].mxu0
    %v2510 = vadd.f32 %v1636, %v2509
    %2511 = vmatprep.mubr.bf16.mxu0 0
    %2512 = vmatmul.mubr.bf16.gmra.mrb[0].mxu0 %v1543
    %v2513 = vpop.f32.mrb[0].mxu0
    %v2514 = vadd.f32 %v1632, %v2513
    %v2515 = vpop.f32.mrb[0].mxu0
    %v2516 = vadd.f32 %v1636, %v2515
    %v2517 = vpop.f32.mrb[0].mxu0
    %v2518 = vadd.f32 %v1632, %v2517
    %v2519 = vpop.f32.mrb[0].mxu0
    %v2520 = vadd.f32 %v1636, %v2519
    %2521 = vmatprep.mubr.bf16.mxu0 0
    %2522 = vmatmul.mubr.bf16.gmra.mrb[0].mxu0 %v1544
    %v2523 = vpop.f32.mrb[0].mxu0
    %v2524 = vadd.f32 %v1632, %v2523
    %v2525 = vpop.f32.mrb[0].mxu0
    %v2526 = vadd.f32 %v1636, %v2525
    %v2527 = vpop.f32.mrb[0].mxu0
    %v2528 = vadd.f32 %v1632, %v2527
    %v2529 = vpop.f32.mrb[0].mxu0
    %v2530 = vadd.f32 %v1636, %v2529
    %2531 = vmatprep.mubr.bf16.mxu0 0
    %2532 = vmatmul.mubr.bf16.gmra.mrb[0].mxu0 %v1545
    %v2533 = vpop.f32.mrb[0].mxu0
    %v2534 = vadd.f32 %v1632, %v2533
    %v2535 = vpop.f32.mrb[0].mxu0
    %v2536 = vadd.f32 %v1636, %v2535
    %v2537 = vpop.f32.mrb[0].mxu0
    %v2538 = vadd.f32 %v1632, %v2537
    %v2539 = vpop.f32.mrb[0].mxu0
    %v2540 = vadd.f32 %v1636, %v2539
    %2541 = vmatprep.mubr.bf16.mxu0 0
    %2542 = vmatmul.mubr.bf16.gmra.mrb[0].mxu0 %v1546
    %v2543 = vpop.f32.mrb[0].mxu0
    %v2544 = vadd.f32 %v1632, %v2543
    %v2545 = vpop.f32.mrb[0].mxu0
    %v2546 = vadd.f32 %v1636, %v2545
    %v2547 = vpop.f32.mrb[0].mxu0
    %v2548 = vadd.f32 %v1632, %v2547
    %v2549 = vpop.f32.mrb[0].mxu0
    %v2550 = vadd.f32 %v1636, %v2549
    %2551 = vdwg.mxu0
    %2552 = vmatprep.subr.bf16.mxu0 %v1852
    %2553 = vmatpush1.bf16.msra.mxu0 %v1851
    %2554 = vmatprep.subr.bf16.mxu0 %v1860
    %2555 = vmatpush1.bf16.msra.mxu0 %v1859
    %2556 = vmatprep.subr.bf16.mxu0 %v1868
    %2557 = vmatpush1.bf16.msra.mxu0 %v1867
    %2558 = vmatprep.subr.bf16.mxu0 %v1876
    %2559 = vmatpush1.bf16.msra.mxu0 %v1875
    %2560 = vmatprep.subr.bf16.mxu0 %v1884
    %2561 = vmatpush1.bf16.msra.mxu0 %v1883
    %2562 = vmatprep.subr.bf16.mxu0 %v1892
    %2563 = vmatpush1.bf16.msra.mxu0 %v1891
    %2564 = vmatprep.subr.bf16.mxu0 %v1900
    %2565 = vmatpush1.bf16.msra.mxu0 %v1899
    %2566 = vmatprep.subr.bf16.mxu0 %v1908
    %2567 = vmatpush1.bf16.msra.mxu0 %v1907
    %2568 = vmatprep.subr.bf16.mxu0 0
    %2569 = vmatpush1.bf16.msra.mxu0 0
    %2570 = vmatprep.subr.bf16.mxu0 0
    %2571 = vmatpush1.bf16.msra.mxu0 0
    %2572 = vmatprep.subr.bf16.mxu0 0
    %2573 = vmatpush1.bf16.msra.mxu0 0
    %2574 = vmatprep.subr.bf16.mxu0 0
    %2575 = vmatpush1.bf16.msra.mxu0 0
    %2576 = vmatprep.subr.bf16.mxu0 0
    %2577 = vmatpush1.bf16.msra.mxu0 0
    %2578 = vmatprep.subr.bf16.mxu0 0
    %2579 = vmatpush1.bf16.msra.mxu0 0
    %2580 = vmatprep.subr.bf16.mxu0 0
    %2581 = vmatpush1.bf16.msra.mxu0 0
    %2582 = vmatprep.subr.bf16.mxu0 0
    %2583 = vmatpush1.bf16.msra.mxu0 0
    %2584 = vmatprep.mubr.bf16.mxu0 0
    %2585 = vmatmul.mubr.bf16.gmra.mrb[0].mxu0 %v1531
    %v2586 = vpop.f32.mrb[0].mxu0
    %v2587 = vadd.f32 %v1640, %v2586
    %v2588 = vpop.f32.mrb[0].mxu0
    %v2589 = vadd.f32 %v1644, %v2588
    %v2590 = vpop.f32.mrb[0].mxu0
    %v2591 = vadd.f32 %v1640, %v2590
    %v2592 = vpop.f32.mrb[0].mxu0
    %v2593 = vadd.f32 %v1644, %v2592
    %2594 = vmatprep.mubr.bf16.mxu0 0
    %2595 = vmatmul.mubr.bf16.gmra.mrb[0].mxu0 %v1532
    %v2596 = vpop.f32.mrb[0].mxu0
    %v2597 = vadd.f32 %v1640, %v2596
    %v2598 = vpop.f32.mrb[0].mxu0
    %v2599 = vadd.f32 %v1644, %v2598
    %v2600 = vpop.f32.mrb[0].mxu0
    %v2601 = vadd.f32 %v1640, %v2600
    %v2602 = vpop.f32.mrb[0].mxu0
    %v2603 = vadd.f32 %v1644, %v2602
    %2604 = vmatprep.mubr.bf16.mxu0 0
    %2605 = vmatmul.mubr.bf16.gmra.mrb[0].mxu0 %v1533
    %v2606 = vpop.f32.mrb[0].mxu0
    %v2607 = vadd.f32 %v1640, %v2606
    %v2608 = vpop.f32.mrb[0].mxu0
    %v2609 = vadd.f32 %v1644, %v2608
    %v2610 = vpop.f32.mrb[0].mxu0
    %v2611 = vadd.f32 %v1640, %v2610
    %v2612 = vpop.f32.mrb[0].mxu0
    %v2613 = vadd.f32 %v1644, %v2612
    %2614 = vmatprep.mubr.bf16.mxu0 0
    %2615 = vmatmul.mubr.bf16.gmra.mrb[0].mxu0 %v1534
    %v2616 = vpop.f32.mrb[0].mxu0
    %v2617 = vadd.f32 %v1640, %v2616
    %v2618 = vpop.f32.mrb[0].mxu0
    %v2619 = vadd.f32 %v1644, %v2618
    %v2620 = vpop.f32.mrb[0].mxu0
    %v2621 = vadd.f32 %v1640, %v2620
    %v2622 = vpop.f32.mrb[0].mxu0
    %v2623 = vadd.f32 %v1644, %v2622
    %2624 = vmatprep.mubr.bf16.mxu0 0
    %2625 = vmatmul.mubr.bf16.gmra.mrb[0].mxu0 %v1535
    %v2626 = vpop.f32.mrb[0].mxu0
    %v2627 = vadd.f32 %v1640, %v2626
    %v2628 = vpop.f32.mrb[0].mxu0
    %v2629 = vadd.f32 %v1644, %v2628
    %v2630 = vpop.f32.mrb[0].mxu0
    %v2631 = vadd.f32 %v1640, %v2630
    %v2632 = vpop.f32.mrb[0].mxu0
    %v2633 = vadd.f32 %v1644, %v2632
    %2634 = vmatprep.mubr.bf16.mxu0 0
    %2635 = vmatmul.mubr.bf16.gmra.mrb[0].mxu0 %v1536
    %v2636 = vpop.f32.mrb[0].mxu0
    %v2637 = vadd.f32 %v1640, %v2636
    %v2638 = vpop.f32.mrb[0].mxu0
    %v2639 = vadd.f32 %v1644, %v2638
    %v2640 = vpop.f32.mrb[0].mxu0
    %v2641 = vadd.f32 %v1640, %v2640
    %v2642 = vpop.f32.mrb[0].mxu0
    %v2643 = vadd.f32 %v1644, %v2642
    %2644 = vmatprep.mubr.bf16.mxu0 0
    %2645 = vmatmul.mubr.bf16.gmra.mrb[0].mxu0 %v1537
    %v2646 = vpop.f32.mrb[0].mxu0
    %v2647 = vadd.f32 %v1640, %v2646
    %v2648 = vpop.f32.mrb[0].mxu0
    %v2649 = vadd.f32 %v1644, %v2648
    %v2650 = vpop.f32.mrb[0].mxu0
    %v2651 = vadd.f32 %v1640, %v2650
    %v2652 = vpop.f32.mrb[0].mxu0
    %v2653 = vadd.f32 %v1644, %v2652
    %2654 = vmatprep.mubr.bf16.mxu0 0
    %2655 = vmatmul.mubr.bf16.gmra.mrb[0].mxu0 %v1538
    %v2656 = vpop.f32.mrb[0].mxu0
    %v2657 = vadd.f32 %v1640, %v2656
    %v2658 = vpop.f32.mrb[0].mxu0
    %v2659 = vadd.f32 %v1644, %v2658
    %v2660 = vpop.f32.mrb[0].mxu0
    %v2661 = vadd.f32 %v1640, %v2660
    %v2662 = vpop.f32.mrb[0].mxu0
    %v2663 = vadd.f32 %v1644, %v2662
    %2664 = vmatprep.mubr.bf16.mxu0 0
    %2665 = vmatmul.mubr.bf16.gmra.mrb[0].mxu0 %v1539
    %v2666 = vpop.f32.mrb[0].mxu0
    %v2667 = vadd.f32 %v1640, %v2666
    %v2668 = vpop.f32.mrb[0].mxu0
    %v2669 = vadd.f32 %v1644, %v2668
    %v2670 = vpop.f32.mrb[0].mxu0
    %v2671 = vadd.f32 %v1640, %v2670
    %v2672 = vpop.f32.mrb[0].mxu0
    %v2673 = vadd.f32 %v1644, %v2672
    %2674 = vmatprep.mubr.bf16.mxu0 0
    %2675 = vmatmul.mubr.bf16.gmra.mrb[0].mxu0 %v1540
    %v2676 = vpop.f32.mrb[0].mxu0
    %v2677 = vadd.f32 %v1640, %v2676
    %v2678 = vpop.f32.mrb[0].mxu0
    %v2679 = vadd.f32 %v1644, %v2678
    %v2680 = vpop.f32.mrb[0].mxu0
    %v2681 = vadd.f32 %v1640, %v2680
    %v2682 = vpop.f32.mrb[0].mxu0
    %v2683 = vadd.f32 %v1644, %v2682
    %2684 = vmatprep.mubr.bf16.mxu0 0
    %2685 = vmatmul.mubr.bf16.gmra.mrb[0].mxu0 %v1541
    %v2686 = vpop.f32.mrb[0].mxu0
    %v2687 = vadd.f32 %v1640, %v2686
    %v2688 = vpop.f32.mrb[0].mxu0
    %v2689 = vadd.f32 %v1644, %v2688
    %v2690 = vpop.f32.mrb[0].mxu0
    %v2691 = vadd.f32 %v1640, %v2690
    %v2692 = vpop.f32.mrb[0].mxu0
    %v2693 = vadd.f32 %v1644, %v2692
    %2694 = vmatprep.mubr.bf16.mxu0 0
    %2695 = vmatmul.mubr.bf16.gmra.mrb[0].mxu0 %v1542
    %v2696 = vpop.f32.mrb[0].mxu0
    %v2697 = vadd.f32 %v1640, %v2696
    %v2698 = vpop.f32.mrb[0].mxu0
    %v2699 = vadd.f32 %v1644, %v2698
    %v2700 = vpop.f32.mrb[0].mxu0
    %v2701 = vadd.f32 %v1640, %v2700
    %v2702 = vpop.f32.mrb[0].mxu0
    %v2703 = vadd.f32 %v1644, %v2702
    %2704 = vmatprep.mubr.bf16.mxu0 0
    %2705 = vmatmul.mubr.bf16.gmra.mrb[0].mxu0 %v1543
    %v2706 = vpop.f32.mrb[0].mxu0
    %v2707 = vadd.f32 %v1640, %v2706
    %v2708 = vpop.f32.mrb[0].mxu0
    %v2709 = vadd.f32 %v1644, %v2708
    %v2710 = vpop.f32.mrb[0].mxu0
    %v2711 = vadd.f32 %v1640, %v2710
    %v2712 = vpop.f32.mrb[0].mxu0
    %v2713 = vadd.f32 %v1644, %v2712
    %2714 = vmatprep.mubr.bf16.mxu0 0
    %2715 = vmatmul.mubr.bf16.gmra.mrb[0].mxu0 %v1544
    %v2716 = vpop.f32.mrb[0].mxu0
    %v2717 = vadd.f32 %v1640, %v2716
    %v2718 = vpop.f32.mrb[0].mxu0
    %v2719 = vadd.f32 %v1644, %v2718
    %v2720 = vpop.f32.mrb[0].mxu0
    %v2721 = vadd.f32 %v1640, %v2720
    %v2722 = vpop.f32.mrb[0].mxu0
    %v2723 = vadd.f32 %v1644, %v2722
    %2724 = vmatprep.mubr.bf16.mxu0 0
    %2725 = vmatmul.mubr.bf16.gmra.mrb[0].mxu0 %v1545
    %v2726 = vpop.f32.mrb[0].mxu0
    %v2727 = vadd.f32 %v1640, %v2726
    %v2728 = vpop.f32.mrb[0].mxu0
    %v2729 = vadd.f32 %v1644, %v2728
    %v2730 = vpop.f32.mrb[0].mxu0
    %v2731 = vadd.f32 %v1640, %v2730
    %v2732 = vpop.f32.mrb[0].mxu0
    %v2733 = vadd.f32 %v1644, %v2732
    %2734 = vmatprep.mubr.bf16.mxu0 0
    %2735 = vmatmul.mubr.bf16.gmra.mrb[0].mxu0 %v1546
    %v2736 = vpop.f32.mrb[0].mxu0
    %v2737 = vadd.f32 %v1640, %v2736
    %v2738 = vpop.f32.mrb[0].mxu0
    %v2739 = vadd.f32 %v1644, %v2738
    %v2740 = vpop.f32.mrb[0].mxu0
    %v2741 = vadd.f32 %v1640, %v2740
    %v2742 = vpop.f32.mrb[0].mxu0
    %v2743 = vadd.f32 %v1644, %v2742
    %2744 = vdwg.mxu0
    %v2745 = vmax.f32 %v2008, 0.0
    %v2746 = vmax.f32 %v2010, 0.0
    %v2747 = vmax.f32 %v2201, 0.0
    %v2748 = vmax.f32 %v2203, 0.0
    %v2749 = vmax.f32 %v2394, 0.0
    %v2750 = vmax.f32 %v2396, 0.0
    %v2751 = vmax.f32 %v2587, 0.0
    %v2752 = vmax.f32 %v2589, 0.0
    %v2753 = vmax.f32 %v2012, 0.0
    %v2754 = vmax.f32 %v2014, 0.0
    %v2755 = vmax.f32 %v2205, 0.0
    %v2756 = vmax.f32 %v2207, 0.0
    %v2757 = vmax.f32 %v2398, 0.0
    %v2758 = vmax.f32 %v2400, 0.0
    %v2759 = vmax.f32 %v2591, 0.0
    %v2760 = vmax.f32 %v2593, 0.0
    %v2761 = vmax.f32 %v2018, 0.0
    %v2762 = vmax.f32 %v2020, 0.0
    %v2763 = vmax.f32 %v2211, 0.0
    %v2764 = vmax.f32 %v2213, 0.0
    %v2765 = vmax.f32 %v2404, 0.0
    %v2766 = vmax.f32 %v2406, 0.0
    %v2767 = vmax.f32 %v2597, 0.0
    %v2768 = vmax.f32 %v2599, 0.0
    %v2769 = vmax.f32 %v2022, 0.0
    %v2770 = vmax.f32 %v2024, 0.0
    %v2771 = vmax.f32 %v2215, 0.0
    %v2772 = vmax.f32 %v2217, 0.0
    %v2773 = vmax.f32 %v2408, 0.0
    %v2774 = vmax.f32 %v2410, 0.0
    %v2775 = vmax.f32 %v2601, 0.0
    %v2776 = vmax.f32 %v2603, 0.0
    %v2777 = vmax.f32 %v2028, 0.0
    %v2778 = vmax.f32 %v2030, 0.0
    %v2779 = vmax.f32 %v2221, 0.0
    %v2780 = vmax.f32 %v2223, 0.0
    %v2781 = vmax.f32 %v2414, 0.0
    %v2782 = vmax.f32 %v2416, 0.0
    %v2783 = vmax.f32 %v2607, 0.0
    %v2784 = vmax.f32 %v2609, 0.0
    %v2785 = vmax.f32 %v2032, 0.0
    %v2786 = vmax.f32 %v2034, 0.0
    %v2787 = vmax.f32 %v2225, 0.0
    %v2788 = vmax.f32 %v2227, 0.0
    %v2789 = vmax.f32 %v2418, 0.0
    %v2790 = vmax.f32 %v2420, 0.0
    %v2791 = vmax.f32 %v2611, 0.0
    %v2792 = vmax.f32 %v2613, 0.0
    %v2793 = vmax.f32 %v2038, 0.0
    %v2794 = vmax.f32 %v2040, 0.0
    %v2795 = vmax.f32 %v2231, 0.0
    %v2796 = vmax.f32 %v2233, 0.0
    %v2797 = vmax.f32 %v2424, 0.0
    %v2798 = vmax.f32 %v2426, 0.0
    %v2799 = vmax.f32 %v2617, 0.0
    %v2800 = vmax.f32 %v2619, 0.0
    %v2801 = vmax.f32 %v2042, 0.0
    %v2802 = vmax.f32 %v2044, 0.0
    %v2803 = vmax.f32 %v2235, 0.0
    %v2804 = vmax.f32 %v2237, 0.0
    %v2805 = vmax.f32 %v2428, 0.0
    %v2806 = vmax.f32 %v2430, 0.0
    %v2807 = vmax.f32 %v2621, 0.0
    %v2808 = vmax.f32 %v2623, 0.0
    %v2809 = vmax.f32 %v2048, 0.0
    %v2810 = vmax.f32 %v2050, 0.0
    %v2811 = vmax.f32 %v2241, 0.0
    %v2812 = vmax.f32 %v2243, 0.0
    %v2813 = vmax.f32 %v2434, 0.0
    %v2814 = vmax.f32 %v2436, 0.0
    %v2815 = vmax.f32 %v2627, 0.0
    %v2816 = vmax.f32 %v2629, 0.0
    %v2817 = vmax.f32 %v2052, 0.0
    %v2818 = vmax.f32 %v2054, 0.0
    %v2819 = vmax.f32 %v2245, 0.0
    %v2820 = vmax.f32 %v2247, 0.0
    %v2821 = vmax.f32 %v2438, 0.0
    %v2822 = vmax.f32 %v2440, 0.0
    %v2823 = vmax.f32 %v2631, 0.0
    %v2824 = vmax.f32 %v2633, 0.0
    %v2825 = vmax.f32 %v2058, 0.0
    %v2826 = vmax.f32 %v2060, 0.0
    %v2827 = vmax.f32 %v2251, 0.0
    %v2828 = vmax.f32 %v2253, 0.0
    %v2829 = vmax.f32 %v2444, 0.0
    %v2830 = vmax.f32 %v2446, 0.0
    %v2831 = vmax.f32 %v2637, 0.0
    %v2832 = vmax.f32 %v2639, 0.0
    %v2833 = vmax.f32 %v2062, 0.0
    %v2834 = vmax.f32 %v2064, 0.0
    %v2835 = vmax.f32 %v2255, 0.0
    %v2836 = vmax.f32 %v2257, 0.0
    %v2837 = vmax.f32 %v2448, 0.0
    %v2838 = vmax.f32 %v2450, 0.0
    %v2839 = vmax.f32 %v2641, 0.0
    %v2840 = vmax.f32 %v2643, 0.0
    %v2841 = vmax.f32 %v2068, 0.0
    %v2842 = vmax.f32 %v2070, 0.0
    %v2843 = vmax.f32 %v2261, 0.0
    %v2844 = vmax.f32 %v2263, 0.0
    %v2845 = vmax.f32 %v2454, 0.0
    %v2846 = vmax.f32 %v2456, 0.0
    %v2847 = vmax.f32 %v2647, 0.0
    %v2848 = vmax.f32 %v2649, 0.0
    %v2849 = vmax.f32 %v2072, 0.0
    %v2850 = vmax.f32 %v2074, 0.0
    %v2851 = vmax.f32 %v2265, 0.0
    %v2852 = vmax.f32 %v2267, 0.0
    %v2853 = vmax.f32 %v2458, 0.0
    %v2854 = vmax.f32 %v2460, 0.0
    %v2855 = vmax.f32 %v2651, 0.0
    %v2856 = vmax.f32 %v2653, 0.0
    %v2857 = vmax.f32 %v2078, 0.0
    %v2858 = vmax.f32 %v2080, 0.0
    %v2859 = vmax.f32 %v2271, 0.0
    %v2860 = vmax.f32 %v2273, 0.0
    %v2861 = vmax.f32 %v2464, 0.0
    %v2862 = vmax.f32 %v2466, 0.0
    %v2863 = vmax.f32 %v2657, 0.0
    %v2864 = vmax.f32 %v2659, 0.0
    %v2865 = vmax.f32 %v2082, 0.0
    %v2866 = vmax.f32 %v2084, 0.0
    %v2867 = vmax.f32 %v2275, 0.0
    %v2868 = vmax.f32 %v2277, 0.0
    %v2869 = vmax.f32 %v2468, 0.0
    %v2870 = vmax.f32 %v2470, 0.0
    %v2871 = vmax.f32 %v2661, 0.0
    %v2872 = vmax.f32 %v2663, 0.0
    %v2873 = vmax.f32 %v2088, 0.0
    %v2874 = vmax.f32 %v2090, 0.0
    %v2875 = vmax.f32 %v2281, 0.0
    %v2876 = vmax.f32 %v2283, 0.0
    %v2877 = vmax.f32 %v2474, 0.0
    %v2878 = vmax.f32 %v2476, 0.0
    %v2879 = vmax.f32 %v2667, 0.0
    %v2880 = vmax.f32 %v2669, 0.0
    %v2881 = vmax.f32 %v2092, 0.0
    %v2882 = vmax.f32 %v2094, 0.0
    %v2883 = vmax.f32 %v2285, 0.0
    %v2884 = vmax.f32 %v2287, 0.0
    %v2885 = vmax.f32 %v2478, 0.0
    %v2886 = vmax.f32 %v2480, 0.0
    %v2887 = vmax.f32 %v2671, 0.0
    %v2888 = vmax.f32 %v2673, 0.0
    %v2889 = vmax.f32 %v2098, 0.0
    %v2890 = vmax.f32 %v2100, 0.0
    %v2891 = vmax.f32 %v2291, 0.0
    %v2892 = vmax.f32 %v2293, 0.0
    %v2893 = vmax.f32 %v2484, 0.0
    %v2894 = vmax.f32 %v2486, 0.0
    %v2895 = vmax.f32 %v2677, 0.0
    %v2896 = vmax.f32 %v2679, 0.0
    %v2897 = vmax.f32 %v2102, 0.0
    %v2898 = vmax.f32 %v2104, 0.0
    %v2899 = vmax.f32 %v2295, 0.0
    %v2900 = vmax.f32 %v2297, 0.0
    %v2901 = vmax.f32 %v2488, 0.0
    %v2902 = vmax.f32 %v2490, 0.0
    %v2903 = vmax.f32 %v2681, 0.0
    %v2904 = vmax.f32 %v2683, 0.0
    %v2905 = vmax.f32 %v2108, 0.0
    %v2906 = vmax.f32 %v2110, 0.0
    %v2907 = vmax.f32 %v2301, 0.0
    %v2908 = vmax.f32 %v2303, 0.0
    %v2909 = vmax.f32 %v2494, 0.0
    %v2910 = vmax.f32 %v2496, 0.0
    %v2911 = vmax.f32 %v2687, 0.0
    %v2912 = vmax.f32 %v2689, 0.0
    %v2913 = vmax.f32 %v2112, 0.0
    %v2914 = vmax.f32 %v2114, 0.0
    %v2915 = vmax.f32 %v2305, 0.0
    %v2916 = vmax.f32 %v2307, 0.0
    %v2917 = vmax.f32 %v2498, 0.0
    %v2918 = vmax.f32 %v2500, 0.0
    %v2919 = vmax.f32 %v2691, 0.0
    %v2920 = vmax.f32 %v2693, 0.0
    %v2921 = vmax.f32 %v2118, 0.0
    %v2922 = vmax.f32 %v2120, 0.0
    %v2923 = vmax.f32 %v2311, 0.0
    %v2924 = vmax.f32 %v2313, 0.0
    %v2925 = vmax.f32 %v2504, 0.0
    %v2926 = vmax.f32 %v2506, 0.0
    %v2927 = vmax.f32 %v2697, 0.0
    %v2928 = vmax.f32 %v2699, 0.0
    %v2929 = vmax.f32 %v2122, 0.0
    %v2930 = vmax.f32 %v2124, 0.0
    %v2931 = vmax.f32 %v2315, 0.0
    %v2932 = vmax.f32 %v2317, 0.0
    %v2933 = vmax.f32 %v2508, 0.0
    %v2934 = vmax.f32 %v2510, 0.0
    %v2935 = vmax.f32 %v2701, 0.0
    %v2936 = vmax.f32 %v2703, 0.0
    %v2937 = vmax.f32 %v2128, 0.0
    %v2938 = vmax.f32 %v2130, 0.0
    %v2939 = vmax.f32 %v2321, 0.0
    %v2940 = vmax.f32 %v2323, 0.0
    %v2941 = vmax.f32 %v2514, 0.0
    %v2942 = vmax.f32 %v2516, 0.0
    %v2943 = vmax.f32 %v2707, 0.0
    %v2944 = vmax.f32 %v2709, 0.0
    %v2945 = vmax.f32 %v2132, 0.0
    %v2946 = vmax.f32 %v2134, 0.0
    %v2947 = vmax.f32 %v2325, 0.0
    %v2948 = vmax.f32 %v2327, 0.0
    %v2949 = vmax.f32 %v2518, 0.0
    %v2950 = vmax.f32 %v2520, 0.0
    %v2951 = vmax.f32 %v2711, 0.0
    %v2952 = vmax.f32 %v2713, 0.0
    %v2953 = vmax.f32 %v2138, 0.0
    %v2954 = vmax.f32 %v2140, 0.0
    %v2955 = vmax.f32 %v2331, 0.0
    %v2956 = vmax.f32 %v2333, 0.0
    %v2957 = vmax.f32 %v2524, 0.0
    %v2958 = vmax.f32 %v2526, 0.0
    %v2959 = vmax.f32 %v2717, 0.0
    %v2960 = vmax.f32 %v2719, 0.0
    %v2961 = vmax.f32 %v2142, 0.0
    %v2962 = vmax.f32 %v2144, 0.0
    %v2963 = vmax.f32 %v2335, 0.0
    %v2964 = vmax.f32 %v2337, 0.0
    %v2965 = vmax.f32 %v2528, 0.0
    %v2966 = vmax.f32 %v2530, 0.0
    %v2967 = vmax.f32 %v2721, 0.0
    %v2968 = vmax.f32 %v2723, 0.0
    %v2969 = vmax.f32 %v2148, 0.0
    %v2970 = vmax.f32 %v2150, 0.0
    %v2971 = vmax.f32 %v2341, 0.0
    %v2972 = vmax.f32 %v2343, 0.0
    %v2973 = vmax.f32 %v2534, 0.0
    %v2974 = vmax.f32 %v2536, 0.0
    %v2975 = vmax.f32 %v2727, 0.0
    %v2976 = vmax.f32 %v2729, 0.0
    %v2977 = vmax.f32 %v2152, 0.0
    %v2978 = vmax.f32 %v2154, 0.0
    %v2979 = vmax.f32 %v2345, 0.0
    %v2980 = vmax.f32 %v2347, 0.0
    %v2981 = vmax.f32 %v2538, 0.0
    %v2982 = vmax.f32 %v2540, 0.0
    %v2983 = vmax.f32 %v2731, 0.0
    %v2984 = vmax.f32 %v2733, 0.0
    %v2985 = vmax.f32 %v2158, 0.0
    %v2986 = vmax.f32 %v2160, 0.0
    %v2987 = vmax.f32 %v2351, 0.0
    %v2988 = vmax.f32 %v2353, 0.0
    %v2989 = vmax.f32 %v2544, 0.0
    %v2990 = vmax.f32 %v2546, 0.0
    %v2991 = vmax.f32 %v2737, 0.0
    %v2992 = vmax.f32 %v2739, 0.0
    %v2993 = vmax.f32 %v2162, 0.0
    %v2994 = vmax.f32 %v2164, 0.0
    %v2995 = vmax.f32 %v2355, 0.0
    %v2996 = vmax.f32 %v2357, 0.0
    %v2997 = vmax.f32 %v2548, 0.0
    %v2998 = vmax.f32 %v2550, 0.0
    %v2999 = vmax.f32 %v2741, 0.0
    %v3000 = vmax.f32 %v2743, 0.0
    %v3001 = vpack.c.bf16 %v2753, %v2745
    %v3002 = vpack.c.bf16 %v2754, %v2746
    %v3003 = vpack.c.bf16 %v2755, %v2747
    %v3004 = vpack.c.bf16 %v2756, %v2748
    %v3005 = vpack.c.bf16 %v2757, %v2749
    %v3006 = vpack.c.bf16 %v2758, %v2750
    %v3007 = vpack.c.bf16 %v2759, %v2751
    %v3008 = vpack.c.bf16 %v2760, %v2752
    %v3009 = vpack.c.bf16 %v2769, %v2761
    %v3010 = vpack.c.bf16 %v2770, %v2762
    %v3011 = vpack.c.bf16 %v2771, %v2763
    %v3012 = vpack.c.bf16 %v2772, %v2764
    %v3013 = vpack.c.bf16 %v2773, %v2765
    %v3014 = vpack.c.bf16 %v2774, %v2766
    %v3015 = vpack.c.bf16 %v2775, %v2767
    %v3016 = vpack.c.bf16 %v2776, %v2768
    %v3017 = vpack.c.bf16 %v2785, %v2777
    %v3018 = vpack.c.bf16 %v2786, %v2778
    %v3019 = vpack.c.bf16 %v2787, %v2779
    %v3020 = vpack.c.bf16 %v2788, %v2780
    %v3021 = vpack.c.bf16 %v2789, %v2781
    %v3022 = vpack.c.bf16 %v2790, %v2782
    %v3023 = vpack.c.bf16 %v2791, %v2783
    %v3024 = vpack.c.bf16 %v2792, %v2784
    %v3025 = vpack.c.bf16 %v2801, %v2793
    %v3026 = vpack.c.bf16 %v2802, %v2794
    %v3027 = vpack.c.bf16 %v2803, %v2795
    %v3028 = vpack.c.bf16 %v2804, %v2796
    %v3029 = vpack.c.bf16 %v2805, %v2797
    %v3030 = vpack.c.bf16 %v2806, %v2798
    %v3031 = vpack.c.bf16 %v2807, %v2799
    %v3032 = vpack.c.bf16 %v2808, %v2800
    %v3033 = vpack.c.bf16 %v2817, %v2809
    %v3034 = vpack.c.bf16 %v2818, %v2810
    %v3035 = vpack.c.bf16 %v2819, %v2811
    %v3036 = vpack.c.bf16 %v2820, %v2812
    %v3037 = vpack.c.bf16 %v2821, %v2813
    %v3038 = vpack.c.bf16 %v2822, %v2814
    %v3039 = vpack.c.bf16 %v2823, %v2815
    %v3040 = vpack.c.bf16 %v2824, %v2816
    %v3041 = vpack.c.bf16 %v2833, %v2825
    %v3042 = vpack.c.bf16 %v2834, %v2826
    %v3043 = vpack.c.bf16 %v2835, %v2827
    %v3044 = vpack.c.bf16 %v2836, %v2828
    %v3045 = vpack.c.bf16 %v2837, %v2829
    %v3046 = vpack.c.bf16 %v2838, %v2830
    %v3047 = vpack.c.bf16 %v2839, %v2831
    %v3048 = vpack.c.bf16 %v2840, %v2832
    %v3049 = vpack.c.bf16 %v2849, %v2841
    %v3050 = vpack.c.bf16 %v2850, %v2842
    %v3051 = vpack.c.bf16 %v2851, %v2843
    %v3052 = vpack.c.bf16 %v2852, %v2844
    %v3053 = vpack.c.bf16 %v2853, %v2845
    %v3054 = vpack.c.bf16 %v2854, %v2846
    %v3055 = vpack.c.bf16 %v2855, %v2847
    %v3056 = vpack.c.bf16 %v2856, %v2848
    %v3057 = vpack.c.bf16 %v2865, %v2857
    %v3058 = vpack.c.bf16 %v2866, %v2858
    %v3059 = vpack.c.bf16 %v2867, %v2859
    %v3060 = vpack.c.bf16 %v2868, %v2860
    %v3061 = vpack.c.bf16 %v2869, %v2861
    %v3062 = vpack.c.bf16 %v2870, %v2862
    %v3063 = vpack.c.bf16 %v2871, %v2863
    %v3064 = vpack.c.bf16 %v2872, %v2864
    %v3065 = vpack.c.bf16 %v2881, %v2873
    %v3066 = vpack.c.bf16 %v2882, %v2874
    %v3067 = vpack.c.bf16 %v2883, %v2875
    %v3068 = vpack.c.bf16 %v2884, %v2876
    %v3069 = vpack.c.bf16 %v2885, %v2877
    %v3070 = vpack.c.bf16 %v2886, %v2878
    %v3071 = vpack.c.bf16 %v2887, %v2879
    %v3072 = vpack.c.bf16 %v2888, %v2880
    %v3073 = vpack.c.bf16 %v2897, %v2889
    %v3074 = vpack.c.bf16 %v2898, %v2890
    %v3075 = vpack.c.bf16 %v2899, %v2891
    %v3076 = vpack.c.bf16 %v2900, %v2892
    %v3077 = vpack.c.bf16 %v2901, %v2893
    %v3078 = vpack.c.bf16 %v2902, %v2894
    %v3079 = vpack.c.bf16 %v2903, %v2895
    %v3080 = vpack.c.bf16 %v2904, %v2896
    %v3081 = vpack.c.bf16 %v2913, %v2905
    %v3082 = vpack.c.bf16 %v2914, %v2906
    %v3083 = vpack.c.bf16 %v2915, %v2907
    %v3084 = vpack.c.bf16 %v2916, %v2908
    %v3085 = vpack.c.bf16 %v2917, %v2909
    %v3086 = vpack.c.bf16 %v2918, %v2910
    %v3087 = vpack.c.bf16 %v2919, %v2911
    %v3088 = vpack.c.bf16 %v2920, %v2912
    %v3089 = vpack.c.bf16 %v2929, %v2921
    %v3090 = vpack.c.bf16 %v2930, %v2922
    %v3091 = vpack.c.bf16 %v2931, %v2923
    %v3092 = vpack.c.bf16 %v2932, %v2924
    %v3093 = vpack.c.bf16 %v2933, %v2925
    %v3094 = vpack.c.bf16 %v2934, %v2926
    %v3095 = vpack.c.bf16 %v2935, %v2927
    %v3096 = vpack.c.bf16 %v2936, %v2928
    %v3097 = vpack.c.bf16 %v2945, %v2937
    %v3098 = vpack.c.bf16 %v2946, %v2938
    %v3099 = vpack.c.bf16 %v2947, %v2939
    %v3100 = vpack.c.bf16 %v2948, %v2940
    %v3101 = vpack.c.bf16 %v2949, %v2941
    %v3102 = vpack.c.bf16 %v2950, %v2942
    %v3103 = vpack.c.bf16 %v2951, %v2943
    %v3104 = vpack.c.bf16 %v2952, %v2944
    %v3105 = vpack.c.bf16 %v2961, %v2953
    %v3106 = vpack.c.bf16 %v2962, %v2954
    %v3107 = vpack.c.bf16 %v2963, %v2955
    %v3108 = vpack.c.bf16 %v2964, %v2956
    %v3109 = vpack.c.bf16 %v2965, %v2957
    %v3110 = vpack.c.bf16 %v2966, %v2958
    %v3111 = vpack.c.bf16 %v2967, %v2959
    %v3112 = vpack.c.bf16 %v2968, %v2960
    %v3113 = vpack.c.bf16 %v2977, %v2969
    %v3114 = vpack.c.bf16 %v2978, %v2970
    %v3115 = vpack.c.bf16 %v2979, %v2971
    %v3116 = vpack.c.bf16 %v2980, %v2972
    %v3117 = vpack.c.bf16 %v2981, %v2973
    %v3118 = vpack.c.bf16 %v2982, %v2974
    %v3119 = vpack.c.bf16 %v2983, %v2975
    %v3120 = vpack.c.bf16 %v2984, %v2976
    %v3121 = vpack.c.bf16 %v2993, %v2985
    %v3122 = vpack.c.bf16 %v2994, %v2986
    %v3123 = vpack.c.bf16 %v2995, %v2987
    %v3124 = vpack.c.bf16 %v2996, %v2988
    %v3125 = vpack.c.bf16 %v2997, %v2989
    %v3126 = vpack.c.bf16 %v2998, %v2990
    %v3127 = vpack.c.bf16 %v2999, %v2991
    %v3128 = vpack.c.bf16 %v3000, %v2992
    %v3129 = vmax.bf16 %v3001, %v3009
    %v3130 = vmax.bf16 %v3129, %v3017
    %v3131 = vmax.bf16 %v3130, %v3025
    %v3132 = vmax.bf16 %v3131, %v3033
    %v3133 = vmax.bf16 %v3132, %v3041
    %v3134 = vmax.bf16 %v3133, %v3049
    %v3135 = vmax.bf16 %v3134, %v3057
    %v3136 = vunpack.i.l.bf16 %v3135
    %v3137 = vunpack.i.h.bf16 %v3135
    %v3138 = vmax.f32 %v3136, %v3137
    %v3139 = vrot.slane %v3138, 4
    %v3140 = vmax.f32 %v3138, %v3139
    %v3141 = vrot.slane %v3140, 2
    %v3142 = vmax.f32 %v3140, %v3141
    %v3143 = vrot.slane %v3142, 1
    %v3144 = vmax.f32 %v3142, %v3143
    %v3145 = vpack.i.bf16 %v3144, %v3144
    %v3146 = vmax.bf16 %v3002, %v3010
    %v3147 = vmax.bf16 %v3146, %v3018
    %v3148 = vmax.bf16 %v3147, %v3026
    %v3149 = vmax.bf16 %v3148, %v3034
    %v3150 = vmax.bf16 %v3149, %v3042
    %v3151 = vmax.bf16 %v3150, %v3050
    %v3152 = vmax.bf16 %v3151, %v3058
    %v3153 = vunpack.i.l.bf16 %v3152
    %v3154 = vunpack.i.h.bf16 %v3152
    %v3155 = vmax.f32 %v3153, %v3154
    %v3156 = vrot.slane %v3155, 4
    %v3157 = vmax.f32 %v3155, %v3156
    %v3158 = vrot.slane %v3157, 2
    %v3159 = vmax.f32 %v3157, %v3158
    %v3160 = vrot.slane %v3159, 1
    %v3161 = vmax.f32 %v3159, %v3160
    %v3162 = vpack.i.bf16 %v3161, %v3161
    %v3163 = vmax.bf16 %v3003, %v3011
    %v3164 = vmax.bf16 %v3163, %v3019
    %v3165 = vmax.bf16 %v3164, %v3027
    %v3166 = vmax.bf16 %v3165, %v3035
    %v3167 = vmax.bf16 %v3166, %v3043
    %v3168 = vmax.bf16 %v3167, %v3051
    %v3169 = vmax.bf16 %v3168, %v3059
    %v3170 = vunpack.i.l.bf16 %v3169
    %v3171 = vunpack.i.h.bf16 %v3169
    %v3172 = vmax.f32 %v3170, %v3171
    %v3173 = vrot.slane %v3172, 4
    %v3174 = vmax.f32 %v3172, %v3173
    %v3175 = vrot.slane %v3174, 2
    %v3176 = vmax.f32 %v3174, %v3175
    %v3177 = vrot.slane %v3176, 1
    %v3178 = vmax.f32 %v3176, %v3177
    %v3179 = vpack.i.bf16 %v3178, %v3178
    %v3180 = vmax.bf16 %v3004, %v3012
    %v3181 = vmax.bf16 %v3180, %v3020
    %v3182 = vmax.bf16 %v3181, %v3028
    %v3183 = vmax.bf16 %v3182, %v3036
    %v3184 = vmax.bf16 %v3183, %v3044
    %v3185 = vmax.bf16 %v3184, %v3052
    %v3186 = vmax.bf16 %v3185, %v3060
    %v3187 = vunpack.i.l.bf16 %v3186
    %v3188 = vunpack.i.h.bf16 %v3186
    %v3189 = vmax.f32 %v3187, %v3188
    %v3190 = vrot.slane %v3189, 4
    %v3191 = vmax.f32 %v3189, %v3190
    %v3192 = vrot.slane %v3191, 2
    %v3193 = vmax.f32 %v3191, %v3192
    %v3194 = vrot.slane %v3193, 1
    %v3195 = vmax.f32 %v3193, %v3194
    %v3196 = vpack.i.bf16 %v3195, %v3195
    %v3197 = vmax.bf16 %v3005, %v3013
    %v3198 = vmax.bf16 %v3197, %v3021
    %v3199 = vmax.bf16 %v3198, %v3029
    %v3200 = vmax.bf16 %v3199, %v3037
    %v3201 = vmax.bf16 %v3200, %v3045
    %v3202 = vmax.bf16 %v3201, %v3053
    %v3203 = vmax.bf16 %v3202, %v3061
    %v3204 = vunpack.i.l.bf16 %v3203
    %v3205 = vunpack.i.h.bf16 %v3203
    %v3206 = vmax.f32 %v3204, %v3205
    %v3207 = vrot.slane %v3206, 4
    %v3208 = vmax.f32 %v3206, %v3207
    %v3209 = vrot.slane %v3208, 2
    %v3210 = vmax.f32 %v3208, %v3209
    %v3211 = vrot.slane %v3210, 1
    %v3212 = vmax.f32 %v3210, %v3211
    %v3213 = vpack.i.bf16 %v3212, %v3212
    %v3214 = vmax.bf16 %v3006, %v3014
    %v3215 = vmax.bf16 %v3214, %v3022
    %v3216 = vmax.bf16 %v3215, %v3030
    %v3217 = vmax.bf16 %v3216, %v3038
    %v3218 = vmax.bf16 %v3217, %v3046
    %v3219 = vmax.bf16 %v3218, %v3054
    %v3220 = vmax.bf16 %v3219, %v3062
    %v3221 = vunpack.i.l.bf16 %v3220
    %v3222 = vunpack.i.h.bf16 %v3220
    %v3223 = vmax.f32 %v3221, %v3222
    %v3224 = vrot.slane %v3223, 4
    %v3225 = vmax.f32 %v3223, %v3224
    %v3226 = vrot.slane %v3225, 2
    %v3227 = vmax.f32 %v3225, %v3226
    %v3228 = vrot.slane %v3227, 1
    %v3229 = vmax.f32 %v3227, %v3228
    %v3230 = vpack.i.bf16 %v3229, %v3229
    %v3231 = vmax.bf16 %v3007, %v3015
    %v3232 = vmax.bf16 %v3231, %v3023
    %v3233 = vmax.bf16 %v3232, %v3031
    %v3234 = vmax.bf16 %v3233, %v3039
    %v3235 = vmax.bf16 %v3234, %v3047
    %v3236 = vmax.bf16 %v3235, %v3055
    %v3237 = vmax.bf16 %v3236, %v3063
    %v3238 = vunpack.i.l.bf16 %v3237
    %v3239 = vunpack.i.h.bf16 %v3237
    %v3240 = vmax.f32 %v3238, %v3239
    %v3241 = vrot.slane %v3240, 4
    %v3242 = vmax.f32 %v3240, %v3241
    %v3243 = vrot.slane %v3242, 2
    %v3244 = vmax.f32 %v3242, %v3243
    %v3245 = vrot.slane %v3244, 1
    %v3246 = vmax.f32 %v3244, %v3245
    %v3247 = vpack.i.bf16 %v3246, %v3246
    %v3248 = vmax.bf16 %v3008, %v3016
    %v3249 = vmax.bf16 %v3248, %v3024
    %v3250 = vmax.bf16 %v3249, %v3032
    %v3251 = vmax.bf16 %v3250, %v3040
    %v3252 = vmax.bf16 %v3251, %v3048
    %v3253 = vmax.bf16 %v3252, %v3056
    %v3254 = vmax.bf16 %v3253, %v3064
    %v3255 = vunpack.i.l.bf16 %v3254
    %v3256 = vunpack.i.h.bf16 %v3254
    %v3257 = vmax.f32 %v3255, %v3256
    %v3258 = vrot.slane %v3257, 4
    %v3259 = vmax.f32 %v3257, %v3258
    %v3260 = vrot.slane %v3259, 2
    %v3261 = vmax.f32 %v3259, %v3260
    %v3262 = vrot.slane %v3261, 1
    %v3263 = vmax.f32 %v3261, %v3262
    %v3264 = vpack.i.bf16 %v3263, %v3263
    %v3265 = vmax.bf16 %v3065, %v3073
    %v3266 = vmax.bf16 %v3265, %v3081
    %v3267 = vmax.bf16 %v3266, %v3089
    %v3268 = vmax.bf16 %v3267, %v3097
    %v3269 = vmax.bf16 %v3268, %v3105
    %v3270 = vmax.bf16 %v3269, %v3113
    %v3271 = vmax.bf16 %v3270, %v3121
    %v3272 = vunpack.i.l.bf16 %v3271
    %v3273 = vunpack.i.h.bf16 %v3271
    %v3274 = vmax.f32 %v3272, %v3273
    %v3275 = vrot.slane %v3274, 4
    %v3276 = vmax.f32 %v3274, %v3275
    %v3277 = vrot.slane %v3276, 2
    %v3278 = vmax.f32 %v3276, %v3277
    %v3279 = vrot.slane %v3278, 1
    %v3280 = vmax.f32 %v3278, %v3279
    %v3281 = vpack.i.bf16 %v3280, %v3280
    %v3282 = vmax.bf16 %v3066, %v3074
    %v3283 = vmax.bf16 %v3282, %v3082
    %v3284 = vmax.bf16 %v3283, %v3090
    %v3285 = vmax.bf16 %v3284, %v3098
    %v3286 = vmax.bf16 %v3285, %v3106
    %v3287 = vmax.bf16 %v3286, %v3114
    %v3288 = vmax.bf16 %v3287, %v3122
    %v3289 = vunpack.i.l.bf16 %v3288
    %v3290 = vunpack.i.h.bf16 %v3288
    %v3291 = vmax.f32 %v3289, %v3290
    %v3292 = vrot.slane %v3291, 4
    %v3293 = vmax.f32 %v3291, %v3292
    %v3294 = vrot.slane %v3293, 2
    %v3295 = vmax.f32 %v3293, %v3294
    %v3296 = vrot.slane %v3295, 1
    %v3297 = vmax.f32 %v3295, %v3296
    %v3298 = vpack.i.bf16 %v3297, %v3297
    %v3299 = vmax.bf16 %v3067, %v3075
    %v3300 = vmax.bf16 %v3299, %v3083
    %v3301 = vmax.bf16 %v3300, %v3091
    %v3302 = vmax.bf16 %v3301, %v3099
    %v3303 = vmax.bf16 %v3302, %v3107
    %v3304 = vmax.bf16 %v3303, %v3115
    %v3305 = vmax.bf16 %v3304, %v3123
    %v3306 = vunpack.i.l.bf16 %v3305
    %v3307 = vunpack.i.h.bf16 %v3305
    %v3308 = vmax.f32 %v3306, %v3307
    %v3309 = vrot.slane %v3308, 4
    %v3310 = vmax.f32 %v3308, %v3309
    %v3311 = vrot.slane %v3310, 2
    %v3312 = vmax.f32 %v3310, %v3311
    %v3313 = vrot.slane %v3312, 1
    %v3314 = vmax.f32 %v3312, %v3313
    %v3315 = vpack.i.bf16 %v3314, %v3314
    %v3316 = vmax.bf16 %v3068, %v3076
    %v3317 = vmax.bf16 %v3316, %v3084
    %v3318 = vmax.bf16 %v3317, %v3092
    %v3319 = vmax.bf16 %v3318, %v3100
    %v3320 = vmax.bf16 %v3319, %v3108
    %v3321 = vmax.bf16 %v3320, %v3116
    %v3322 = vmax.bf16 %v3321, %v3124
    %v3323 = vunpack.i.l.bf16 %v3322
    %v3324 = vunpack.i.h.bf16 %v3322
    %v3325 = vmax.f32 %v3323, %v3324
    %v3326 = vrot.slane %v3325, 4
    %v3327 = vmax.f32 %v3325, %v3326
    %v3328 = vrot.slane %v3327, 2
    %v3329 = vmax.f32 %v3327, %v3328
    %v3330 = vrot.slane %v3329, 1
    %v3331 = vmax.f32 %v3329, %v3330
    %v3332 = vpack.i.bf16 %v3331, %v3331
    %v3333 = vmax.bf16 %v3069, %v3077
    %v3334 = vmax.bf16 %v3333, %v3085
    %v3335 = vmax.bf16 %v3334, %v3093
    %v3336 = vmax.bf16 %v3335, %v3101
    %v3337 = vmax.bf16 %v3336, %v3109
    %v3338 = vmax.bf16 %v3337, %v3117
    %v3339 = vmax.bf16 %v3338, %v3125
    %v3340 = vunpack.i.l.bf16 %v3339
    %v3341 = vunpack.i.h.bf16 %v3339
    %v3342 = vmax.f32 %v3340, %v3341
    %v3343 = vrot.slane %v3342, 4
    %v3344 = vmax.f32 %v3342, %v3343
    %v3345 = vrot.slane %v3344, 2
    %v3346 = vmax.f32 %v3344, %v3345
    %v3347 = vrot.slane %v3346, 1
    %v3348 = vmax.f32 %v3346, %v3347
    %v3349 = vpack.i.bf16 %v3348, %v3348
    %v3350 = vmax.bf16 %v3070, %v3078
    %v3351 = vmax.bf16 %v3350, %v3086
    %v3352 = vmax.bf16 %v3351, %v3094
    %v3353 = vmax.bf16 %v3352, %v3102
    %v3354 = vmax.bf16 %v3353, %v3110
    %v3355 = vmax.bf16 %v3354, %v3118
    %v3356 = vmax.bf16 %v3355, %v3126
    %v3357 = vunpack.i.l.bf16 %v3356
    %v3358 = vunpack.i.h.bf16 %v3356
    %v3359 = vmax.f32 %v3357, %v3358
    %v3360 = vrot.slane %v3359, 4
    %v3361 = vmax.f32 %v3359, %v3360
    %v3362 = vrot.slane %v3361, 2
    %v3363 = vmax.f32 %v3361, %v3362
    %v3364 = vrot.slane %v3363, 1
    %v3365 = vmax.f32 %v3363, %v3364
    %v3366 = vpack.i.bf16 %v3365, %v3365
    %v3367 = vmax.bf16 %v3071, %v3079
    %v3368 = vmax.bf16 %v3367, %v3087
    %v3369 = vmax.bf16 %v3368, %v3095
    %v3370 = vmax.bf16 %v3369, %v3103
    %v3371 = vmax.bf16 %v3370, %v3111
    %v3372 = vmax.bf16 %v3371, %v3119
    %v3373 = vmax.bf16 %v3372, %v3127
    %v3374 = vunpack.i.l.bf16 %v3373
    %v3375 = vunpack.i.h.bf16 %v3373
    %v3376 = vmax.f32 %v3374, %v3375
    %v3377 = vrot.slane %v3376, 4
    %v3378 = vmax.f32 %v3376, %v3377
    %v3379 = vrot.slane %v3378, 2
    %v3380 = vmax.f32 %v3378, %v3379
    %v3381 = vrot.slane %v3380, 1
    %v3382 = vmax.f32 %v3380, %v3381
    %v3383 = vpack.i.bf16 %v3382, %v3382
    %v3384 = vmax.bf16 %v3072, %v3080
    %v3385 = vmax.bf16 %v3384, %v3088
    %v3386 = vmax.bf16 %v3385, %v3096
    %v3387 = vmax.bf16 %v3386, %v3104
    %v3388 = vmax.bf16 %v3387, %v3112
    %v3389 = vmax.bf16 %v3388, %v3120
    %v3390 = vmax.bf16 %v3389, %v3128
    %v3391 = vunpack.i.l.bf16 %v3390
    %v3392 = vunpack.i.h.bf16 %v3390
    %v3393 = vmax.f32 %v3391, %v3392
    %v3394 = vrot.slane %v3393, 4
    %v3395 = vmax.f32 %v3393, %v3394
    %v3396 = vrot.slane %v3395, 2
    %v3397 = vmax.f32 %v3395, %v3396
    %v3398 = vrot.slane %v3397, 1
    %v3399 = vmax.f32 %v3397, %v3398
    %v3400 = vpack.i.bf16 %v3399, %v3399
    %v3401 = vld [vmem:[#allocation20] sm:$0xff]
    %v3402 = vld [vmem:[#allocation20 + $0x8] sm:$0xff]
    %v3403 = vld [vmem:[#allocation20 + $0x10] sm:$0xff]
    %v3404 = vld [vmem:[#allocation20 + $0x18] sm:$0xff]
    %v3405 = vld [vmem:[#allocation20 + $0x20] sm:$0xff]
    %v3406 = vld [vmem:[#allocation20 + $0x28] sm:$0xff]
    %v3407 = vld [vmem:[#allocation20 + $0x30] sm:$0xff]
    %v3408 = vld [vmem:[#allocation20 + $0x38] sm:$0xff]
    %v3409 = vld [vmem:[#allocation20 + $0x40] sm:$0xff]
    %v3410 = vld [vmem:[#allocation20 + $0x48] sm:$0xff]
    %v3411 = vld [vmem:[#allocation20 + $0x50] sm:$0xff]
    %v3412 = vld [vmem:[#allocation20 + $0x58] sm:$0xff]
    %v3413 = vld [vmem:[#allocation20 + $0x60] sm:$0xff]
    %v3414 = vld [vmem:[#allocation20 + $0x68] sm:$0xff]
    %v3415 = vld [vmem:[#allocation20 + $0x70] sm:$0xff]
    %v3416 = vld [vmem:[#allocation20 + $0x78] sm:$0xff]
    %v3417 = vld [vmem:[#allocation20 + $0x80] sm:$0xff]
    %v3418 = vld [vmem:[#allocation20 + $0x88] sm:$0xff]
    %v3419 = vld [vmem:[#allocation20 + $0x90] sm:$0xff]
    %v3420 = vld [vmem:[#allocation20 + $0x98] sm:$0xff]
    %v3421 = vld [vmem:[#allocation20 + $0xa0] sm:$0xff]
    %v3422 = vld [vmem:[#allocation20 + $0xa8] sm:$0xff]
    %v3423 = vld [vmem:[#allocation20 + $0xb0] sm:$0xff]
    %v3424 = vld [vmem:[#allocation20 + $0xb8] sm:$0xff]
    %v3425 = vld [vmem:[#allocation20 + $0xc0] sm:$0xff]
    %v3426 = vld [vmem:[#allocation20 + $0xc8] sm:$0xff]
    %v3427 = vld [vmem:[#allocation20 + $0xd0] sm:$0xff]
    %v3428 = vld [vmem:[#allocation20 + $0xd8] sm:$0xff]
    %v3429 = vld [vmem:[#allocation20 + $0xe0] sm:$0xff]
    %v3430 = vld [vmem:[#allocation20 + $0xe8] sm:$0xff]
    %v3431 = vld [vmem:[#allocation20 + $0xf0] sm:$0xff]
    %v3432 = vld [vmem:[#allocation20 + $0xf8] sm:$0xff]
    %v3433 = vld [vmem:[#allocation20 + $0x100] sm:$0xff]
    %v3434 = vld [vmem:[#allocation20 + $0x108] sm:$0xff]
    %v3435 = vld [vmem:[#allocation20 + $0x110] sm:$0xff]
    %v3436 = vld [vmem:[#allocation20 + $0x118] sm:$0xff]
    %v3437 = vld [vmem:[#allocation20 + $0x120] sm:$0xff]
    %v3438 = vld [vmem:[#allocation20 + $0x128] sm:$0xff]
    %v3439 = vld [vmem:[#allocation20 + $0x130] sm:$0xff]
    %v3440 = vld [vmem:[#allocation20 + $0x138] sm:$0xff]
    %v3441 = vld [vmem:[#allocation20 + $0x140] sm:$0xff]
    %v3442 = vld [vmem:[#allocation20 + $0x148] sm:$0xff]
    %v3443 = vld [vmem:[#allocation20 + $0x150] sm:$0xff]
    %v3444 = vld [vmem:[#allocation20 + $0x158] sm:$0xff]
    %v3445 = vld [vmem:[#allocation20 + $0x160] sm:$0xff]
    %v3446 = vld [vmem:[#allocation20 + $0x168] sm:$0xff]
    %v3447 = vld [vmem:[#allocation20 + $0x170] sm:$0xff]
    %v3448 = vld [vmem:[#allocation20 + $0x178] sm:$0xff]
    %v3449 = vld [vmem:[#allocation20 + $0x180] sm:$0xff]
    %v3450 = vld [vmem:[#allocation20 + $0x188] sm:$0xff]
    %v3451 = vld [vmem:[#allocation20 + $0x190] sm:$0xff]
    %v3452 = vld [vmem:[#allocation20 + $0x198] sm:$0xff]
    %v3453 = vld [vmem:[#allocation20 + $0x1a0] sm:$0xff]
    %v3454 = vld [vmem:[#allocation20 + $0x1a8] sm:$0xff]
    %v3455 = vld [vmem:[#allocation20 + $0x1b0] sm:$0xff]
    %v3456 = vld [vmem:[#allocation20 + $0x1b8] sm:$0xff]
    %v3457 = vld [vmem:[#allocation20 + $0x1c0] sm:$0xff]
    %v3458 = vld [vmem:[#allocation20 + $0x1c8] sm:$0xff]
    %v3459 = vld [vmem:[#allocation20 + $0x1d0] sm:$0xff]
    %v3460 = vld [vmem:[#allocation20 + $0x1d8] sm:$0xff]
    %v3461 = vld [vmem:[#allocation20 + $0x1e0] sm:$0xff]
    %v3462 = vld [vmem:[#allocation20 + $0x1e8] sm:$0xff]
    %v3463 = vld [vmem:[#allocation20 + $0x1f0] sm:$0xff]
    %v3464 = vld [vmem:[#allocation20 + $0x1f8] sm:$0xff]
    %v3465 = vld [vmem:[#allocation20 + $0x200] sm:$0xff]
    %v3466 = vld [vmem:[#allocation20 + $0x208] sm:$0xff]
    %v3467 = vld [vmem:[#allocation20 + $0x210] sm:$0xff]
    %v3468 = vld [vmem:[#allocation20 + $0x218] sm:$0xff]
    %v3469 = vld [vmem:[#allocation20 + $0x220] sm:$0xff]
    %v3470 = vld [vmem:[#allocation20 + $0x228] sm:$0xff]
    %v3471 = vld [vmem:[#allocation20 + $0x230] sm:$0xff]
    %v3472 = vld [vmem:[#allocation20 + $0x238] sm:$0xff]
    %v3473 = vld [vmem:[#allocation20 + $0x240] sm:$0xff]
    %v3474 = vld [vmem:[#allocation20 + $0x248] sm:$0xff]
    %v3475 = vld [vmem:[#allocation20 + $0x250] sm:$0xff]
    %v3476 = vld [vmem:[#allocation20 + $0x258] sm:$0xff]
    %v3477 = vld [vmem:[#allocation20 + $0x260] sm:$0xff]
    %v3478 = vld [vmem:[#allocation20 + $0x268] sm:$0xff]
    %v3479 = vld [vmem:[#allocation20 + $0x270] sm:$0xff]
    %v3480 = vld [vmem:[#allocation20 + $0x278] sm:$0xff]
    %v3481 = vld [vmem:[#allocation20 + $0x280] sm:$0xff]
    %v3482 = vld [vmem:[#allocation20 + $0x288] sm:$0xff]
    %v3483 = vld [vmem:[#allocation20 + $0x290] sm:$0xff]
    %v3484 = vld [vmem:[#allocation20 + $0x298] sm:$0xff]
    %v3485 = vld [vmem:[#allocation20 + $0x2a0] sm:$0xff]
    %v3486 = vld [vmem:[#allocation20 + $0x2a8] sm:$0xff]
    %v3487 = vld [vmem:[#allocation20 + $0x2b0] sm:$0xff]
    %v3488 = vld [vmem:[#allocation20 + $0x2b8] sm:$0xff]
    %v3489 = vld [vmem:[#allocation20 + $0x2c0] sm:$0xff]
    %v3490 = vld [vmem:[#allocation20 + $0x2c8] sm:$0xff]
    %v3491 = vld [vmem:[#allocation20 + $0x2d0] sm:$0xff]
    %v3492 = vld [vmem:[#allocation20 + $0x2d8] sm:$0xff]
    %v3493 = vld [vmem:[#allocation20 + $0x2e0] sm:$0xff]
    %v3494 = vld [vmem:[#allocation20 + $0x2e8] sm:$0xff]
    %v3495 = vld [vmem:[#allocation20 + $0x2f0] sm:$0xff]
    %v3496 = vld [vmem:[#allocation20 + $0x2f8] sm:$0xff]
    %v3497 = vld [vmem:[#allocation20 + $0x300] sm:$0xff]
    %v3498 = vld [vmem:[#allocation20 + $0x308] sm:$0xff]
    %v3499 = vld [vmem:[#allocation20 + $0x310] sm:$0xff]
    %v3500 = vld [vmem:[#allocation20 + $0x318] sm:$0xff]
    %v3501 = vld [vmem:[#allocation20 + $0x320] sm:$0xff]
    %v3502 = vld [vmem:[#allocation20 + $0x328] sm:$0xff]
    %v3503 = vld [vmem:[#allocation20 + $0x330] sm:$0xff]
    %v3504 = vld [vmem:[#allocation20 + $0x338] sm:$0xff]
    %v3505 = vld [vmem:[#allocation20 + $0x340] sm:$0xff]
    %v3506 = vld [vmem:[#allocation20 + $0x348] sm:$0xff]
    %v3507 = vld [vmem:[#allocation20 + $0x350] sm:$0xff]
    %v3508 = vld [vmem:[#allocation20 + $0x358] sm:$0xff]
    %v3509 = vld [vmem:[#allocation20 + $0x360] sm:$0xff]
    %v3510 = vld [vmem:[#allocation20 + $0x368] sm:$0xff]
    %v3511 = vld [vmem:[#allocation20 + $0x370] sm:$0xff]
    %v3512 = vld [vmem:[#allocation20 + $0x378] sm:$0xff]
    %v3513 = vld [vmem:[#allocation20 + $0x380] sm:$0xff]
    %v3514 = vld [vmem:[#allocation20 + $0x388] sm:$0xff]
    %v3515 = vld [vmem:[#allocation20 + $0x390] sm:$0xff]
    %v3516 = vld [vmem:[#allocation20 + $0x398] sm:$0xff]
    %v3517 = vld [vmem:[#allocation20 + $0x3a0] sm:$0xff]
    %v3518 = vld [vmem:[#allocation20 + $0x3a8] sm:$0xff]
    %v3519 = vld [vmem:[#allocation20 + $0x3b0] sm:$0xff]
    %v3520 = vld [vmem:[#allocation20 + $0x3b8] sm:$0xff]
    %v3521 = vld [vmem:[#allocation20 + $0x3c0] sm:$0xff]
    %v3522 = vld [vmem:[#allocation20 + $0x3c8] sm:$0xff]
    %v3523 = vld [vmem:[#allocation20 + $0x3d0] sm:$0xff]
    %v3524 = vld [vmem:[#allocation20 + $0x3d8] sm:$0xff]
    %v3525 = vld [vmem:[#allocation20 + $0x3e0] sm:$0xff]
    %v3526 = vld [vmem:[#allocation20 + $0x3e8] sm:$0xff]
    %v3527 = vld [vmem:[#allocation20 + $0x3f0] sm:$0xff]
    %v3528 = vld [vmem:[#allocation20 + $0x3f8] sm:$0xff]
    %v3529 = vld [vmem:[#allocation20 + $0x400] sm:$0xff]
    %v3530 = vld [vmem:[#allocation20 + $0x408] sm:$0xff]
    %v3531 = vld [vmem:[#allocation20 + $0x410] sm:$0xff]
    %v3532 = vld [vmem:[#allocation20 + $0x418] sm:$0xff]
    %v3533 = vld [vmem:[#allocation20 + $0x420] sm:$0xff]
    %v3534 = vld [vmem:[#allocation20 + $0x428] sm:$0xff]
    %v3535 = vld [vmem:[#allocation20 + $0x430] sm:$0xff]
    %v3536 = vld [vmem:[#allocation20 + $0x438] sm:$0xff]
    %v3537 = vld [vmem:[#allocation20 + $0x440] sm:$0xff]
    %v3538 = vld [vmem:[#allocation20 + $0x448] sm:$0xff]
    %v3539 = vld [vmem:[#allocation20 + $0x450] sm:$0xff]
    %v3540 = vld [vmem:[#allocation20 + $0x458] sm:$0xff]
    %v3541 = vld [vmem:[#allocation20 + $0x460] sm:$0xff]
    %v3542 = vld [vmem:[#allocation20 + $0x468] sm:$0xff]
    %v3543 = vld [vmem:[#allocation20 + $0x470] sm:$0xff]
    %v3544 = vld [vmem:[#allocation20 + $0x478] sm:$0xff]
    %v3545 = vld [vmem:[#allocation20 + $0x480] sm:$0xff]
    %v3546 = vld [vmem:[#allocation20 + $0x488] sm:$0xff]
    %v3547 = vld [vmem:[#allocation20 + $0x490] sm:$0xff]
    %v3548 = vld [vmem:[#allocation20 + $0x498] sm:$0xff]
    %v3549 = vld [vmem:[#allocation20 + $0x4a0] sm:$0xff]
    %v3550 = vld [vmem:[#allocation20 + $0x4a8] sm:$0xff]
    %v3551 = vld [vmem:[#allocation20 + $0x4b0] sm:$0xff]
    %v3552 = vld [vmem:[#allocation20 + $0x4b8] sm:$0xff]
    %v3553 = vld [vmem:[#allocation20 + $0x4c0] sm:$0xff]
    %v3554 = vld [vmem:[#allocation20 + $0x4c8] sm:$0xff]
    %v3555 = vld [vmem:[#allocation20 + $0x4d0] sm:$0xff]
    %v3556 = vld [vmem:[#allocation20 + $0x4d8] sm:$0xff]
    %v3557 = vld [vmem:[#allocation20 + $0x4e0] sm:$0xff]
    %v3558 = vld [vmem:[#allocation20 + $0x4e8] sm:$0xff]
    %v3559 = vld [vmem:[#allocation20 + $0x4f0] sm:$0xff]
    %v3560 = vld [vmem:[#allocation20 + $0x4f8] sm:$0xff]
    %v3561 = vld [vmem:[#allocation20 + $0x500] sm:$0xff]
    %v3562 = vld [vmem:[#allocation20 + $0x508] sm:$0xff]
    %v3563 = vld [vmem:[#allocation20 + $0x510] sm:$0xff]
    %v3564 = vld [vmem:[#allocation20 + $0x518] sm:$0xff]
    %v3565 = vld [vmem:[#allocation20 + $0x520] sm:$0xff]
    %v3566 = vld [vmem:[#allocation20 + $0x528] sm:$0xff]
    %v3567 = vld [vmem:[#allocation20 + $0x530] sm:$0xff]
    %v3568 = vld [vmem:[#allocation20 + $0x538] sm:$0xff]
    %v3569 = vld [vmem:[#allocation20 + $0x540] sm:$0xff]
    %v3570 = vld [vmem:[#allocation20 + $0x548] sm:$0xff]
    %v3571 = vld [vmem:[#allocation20 + $0x550] sm:$0xff]
    %v3572 = vld [vmem:[#allocation20 + $0x558] sm:$0xff]
    %v3573 = vld [vmem:[#allocation20 + $0x560] sm:$0xff]
    %v3574 = vld [vmem:[#allocation20 + $0x568] sm:$0xff]
    %v3575 = vld [vmem:[#allocation20 + $0x570] sm:$0xff]
    %v3576 = vld [vmem:[#allocation20 + $0x578] sm:$0xff]
    %v3577 = vld [vmem:[#allocation20 + $0x580] sm:$0xff]
    %v3578 = vld [vmem:[#allocation20 + $0x588] sm:$0xff]
    %v3579 = vld [vmem:[#allocation20 + $0x590] sm:$0xff]
    %v3580 = vld [vmem:[#allocation20 + $0x598] sm:$0xff]
    %v3581 = vld [vmem:[#allocation20 + $0x5a0] sm:$0xff]
    %v3582 = vld [vmem:[#allocation20 + $0x5a8] sm:$0xff]
    %v3583 = vld [vmem:[#allocation20 + $0x5b0] sm:$0xff]
    %v3584 = vld [vmem:[#allocation20 + $0x5b8] sm:$0xff]
    %v3585 = vld [vmem:[#allocation20 + $0x5c0] sm:$0xff]
    %v3586 = vld [vmem:[#allocation20 + $0x5c8] sm:$0xff]
    %v3587 = vld [vmem:[#allocation20 + $0x5d0] sm:$0xff]
    %v3588 = vld [vmem:[#allocation20 + $0x5d8] sm:$0xff]
    %v3589 = vld [vmem:[#allocation20 + $0x5e0] sm:$0xff]
    %v3590 = vld [vmem:[#allocation20 + $0x5e8] sm:$0xff]
    %v3591 = vld [vmem:[#allocation20 + $0x5f0] sm:$0xff]
    %v3592 = vld [vmem:[#allocation20 + $0x5f8] sm:$0xff]
    %v3593 = vld [vmem:[#allocation20 + $0x600] sm:$0xff]
    %v3594 = vld [vmem:[#allocation20 + $0x608] sm:$0xff]
    %v3595 = vld [vmem:[#allocation20 + $0x610] sm:$0xff]
    %v3596 = vld [vmem:[#allocation20 + $0x618] sm:$0xff]
    %v3597 = vld [vmem:[#allocation20 + $0x620] sm:$0xff]
    %v3598 = vld [vmem:[#allocation20 + $0x628] sm:$0xff]
    %v3599 = vld [vmem:[#allocation20 + $0x630] sm:$0xff]
    %v3600 = vld [vmem:[#allocation20 + $0x638] sm:$0xff]
    %v3601 = vld [vmem:[#allocation20 + $0x640] sm:$0xff]
    %v3602 = vld [vmem:[#allocation20 + $0x648] sm:$0xff]
    %v3603 = vld [vmem:[#allocation20 + $0x650] sm:$0xff]
    %v3604 = vld [vmem:[#allocation20 + $0x658] sm:$0xff]
    %v3605 = vld [vmem:[#allocation20 + $0x660] sm:$0xff]
    %v3606 = vld [vmem:[#allocation20 + $0x668] sm:$0xff]
    %v3607 = vld [vmem:[#allocation20 + $0x670] sm:$0xff]
    %v3608 = vld [vmem:[#allocation20 + $0x678] sm:$0xff]
    %v3609 = vld [vmem:[#allocation20 + $0x680] sm:$0xff]
    %v3610 = vld [vmem:[#allocation20 + $0x688] sm:$0xff]
    %v3611 = vld [vmem:[#allocation20 + $0x690] sm:$0xff]
    %v3612 = vld [vmem:[#allocation20 + $0x698] sm:$0xff]
    %v3613 = vld [vmem:[#allocation20 + $0x6a0] sm:$0xff]
    %v3614 = vld [vmem:[#allocation20 + $0x6a8] sm:$0xff]
    %v3615 = vld [vmem:[#allocation20 + $0x6b0] sm:$0xff]
    %v3616 = vld [vmem:[#allocation20 + $0x6b8] sm:$0xff]
    %v3617 = vld [vmem:[#allocation20 + $0x6c0] sm:$0xff]
    %v3618 = vld [vmem:[#allocation20 + $0x6c8] sm:$0xff]
    %v3619 = vld [vmem:[#allocation20 + $0x6d0] sm:$0xff]
    %v3620 = vld [vmem:[#allocation20 + $0x6d8] sm:$0xff]
    %v3621 = vld [vmem:[#allocation20 + $0x6e0] sm:$0xff]
    %v3622 = vld [vmem:[#allocation20 + $0x6e8] sm:$0xff]
    %v3623 = vld [vmem:[#allocation20 + $0x6f0] sm:$0xff]
    %v3624 = vld [vmem:[#allocation20 + $0x6f8] sm:$0xff]
    %v3625 = vld [vmem:[#allocation20 + $0x700] sm:$0xff]
    %v3626 = vld [vmem:[#allocation20 + $0x708] sm:$0xff]
    %v3627 = vld [vmem:[#allocation20 + $0x710] sm:$0xff]
    %v3628 = vld [vmem:[#allocation20 + $0x718] sm:$0xff]
    %v3629 = vld [vmem:[#allocation20 + $0x720] sm:$0xff]
    %v3630 = vld [vmem:[#allocation20 + $0x728] sm:$0xff]
    %v3631 = vld [vmem:[#allocation20 + $0x730] sm:$0xff]
    %v3632 = vld [vmem:[#allocation20 + $0x738] sm:$0xff]
    %v3633 = vld [vmem:[#allocation20 + $0x740] sm:$0xff]
    %v3634 = vld [vmem:[#allocation20 + $0x748] sm:$0xff]
    %v3635 = vld [vmem:[#allocation20 + $0x750] sm:$0xff]
    %v3636 = vld [vmem:[#allocation20 + $0x758] sm:$0xff]
    %v3637 = vld [vmem:[#allocation20 + $0x760] sm:$0xff]
    %v3638 = vld [vmem:[#allocation20 + $0x768] sm:$0xff]
    %v3639 = vld [vmem:[#allocation20 + $0x770] sm:$0xff]
    %v3640 = vld [vmem:[#allocation20 + $0x778] sm:$0xff]
    %v3641 = vld [vmem:[#allocation20 + $0x780] sm:$0xff]
    %v3642 = vld [vmem:[#allocation20 + $0x788] sm:$0xff]
    %v3643 = vld [vmem:[#allocation20 + $0x790] sm:$0xff]
    %v3644 = vld [vmem:[#allocation20 + $0x798] sm:$0xff]
    %v3645 = vld [vmem:[#allocation20 + $0x7a0] sm:$0xff]
    %v3646 = vld [vmem:[#allocation20 + $0x7a8] sm:$0xff]
    %v3647 = vld [vmem:[#allocation20 + $0x7b0] sm:$0xff]
    %v3648 = vld [vmem:[#allocation20 + $0x7b8] sm:$0xff]
    %v3649 = vld [vmem:[#allocation20 + $0x7c0] sm:$0xff]
    %v3650 = vld [vmem:[#allocation20 + $0x7c8] sm:$0xff]
    %v3651 = vld [vmem:[#allocation20 + $0x7d0] sm:$0xff]
    %v3652 = vld [vmem:[#allocation20 + $0x7d8] sm:$0xff]
    %v3653 = vld [vmem:[#allocation20 + $0x7e0] sm:$0xff]
    %v3654 = vld [vmem:[#allocation20 + $0x7e8] sm:$0xff]
    %v3655 = vld [vmem:[#allocation20 + $0x7f0] sm:$0xff]
    %v3656 = vld [vmem:[#allocation20 + $0x7f8] sm:$0xff]
    %v3673 = vunpack.c.l.b16 %v3145
    %v3674 = vunpack.c.l.b16 %v3162
    %v3675 = vunpack.c.l.b16 %v3179
    %v3676 = vunpack.c.l.b16 %v3196
    %v3677 = vunpack.c.l.b16 %v3213
    %v3678 = vunpack.c.l.b16 %v3230
    %v3679 = vunpack.c.l.b16 %v3247
    %v3680 = vunpack.c.l.b16 %v3264
    %v3681 = vunpack.c.l.b16 %v3281
    %v3682 = vunpack.c.l.b16 %v3298
    %v3683 = vunpack.c.l.b16 %v3315
    %v3684 = vunpack.c.l.b16 %v3332
    %v3685 = vunpack.c.l.b16 %v3349
    %v3686 = vunpack.c.l.b16 %v3366
    %v3687 = vunpack.c.l.b16 %v3383
    %v3688 = vunpack.c.l.b16 %v3400
    %vm3689 = vcmask 1041409
    %v3690 = vsel %vm3689, %v3681, %v3673
    %v3691 = vsel %vm3689, %v3682, %v3674
    %v3692 = vsel %vm3689, %v3683, %v3675
    %v3693 = vsel %vm3689, %v3684, %v3676
    %v3694 = vsel %vm3689, %v3685, %v3677
    %v3695 = vsel %vm3689, %v3686, %v3678
    %v3696 = vsel %vm3689, %v3687, %v3679
    %v3697 = vsel %vm3689, %v3688, %v3680
    %v3698 = vpack.c.b16 %v3690, %v3690
    %v3699 = vpack.c.b16 %v3691, %v3691
    %v3700 = vpack.c.b16 %v3692, %v3692
    %v3701 = vpack.c.b16 %v3693, %v3693
    %v3702 = vpack.c.b16 %v3694, %v3694
    %v3703 = vpack.c.b16 %v3695, %v3695
    %v3704 = vpack.c.b16 %v3696, %v3696
    %v3705 = vpack.c.b16 %v3697, %v3697
    %v3970 = vunpack.c.l.b16 %v3401
    %v3971 = vunpack.c.h.b16 %v3401
    %v3972 = vunpack.c.l.b16 %v3402
    %v3973 = vunpack.c.h.b16 %v3402
    %v3974 = vunpack.c.l.b16 %v3403
    %v3975 = vunpack.c.h.b16 %v3403
    %v3976 = vunpack.c.l.b16 %v3404
    %v3977 = vunpack.c.h.b16 %v3404
    %v3978 = vunpack.c.l.b16 %v3405
    %v3979 = vunpack.c.h.b16 %v3405
    %v3980 = vunpack.c.l.b16 %v3406
    %v3981 = vunpack.c.h.b16 %v3406
    %v3982 = vunpack.c.l.b16 %v3407
    %v3983 = vunpack.c.h.b16 %v3407
    %v3984 = vunpack.c.l.b16 %v3408
    %v3985 = vunpack.c.h.b16 %v3408
    %v3986 = vunpack.c.l.b16 %v3409
    %v3987 = vunpack.c.h.b16 %v3409
    %v3988 = vunpack.c.l.b16 %v3410
    %v3989 = vunpack.c.h.b16 %v3410
    %v3990 = vunpack.c.l.b16 %v3411
    %v3991 = vunpack.c.h.b16 %v3411
    %v3992 = vunpack.c.l.b16 %v3412
    %v3993 = vunpack.c.h.b16 %v3412
    %v3994 = vunpack.c.l.b16 %v3413
    %v3995 = vunpack.c.h.b16 %v3413
    %v3996 = vunpack.c.l.b16 %v3414
    %v3997 = vunpack.c.h.b16 %v3414
    %v3998 = vunpack.c.l.b16 %v3415
    %v3999 = vunpack.c.h.b16 %v3415
    %v4000 = vunpack.c.l.b16 %v3416
    %v4001 = vunpack.c.h.b16 %v3416
    %v4002 = vunpack.c.l.b16 %v3417
    %v4003 = vunpack.c.h.b16 %v3417
    %v4004 = vunpack.c.l.b16 %v3418
    %v4005 = vunpack.c.h.b16 %v3418
    %v4006 = vunpack.c.l.b16 %v3419
    %v4007 = vunpack.c.h.b16 %v3419
    %v4008 = vunpack.c.l.b16 %v3420
    %v4009 = vunpack.c.h.b16 %v3420
    %v4010 = vunpack.c.l.b16 %v3421
    %v4011 = vunpack.c.h.b16 %v3421
    %v4012 = vunpack.c.l.b16 %v3422
    %v4013 = vunpack.c.h.b16 %v3422
    %v4014 = vunpack.c.l.b16 %v3423
    %v4015 = vunpack.c.h.b16 %v3423
    %v4016 = vunpack.c.l.b16 %v3424
    %v4017 = vunpack.c.h.b16 %v3424
    %v4018 = vunpack.c.l.b16 %v3425
    %v4019 = vunpack.c.h.b16 %v3425
    %v4020 = vunpack.c.l.b16 %v3426
    %v4021 = vunpack.c.h.b16 %v3426
    %v4022 = vunpack.c.l.b16 %v3427
    %v4023 = vunpack.c.h.b16 %v3427
    %v4024 = vunpack.c.l.b16 %v3428
    %v4025 = vunpack.c.h.b16 %v3428
    %v4026 = vunpack.c.l.b16 %v3429
    %v4027 = vunpack.c.h.b16 %v3429
    %v4028 = vunpack.c.l.b16 %v3430
    %v4029 = vunpack.c.h.b16 %v3430
    %v4030 = vunpack.c.l.b16 %v3431
    %v4031 = vunpack.c.h.b16 %v3431
    %v4032 = vunpack.c.l.b16 %v3432
    %v4033 = vunpack.c.h.b16 %v3432
    %v4034 = vunpack.c.l.b16 %v3433
    %v4035 = vunpack.c.h.b16 %v3433
    %v4036 = vunpack.c.l.b16 %v3434
    %v4037 = vunpack.c.h.b16 %v3434
    %v4038 = vunpack.c.l.b16 %v3435
    %v4039 = vunpack.c.h.b16 %v3435
    %v4040 = vunpack.c.l.b16 %v3436
    %v4041 = vunpack.c.h.b16 %v3436
    %v4042 = vunpack.c.l.b16 %v3437
    %v4043 = vunpack.c.h.b16 %v3437
    %v4044 = vunpack.c.l.b16 %v3438
    %v4045 = vunpack.c.h.b16 %v3438
    %v4046 = vunpack.c.l.b16 %v3439
    %v4047 = vunpack.c.h.b16 %v3439
    %v4048 = vunpack.c.l.b16 %v3440
    %v4049 = vunpack.c.h.b16 %v3440
    %v4050 = vunpack.c.l.b16 %v3441
    %v4051 = vunpack.c.h.b16 %v3441
    %v4052 = vunpack.c.l.b16 %v3442
    %v4053 = vunpack.c.h.b16 %v3442
    %v4054 = vunpack.c.l.b16 %v3443
    %v4055 = vunpack.c.h.b16 %v3443
    %v4056 = vunpack.c.l.b16 %v3444
    %v4057 = vunpack.c.h.b16 %v3444
    %v4058 = vunpack.c.l.b16 %v3445
    %v4059 = vunpack.c.h.b16 %v3445
    %v4060 = vunpack.c.l.b16 %v3446
    %v4061 = vunpack.c.h.b16 %v3446
    %v4062 = vunpack.c.l.b16 %v3447
    %v4063 = vunpack.c.h.b16 %v3447
    %v4064 = vunpack.c.l.b16 %v3448
    %v4065 = vunpack.c.h.b16 %v3448
    %v4066 = vunpack.c.l.b16 %v3449
    %v4067 = vunpack.c.h.b16 %v3449
    %v4068 = vunpack.c.l.b16 %v3450
    %v4069 = vunpack.c.h.b16 %v3450
    %v4070 = vunpack.c.l.b16 %v3451
    %v4071 = vunpack.c.h.b16 %v3451
    %v4072 = vunpack.c.l.b16 %v3452
    %v4073 = vunpack.c.h.b16 %v3452
    %v4074 = vunpack.c.l.b16 %v3453
    %v4075 = vunpack.c.h.b16 %v3453
    %v4076 = vunpack.c.l.b16 %v3454
    %v4077 = vunpack.c.h.b16 %v3454
    %v4078 = vunpack.c.l.b16 %v3455
    %v4079 = vunpack.c.h.b16 %v3455
    %v4080 = vunpack.c.l.b16 %v3456
    %v4081 = vunpack.c.h.b16 %v3456
    %v4082 = vunpack.c.l.b16 %v3457
    %v4083 = vunpack.c.h.b16 %v3457
    %v4084 = vunpack.c.l.b16 %v3458
    %v4085 = vunpack.c.h.b16 %v3458
    %v4086 = vunpack.c.l.b16 %v3459
    %v4087 = vunpack.c.h.b16 %v3459
    %v4088 = vunpack.c.l.b16 %v3460
    %v4089 = vunpack.c.h.b16 %v3460
    %v4090 = vunpack.c.l.b16 %v3461
    %v4091 = vunpack.c.h.b16 %v3461
    %v4092 = vunpack.c.l.b16 %v3462
    %v4093 = vunpack.c.h.b16 %v3462
    %v4094 = vunpack.c.l.b16 %v3463
    %v4095 = vunpack.c.h.b16 %v3463
    %v4096 = vunpack.c.l.b16 %v3464
    %v4097 = vunpack.c.h.b16 %v3464
    %v4098 = vunpack.c.l.b16 %v3465
    %v4099 = vunpack.c.h.b16 %v3465
    %v4100 = vunpack.c.l.b16 %v3466
    %v4101 = vunpack.c.h.b16 %v3466
    %v4102 = vunpack.c.l.b16 %v3467
    %v4103 = vunpack.c.h.b16 %v3467
    %v4104 = vunpack.c.l.b16 %v3468
    %v4105 = vunpack.c.h.b16 %v3468
    %v4106 = vunpack.c.l.b16 %v3469
    %v4107 = vunpack.c.h.b16 %v3469
    %v4108 = vunpack.c.l.b16 %v3470
    %v4109 = vunpack.c.h.b16 %v3470
    %v4110 = vunpack.c.l.b16 %v3471
    %v4111 = vunpack.c.h.b16 %v3471
    %v4112 = vunpack.c.l.b16 %v3472
    %v4113 = vunpack.c.h.b16 %v3472
    %v4114 = vunpack.c.l.b16 %v3473
    %v4115 = vunpack.c.h.b16 %v3473
    %v4116 = vunpack.c.l.b16 %v3474
    %v4117 = vunpack.c.h.b16 %v3474
    %v4118 = vunpack.c.l.b16 %v3475
    %v4119 = vunpack.c.h.b16 %v3475
    %v4120 = vunpack.c.l.b16 %v3476
    %v4121 = vunpack.c.h.b16 %v3476
    %v4122 = vunpack.c.l.b16 %v3477
    %v4123 = vunpack.c.h.b16 %v3477
    %v4124 = vunpack.c.l.b16 %v3478
    %v4125 = vunpack.c.h.b16 %v3478
    %v4126 = vunpack.c.l.b16 %v3479
    %v4127 = vunpack.c.h.b16 %v3479
    %v4128 = vunpack.c.l.b16 %v3480
    %v4129 = vunpack.c.h.b16 %v3480
    %v4130 = vunpack.c.l.b16 %v3481
    %v4131 = vunpack.c.h.b16 %v3481
    %v4132 = vunpack.c.l.b16 %v3482
    %v4133 = vunpack.c.h.b16 %v3482
    %v4134 = vunpack.c.l.b16 %v3483
    %v4135 = vunpack.c.h.b16 %v3483
    %v4136 = vunpack.c.l.b16 %v3484
    %v4137 = vunpack.c.h.b16 %v3484
    %v4138 = vunpack.c.l.b16 %v3485
    %v4139 = vunpack.c.h.b16 %v3485
    %v4140 = vunpack.c.l.b16 %v3486
    %v4141 = vunpack.c.h.b16 %v3486
    %v4142 = vunpack.c.l.b16 %v3487
    %v4143 = vunpack.c.h.b16 %v3487
    %v4144 = vunpack.c.l.b16 %v3488
    %v4145 = vunpack.c.h.b16 %v3488
    %v4146 = vunpack.c.l.b16 %v3489
    %v4147 = vunpack.c.h.b16 %v3489
    %v4148 = vunpack.c.l.b16 %v3490
    %v4149 = vunpack.c.h.b16 %v3490
    %v4150 = vunpack.c.l.b16 %v3491
    %v4151 = vunpack.c.h.b16 %v3491
    %v4152 = vunpack.c.l.b16 %v3492
    %v4153 = vunpack.c.h.b16 %v3492
    %v4154 = vunpack.c.l.b16 %v3493
    %v4155 = vunpack.c.h.b16 %v3493
    %v4156 = vunpack.c.l.b16 %v3494
    %v4157 = vunpack.c.h.b16 %v3494
    %v4158 = vunpack.c.l.b16 %v3495
    %v4159 = vunpack.c.h.b16 %v3495
    %v4160 = vunpack.c.l.b16 %v3496
    %v4161 = vunpack.c.h.b16 %v3496
    %v4162 = vunpack.c.l.b16 %v3497
    %v4163 = vunpack.c.h.b16 %v3497
    %v4164 = vunpack.c.l.b16 %v3498
    %v4165 = vunpack.c.h.b16 %v3498
    %v4166 = vunpack.c.l.b16 %v3499
    %v4167 = vunpack.c.h.b16 %v3499
    %v4168 = vunpack.c.l.b16 %v3500
    %v4169 = vunpack.c.h.b16 %v3500
    %v4170 = vunpack.c.l.b16 %v3501
    %v4171 = vunpack.c.h.b16 %v3501
    %v4172 = vunpack.c.l.b16 %v3502
    %v4173 = vunpack.c.h.b16 %v3502
    %v4174 = vunpack.c.l.b16 %v3503
    %v4175 = vunpack.c.h.b16 %v3503
    %v4176 = vunpack.c.l.b16 %v3504
    %v4177 = vunpack.c.h.b16 %v3504
    %v4178 = vunpack.c.l.b16 %v3505
    %v4179 = vunpack.c.h.b16 %v3505
    %v4180 = vunpack.c.l.b16 %v3506
    %v4181 = vunpack.c.h.b16 %v3506
    %v4182 = vunpack.c.l.b16 %v3507
    %v4183 = vunpack.c.h.b16 %v3507
    %v4184 = vunpack.c.l.b16 %v3508
    %v4185 = vunpack.c.h.b16 %v3508
    %v4186 = vunpack.c.l.b16 %v3509
    %v4187 = vunpack.c.h.b16 %v3509
    %v4188 = vunpack.c.l.b16 %v3510
    %v4189 = vunpack.c.h.b16 %v3510
    %v4190 = vunpack.c.l.b16 %v3511
    %v4191 = vunpack.c.h.b16 %v3511
    %v4192 = vunpack.c.l.b16 %v3512
    %v4193 = vunpack.c.h.b16 %v3512
    %v4194 = vunpack.c.l.b16 %v3513
    %v4195 = vunpack.c.h.b16 %v3513
    %v4196 = vunpack.c.l.b16 %v3514
    %v4197 = vunpack.c.h.b16 %v3514
    %v4198 = vunpack.c.l.b16 %v3515
    %v4199 = vunpack.c.h.b16 %v3515
    %v4200 = vunpack.c.l.b16 %v3516
    %v4201 = vunpack.c.h.b16 %v3516
    %v4202 = vunpack.c.l.b16 %v3517
    %v4203 = vunpack.c.h.b16 %v3517
    %v4204 = vunpack.c.l.b16 %v3518
    %v4205 = vunpack.c.h.b16 %v3518
    %v4206 = vunpack.c.l.b16 %v3519
    %v4207 = vunpack.c.h.b16 %v3519
    %v4208 = vunpack.c.l.b16 %v3520
    %v4209 = vunpack.c.h.b16 %v3520
    %v4210 = vunpack.c.l.b16 %v3521
    %v4211 = vunpack.c.h.b16 %v3521
    %v4212 = vunpack.c.l.b16 %v3522
    %v4213 = vunpack.c.h.b16 %v3522
    %v4214 = vunpack.c.l.b16 %v3523
    %v4215 = vunpack.c.h.b16 %v3523
    %v4216 = vunpack.c.l.b16 %v3524
    %v4217 = vunpack.c.h.b16 %v3524
    %v4218 = vunpack.c.l.b16 %v3525
    %v4219 = vunpack.c.h.b16 %v3525
    %v4220 = vunpack.c.l.b16 %v3526
    %v4221 = vunpack.c.h.b16 %v3526
    %v4222 = vunpack.c.l.b16 %v3527
    %v4223 = vunpack.c.h.b16 %v3527
    %v4224 = vunpack.c.l.b16 %v3528
    %v4225 = vunpack.c.h.b16 %v3528
    %v4226 = vunpack.c.l.b16 %v3529
    %v4227 = vunpack.c.h.b16 %v3529
    %v4228 = vunpack.c.l.b16 %v3530
    %v4229 = vunpack.c.h.b16 %v3530
    %v4230 = vunpack.c.l.b16 %v3531
    %v4231 = vunpack.c.h.b16 %v3531
    %v4232 = vunpack.c.l.b16 %v3532
    %v4233 = vunpack.c.h.b16 %v3532
    %v4234 = vunpack.c.l.b16 %v3533
    %v4235 = vunpack.c.h.b16 %v3533
    %v4236 = vunpack.c.l.b16 %v3534
    %v4237 = vunpack.c.h.b16 %v3534
    %v4238 = vunpack.c.l.b16 %v3535
    %v4239 = vunpack.c.h.b16 %v3535
    %v4240 = vunpack.c.l.b16 %v3536
    %v4241 = vunpack.c.h.b16 %v3536
    %v4242 = vunpack.c.l.b16 %v3537
    %v4243 = vunpack.c.h.b16 %v3537
    %v4244 = vunpack.c.l.b16 %v3538
    %v4245 = vunpack.c.h.b16 %v3538
    %v4246 = vunpack.c.l.b16 %v3539
    %v4247 = vunpack.c.h.b16 %v3539
    %v4248 = vunpack.c.l.b16 %v3540
    %v4249 = vunpack.c.h.b16 %v3540
    %v4250 = vunpack.c.l.b16 %v3541
    %v4251 = vunpack.c.h.b16 %v3541
    %v4252 = vunpack.c.l.b16 %v3542
    %v4253 = vunpack.c.h.b16 %v3542
    %v4254 = vunpack.c.l.b16 %v3543
    %v4255 = vunpack.c.h.b16 %v3543
    %v4256 = vunpack.c.l.b16 %v3544
    %v4257 = vunpack.c.h.b16 %v3544
    %v4258 = vunpack.c.l.b16 %v3545
    %v4259 = vunpack.c.h.b16 %v3545
    %v4260 = vunpack.c.l.b16 %v3546
    %v4261 = vunpack.c.h.b16 %v3546
    %v4262 = vunpack.c.l.b16 %v3547
    %v4263 = vunpack.c.h.b16 %v3547
    %v4264 = vunpack.c.l.b16 %v3548
    %v4265 = vunpack.c.h.b16 %v3548
    %v4266 = vunpack.c.l.b16 %v3549
    %v4267 = vunpack.c.h.b16 %v3549
    %v4268 = vunpack.c.l.b16 %v3550
    %v4269 = vunpack.c.h.b16 %v3550
    %v4270 = vunpack.c.l.b16 %v3551
    %v4271 = vunpack.c.h.b16 %v3551
    %v4272 = vunpack.c.l.b16 %v3552
    %v4273 = vunpack.c.h.b16 %v3552
    %v4274 = vunpack.c.l.b16 %v3553
    %v4275 = vunpack.c.h.b16 %v3553
    %v4276 = vunpack.c.l.b16 %v3554
    %v4277 = vunpack.c.h.b16 %v3554
    %v4278 = vunpack.c.l.b16 %v3555
    %v4279 = vunpack.c.h.b16 %v3555
    %v4280 = vunpack.c.l.b16 %v3556
    %v4281 = vunpack.c.h.b16 %v3556
    %v4282 = vunpack.c.l.b16 %v3557
    %v4283 = vunpack.c.h.b16 %v3557
    %v4284 = vunpack.c.l.b16 %v3558
    %v4285 = vunpack.c.h.b16 %v3558
    %v4286 = vunpack.c.l.b16 %v3559
    %v4287 = vunpack.c.h.b16 %v3559
    %v4288 = vunpack.c.l.b16 %v3560
    %v4289 = vunpack.c.h.b16 %v3560
    %v4290 = vunpack.c.l.b16 %v3561
    %v4291 = vunpack.c.h.b16 %v3561
    %v4292 = vunpack.c.l.b16 %v3562
    %v4293 = vunpack.c.h.b16 %v3562
    %v4294 = vunpack.c.l.b16 %v3563
    %v4295 = vunpack.c.h.b16 %v3563
    %v4296 = vunpack.c.l.b16 %v3564
    %v4297 = vunpack.c.h.b16 %v3564
    %v4298 = vunpack.c.l.b16 %v3565
    %v4299 = vunpack.c.h.b16 %v3565
    %v4300 = vunpack.c.l.b16 %v3566
    %v4301 = vunpack.c.h.b16 %v3566
    %v4302 = vunpack.c.l.b16 %v3567
    %v4303 = vunpack.c.h.b16 %v3567
    %v4304 = vunpack.c.l.b16 %v3568
    %v4305 = vunpack.c.h.b16 %v3568
    %v4306 = vunpack.c.l.b16 %v3569
    %v4307 = vunpack.c.h.b16 %v3569
    %v4308 = vunpack.c.l.b16 %v3570
    %v4309 = vunpack.c.h.b16 %v3570
    %v4310 = vunpack.c.l.b16 %v3571
    %v4311 = vunpack.c.h.b16 %v3571
    %v4312 = vunpack.c.l.b16 %v3572
    %v4313 = vunpack.c.h.b16 %v3572
    %v4314 = vunpack.c.l.b16 %v3573
    %v4315 = vunpack.c.h.b16 %v3573
    %v4316 = vunpack.c.l.b16 %v3574
    %v4317 = vunpack.c.h.b16 %v3574
    %v4318 = vunpack.c.l.b16 %v3575
    %v4319 = vunpack.c.h.b16 %v3575
    %v4320 = vunpack.c.l.b16 %v3576
    %v4321 = vunpack.c.h.b16 %v3576
    %v4322 = vunpack.c.l.b16 %v3577
    %v4323 = vunpack.c.h.b16 %v3577
    %v4324 = vunpack.c.l.b16 %v3578
    %v4325 = vunpack.c.h.b16 %v3578
    %v4326 = vunpack.c.l.b16 %v3579
    %v4327 = vunpack.c.h.b16 %v3579
    %v4328 = vunpack.c.l.b16 %v3580
    %v4329 = vunpack.c.h.b16 %v3580
    %v4330 = vunpack.c.l.b16 %v3581
    %v4331 = vunpack.c.h.b16 %v3581
    %v4332 = vunpack.c.l.b16 %v3582
    %v4333 = vunpack.c.h.b16 %v3582
    %v4334 = vunpack.c.l.b16 %v3583
    %v4335 = vunpack.c.h.b16 %v3583
    %v4336 = vunpack.c.l.b16 %v3584
    %v4337 = vunpack.c.h.b16 %v3584
    %v4338 = vunpack.c.l.b16 %v3585
    %v4339 = vunpack.c.h.b16 %v3585
    %v4340 = vunpack.c.l.b16 %v3586
    %v4341 = vunpack.c.h.b16 %v3586
    %v4342 = vunpack.c.l.b16 %v3587
    %v4343 = vunpack.c.h.b16 %v3587
    %v4344 = vunpack.c.l.b16 %v3588
    %v4345 = vunpack.c.h.b16 %v3588
    %v4346 = vunpack.c.l.b16 %v3589
    %v4347 = vunpack.c.h.b16 %v3589
    %v4348 = vunpack.c.l.b16 %v3590
    %v4349 = vunpack.c.h.b16 %v3590
    %v4350 = vunpack.c.l.b16 %v3591
    %v4351 = vunpack.c.h.b16 %v3591
    %v4352 = vunpack.c.l.b16 %v3592
    %v4353 = vunpack.c.h.b16 %v3592
    %v4354 = vunpack.c.l.b16 %v3593
    %v4355 = vunpack.c.h.b16 %v3593
    %v4356 = vunpack.c.l.b16 %v3594
    %v4357 = vunpack.c.h.b16 %v3594
    %v4358 = vunpack.c.l.b16 %v3595
    %v4359 = vunpack.c.h.b16 %v3595
    %v4360 = vunpack.c.l.b16 %v3596
    %v4361 = vunpack.c.h.b16 %v3596
    %v4362 = vunpack.c.l.b16 %v3597
    %v4363 = vunpack.c.h.b16 %v3597
    %v4364 = vunpack.c.l.b16 %v3598
    %v4365 = vunpack.c.h.b16 %v3598
    %v4366 = vunpack.c.l.b16 %v3599
    %v4367 = vunpack.c.h.b16 %v3599
    %v4368 = vunpack.c.l.b16 %v3600
    %v4369 = vunpack.c.h.b16 %v3600
    %v4370 = vunpack.c.l.b16 %v3601
    %v4371 = vunpack.c.h.b16 %v3601
    %v4372 = vunpack.c.l.b16 %v3602
    %v4373 = vunpack.c.h.b16 %v3602
    %v4374 = vunpack.c.l.b16 %v3603
    %v4375 = vunpack.c.h.b16 %v3603
    %v4376 = vunpack.c.l.b16 %v3604
    %v4377 = vunpack.c.h.b16 %v3604
    %v4378 = vunpack.c.l.b16 %v3605
    %v4379 = vunpack.c.h.b16 %v3605
    %v4380 = vunpack.c.l.b16 %v3606
    %v4381 = vunpack.c.h.b16 %v3606
    %v4382 = vunpack.c.l.b16 %v3607
    %v4383 = vunpack.c.h.b16 %v3607
    %v4384 = vunpack.c.l.b16 %v3608
    %v4385 = vunpack.c.h.b16 %v3608
    %v4386 = vunpack.c.l.b16 %v3609
    %v4387 = vunpack.c.h.b16 %v3609
    %v4388 = vunpack.c.l.b16 %v3610
    %v4389 = vunpack.c.h.b16 %v3610
    %v4390 = vunpack.c.l.b16 %v3611
    %v4391 = vunpack.c.h.b16 %v3611
    %v4392 = vunpack.c.l.b16 %v3612
    %v4393 = vunpack.c.h.b16 %v3612
    %v4394 = vunpack.c.l.b16 %v3613
    %v4395 = vunpack.c.h.b16 %v3613
    %v4396 = vunpack.c.l.b16 %v3614
    %v4397 = vunpack.c.h.b16 %v3614
    %v4398 = vunpack.c.l.b16 %v3615
    %v4399 = vunpack.c.h.b16 %v3615
    %v4400 = vunpack.c.l.b16 %v3616
    %v4401 = vunpack.c.h.b16 %v3616
    %v4402 = vunpack.c.l.b16 %v3617
    %v4403 = vunpack.c.h.b16 %v3617
    %v4404 = vunpack.c.l.b16 %v3618
    %v4405 = vunpack.c.h.b16 %v3618
    %v4406 = vunpack.c.l.b16 %v3619
    %v4407 = vunpack.c.h.b16 %v3619
    %v4408 = vunpack.c.l.b16 %v3620
    %v4409 = vunpack.c.h.b16 %v3620
    %v4410 = vunpack.c.l.b16 %v3621
    %v4411 = vunpack.c.h.b16 %v3621
    %v4412 = vunpack.c.l.b16 %v3622
    %v4413 = vunpack.c.h.b16 %v3622
    %v4414 = vunpack.c.l.b16 %v3623
    %v4415 = vunpack.c.h.b16 %v3623
    %v4416 = vunpack.c.l.b16 %v3624
    %v4417 = vunpack.c.h.b16 %v3624
    %v4418 = vunpack.c.l.b16 %v3625
    %v4419 = vunpack.c.h.b16 %v3625
    %v4420 = vunpack.c.l.b16 %v3626
    %v4421 = vunpack.c.h.b16 %v3626
    %v4422 = vunpack.c.l.b16 %v3627
    %v4423 = vunpack.c.h.b16 %v3627
    %v4424 = vunpack.c.l.b16 %v3628
    %v4425 = vunpack.c.h.b16 %v3628
    %v4426 = vunpack.c.l.b16 %v3629
    %v4427 = vunpack.c.h.b16 %v3629
    %v4428 = vunpack.c.l.b16 %v3630
    %v4429 = vunpack.c.h.b16 %v3630
    %v4430 = vunpack.c.l.b16 %v3631
    %v4431 = vunpack.c.h.b16 %v3631
    %v4432 = vunpack.c.l.b16 %v3632
    %v4433 = vunpack.c.h.b16 %v3632
    %v4434 = vunpack.c.l.b16 %v3633
    %v4435 = vunpack.c.h.b16 %v3633
    %v4436 = vunpack.c.l.b16 %v3634
    %v4437 = vunpack.c.h.b16 %v3634
    %v4438 = vunpack.c.l.b16 %v3635
    %v4439 = vunpack.c.h.b16 %v3635
    %v4440 = vunpack.c.l.b16 %v3636
    %v4441 = vunpack.c.h.b16 %v3636
    %v4442 = vunpack.c.l.b16 %v3637
    %v4443 = vunpack.c.h.b16 %v3637
    %v4444 = vunpack.c.l.b16 %v3638
    %v4445 = vunpack.c.h.b16 %v3638
    %v4446 = vunpack.c.l.b16 %v3639
    %v4447 = vunpack.c.h.b16 %v3639
    %v4448 = vunpack.c.l.b16 %v3640
    %v4449 = vunpack.c.h.b16 %v3640
    %v4450 = vunpack.c.l.b16 %v3641
    %v4451 = vunpack.c.h.b16 %v3641
    %v4452 = vunpack.c.l.b16 %v3642
    %v4453 = vunpack.c.h.b16 %v3642
    %v4454 = vunpack.c.l.b16 %v3643
    %v4455 = vunpack.c.h.b16 %v3643
    %v4456 = vunpack.c.l.b16 %v3644
    %v4457 = vunpack.c.h.b16 %v3644
    %v4458 = vunpack.c.l.b16 %v3645
    %v4459 = vunpack.c.h.b16 %v3645
    %v4460 = vunpack.c.l.b16 %v3646
    %v4461 = vunpack.c.h.b16 %v3646
    %v4462 = vunpack.c.l.b16 %v3647
    %v4463 = vunpack.c.h.b16 %v3647
    %v4464 = vunpack.c.l.b16 %v3648
    %v4465 = vunpack.c.h.b16 %v3648
    %v4466 = vunpack.c.l.b16 %v3649
    %v4467 = vunpack.c.h.b16 %v3649
    %v4468 = vunpack.c.l.b16 %v3650
    %v4469 = vunpack.c.h.b16 %v3650
    %v4470 = vunpack.c.l.b16 %v3651
    %v4471 = vunpack.c.h.b16 %v3651
    %v4472 = vunpack.c.l.b16 %v3652
    %v4473 = vunpack.c.h.b16 %v3652
    %v4474 = vunpack.c.l.b16 %v3653
    %v4475 = vunpack.c.h.b16 %v3653
    %v4476 = vunpack.c.l.b16 %v3654
    %v4477 = vunpack.c.h.b16 %v3654
    %v4478 = vunpack.c.l.b16 %v3655
    %v4479 = vunpack.c.h.b16 %v3655
    %v4480 = vunpack.c.l.b16 %v3656
    %v4481 = vunpack.c.h.b16 %v3656
    %v4482 = vpack.c.b16 %v3974, %v3970
    %v4483 = vpack.c.b16 %v3975, %v3971
    %v4484 = vpack.c.b16 %v3976, %v3972
    %v4485 = vpack.c.b16 %v3977, %v3973
    %v4486 = vpack.c.b16 %v3982, %v3978
    %v4487 = vpack.c.b16 %v3983, %v3979
    %v4488 = vpack.c.b16 %v3984, %v3980
    %v4489 = vpack.c.b16 %v3985, %v3981
    %v4490 = vpack.c.b16 %v3990, %v3986
    %v4491 = vpack.c.b16 %v3991, %v3987
    %v4492 = vpack.c.b16 %v3992, %v3988
    %v4493 = vpack.c.b16 %v3993, %v3989
    %v4494 = vpack.c.b16 %v3998, %v3994
    %v4495 = vpack.c.b16 %v3999, %v3995
    %v4496 = vpack.c.b16 %v4000, %v3996
    %v4497 = vpack.c.b16 %v4001, %v3997
    %v4498 = vpack.c.b16 %v4006, %v4002
    %v4499 = vpack.c.b16 %v4007, %v4003
    %v4500 = vpack.c.b16 %v4008, %v4004
    %v4501 = vpack.c.b16 %v4009, %v4005
    %v4502 = vpack.c.b16 %v4014, %v4010
    %v4503 = vpack.c.b16 %v4015, %v4011
    %v4504 = vpack.c.b16 %v4016, %v4012
    %v4505 = vpack.c.b16 %v4017, %v4013
    %v4506 = vpack.c.b16 %v4022, %v4018
    %v4507 = vpack.c.b16 %v4023, %v4019
    %v4508 = vpack.c.b16 %v4024, %v4020
    %v4509 = vpack.c.b16 %v4025, %v4021
    %v4510 = vpack.c.b16 %v4030, %v4026
    %v4511 = vpack.c.b16 %v4031, %v4027
    %v4512 = vpack.c.b16 %v4032, %v4028
    %v4513 = vpack.c.b16 %v4033, %v4029
    %v4514 = vpack.c.b16 %v4038, %v4034
    %v4515 = vpack.c.b16 %v4039, %v4035
    %v4516 = vpack.c.b16 %v4040, %v4036
    %v4517 = vpack.c.b16 %v4041, %v4037
    %v4518 = vpack.c.b16 %v4046, %v4042
    %v4519 = vpack.c.b16 %v4047, %v4043
    %v4520 = vpack.c.b16 %v4048, %v4044
    %v4521 = vpack.c.b16 %v4049, %v4045
    %v4522 = vpack.c.b16 %v4054, %v4050
    %v4523 = vpack.c.b16 %v4055, %v4051
    %v4524 = vpack.c.b16 %v4056, %v4052
    %v4525 = vpack.c.b16 %v4057, %v4053
    %v4526 = vpack.c.b16 %v4062, %v4058
    %v4527 = vpack.c.b16 %v4063, %v4059
    %v4528 = vpack.c.b16 %v4064, %v4060
    %v4529 = vpack.c.b16 %v4065, %v4061
    %v4530 = vpack.c.b16 %v4070, %v4066
    %v4531 = vpack.c.b16 %v4071, %v4067
    %v4532 = vpack.c.b16 %v4072, %v4068
    %v4533 = vpack.c.b16 %v4073, %v4069
    %v4534 = vpack.c.b16 %v4078, %v4074
    %v4535 = vpack.c.b16 %v4079, %v4075
    %v4536 = vpack.c.b16 %v4080, %v4076
    %v4537 = vpack.c.b16 %v4081, %v4077
    %v4538 = vpack.c.b16 %v4086, %v4082
    %v4539 = vpack.c.b16 %v4087, %v4083
    %v4540 = vpack.c.b16 %v4088, %v4084
    %v4541 = vpack.c.b16 %v4089, %v4085
    %v4542 = vpack.c.b16 %v4094, %v4090
    %v4543 = vpack.c.b16 %v4095, %v4091
    %v4544 = vpack.c.b16 %v4096, %v4092
    %v4545 = vpack.c.b16 %v4097, %v4093
    %v4546 = vpack.c.b16 %v4102, %v4098
    %v4547 = vpack.c.b16 %v4103, %v4099
    %v4548 = vpack.c.b16 %v4104, %v4100
    %v4549 = vpack.c.b16 %v4105, %v4101
    %v4550 = vpack.c.b16 %v4110, %v4106
    %v4551 = vpack.c.b16 %v4111, %v4107
    %v4552 = vpack.c.b16 %v4112, %v4108
    %v4553 = vpack.c.b16 %v4113, %v4109
    %v4554 = vpack.c.b16 %v4118, %v4114
    %v4555 = vpack.c.b16 %v4119, %v4115
    %v4556 = vpack.c.b16 %v4120, %v4116
    %v4557 = vpack.c.b16 %v4121, %v4117
    %v4558 = vpack.c.b16 %v4126, %v4122
    %v4559 = vpack.c.b16 %v4127, %v4123
    %v4560 = vpack.c.b16 %v4128, %v4124
    %v4561 = vpack.c.b16 %v4129, %v4125
    %v4562 = vpack.c.b16 %v4134, %v4130
    %v4563 = vpack.c.b16 %v4135, %v4131
    %v4564 = vpack.c.b16 %v4136, %v4132
    %v4565 = vpack.c.b16 %v4137, %v4133
    %v4566 = vpack.c.b16 %v4142, %v4138
    %v4567 = vpack.c.b16 %v4143, %v4139
    %v4568 = vpack.c.b16 %v4144, %v4140
    %v4569 = vpack.c.b16 %v4145, %v4141
    %v4570 = vpack.c.b16 %v4150, %v4146
    %v4571 = vpack.c.b16 %v4151, %v4147
    %v4572 = vpack.c.b16 %v4152, %v4148
    %v4573 = vpack.c.b16 %v4153, %v4149
    %v4574 = vpack.c.b16 %v4158, %v4154
    %v4575 = vpack.c.b16 %v4159, %v4155
    %v4576 = vpack.c.b16 %v4160, %v4156
    %v4577 = vpack.c.b16 %v4161, %v4157
    %v4578 = vpack.c.b16 %v4166, %v4162
    %v4579 = vpack.c.b16 %v4167, %v4163
    %v4580 = vpack.c.b16 %v4168, %v4164
    %v4581 = vpack.c.b16 %v4169, %v4165
    %v4582 = vpack.c.b16 %v4174, %v4170
    %v4583 = vpack.c.b16 %v4175, %v4171
    %v4584 = vpack.c.b16 %v4176, %v4172
    %v4585 = vpack.c.b16 %v4177, %v4173
    %v4586 = vpack.c.b16 %v4182, %v4178
    %v4587 = vpack.c.b16 %v4183, %v4179
    %v4588 = vpack.c.b16 %v4184, %v4180
    %v4589 = vpack.c.b16 %v4185, %v4181
    %v4590 = vpack.c.b16 %v4190, %v4186
    %v4591 = vpack.c.b16 %v4191, %v4187
    %v4592 = vpack.c.b16 %v4192, %v4188
    %v4593 = vpack.c.b16 %v4193, %v4189
    %v4594 = vpack.c.b16 %v4198, %v4194
    %v4595 = vpack.c.b16 %v4199, %v4195
    %v4596 = vpack.c.b16 %v4200, %v4196
    %v4597 = vpack.c.b16 %v4201, %v4197
    %v4598 = vpack.c.b16 %v4206, %v4202
    %v4599 = vpack.c.b16 %v4207, %v4203
    %v4600 = vpack.c.b16 %v4208, %v4204
    %v4601 = vpack.c.b16 %v4209, %v4205
    %v4602 = vpack.c.b16 %v4214, %v4210
    %v4603 = vpack.c.b16 %v4215, %v4211
    %v4604 = vpack.c.b16 %v4216, %v4212
    %v4605 = vpack.c.b16 %v4217, %v4213
    %v4606 = vpack.c.b16 %v4222, %v4218
    %v4607 = vpack.c.b16 %v4223, %v4219
    %v4608 = vpack.c.b16 %v4224, %v4220
    %v4609 = vpack.c.b16 %v4225, %v4221
    %v4610 = vpack.c.b16 %v4230, %v4226
    %v4611 = vpack.c.b16 %v4231, %v4227
    %v4612 = vpack.c.b16 %v4232, %v4228
    %v4613 = vpack.c.b16 %v4233, %v4229
    %v4614 = vpack.c.b16 %v4238, %v4234
    %v4615 = vpack.c.b16 %v4239, %v4235
    %v4616 = vpack.c.b16 %v4240, %v4236
    %v4617 = vpack.c.b16 %v4241, %v4237
    %v4618 = vpack.c.b16 %v4246, %v4242
    %v4619 = vpack.c.b16 %v4247, %v4243
    %v4620 = vpack.c.b16 %v4248, %v4244
    %v4621 = vpack.c.b16 %v4249, %v4245
    %v4622 = vpack.c.b16 %v4254, %v4250
    %v4623 = vpack.c.b16 %v4255, %v4251
    %v4624 = vpack.c.b16 %v4256, %v4252
    %v4625 = vpack.c.b16 %v4257, %v4253
    %v4626 = vpack.c.b16 %v4262, %v4258
    %v4627 = vpack.c.b16 %v4263, %v4259
    %v4628 = vpack.c.b16 %v4264, %v4260
    %v4629 = vpack.c.b16 %v4265, %v4261
    %v4630 = vpack.c.b16 %v4270, %v4266
    %v4631 = vpack.c.b16 %v4271, %v4267
    %v4632 = vpack.c.b16 %v4272, %v4268
    %v4633 = vpack.c.b16 %v4273, %v4269
    %v4634 = vpack.c.b16 %v4278, %v4274
    %v4635 = vpack.c.b16 %v4279, %v4275
    %v4636 = vpack.c.b16 %v4280, %v4276
    %v4637 = vpack.c.b16 %v4281, %v4277
    %v4638 = vpack.c.b16 %v4286, %v4282
    %v4639 = vpack.c.b16 %v4287, %v4283
    %v4640 = vpack.c.b16 %v4288, %v4284
    %v4641 = vpack.c.b16 %v4289, %v4285
    %v4642 = vpack.c.b16 %v4294, %v4290
    %v4643 = vpack.c.b16 %v4295, %v4291
    %v4644 = vpack.c.b16 %v4296, %v4292
    %v4645 = vpack.c.b16 %v4297, %v4293
    %v4646 = vpack.c.b16 %v4302, %v4298
    %v4647 = vpack.c.b16 %v4303, %v4299
    %v4648 = vpack.c.b16 %v4304, %v4300
    %v4649 = vpack.c.b16 %v4305, %v4301
    %v4650 = vpack.c.b16 %v4310, %v4306
    %v4651 = vpack.c.b16 %v4311, %v4307
    %v4652 = vpack.c.b16 %v4312, %v4308
    %v4653 = vpack.c.b16 %v4313, %v4309
    %v4654 = vpack.c.b16 %v4318, %v4314
    %v4655 = vpack.c.b16 %v4319, %v4315
    %v4656 = vpack.c.b16 %v4320, %v4316
    %v4657 = vpack.c.b16 %v4321, %v4317
    %v4658 = vpack.c.b16 %v4326, %v4322
    %v4659 = vpack.c.b16 %v4327, %v4323
    %v4660 = vpack.c.b16 %v4328, %v4324
    %v4661 = vpack.c.b16 %v4329, %v4325
    %v4662 = vpack.c.b16 %v4334, %v4330
    %v4663 = vpack.c.b16 %v4335, %v4331
    %v4664 = vpack.c.b16 %v4336, %v4332
    %v4665 = vpack.c.b16 %v4337, %v4333
    %v4666 = vpack.c.b16 %v4342, %v4338
    %v4667 = vpack.c.b16 %v4343, %v4339
    %v4668 = vpack.c.b16 %v4344, %v4340
    %v4669 = vpack.c.b16 %v4345, %v4341
    %v4670 = vpack.c.b16 %v4350, %v4346
    %v4671 = vpack.c.b16 %v4351, %v4347
    %v4672 = vpack.c.b16 %v4352, %v4348
    %v4673 = vpack.c.b16 %v4353, %v4349
    %v4674 = vpack.c.b16 %v4358, %v4354
    %v4675 = vpack.c.b16 %v4359, %v4355
    %v4676 = vpack.c.b16 %v4360, %v4356
    %v4677 = vpack.c.b16 %v4361, %v4357
    %v4678 = vpack.c.b16 %v4366, %v4362
    %v4679 = vpack.c.b16 %v4367, %v4363
    %v4680 = vpack.c.b16 %v4368, %v4364
    %v4681 = vpack.c.b16 %v4369, %v4365
    %v4682 = vpack.c.b16 %v4374, %v4370
    %v4683 = vpack.c.b16 %v4375, %v4371
    %v4684 = vpack.c.b16 %v4376, %v4372
    %v4685 = vpack.c.b16 %v4377, %v4373
    %v4686 = vpack.c.b16 %v4382, %v4378
    %v4687 = vpack.c.b16 %v4383, %v4379
    %v4688 = vpack.c.b16 %v4384, %v4380
    %v4689 = vpack.c.b16 %v4385, %v4381
    %v4690 = vpack.c.b16 %v4390, %v4386
    %v4691 = vpack.c.b16 %v4391, %v4387
    %v4692 = vpack.c.b16 %v4392, %v4388
    %v4693 = vpack.c.b16 %v4393, %v4389
    %v4694 = vpack.c.b16 %v4398, %v4394
    %v4695 = vpack.c.b16 %v4399, %v4395
    %v4696 = vpack.c.b16 %v4400, %v4396
    %v4697 = vpack.c.b16 %v4401, %v4397
    %v4698 = vpack.c.b16 %v4406, %v4402
    %v4699 = vpack.c.b16 %v4407, %v4403
    %v4700 = vpack.c.b16 %v4408, %v4404
    %v4701 = vpack.c.b16 %v4409, %v4405
    %v4702 = vpack.c.b16 %v4414, %v4410
    %v4703 = vpack.c.b16 %v4415, %v4411
    %v4704 = vpack.c.b16 %v4416, %v4412
    %v4705 = vpack.c.b16 %v4417, %v4413
    %v4706 = vpack.c.b16 %v4422, %v4418
    %v4707 = vpack.c.b16 %v4423, %v4419
    %v4708 = vpack.c.b16 %v4424, %v4420
    %v4709 = vpack.c.b16 %v4425, %v4421
    %v4710 = vpack.c.b16 %v4430, %v4426
    %v4711 = vpack.c.b16 %v4431, %v4427
    %v4712 = vpack.c.b16 %v4432, %v4428
    %v4713 = vpack.c.b16 %v4433, %v4429
    %v4714 = vpack.c.b16 %v4438, %v4434
    %v4715 = vpack.c.b16 %v4439, %v4435
    %v4716 = vpack.c.b16 %v4440, %v4436
    %v4717 = vpack.c.b16 %v4441, %v4437
    %v4718 = vpack.c.b16 %v4446, %v4442
    %v4719 = vpack.c.b16 %v4447, %v4443
    %v4720 = vpack.c.b16 %v4448, %v4444
    %v4721 = vpack.c.b16 %v4449, %v4445
    %v4722 = vpack.c.b16 %v4454, %v4450
    %v4723 = vpack.c.b16 %v4455, %v4451
    %v4724 = vpack.c.b16 %v4456, %v4452
    %v4725 = vpack.c.b16 %v4457, %v4453
    %v4726 = vpack.c.b16 %v4462, %v4458
    %v4727 = vpack.c.b16 %v4463, %v4459
    %v4728 = vpack.c.b16 %v4464, %v4460
    %v4729 = vpack.c.b16 %v4465, %v4461
    %v4730 = vpack.c.b16 %v4470, %v4466
    %v4731 = vpack.c.b16 %v4471, %v4467
    %v4732 = vpack.c.b16 %v4472, %v4468
    %v4733 = vpack.c.b16 %v4473, %v4469
    %v4734 = vpack.c.b16 %v4478, %v4474
    %v4735 = vpack.c.b16 %v4479, %v4475
    %v4736 = vpack.c.b16 %v4480, %v4476
    %v4737 = vpack.c.b16 %v4481, %v4477
    %4994 = vmatprep.subr.bf16.mxu0 %v4483
    %4995 = vmatpush1.bf16.msra.mxu0 %v4482
    %4996 = vmatprep.subr.bf16.mxu0 %v4487
    %4997 = vmatpush1.bf16.msra.mxu0 %v4486
    %4998 = vmatprep.subr.bf16.mxu0 %v4491
    %4999 = vmatpush1.bf16.msra.mxu0 %v4490
    %5000 = vmatprep.subr.bf16.mxu0 %v4495
    %5001 = vmatpush1.bf16.msra.mxu0 %v4494
    %5002 = vmatprep.subr.bf16.mxu0 %v4499
    %5003 = vmatpush1.bf16.msra.mxu0 %v4498
    %5004 = vmatprep.subr.bf16.mxu0 %v4503
    %5005 = vmatpush1.bf16.msra.mxu0 %v4502
    %5006 = vmatprep.subr.bf16.mxu0 %v4507
    %5007 = vmatpush1.bf16.msra.mxu0 %v4506
    %5008 = vmatprep.subr.bf16.mxu0 %v4511
    %5009 = vmatpush1.bf16.msra.mxu0 %v4510
    %5010 = vmatprep.subr.bf16.mxu0 %v4515
    %5011 = vmatpush1.bf16.msra.mxu0 %v4514
    %5012 = vmatprep.subr.bf16.mxu0 %v4519
    %5013 = vmatpush1.bf16.msra.mxu0 %v4518
    %5014 = vmatprep.subr.bf16.mxu0 %v4523
    %5015 = vmatpush1.bf16.msra.mxu0 %v4522
    %5016 = vmatprep.subr.bf16.mxu0 %v4527
    %5017 = vmatpush1.bf16.msra.mxu0 %v4526
    %5018 = vmatprep.subr.bf16.mxu0 %v4531
    %5019 = vmatpush1.bf16.msra.mxu0 %v4530
    %5020 = vmatprep.subr.bf16.mxu0 %v4535
    %5021 = vmatpush1.bf16.msra.mxu0 %v4534
    %5022 = vmatprep.subr.bf16.mxu0 %v4539
    %5023 = vmatpush1.bf16.msra.mxu0 %v4538
    %5024 = vmatprep.subr.bf16.mxu0 %v4543
    %5025 = vmatpush1.bf16.msra.mxu0 %v4542
    %5026 = vmatprep.mubr.bf16.mxu0 %v3699
    %5027 = vmatmul.mubr.bf16.gmra.mrb[0].mxu0 %v3698
    %v5028 = vpop.f32.mrb[0].mxu0
    %v5029 = vadd.f32 0.0, %v5028
    %v5030 = vpop.f32.mrb[0].mxu0
    %v5031 = vadd.f32 0.0, %v5030
    %v5032 = vpop.f32.mrb[0].mxu0
    %v5033 = vpop.f32.mrb[0].mxu0
    %5034 = vdwg.mxu0
    %5035 = vmatprep.subr.bf16.mxu0 %v4547
    %5036 = vmatpush1.bf16.msra.mxu0 %v4546
    %5037 = vmatprep.subr.bf16.mxu0 %v4551
    %5038 = vmatpush1.bf16.msra.mxu0 %v4550
    %5039 = vmatprep.subr.bf16.mxu0 %v4555
    %5040 = vmatpush1.bf16.msra.mxu0 %v4554
    %5041 = vmatprep.subr.bf16.mxu0 %v4559
    %5042 = vmatpush1.bf16.msra.mxu0 %v4558
    %5043 = vmatprep.subr.bf16.mxu0 %v4563
    %5044 = vmatpush1.bf16.msra.mxu0 %v4562
    %5045 = vmatprep.subr.bf16.mxu0 %v4567
    %5046 = vmatpush1.bf16.msra.mxu0 %v4566
    %5047 = vmatprep.subr.bf16.mxu0 %v4571
    %5048 = vmatpush1.bf16.msra.mxu0 %v4570
    %5049 = vmatprep.subr.bf16.mxu0 %v4575
    %5050 = vmatpush1.bf16.msra.mxu0 %v4574
    %5051 = vmatprep.subr.bf16.mxu0 %v4579
    %5052 = vmatpush1.bf16.msra.mxu0 %v4578
    %5053 = vmatprep.subr.bf16.mxu0 %v4583
    %5054 = vmatpush1.bf16.msra.mxu0 %v4582
    %5055 = vmatprep.subr.bf16.mxu0 %v4587
    %5056 = vmatpush1.bf16.msra.mxu0 %v4586
    %5057 = vmatprep.subr.bf16.mxu0 %v4591
    %5058 = vmatpush1.bf16.msra.mxu0 %v4590
    %5059 = vmatprep.subr.bf16.mxu0 %v4595
    %5060 = vmatpush1.bf16.msra.mxu0 %v4594
    %5061 = vmatprep.subr.bf16.mxu0 %v4599
    %5062 = vmatpush1.bf16.msra.mxu0 %v4598
    %5063 = vmatprep.subr.bf16.mxu0 %v4603
    %5064 = vmatpush1.bf16.msra.mxu0 %v4602
    %5065 = vmatprep.subr.bf16.mxu0 %v4607
    %5066 = vmatpush1.bf16.msra.mxu0 %v4606
    %5067 = vmatprep.mubr.bf16.mxu0 %v3701
    %5068 = vmatmul.mubr.bf16.gmra.mrb[0].mxu0 %v3700
    %v5069 = vpop.f32.mrb[0].mxu0
    %v5070 = vadd.f32 %v5029, %v5069
    %v5071 = vpop.f32.mrb[0].mxu0
    %v5072 = vadd.f32 %v5031, %v5071
    %v5073 = vpop.f32.mrb[0].mxu0
    %v5074 = vpop.f32.mrb[0].mxu0
    %5075 = vdwg.mxu0
    %5076 = vmatprep.subr.bf16.mxu0 %v4611
    %5077 = vmatpush1.bf16.msra.mxu0 %v4610
    %5078 = vmatprep.subr.bf16.mxu0 %v4615
    %5079 = vmatpush1.bf16.msra.mxu0 %v4614
    %5080 = vmatprep.subr.bf16.mxu0 %v4619
    %5081 = vmatpush1.bf16.msra.mxu0 %v4618
    %5082 = vmatprep.subr.bf16.mxu0 %v4623
    %5083 = vmatpush1.bf16.msra.mxu0 %v4622
    %5084 = vmatprep.subr.bf16.mxu0 %v4627
    %5085 = vmatpush1.bf16.msra.mxu0 %v4626
    %5086 = vmatprep.subr.bf16.mxu0 %v4631
    %5087 = vmatpush1.bf16.msra.mxu0 %v4630
    %5088 = vmatprep.subr.bf16.mxu0 %v4635
    %5089 = vmatpush1.bf16.msra.mxu0 %v4634
    %5090 = vmatprep.subr.bf16.mxu0 %v4639
    %5091 = vmatpush1.bf16.msra.mxu0 %v4638
    %5092 = vmatprep.subr.bf16.mxu0 %v4643
    %5093 = vmatpush1.bf16.msra.mxu0 %v4642
    %5094 = vmatprep.subr.bf16.mxu0 %v4647
    %5095 = vmatpush1.bf16.msra.mxu0 %v4646
    %5096 = vmatprep.subr.bf16.mxu0 %v4651
    %5097 = vmatpush1.bf16.msra.mxu0 %v4650
    %5098 = vmatprep.subr.bf16.mxu0 %v4655
    %5099 = vmatpush1.bf16.msra.mxu0 %v4654
    %5100 = vmatprep.subr.bf16.mxu0 %v4659
    %5101 = vmatpush1.bf16.msra.mxu0 %v4658
    %5102 = vmatprep.subr.bf16.mxu0 %v4663
    %5103 = vmatpush1.bf16.msra.mxu0 %v4662
    %5104 = vmatprep.subr.bf16.mxu0 %v4667
    %5105 = vmatpush1.bf16.msra.mxu0 %v4666
    %5106 = vmatprep.subr.bf16.mxu0 %v4671
    %5107 = vmatpush1.bf16.msra.mxu0 %v4670
    %5108 = vmatprep.mubr.bf16.mxu0 %v3703
    %5109 = vmatmul.mubr.bf16.gmra.mrb[0].mxu0 %v3702
    %v5110 = vpop.f32.mrb[0].mxu0
    %v5111 = vadd.f32 %v5070, %v5110
    %v5112 = vpop.f32.mrb[0].mxu0
    %v5113 = vadd.f32 %v5072, %v5112
    %v5114 = vpop.f32.mrb[0].mxu0
    %v5115 = vpop.f32.mrb[0].mxu0
    %5116 = vdwg.mxu0
    %5117 = vmatprep.subr.bf16.mxu0 %v4675
    %5118 = vmatpush1.bf16.msra.mxu0 %v4674
    %5119 = vmatprep.subr.bf16.mxu0 %v4679
    %5120 = vmatpush1.bf16.msra.mxu0 %v4678
    %5121 = vmatprep.subr.bf16.mxu0 %v4683
    %5122 = vmatpush1.bf16.msra.mxu0 %v4682
    %5123 = vmatprep.subr.bf16.mxu0 %v4687
    %5124 = vmatpush1.bf16.msra.mxu0 %v4686
    %5125 = vmatprep.subr.bf16.mxu0 %v4691
    %5126 = vmatpush1.bf16.msra.mxu0 %v4690
    %5127 = vmatprep.subr.bf16.mxu0 %v4695
    %5128 = vmatpush1.bf16.msra.mxu0 %v4694
    %5129 = vmatprep.subr.bf16.mxu0 %v4699
    %5130 = vmatpush1.bf16.msra.mxu0 %v4698
    %5131 = vmatprep.subr.bf16.mxu0 %v4703
    %5132 = vmatpush1.bf16.msra.mxu0 %v4702
    %5133 = vmatprep.subr.bf16.mxu0 %v4707
    %5134 = vmatpush1.bf16.msra.mxu0 %v4706
    %5135 = vmatprep.subr.bf16.mxu0 %v4711
    %5136 = vmatpush1.bf16.msra.mxu0 %v4710
    %5137 = vmatprep.subr.bf16.mxu0 %v4715
    %5138 = vmatpush1.bf16.msra.mxu0 %v4714
    %5139 = vmatprep.subr.bf16.mxu0 %v4719
    %5140 = vmatpush1.bf16.msra.mxu0 %v4718
    %5141 = vmatprep.subr.bf16.mxu0 %v4723
    %5142 = vmatpush1.bf16.msra.mxu0 %v4722
    %5143 = vmatprep.subr.bf16.mxu0 %v4727
    %5144 = vmatpush1.bf16.msra.mxu0 %v4726
    %5145 = vmatprep.subr.bf16.mxu0 %v4731
    %5146 = vmatpush1.bf16.msra.mxu0 %v4730
    %5147 = vmatprep.subr.bf16.mxu0 %v4735
    %5148 = vmatpush1.bf16.msra.mxu0 %v4734
    %5149 = vmatprep.mubr.bf16.mxu0 %v3705
    %5150 = vmatmul.mubr.bf16.gmra.mrb[0].mxu0 %v3704
    %v5151 = vpop.f32.mrb[0].mxu0
    %v5152 = vadd.f32 %v5111, %v5151
    %v5153 = vpop.f32.mrb[0].mxu0
    %v5154 = vadd.f32 %v5113, %v5153
    %v5155 = vpop.f32.mrb[0].mxu0
    %v5156 = vpop.f32.mrb[0].mxu0
    %5157 = vdwg.mxu0
    %5158 = vmatprep.subr.bf16.mxu0 %v4485
    %5159 = vmatpush1.bf16.msra.mxu0 %v4484
    %5160 = vmatprep.subr.bf16.mxu0 %v4489
    %5161 = vmatpush1.bf16.msra.mxu0 %v4488
    %5162 = vmatprep.subr.bf16.mxu0 %v4493
    %5163 = vmatpush1.bf16.msra.mxu0 %v4492
    %5164 = vmatprep.subr.bf16.mxu0 %v4497
    %5165 = vmatpush1.bf16.msra.mxu0 %v4496
    %5166 = vmatprep.subr.bf16.mxu0 %v4501
    %5167 = vmatpush1.bf16.msra.mxu0 %v4500
    %5168 = vmatprep.subr.bf16.mxu0 %v4505
    %5169 = vmatpush1.bf16.msra.mxu0 %v4504
    %5170 = vmatprep.subr.bf16.mxu0 %v4509
    %5171 = vmatpush1.bf16.msra.mxu0 %v4508
    %5172 = vmatprep.subr.bf16.mxu0 %v4513
    %5173 = vmatpush1.bf16.msra.mxu0 %v4512
    %5174 = vmatprep.subr.bf16.mxu0 %v4517
    %5175 = vmatpush1.bf16.msra.mxu0 %v4516
    %5176 = vmatprep.subr.bf16.mxu0 %v4521
    %5177 = vmatpush1.bf16.msra.mxu0 %v4520
    %5178 = vmatprep.subr.bf16.mxu0 %v4525
    %5179 = vmatpush1.bf16.msra.mxu0 %v4524
    %5180 = vmatprep.subr.bf16.mxu0 %v4529
    %5181 = vmatpush1.bf16.msra.mxu0 %v4528
    %5182 = vmatprep.subr.bf16.mxu0 %v4533
    %5183 = vmatpush1.bf16.msra.mxu0 %v4532
    %5184 = vmatprep.subr.bf16.mxu0 %v4537
    %5185 = vmatpush1.bf16.msra.mxu0 %v4536
    %5186 = vmatprep.subr.bf16.mxu0 %v4541
    %5187 = vmatpush1.bf16.msra.mxu0 %v4540
    %5188 = vmatprep.subr.bf16.mxu0 %v4545
    %5189 = vmatpush1.bf16.msra.mxu0 %v4544
    %5190 = vmatprep.mubr.bf16.mxu0 %v3699
    %5191 = vmatmul.mubr.bf16.gmra.mrb[0].mxu0 %v3698
    %v5192 = vpop.f32.mrb[0].mxu0
    %v5193 = vadd.f32 0.0, %v5192
    %v5194 = vpop.f32.mrb[0].mxu0
    %v5195 = vadd.f32 0.0, %v5194
    %v5196 = vpop.f32.mrb[0].mxu0
    %v5197 = vpop.f32.mrb[0].mxu0
    %5198 = vdwg.mxu0
    %5199 = vmatprep.subr.bf16.mxu0 %v4549
    %5200 = vmatpush1.bf16.msra.mxu0 %v4548
    %5201 = vmatprep.subr.bf16.mxu0 %v4553
    %5202 = vmatpush1.bf16.msra.mxu0 %v4552
    %5203 = vmatprep.subr.bf16.mxu0 %v4557
    %5204 = vmatpush1.bf16.msra.mxu0 %v4556
    %5205 = vmatprep.subr.bf16.mxu0 %v4561
    %5206 = vmatpush1.bf16.msra.mxu0 %v4560
    %5207 = vmatprep.subr.bf16.mxu0 %v4565
    %5208 = vmatpush1.bf16.msra.mxu0 %v4564
    %5209 = vmatprep.subr.bf16.mxu0 %v4569
    %5210 = vmatpush1.bf16.msra.mxu0 %v4568
    %5211 = vmatprep.subr.bf16.mxu0 %v4573
    %5212 = vmatpush1.bf16.msra.mxu0 %v4572
    %5213 = vmatprep.subr.bf16.mxu0 %v4577
    %5214 = vmatpush1.bf16.msra.mxu0 %v4576
    %5215 = vmatprep.subr.bf16.mxu0 %v4581
    %5216 = vmatpush1.bf16.msra.mxu0 %v4580
    %5217 = vmatprep.subr.bf16.mxu0 %v4585
    %5218 = vmatpush1.bf16.msra.mxu0 %v4584
    %5219 = vmatprep.subr.bf16.mxu0 %v4589
    %5220 = vmatpush1.bf16.msra.mxu0 %v4588
    %5221 = vmatprep.subr.bf16.mxu0 %v4593
    %5222 = vmatpush1.bf16.msra.mxu0 %v4592
    %5223 = vmatprep.subr.bf16.mxu0 %v4597
    %5224 = vmatpush1.bf16.msra.mxu0 %v4596
    %5225 = vmatprep.subr.bf16.mxu0 %v4601
    %5226 = vmatpush1.bf16.msra.mxu0 %v4600
    %5227 = vmatprep.subr.bf16.mxu0 %v4605
    %5228 = vmatpush1.bf16.msra.mxu0 %v4604
    %5229 = vmatprep.subr.bf16.mxu0 %v4609
    %5230 = vmatpush1.bf16.msra.mxu0 %v4608
    %5231 = vmatprep.mubr.bf16.mxu0 %v3701
    %5232 = vmatmul.mubr.bf16.gmra.mrb[0].mxu0 %v3700
    %v5233 = vpop.f32.mrb[0].mxu0
    %v5234 = vadd.f32 %v5193, %v5233
    %v5235 = vpop.f32.mrb[0].mxu0
    %v5236 = vadd.f32 %v5195, %v5235
    %v5237 = vpop.f32.mrb[0].mxu0
    %v5238 = vpop.f32.mrb[0].mxu0
    %5239 = vdwg.mxu0
    %5240 = vmatprep.subr.bf16.mxu0 %v4613
    %5241 = vmatpush1.bf16.msra.mxu0 %v4612
    %5242 = vmatprep.subr.bf16.mxu0 %v4617
    %5243 = vmatpush1.bf16.msra.mxu0 %v4616
    %5244 = vmatprep.subr.bf16.mxu0 %v4621
    %5245 = vmatpush1.bf16.msra.mxu0 %v4620
    %5246 = vmatprep.subr.bf16.mxu0 %v4625
    %5247 = vmatpush1.bf16.msra.mxu0 %v4624
    %5248 = vmatprep.subr.bf16.mxu0 %v4629
    %5249 = vmatpush1.bf16.msra.mxu0 %v4628
    %5250 = vmatprep.subr.bf16.mxu0 %v4633
    %5251 = vmatpush1.bf16.msra.mxu0 %v4632
    %5252 = vmatprep.subr.bf16.mxu0 %v4637
    %5253 = vmatpush1.bf16.msra.mxu0 %v4636
    %5254 = vmatprep.subr.bf16.mxu0 %v4641
    %5255 = vmatpush1.bf16.msra.mxu0 %v4640
    %5256 = vmatprep.subr.bf16.mxu0 %v4645
    %5257 = vmatpush1.bf16.msra.mxu0 %v4644
    %5258 = vmatprep.subr.bf16.mxu0 %v4649
    %5259 = vmatpush1.bf16.msra.mxu0 %v4648
    %5260 = vmatprep.subr.bf16.mxu0 %v4653
    %5261 = vmatpush1.bf16.msra.mxu0 %v4652
    %5262 = vmatprep.subr.bf16.mxu0 %v4657
    %5263 = vmatpush1.bf16.msra.mxu0 %v4656
    %5264 = vmatprep.subr.bf16.mxu0 %v4661
    %5265 = vmatpush1.bf16.msra.mxu0 %v4660
    %5266 = vmatprep.subr.bf16.mxu0 %v4665
    %5267 = vmatpush1.bf16.msra.mxu0 %v4664
    %5268 = vmatprep.subr.bf16.mxu0 %v4669
    %5269 = vmatpush1.bf16.msra.mxu0 %v4668
    %5270 = vmatprep.subr.bf16.mxu0 %v4673
    %5271 = vmatpush1.bf16.msra.mxu0 %v4672
    %5272 = vmatprep.mubr.bf16.mxu0 %v3703
    %5273 = vmatmul.mubr.bf16.gmra.mrb[0].mxu0 %v3702
    %v5274 = vpop.f32.mrb[0].mxu0
    %v5275 = vadd.f32 %v5234, %v5274
    %v5276 = vpop.f32.mrb[0].mxu0
    %v5277 = vadd.f32 %v5236, %v5276
    %v5278 = vpop.f32.mrb[0].mxu0
    %v5279 = vpop.f32.mrb[0].mxu0
    %5280 = vdwg.mxu0
    %5281 = vmatprep.subr.bf16.mxu0 %v4677
    %5282 = vmatpush1.bf16.msra.mxu0 %v4676
    %5283 = vmatprep.subr.bf16.mxu0 %v4681
    %5284 = vmatpush1.bf16.msra.mxu0 %v4680
    %5285 = vmatprep.subr.bf16.mxu0 %v4685
    %5286 = vmatpush1.bf16.msra.mxu0 %v4684
    %5287 = vmatprep.subr.bf16.mxu0 %v4689
    %5288 = vmatpush1.bf16.msra.mxu0 %v4688
    %5289 = vmatprep.subr.bf16.mxu0 %v4693
    %5290 = vmatpush1.bf16.msra.mxu0 %v4692
    %5291 = vmatprep.subr.bf16.mxu0 %v4697
    %5292 = vmatpush1.bf16.msra.mxu0 %v4696
    %5293 = vmatprep.subr.bf16.mxu0 %v4701
    %5294 = vmatpush1.bf16.msra.mxu0 %v4700
    %5295 = vmatprep.subr.bf16.mxu0 %v4705
    %5296 = vmatpush1.bf16.msra.mxu0 %v4704
    %5297 = vmatprep.subr.bf16.mxu0 %v4709
    %5298 = vmatpush1.bf16.msra.mxu0 %v4708
    %5299 = vmatprep.subr.bf16.mxu0 %v4713
    %5300 = vmatpush1.bf16.msra.mxu0 %v4712
    %5301 = vmatprep.subr.bf16.mxu0 %v4717
    %5302 = vmatpush1.bf16.msra.mxu0 %v4716
    %5303 = vmatprep.subr.bf16.mxu0 %v4721
    %5304 = vmatpush1.bf16.msra.mxu0 %v4720
    %5305 = vmatprep.subr.bf16.mxu0 %v4725
    %5306 = vmatpush1.bf16.msra.mxu0 %v4724
    %5307 = vmatprep.subr.bf16.mxu0 %v4729
    %5308 = vmatpush1.bf16.msra.mxu0 %v4728
    %5309 = vmatprep.subr.bf16.mxu0 %v4733
    %5310 = vmatpush1.bf16.msra.mxu0 %v4732
    %5311 = vmatprep.subr.bf16.mxu0 %v4737
    %5312 = vmatpush1.bf16.msra.mxu0 %v4736
    %5313 = vmatprep.mubr.bf16.mxu0 %v3705
    %5314 = vmatmul.mubr.bf16.gmra.mrb[0].mxu0 %v3704
    %v5315 = vpop.f32.mrb[0].mxu0
    %v5316 = vadd.f32 %v5275, %v5315
    %v5317 = vpop.f32.mrb[0].mxu0
    %v5318 = vadd.f32 %v5277, %v5317
    %v5319 = vpop.f32.mrb[0].mxu0
    %v5320 = vpop.f32.mrb[0].mxu0
    %5321 = vdwg.mxu0
    %v5326 = vcombine.low %v5152, %v5154
    %v5327 = vcombine.low %v5316, %v5318
    %v5329 = vunpack.c.l.s4 1966171168
    %v5330 = vunpack.c.0.s8 %v5329
    %v5331 = vlaneseq
    %v5332 = vshrl.u32 %v5331, 7
    %v5333 = vsub.s32 %v5330, %v5332
    %v5334 = vrot.slane %v5326, %v5333
    %v5336 = vunpack.c.l.s4 1966171168
    %v5337 = vunpack.c.0.s8 %v5336
    %v5338 = vlaneseq
    %v5339 = vshrl.u32 %v5338, 7
    %v5340 = vsub.s32 %v5337, %v5339
    %v5341 = vrot.slane %v5327, %v5340
    %v5342 = vcombine.low %v5334, %v5341
    %v5343 = vcombine.high %v5334, %v5341
    %v5345 = vunpack.c.l.s4 1966171168
    %v5346 = vunpack.c.0.s8 %v5345
    %v5347 = vlaneseq
    %v5348 = vshrl.u32 %v5347, 7
    %v5349 = vsub.s32 %v5346, %v5348
    %v5350 = vrot.slane %v5342, %v5349
    %v5352 = vunpack.c.l.s4 1966171168
    %v5353 = vunpack.c.0.s8 %v5352
    %v5354 = vlaneseq
    %v5355 = vshrl.u32 %v5354, 7
    %v5356 = vsub.s32 %v5353, %v5355
    %v5357 = vrot.slane %v5343, %v5356
    %v5360 = vld [vmem:[#allocation2] sm:$0xf]
    %v5361 = vld [vmem:[#allocation2 + $0x4] sm:$0xf]
    %v5362 = vadd.f32 %v5350, %v5360
    %v5363 = vadd.f32 %v5357, %v5361
    %v5364 = vld [vmem:[%s12] sm:$0xff]
    %v5365 = vld [vmem:[%s12 + $0x8] sm:$0xff]
    %v5366 = vld [vmem:[%s12 + $0x10] sm:$0xff]
    %v5367 = vld [vmem:[%s12 + $0x18] sm:$0xff]
    %v5368 = vld [vmem:[%s12 + $0x20] sm:$0xff]
    %v5369 = vld [vmem:[%s12 + $0x28] sm:$0xff]
    %v5370 = vld [vmem:[%s12 + $0x30] sm:$0xff]
    %v5371 = vld [vmem:[%s12 + $0x38] sm:$0xff]
    %v5372 = vld [vmem:[%s12 + $0x40] sm:$0xff]
    %v5373 = vld [vmem:[%s12 + $0x48] sm:$0xff]
    %v5374 = vld [vmem:[%s12 + $0x50] sm:$0xff]
    %v5375 = vld [vmem:[%s12 + $0x58] sm:$0xff]
    %v5376 = vld [vmem:[%s12 + $0x60] sm:$0xff]
    %v5377 = vld [vmem:[%s12 + $0x68] sm:$0xff]
    %v5378 = vld [vmem:[%s12 + $0x70] sm:$0xff]
    %v5379 = vld [vmem:[%s12 + $0x78] sm:$0xff]
    %v5396 = vunpack.c.l.b16 %v5364
    %v5397 = vunpack.c.h.b16 %v5364
    %v5398 = vunpack.c.l.b16 %v5365
    %v5399 = vunpack.c.h.b16 %v5365
    %v5400 = vunpack.c.l.b16 %v5366
    %v5401 = vunpack.c.h.b16 %v5366
    %v5402 = vunpack.c.l.b16 %v5367
    %v5403 = vunpack.c.h.b16 %v5367
    %v5404 = vunpack.c.l.b16 %v5368
    %v5405 = vunpack.c.h.b16 %v5368
    %v5406 = vunpack.c.l.b16 %v5369
    %v5407 = vunpack.c.h.b16 %v5369
    %v5408 = vunpack.c.l.b16 %v5370
    %v5409 = vunpack.c.h.b16 %v5370
    %v5410 = vunpack.c.l.b16 %v5371
    %v5411 = vunpack.c.h.b16 %v5371
    %v5412 = vunpack.c.l.b16 %v5372
    %v5413 = vunpack.c.h.b16 %v5372
    %v5414 = vunpack.c.l.b16 %v5373
    %v5415 = vunpack.c.h.b16 %v5373
    %v5416 = vunpack.c.l.b16 %v5374
    %v5417 = vunpack.c.h.b16 %v5374
    %v5418 = vunpack.c.l.b16 %v5375
    %v5419 = vunpack.c.h.b16 %v5375
    %v5420 = vunpack.c.l.b16 %v5376
    %v5421 = vunpack.c.h.b16 %v5376
    %v5422 = vunpack.c.l.b16 %v5377
    %v5423 = vunpack.c.h.b16 %v5377
    %v5424 = vunpack.c.l.b16 %v5378
    %v5425 = vunpack.c.h.b16 %v5378
    %v5426 = vunpack.c.l.b16 %v5379
    %v5427 = vunpack.c.h.b16 %v5379
    %v5428 = vpack.c.b16 %v5400, %v5396
    %v5429 = vpack.c.b16 %v5401, %v5397
    %v5430 = vpack.c.b16 %v5402, %v5398
    %v5431 = vpack.c.b16 %v5403, %v5399
    %v5432 = vpack.c.b16 %v5408, %v5404
    %v5433 = vpack.c.b16 %v5409, %v5405
    %v5434 = vpack.c.b16 %v5410, %v5406
    %v5435 = vpack.c.b16 %v5411, %v5407
    %v5436 = vpack.c.b16 %v5416, %v5412
    %v5437 = vpack.c.b16 %v5417, %v5413
    %v5438 = vpack.c.b16 %v5418, %v5414
    %v5439 = vpack.c.b16 %v5419, %v5415
    %v5440 = vpack.c.b16 %v5424, %v5420
    %v5441 = vpack.c.b16 %v5425, %v5421
    %v5442 = vpack.c.b16 %v5426, %v5422
    %v5443 = vpack.c.b16 %v5427, %v5423
    %5460 = vmatprep.subr.bf16.mxu0 %v5429
    %5461 = vmatpush1.bf16.msra.mxu0 %v5428
    %5462 = vmatprep.subr.bf16.mxu0 %v5433
    %5463 = vmatpush1.bf16.msra.mxu0 %v5432
    %5464 = vmatprep.subr.bf16.mxu0 %v5437
    %5465 = vmatpush1.bf16.msra.mxu0 %v5436
    %5466 = vmatprep.subr.bf16.mxu0 %v5441
    %5467 = vmatpush1.bf16.msra.mxu0 %v5440
    %5468 = vmatprep.subr.bf16.mxu0 0
    %5469 = vmatpush1.bf16.msra.mxu0 0
    %5470 = vmatprep.subr.bf16.mxu0 0
    %5471 = vmatpush1.bf16.msra.mxu0 0
    %5472 = vmatprep.subr.bf16.mxu0 0
    %5473 = vmatpush1.bf16.msra.mxu0 0
    %5474 = vmatprep.subr.bf16.mxu0 0
    %5475 = vmatpush1.bf16.msra.mxu0 0
    %5476 = vmatprep.subr.bf16.mxu0 0
    %5477 = vmatpush1.bf16.msra.mxu0 0
    %5478 = vmatprep.subr.bf16.mxu0 0
    %5479 = vmatpush1.bf16.msra.mxu0 0
    %5480 = vmatprep.subr.bf16.mxu0 0
    %5481 = vmatpush1.bf16.msra.mxu0 0
    %5482 = vmatprep.subr.bf16.mxu0 0
    %5483 = vmatpush1.bf16.msra.mxu0 0
    %5484 = vmatprep.subr.bf16.mxu0 0
    %5485 = vmatpush1.bf16.msra.mxu0 0
    %5486 = vmatprep.subr.bf16.mxu0 0
    %5487 = vmatpush1.bf16.msra.mxu0 0
    %5488 = vmatprep.subr.bf16.mxu0 0
    %5489 = vmatpush1.bf16.msra.mxu0 0
    %5490 = vmatprep.subr.bf16.mxu0 0
    %5491 = vmatpush1.bf16.msra.mxu0 0
    %5492 = vmatprep.mubr.bf16.mxu0 0
    %5493 = vmatmul.mubr.bf16.gmra.mrb[0].mxu0 %v995
    %v5494 = vpop.f32.mrb[0].mxu0
    %v5495 = vadd.f32 0.0, %v5494
    %v5496 = vpop.f32.mrb[0].mxu0
    %v5497 = vadd.f32 0.0, %v5496
    %v5498 = vpop.f32.mrb[0].mxu0
    %v5499 = vadd.f32 0.0, %v5498
    %v5500 = vpop.f32.mrb[0].mxu0
    %v5501 = vadd.f32 0.0, %v5500
    %5502 = vmatprep.mubr.bf16.mxu0 0
    %5503 = vmatmul.mubr.bf16.gmra.mrb[0].mxu0 %v998
    %v5504 = vpop.f32.mrb[0].mxu0
    %v5505 = vadd.f32 0.0, %v5504
    %v5506 = vpop.f32.mrb[0].mxu0
    %v5507 = vadd.f32 0.0, %v5506
    %v5508 = vpop.f32.mrb[0].mxu0
    %v5509 = vadd.f32 0.0, %v5508
    %v5510 = vpop.f32.mrb[0].mxu0
    %v5511 = vadd.f32 0.0, %v5510
    %5512 = vmatprep.mubr.bf16.mxu0 0
    %5513 = vmatmul.mubr.bf16.gmra.mrb[0].mxu0 %v1001
    %v5514 = vpop.f32.mrb[0].mxu0
    %v5515 = vadd.f32 0.0, %v5514
    %v5516 = vpop.f32.mrb[0].mxu0
    %v5517 = vadd.f32 0.0, %v5516
    %v5518 = vpop.f32.mrb[0].mxu0
    %v5519 = vadd.f32 0.0, %v5518
    %v5520 = vpop.f32.mrb[0].mxu0
    %v5521 = vadd.f32 0.0, %v5520
    %5522 = vmatprep.mubr.bf16.mxu0 0
    %5523 = vmatmul.mubr.bf16.gmra.mrb[0].mxu0 %v1004
    %v5524 = vpop.f32.mrb[0].mxu0
    %v5525 = vadd.f32 0.0, %v5524
    %v5526 = vpop.f32.mrb[0].mxu0
    %v5527 = vadd.f32 0.0, %v5526
    %v5528 = vpop.f32.mrb[0].mxu0
    %v5529 = vadd.f32 0.0, %v5528
    %v5530 = vpop.f32.mrb[0].mxu0
    %v5531 = vadd.f32 0.0, %v5530
    %5532 = vmatprep.mubr.bf16.mxu0 0
    %5533 = vmatmul.mubr.bf16.gmra.mrb[0].mxu0 %v1007
    %v5534 = vpop.f32.mrb[0].mxu0
    %v5535 = vadd.f32 0.0, %v5534
    %v5536 = vpop.f32.mrb[0].mxu0
    %v5537 = vadd.f32 0.0, %v5536
    %v5538 = vpop.f32.mrb[0].mxu0
    %v5539 = vadd.f32 0.0, %v5538
    %v5540 = vpop.f32.mrb[0].mxu0
    %v5541 = vadd.f32 0.0, %v5540
    %5542 = vmatprep.mubr.bf16.mxu0 0
    %5543 = vmatmul.mubr.bf16.gmra.mrb[0].mxu0 %v1010
    %v5544 = vpop.f32.mrb[0].mxu0
    %v5545 = vadd.f32 0.0, %v5544
    %v5546 = vpop.f32.mrb[0].mxu0
    %v5547 = vadd.f32 0.0, %v5546
    %v5548 = vpop.f32.mrb[0].mxu0
    %v5549 = vadd.f32 0.0, %v5548
    %v5550 = vpop.f32.mrb[0].mxu0
    %v5551 = vadd.f32 0.0, %v5550
    %5552 = vmatprep.mubr.bf16.mxu0 0
    %5553 = vmatmul.mubr.bf16.gmra.mrb[0].mxu0 %v1013
    %v5554 = vpop.f32.mrb[0].mxu0
    %v5555 = vadd.f32 0.0, %v5554
    %v5556 = vpop.f32.mrb[0].mxu0
    %v5557 = vadd.f32 0.0, %v5556
    %v5558 = vpop.f32.mrb[0].mxu0
    %v5559 = vadd.f32 0.0, %v5558
    %v5560 = vpop.f32.mrb[0].mxu0
    %v5561 = vadd.f32 0.0, %v5560
    %5562 = vmatprep.mubr.bf16.mxu0 0
    %5563 = vmatmul.mubr.bf16.gmra.mrb[0].mxu0 %v1016
    %v5564 = vpop.f32.mrb[0].mxu0
    %v5565 = vadd.f32 0.0, %v5564
    %v5566 = vpop.f32.mrb[0].mxu0
    %v5567 = vadd.f32 0.0, %v5566
    %v5568 = vpop.f32.mrb[0].mxu0
    %v5569 = vadd.f32 0.0, %v5568
    %v5570 = vpop.f32.mrb[0].mxu0
    %v5571 = vadd.f32 0.0, %v5570
    %5572 = vmatprep.mubr.bf16.mxu0 0
    %5573 = vmatmul.mubr.bf16.gmra.mrb[0].mxu0 %v1019
    %v5574 = vpop.f32.mrb[0].mxu0
    %v5575 = vadd.f32 0.0, %v5574
    %v5576 = vpop.f32.mrb[0].mxu0
    %v5577 = vadd.f32 0.0, %v5576
    %v5578 = vpop.f32.mrb[0].mxu0
    %v5579 = vadd.f32 0.0, %v5578
    %v5580 = vpop.f32.mrb[0].mxu0
    %v5581 = vadd.f32 0.0, %v5580
    %5582 = vmatprep.mubr.bf16.mxu0 0
    %5583 = vmatmul.mubr.bf16.gmra.mrb[0].mxu0 %v1022
    %v5584 = vpop.f32.mrb[0].mxu0
    %v5585 = vadd.f32 0.0, %v5584
    %v5586 = vpop.f32.mrb[0].mxu0
    %v5587 = vadd.f32 0.0, %v5586
    %v5588 = vpop.f32.mrb[0].mxu0
    %v5589 = vadd.f32 0.0, %v5588
    %v5590 = vpop.f32.mrb[0].mxu0
    %v5591 = vadd.f32 0.0, %v5590
    %5592 = vmatprep.mubr.bf16.mxu0 0
    %5593 = vmatmul.mubr.bf16.gmra.mrb[0].mxu0 %v1025
    %v5594 = vpop.f32.mrb[0].mxu0
    %v5595 = vadd.f32 0.0, %v5594
    %v5596 = vpop.f32.mrb[0].mxu0
    %v5597 = vadd.f32 0.0, %v5596
    %v5598 = vpop.f32.mrb[0].mxu0
    %v5599 = vadd.f32 0.0, %v5598
    %v5600 = vpop.f32.mrb[0].mxu0
    %v5601 = vadd.f32 0.0, %v5600
    %5602 = vmatprep.mubr.bf16.mxu0 0
    %5603 = vmatmul.mubr.bf16.gmra.mrb[0].mxu0 %v1028
    %v5604 = vpop.f32.mrb[0].mxu0
    %v5605 = vadd.f32 0.0, %v5604
    %v5606 = vpop.f32.mrb[0].mxu0
    %v5607 = vadd.f32 0.0, %v5606
    %v5608 = vpop.f32.mrb[0].mxu0
    %v5609 = vadd.f32 0.0, %v5608
    %v5610 = vpop.f32.mrb[0].mxu0
    %v5611 = vadd.f32 0.0, %v5610
    %5612 = vmatprep.mubr.bf16.mxu0 0
    %5613 = vmatmul.mubr.bf16.gmra.mrb[0].mxu0 %v1031
    %v5614 = vpop.f32.mrb[0].mxu0
    %v5615 = vadd.f32 0.0, %v5614
    %v5616 = vpop.f32.mrb[0].mxu0
    %v5617 = vadd.f32 0.0, %v5616
    %v5618 = vpop.f32.mrb[0].mxu0
    %v5619 = vadd.f32 0.0, %v5618
    %v5620 = vpop.f32.mrb[0].mxu0
    %v5621 = vadd.f32 0.0, %v5620
    %5622 = vmatprep.mubr.bf16.mxu0 0
    %5623 = vmatmul.mubr.bf16.gmra.mrb[0].mxu0 %v1034
    %v5624 = vpop.f32.mrb[0].mxu0
    %v5625 = vadd.f32 0.0, %v5624
    %v5626 = vpop.f32.mrb[0].mxu0
    %v5627 = vadd.f32 0.0, %v5626
    %v5628 = vpop.f32.mrb[0].mxu0
    %v5629 = vadd.f32 0.0, %v5628
    %v5630 = vpop.f32.mrb[0].mxu0
    %v5631 = vadd.f32 0.0, %v5630
    %5632 = vmatprep.mubr.bf16.mxu0 0
    %5633 = vmatmul.mubr.bf16.gmra.mrb[0].mxu0 %v1037
    %v5634 = vpop.f32.mrb[0].mxu0
    %v5635 = vadd.f32 0.0, %v5634
    %v5636 = vpop.f32.mrb[0].mxu0
    %v5637 = vadd.f32 0.0, %v5636
    %v5638 = vpop.f32.mrb[0].mxu0
    %v5639 = vadd.f32 0.0, %v5638
    %v5640 = vpop.f32.mrb[0].mxu0
    %v5641 = vadd.f32 0.0, %v5640
    %5642 = vmatprep.mubr.bf16.mxu0 0
    %5643 = vmatmul.mubr.bf16.gmra.mrb[0].mxu0 %v1040
    %v5644 = vpop.f32.mrb[0].mxu0
    %v5645 = vadd.f32 0.0, %v5644
    %v5646 = vpop.f32.mrb[0].mxu0
    %v5647 = vadd.f32 0.0, %v5646
    %v5648 = vpop.f32.mrb[0].mxu0
    %v5649 = vadd.f32 0.0, %v5648
    %v5650 = vpop.f32.mrb[0].mxu0
    %v5651 = vadd.f32 0.0, %v5650
    %5652 = vdwg.mxu0
    %5653 = vmatprep.subr.bf16.mxu0 %v5431
    %5654 = vmatpush1.bf16.msra.mxu0 %v5430
    %5655 = vmatprep.subr.bf16.mxu0 %v5435
    %5656 = vmatpush1.bf16.msra.mxu0 %v5434
    %5657 = vmatprep.subr.bf16.mxu0 %v5439
    %5658 = vmatpush1.bf16.msra.mxu0 %v5438
    %5659 = vmatprep.subr.bf16.mxu0 %v5443
    %5660 = vmatpush1.bf16.msra.mxu0 %v5442
    %5661 = vmatprep.subr.bf16.mxu0 0
    %5662 = vmatpush1.bf16.msra.mxu0 0
    %5663 = vmatprep.subr.bf16.mxu0 0
    %5664 = vmatpush1.bf16.msra.mxu0 0
    %5665 = vmatprep.subr.bf16.mxu0 0
    %5666 = vmatpush1.bf16.msra.mxu0 0
    %5667 = vmatprep.subr.bf16.mxu0 0
    %5668 = vmatpush1.bf16.msra.mxu0 0
    %5669 = vmatprep.subr.bf16.mxu0 0
    %5670 = vmatpush1.bf16.msra.mxu0 0
    %5671 = vmatprep.subr.bf16.mxu0 0
    %5672 = vmatpush1.bf16.msra.mxu0 0
    %5673 = vmatprep.subr.bf16.mxu0 0
    %5674 = vmatpush1.bf16.msra.mxu0 0
    %5675 = vmatprep.subr.bf16.mxu0 0
    %5676 = vmatpush1.bf16.msra.mxu0 0
    %5677 = vmatprep.subr.bf16.mxu0 0
    %5678 = vmatpush1.bf16.msra.mxu0 0
    %5679 = vmatprep.subr.bf16.mxu0 0
    %5680 = vmatpush1.bf16.msra.mxu0 0
    %5681 = vmatprep.subr.bf16.mxu0 0
    %5682 = vmatpush1.bf16.msra.mxu0 0
    %5683 = vmatprep.subr.bf16.mxu0 0
    %5684 = vmatpush1.bf16.msra.mxu0 0
    %5685 = vmatprep.mubr.bf16.mxu0 0
    %5686 = vmatmul.mubr.bf16.gmra.mrb[0].mxu0 %v995
    %v5687 = vpop.f32.mrb[0].mxu0
    %v5688 = vadd.f32 0.0, %v5687
    %v5689 = vpop.f32.mrb[0].mxu0
    %v5690 = vadd.f32 0.0, %v5689
    %v5691 = vpop.f32.mrb[0].mxu0
    %v5692 = vadd.f32 0.0, %v5691
    %v5693 = vpop.f32.mrb[0].mxu0
    %v5694 = vadd.f32 0.0, %v5693
    %5695 = vmatprep.mubr.bf16.mxu0 0
    %5696 = vmatmul.mubr.bf16.gmra.mrb[0].mxu0 %v998
    %v5697 = vpop.f32.mrb[0].mxu0
    %v5698 = vadd.f32 0.0, %v5697
    %v5699 = vpop.f32.mrb[0].mxu0
    %v5700 = vadd.f32 0.0, %v5699
    %v5701 = vpop.f32.mrb[0].mxu0
    %v5702 = vadd.f32 0.0, %v5701
    %v5703 = vpop.f32.mrb[0].mxu0
    %v5704 = vadd.f32 0.0, %v5703
    %5705 = vmatprep.mubr.bf16.mxu0 0
    %5706 = vmatmul.mubr.bf16.gmra.mrb[0].mxu0 %v1001
    %v5707 = vpop.f32.mrb[0].mxu0
    %v5708 = vadd.f32 0.0, %v5707
    %v5709 = vpop.f32.mrb[0].mxu0
    %v5710 = vadd.f32 0.0, %v5709
    %v5711 = vpop.f32.mrb[0].mxu0
    %v5712 = vadd.f32 0.0, %v5711
    %v5713 = vpop.f32.mrb[0].mxu0
    %v5714 = vadd.f32 0.0, %v5713
    %5715 = vmatprep.mubr.bf16.mxu0 0
    %5716 = vmatmul.mubr.bf16.gmra.mrb[0].mxu0 %v1004
    %v5717 = vpop.f32.mrb[0].mxu0
    %v5718 = vadd.f32 0.0, %v5717
    %v5719 = vpop.f32.mrb[0].mxu0
    %v5720 = vadd.f32 0.0, %v5719
    %v5721 = vpop.f32.mrb[0].mxu0
    %v5722 = vadd.f32 0.0, %v5721
    %v5723 = vpop.f32.mrb[0].mxu0
    %v5724 = vadd.f32 0.0, %v5723
    %5725 = vmatprep.mubr.bf16.mxu0 0
    %5726 = vmatmul.mubr.bf16.gmra.mrb[0].mxu0 %v1007
    %v5727 = vpop.f32.mrb[0].mxu0
    %v5728 = vadd.f32 0.0, %v5727
    %v5729 = vpop.f32.mrb[0].mxu0
    %v5730 = vadd.f32 0.0, %v5729
    %v5731 = vpop.f32.mrb[0].mxu0
    %v5732 = vadd.f32 0.0, %v5731
    %v5733 = vpop.f32.mrb[0].mxu0
    %v5734 = vadd.f32 0.0, %v5733
    %5735 = vmatprep.mubr.bf16.mxu0 0
    %5736 = vmatmul.mubr.bf16.gmra.mrb[0].mxu0 %v1010
    %v5737 = vpop.f32.mrb[0].mxu0
    %v5738 = vadd.f32 0.0, %v5737
    %v5739 = vpop.f32.mrb[0].mxu0
    %v5740 = vadd.f32 0.0, %v5739
    %v5741 = vpop.f32.mrb[0].mxu0
    %v5742 = vadd.f32 0.0, %v5741
    %v5743 = vpop.f32.mrb[0].mxu0
    %v5744 = vadd.f32 0.0, %v5743
    %5745 = vmatprep.mubr.bf16.mxu0 0
    %5746 = vmatmul.mubr.bf16.gmra.mrb[0].mxu0 %v1013
    %v5747 = vpop.f32.mrb[0].mxu0
    %v5748 = vadd.f32 0.0, %v5747
    %v5749 = vpop.f32.mrb[0].mxu0
    %v5750 = vadd.f32 0.0, %v5749
    %v5751 = vpop.f32.mrb[0].mxu0
    %v5752 = vadd.f32 0.0, %v5751
    %v5753 = vpop.f32.mrb[0].mxu0
    %v5754 = vadd.f32 0.0, %v5753
    %5755 = vmatprep.mubr.bf16.mxu0 0
    %5756 = vmatmul.mubr.bf16.gmra.mrb[0].mxu0 %v1016
    %v5757 = vpop.f32.mrb[0].mxu0
    %v5758 = vadd.f32 0.0, %v5757
    %v5759 = vpop.f32.mrb[0].mxu0
    %v5760 = vadd.f32 0.0, %v5759
    %v5761 = vpop.f32.mrb[0].mxu0
    %v5762 = vadd.f32 0.0, %v5761
    %v5763 = vpop.f32.mrb[0].mxu0
    %v5764 = vadd.f32 0.0, %v5763
    %5765 = vmatprep.mubr.bf16.mxu0 0
    %5766 = vmatmul.mubr.bf16.gmra.mrb[0].mxu0 %v1019
    %v5767 = vpop.f32.mrb[0].mxu0
    %v5768 = vadd.f32 0.0, %v5767
    %v5769 = vpop.f32.mrb[0].mxu0
    %v5770 = vadd.f32 0.0, %v5769
    %v5771 = vpop.f32.mrb[0].mxu0
    %v5772 = vadd.f32 0.0, %v5771
    %v5773 = vpop.f32.mrb[0].mxu0
    %v5774 = vadd.f32 0.0, %v5773
    %5775 = vmatprep.mubr.bf16.mxu0 0
    %5776 = vmatmul.mubr.bf16.gmra.mrb[0].mxu0 %v1022
    %v5777 = vpop.f32.mrb[0].mxu0
    %v5778 = vadd.f32 0.0, %v5777
    %v5779 = vpop.f32.mrb[0].mxu0
    %v5780 = vadd.f32 0.0, %v5779
    %v5781 = vpop.f32.mrb[0].mxu0
    %v5782 = vadd.f32 0.0, %v5781
    %v5783 = vpop.f32.mrb[0].mxu0
    %v5784 = vadd.f32 0.0, %v5783
    %5785 = vmatprep.mubr.bf16.mxu0 0
    %5786 = vmatmul.mubr.bf16.gmra.mrb[0].mxu0 %v1025
    %v5787 = vpop.f32.mrb[0].mxu0
    %v5788 = vadd.f32 0.0, %v5787
    %v5789 = vpop.f32.mrb[0].mxu0
    %v5790 = vadd.f32 0.0, %v5789
    %v5791 = vpop.f32.mrb[0].mxu0
    %v5792 = vadd.f32 0.0, %v5791
    %v5793 = vpop.f32.mrb[0].mxu0
    %v5794 = vadd.f32 0.0, %v5793
    %5795 = vmatprep.mubr.bf16.mxu0 0
    %5796 = vmatmul.mubr.bf16.gmra.mrb[0].mxu0 %v1028
    %v5797 = vpop.f32.mrb[0].mxu0
    %v5798 = vadd.f32 0.0, %v5797
    %v5799 = vpop.f32.mrb[0].mxu0
    %v5800 = vadd.f32 0.0, %v5799
    %v5801 = vpop.f32.mrb[0].mxu0
    %v5802 = vadd.f32 0.0, %v5801
    %v5803 = vpop.f32.mrb[0].mxu0
    %v5804 = vadd.f32 0.0, %v5803
    %5805 = vmatprep.mubr.bf16.mxu0 0
    %5806 = vmatmul.mubr.bf16.gmra.mrb[0].mxu0 %v1031
    %v5807 = vpop.f32.mrb[0].mxu0
    %v5808 = vadd.f32 0.0, %v5807
    %v5809 = vpop.f32.mrb[0].mxu0
    %v5810 = vadd.f32 0.0, %v5809
    %v5811 = vpop.f32.mrb[0].mxu0
    %v5812 = vadd.f32 0.0, %v5811
    %v5813 = vpop.f32.mrb[0].mxu0
    %v5814 = vadd.f32 0.0, %v5813
    %5815 = vmatprep.mubr.bf16.mxu0 0
    %5816 = vmatmul.mubr.bf16.gmra.mrb[0].mxu0 %v1034
    %v5817 = vpop.f32.mrb[0].mxu0
    %v5818 = vadd.f32 0.0, %v5817
    %v5819 = vpop.f32.mrb[0].mxu0
    %v5820 = vadd.f32 0.0, %v5819
    %v5821 = vpop.f32.mrb[0].mxu0
    %v5822 = vadd.f32 0.0, %v5821
    %v5823 = vpop.f32.mrb[0].mxu0
    %v5824 = vadd.f32 0.0, %v5823
    %5825 = vmatprep.mubr.bf16.mxu0 0
    %5826 = vmatmul.mubr.bf16.gmra.mrb[0].mxu0 %v1037
    %v5827 = vpop.f32.mrb[0].mxu0
    %v5828 = vadd.f32 0.0, %v5827
    %v5829 = vpop.f32.mrb[0].mxu0
    %v5830 = vadd.f32 0.0, %v5829
    %v5831 = vpop.f32.mrb[0].mxu0
    %v5832 = vadd.f32 0.0, %v5831
    %v5833 = vpop.f32.mrb[0].mxu0
    %v5834 = vadd.f32 0.0, %v5833
    %5835 = vmatprep.mubr.bf16.mxu0 0
    %5836 = vmatmul.mubr.bf16.gmra.mrb[0].mxu0 %v1040
    %v5837 = vpop.f32.mrb[0].mxu0
    %v5838 = vadd.f32 0.0, %v5837
    %v5839 = vpop.f32.mrb[0].mxu0
    %v5840 = vadd.f32 0.0, %v5839
    %v5841 = vpop.f32.mrb[0].mxu0
    %v5842 = vadd.f32 0.0, %v5841
    %v5843 = vpop.f32.mrb[0].mxu0
    %v5844 = vadd.f32 0.0, %v5843
    %5845 = vdwg.mxu0
    %v5848 = vlaneseq
    %v5849 = vshrl.u32 %v5848, 7
    %v5850 = vsub.s32 0, %v5849
    %v5851 = vrot.slane %v5362, %v5850
    %v5852 = vlaneseq
    %v5853 = vshrl.u32 %v5852, 7
    %v5854 = vsub.s32 1, %v5853
    %v5855 = vrot.slane %v5362, %v5854
    %v5856 = vlaneseq
    %v5857 = vshrl.u32 %v5856, 7
    %v5858 = vsub.s32 2, %v5857
    %v5859 = vrot.slane %v5362, %v5858
    %v5860 = vlaneseq
    %v5861 = vshrl.u32 %v5860, 7
    %v5862 = vsub.s32 3, %v5861
    %v5863 = vrot.slane %v5362, %v5862
    %v5864 = vlaneseq
    %v5865 = vshrl.u32 %v5864, 7
    %v5866 = vsub.s32 0, %v5865
    %v5867 = vrot.slane %v5363, %v5866
    %v5868 = vlaneseq
    %v5869 = vshrl.u32 %v5868, 7
    %v5870 = vsub.s32 1, %v5869
    %v5871 = vrot.slane %v5363, %v5870
    %v5872 = vlaneseq
    %v5873 = vshrl.u32 %v5872, 7
    %v5874 = vsub.s32 2, %v5873
    %v5875 = vrot.slane %v5363, %v5874
    %v5876 = vlaneseq
    %v5877 = vshrl.u32 %v5876, 7
    %v5878 = vsub.s32 3, %v5877
    %v5879 = vrot.slane %v5363, %v5878
    %v5888 = vadd.f32 %v5495, %v5851
    %v5889 = vadd.f32 %v5497, %v5855
    %v5890 = vadd.f32 %v5688, %v5859
    %v5891 = vadd.f32 %v5690, %v5863
    %v5892 = vadd.f32 %v5499, %v5851
    %v5893 = vadd.f32 %v5501, %v5855
    %v5894 = vadd.f32 %v5692, %v5859
    %v5895 = vadd.f32 %v5694, %v5863
    %v5896 = vadd.f32 %v5505, %v5851
    %v5897 = vadd.f32 %v5507, %v5855
    %v5898 = vadd.f32 %v5698, %v5859
    %v5899 = vadd.f32 %v5700, %v5863
    %v5900 = vadd.f32 %v5509, %v5851
    %v5901 = vadd.f32 %v5511, %v5855
    %v5902 = vadd.f32 %v5702, %v5859
    %v5903 = vadd.f32 %v5704, %v5863
    %v5904 = vadd.f32 %v5515, %v5851
    %v5905 = vadd.f32 %v5517, %v5855
    %v5906 = vadd.f32 %v5708, %v5859
    %v5907 = vadd.f32 %v5710, %v5863
    %v5908 = vadd.f32 %v5519, %v5851
    %v5909 = vadd.f32 %v5521, %v5855
    %v5910 = vadd.f32 %v5712, %v5859
    %v5911 = vadd.f32 %v5714, %v5863
    %v5912 = vadd.f32 %v5525, %v5851
    %v5913 = vadd.f32 %v5527, %v5855
    %v5914 = vadd.f32 %v5718, %v5859
    %v5915 = vadd.f32 %v5720, %v5863
    %v5916 = vadd.f32 %v5529, %v5851
    %v5917 = vadd.f32 %v5531, %v5855
    %v5918 = vadd.f32 %v5722, %v5859
    %v5919 = vadd.f32 %v5724, %v5863
    %v5920 = vadd.f32 %v5535, %v5851
    %v5921 = vadd.f32 %v5537, %v5855
    %v5922 = vadd.f32 %v5728, %v5859
    %v5923 = vadd.f32 %v5730, %v5863
    %v5924 = vadd.f32 %v5539, %v5851
    %v5925 = vadd.f32 %v5541, %v5855
    %v5926 = vadd.f32 %v5732, %v5859
    %v5927 = vadd.f32 %v5734, %v5863
    %v5928 = vadd.f32 %v5545, %v5851
    %v5929 = vadd.f32 %v5547, %v5855
    %v5930 = vadd.f32 %v5738, %v5859
    %v5931 = vadd.f32 %v5740, %v5863
    %v5932 = vadd.f32 %v5549, %v5851
    %v5933 = vadd.f32 %v5551, %v5855
    %v5934 = vadd.f32 %v5742, %v5859
    %v5935 = vadd.f32 %v5744, %v5863
    %v5936 = vadd.f32 %v5555, %v5851
    %v5937 = vadd.f32 %v5557, %v5855
    %v5938 = vadd.f32 %v5748, %v5859
    %v5939 = vadd.f32 %v5750, %v5863
    %v5940 = vadd.f32 %v5559, %v5851
    %v5941 = vadd.f32 %v5561, %v5855
    %v5942 = vadd.f32 %v5752, %v5859
    %v5943 = vadd.f32 %v5754, %v5863
    %v5944 = vadd.f32 %v5565, %v5851
    %v5945 = vadd.f32 %v5567, %v5855
    %v5946 = vadd.f32 %v5758, %v5859
    %v5947 = vadd.f32 %v5760, %v5863
    %v5948 = vadd.f32 %v5569, %v5851
    %v5949 = vadd.f32 %v5571, %v5855
    %v5950 = vadd.f32 %v5762, %v5859
    %v5951 = vadd.f32 %v5764, %v5863
    %v5952 = vadd.f32 %v5575, %v5867
    %v5953 = vadd.f32 %v5577, %v5871
    %v5954 = vadd.f32 %v5768, %v5875
    %v5955 = vadd.f32 %v5770, %v5879
    %v5956 = vadd.f32 %v5579, %v5867
    %v5957 = vadd.f32 %v5581, %v5871
    %v5958 = vadd.f32 %v5772, %v5875
    %v5959 = vadd.f32 %v5774, %v5879
    %v5960 = vadd.f32 %v5585, %v5867
    %v5961 = vadd.f32 %v5587, %v5871
    %v5962 = vadd.f32 %v5778, %v5875
    %v5963 = vadd.f32 %v5780, %v5879
    %v5964 = vadd.f32 %v5589, %v5867
    %v5965 = vadd.f32 %v5591, %v5871
    %v5966 = vadd.f32 %v5782, %v5875
    %v5967 = vadd.f32 %v5784, %v5879
    %v5968 = vadd.f32 %v5595, %v5867
    %v5969 = vadd.f32 %v5597, %v5871
    %v5970 = vadd.f32 %v5788, %v5875
    %v5971 = vadd.f32 %v5790, %v5879
    %v5972 = vadd.f32 %v5599, %v5867
    %v5973 = vadd.f32 %v5601, %v5871
    %v5974 = vadd.f32 %v5792, %v5875
    %v5975 = vadd.f32 %v5794, %v5879
    %v5976 = vadd.f32 %v5605, %v5867
    %v5977 = vadd.f32 %v5607, %v5871
    %v5978 = vadd.f32 %v5798, %v5875
    %v5979 = vadd.f32 %v5800, %v5879
    %v5980 = vadd.f32 %v5609, %v5867
    %v5981 = vadd.f32 %v5611, %v5871
    %v5982 = vadd.f32 %v5802, %v5875
    %v5983 = vadd.f32 %v5804, %v5879
    %v5984 = vadd.f32 %v5615, %v5867
    %v5985 = vadd.f32 %v5617, %v5871
    %v5986 = vadd.f32 %v5808, %v5875
    %v5987 = vadd.f32 %v5810, %v5879
    %v5988 = vadd.f32 %v5619, %v5867
    %v5989 = vadd.f32 %v5621, %v5871
    %v5990 = vadd.f32 %v5812, %v5875
    %v5991 = vadd.f32 %v5814, %v5879
    %v5992 = vadd.f32 %v5625, %v5867
    %v5993 = vadd.f32 %v5627, %v5871
    %v5994 = vadd.f32 %v5818, %v5875
    %v5995 = vadd.f32 %v5820, %v5879
    %v5996 = vadd.f32 %v5629, %v5867
    %v5997 = vadd.f32 %v5631, %v5871
    %v5998 = vadd.f32 %v5822, %v5875
    %v5999 = vadd.f32 %v5824, %v5879
    %v6000 = vadd.f32 %v5635, %v5867
    %v6001 = vadd.f32 %v5637, %v5871
    %v6002 = vadd.f32 %v5828, %v5875
    %v6003 = vadd.f32 %v5830, %v5879
    %v6004 = vadd.f32 %v5639, %v5867
    %v6005 = vadd.f32 %v5641, %v5871
    %v6006 = vadd.f32 %v5832, %v5875
    %v6007 = vadd.f32 %v5834, %v5879
    %v6008 = vadd.f32 %v5645, %v5867
    %v6009 = vadd.f32 %v5647, %v5871
    %v6010 = vadd.f32 %v5838, %v5875
    %v6011 = vadd.f32 %v5840, %v5879
    %v6012 = vadd.f32 %v5649, %v5867
    %v6013 = vadd.f32 %v5651, %v5871
    %v6014 = vadd.f32 %v5842, %v5875
    %v6015 = vadd.f32 %v5844, %v5879
    %v6016 = vmax.f32 %v5888, 0.0
    %v6017 = vmax.f32 %v5889, 0.0
    %v6018 = vmax.f32 %v5890, 0.0
    %v6019 = vmax.f32 %v5891, 0.0
    %v6020 = vmax.f32 %v5892, 0.0
    %v6021 = vmax.f32 %v5893, 0.0
    %v6022 = vmax.f32 %v5894, 0.0
    %v6023 = vmax.f32 %v5895, 0.0
    %v6024 = vmax.f32 %v5896, 0.0
    %v6025 = vmax.f32 %v5897, 0.0
    %v6026 = vmax.f32 %v5898, 0.0
    %v6027 = vmax.f32 %v5899, 0.0
    %v6028 = vmax.f32 %v5900, 0.0
    %v6029 = vmax.f32 %v5901, 0.0
    %v6030 = vmax.f32 %v5902, 0.0
    %v6031 = vmax.f32 %v5903, 0.0
    %v6032 = vmax.f32 %v5904, 0.0
    %v6033 = vmax.f32 %v5905, 0.0
    %v6034 = vmax.f32 %v5906, 0.0
    %v6035 = vmax.f32 %v5907, 0.0
    %v6036 = vmax.f32 %v5908, 0.0
    %v6037 = vmax.f32 %v5909, 0.0
    %v6038 = vmax.f32 %v5910, 0.0
    %v6039 = vmax.f32 %v5911, 0.0
    %v6040 = vmax.f32 %v5912, 0.0
    %v6041 = vmax.f32 %v5913, 0.0
    %v6042 = vmax.f32 %v5914, 0.0
    %v6043 = vmax.f32 %v5915, 0.0
    %v6044 = vmax.f32 %v5916, 0.0
    %v6045 = vmax.f32 %v5917, 0.0
    %v6046 = vmax.f32 %v5918, 0.0
    %v6047 = vmax.f32 %v5919, 0.0
    %v6048 = vmax.f32 %v5920, 0.0
    %v6049 = vmax.f32 %v5921, 0.0
    %v6050 = vmax.f32 %v5922, 0.0
    %v6051 = vmax.f32 %v5923, 0.0
    %v6052 = vmax.f32 %v5924, 0.0
    %v6053 = vmax.f32 %v5925, 0.0
    %v6054 = vmax.f32 %v5926, 0.0
    %v6055 = vmax.f32 %v5927, 0.0
    %v6056 = vmax.f32 %v5928, 0.0
    %v6057 = vmax.f32 %v5929, 0.0
    %v6058 = vmax.f32 %v5930, 0.0
    %v6059 = vmax.f32 %v5931, 0.0
    %v6060 = vmax.f32 %v5932, 0.0
    %v6061 = vmax.f32 %v5933, 0.0
    %v6062 = vmax.f32 %v5934, 0.0
    %v6063 = vmax.f32 %v5935, 0.0
    %v6064 = vmax.f32 %v5936, 0.0
    %v6065 = vmax.f32 %v5937, 0.0
    %v6066 = vmax.f32 %v5938, 0.0
    %v6067 = vmax.f32 %v5939, 0.0
    %v6068 = vmax.f32 %v5940, 0.0
    %v6069 = vmax.f32 %v5941, 0.0
    %v6070 = vmax.f32 %v5942, 0.0
    %v6071 = vmax.f32 %v5943, 0.0
    %v6072 = vmax.f32 %v5944, 0.0
    %v6073 = vmax.f32 %v5945, 0.0
    %v6074 = vmax.f32 %v5946, 0.0
    %v6075 = vmax.f32 %v5947, 0.0
    %v6076 = vmax.f32 %v5948, 0.0
    %v6077 = vmax.f32 %v5949, 0.0
    %v6078 = vmax.f32 %v5950, 0.0
    %v6079 = vmax.f32 %v5951, 0.0
    %v6080 = vmax.f32 %v5952, 0.0
    %v6081 = vmax.f32 %v5953, 0.0
    %v6082 = vmax.f32 %v5954, 0.0
    %v6083 = vmax.f32 %v5955, 0.0
    %v6084 = vmax.f32 %v5956, 0.0
    %v6085 = vmax.f32 %v5957, 0.0
    %v6086 = vmax.f32 %v5958, 0.0
    %v6087 = vmax.f32 %v5959, 0.0
    %v6088 = vmax.f32 %v5960, 0.0
    %v6089 = vmax.f32 %v5961, 0.0
    %v6090 = vmax.f32 %v5962, 0.0
    %v6091 = vmax.f32 %v5963, 0.0
    %v6092 = vmax.f32 %v5964, 0.0
    %v6093 = vmax.f32 %v5965, 0.0
    %v6094 = vmax.f32 %v5966, 0.0
    %v6095 = vmax.f32 %v5967, 0.0
    %v6096 = vmax.f32 %v5968, 0.0
    %v6097 = vmax.f32 %v5969, 0.0
    %v6098 = vmax.f32 %v5970, 0.0
    %v6099 = vmax.f32 %v5971, 0.0
    %v6100 = vmax.f32 %v5972, 0.0
    %v6101 = vmax.f32 %v5973, 0.0
    %v6102 = vmax.f32 %v5974, 0.0
    %v6103 = vmax.f32 %v5975, 0.0
    %v6104 = vmax.f32 %v5976, 0.0
    %v6105 = vmax.f32 %v5977, 0.0
    %v6106 = vmax.f32 %v5978, 0.0
    %v6107 = vmax.f32 %v5979, 0.0
    %v6108 = vmax.f32 %v5980, 0.0
    %v6109 = vmax.f32 %v5981, 0.0
    %v6110 = vmax.f32 %v5982, 0.0
    %v6111 = vmax.f32 %v5983, 0.0
    %v6112 = vmax.f32 %v5984, 0.0
    %v6113 = vmax.f32 %v5985, 0.0
    %v6114 = vmax.f32 %v5986, 0.0
    %v6115 = vmax.f32 %v5987, 0.0
    %v6116 = vmax.f32 %v5988, 0.0
    %v6117 = vmax.f32 %v5989, 0.0
    %v6118 = vmax.f32 %v5990, 0.0
    %v6119 = vmax.f32 %v5991, 0.0
    %v6120 = vmax.f32 %v5992, 0.0
    %v6121 = vmax.f32 %v5993, 0.0
    %v6122 = vmax.f32 %v5994, 0.0
    %v6123 = vmax.f32 %v5995, 0.0
    %v6124 = vmax.f32 %v5996, 0.0
    %v6125 = vmax.f32 %v5997, 0.0
    %v6126 = vmax.f32 %v5998, 0.0
    %v6127 = vmax.f32 %v5999, 0.0
    %v6128 = vmax.f32 %v6000, 0.0
    %v6129 = vmax.f32 %v6001, 0.0
    %v6130 = vmax.f32 %v6002, 0.0
    %v6131 = vmax.f32 %v6003, 0.0
    %v6132 = vmax.f32 %v6004, 0.0
    %v6133 = vmax.f32 %v6005, 0.0
    %v6134 = vmax.f32 %v6006, 0.0
    %v6135 = vmax.f32 %v6007, 0.0
    %v6136 = vmax.f32 %v6008, 0.0
    %v6137 = vmax.f32 %v6009, 0.0
    %v6138 = vmax.f32 %v6010, 0.0
    %v6139 = vmax.f32 %v6011, 0.0
    %v6140 = vmax.f32 %v6012, 0.0
    %v6141 = vmax.f32 %v6013, 0.0
    %v6142 = vmax.f32 %v6014, 0.0
    %v6143 = vmax.f32 %v6015, 0.0
    %v6144 = vpack.c.bf16 %v6020, %v6016
    %v6145 = vpack.c.bf16 %v6021, %v6017
    %v6146 = vpack.c.bf16 %v6022, %v6018
    %v6147 = vpack.c.bf16 %v6023, %v6019
    %v6148 = vpack.c.bf16 %v6028, %v6024
    %v6149 = vpack.c.bf16 %v6029, %v6025
    %v6150 = vpack.c.bf16 %v6030, %v6026
    %v6151 = vpack.c.bf16 %v6031, %v6027
    %v6152 = vpack.c.bf16 %v6036, %v6032
    %v6153 = vpack.c.bf16 %v6037, %v6033
    %v6154 = vpack.c.bf16 %v6038, %v6034
    %v6155 = vpack.c.bf16 %v6039, %v6035
    %v6156 = vpack.c.bf16 %v6044, %v6040
    %v6157 = vpack.c.bf16 %v6045, %v6041
    %v6158 = vpack.c.bf16 %v6046, %v6042
    %v6159 = vpack.c.bf16 %v6047, %v6043
    %v6160 = vpack.c.bf16 %v6052, %v6048
    %v6161 = vpack.c.bf16 %v6053, %v6049
    %v6162 = vpack.c.bf16 %v6054, %v6050
    %v6163 = vpack.c.bf16 %v6055, %v6051
    %v6164 = vpack.c.bf16 %v6060, %v6056
    %v6165 = vpack.c.bf16 %v6061, %v6057
    %v6166 = vpack.c.bf16 %v6062, %v6058
    %v6167 = vpack.c.bf16 %v6063, %v6059
    %v6168 = vpack.c.bf16 %v6068, %v6064
    %v6169 = vpack.c.bf16 %v6069, %v6065
    %v6170 = vpack.c.bf16 %v6070, %v6066
    %v6171 = vpack.c.bf16 %v6071, %v6067
    %v6172 = vpack.c.bf16 %v6076, %v6072
    %v6173 = vpack.c.bf16 %v6077, %v6073
    %v6174 = vpack.c.bf16 %v6078, %v6074
    %v6175 = vpack.c.bf16 %v6079, %v6075
    %v6176 = vpack.c.bf16 %v6084, %v6080
    %v6177 = vpack.c.bf16 %v6085, %v6081
    %v6178 = vpack.c.bf16 %v6086, %v6082
    %v6179 = vpack.c.bf16 %v6087, %v6083
    %v6180 = vpack.c.bf16 %v6092, %v6088
    %v6181 = vpack.c.bf16 %v6093, %v6089
    %v6182 = vpack.c.bf16 %v6094, %v6090
    %v6183 = vpack.c.bf16 %v6095, %v6091
    %v6184 = vpack.c.bf16 %v6100, %v6096
    %v6185 = vpack.c.bf16 %v6101, %v6097
    %v6186 = vpack.c.bf16 %v6102, %v6098
    %v6187 = vpack.c.bf16 %v6103, %v6099
    %v6188 = vpack.c.bf16 %v6108, %v6104
    %v6189 = vpack.c.bf16 %v6109, %v6105
    %v6190 = vpack.c.bf16 %v6110, %v6106
    %v6191 = vpack.c.bf16 %v6111, %v6107
    %v6192 = vpack.c.bf16 %v6116, %v6112
    %v6193 = vpack.c.bf16 %v6117, %v6113
    %v6194 = vpack.c.bf16 %v6118, %v6114
    %v6195 = vpack.c.bf16 %v6119, %v6115
    %v6196 = vpack.c.bf16 %v6124, %v6120
    %v6197 = vpack.c.bf16 %v6125, %v6121
    %v6198 = vpack.c.bf16 %v6126, %v6122
    %v6199 = vpack.c.bf16 %v6127, %v6123
    %v6200 = vpack.c.bf16 %v6132, %v6128
    %v6201 = vpack.c.bf16 %v6133, %v6129
    %v6202 = vpack.c.bf16 %v6134, %v6130
    %v6203 = vpack.c.bf16 %v6135, %v6131
    %v6204 = vpack.c.bf16 %v6140, %v6136
    %v6205 = vpack.c.bf16 %v6141, %v6137
    %v6206 = vpack.c.bf16 %v6142, %v6138
    %v6207 = vpack.c.bf16 %v6143, %v6139
    %v6208 = vld [vmem:[#allocation22] sm:$0xff]
    %v6209 = vld [vmem:[#allocation22 + $0x8] sm:$0xff]
    %v6210 = vld [vmem:[#allocation22 + $0x10] sm:$0xff]
    %v6211 = vld [vmem:[#allocation22 + $0x18] sm:$0xff]
    %v6212 = vld [vmem:[#allocation22 + $0x20] sm:$0xff]
    %v6213 = vld [vmem:[#allocation22 + $0x28] sm:$0xff]
    %v6214 = vld [vmem:[#allocation22 + $0x30] sm:$0xff]
    %v6215 = vld [vmem:[#allocation22 + $0x38] sm:$0xff]
    %v6216 = vld [vmem:[#allocation22 + $0x40] sm:$0xff]
    %v6217 = vld [vmem:[#allocation22 + $0x48] sm:$0xff]
    %v6218 = vld [vmem:[#allocation22 + $0x50] sm:$0xff]
    %v6219 = vld [vmem:[#allocation22 + $0x58] sm:$0xff]
    %v6220 = vld [vmem:[#allocation22 + $0x60] sm:$0xff]
    %v6221 = vld [vmem:[#allocation22 + $0x68] sm:$0xff]
    %v6222 = vld [vmem:[#allocation22 + $0x70] sm:$0xff]
    %v6223 = vld [vmem:[#allocation22 + $0x78] sm:$0xff]
    %v6224 = vld [vmem:[#allocation22 + $0x80] sm:$0xff]
    %v6225 = vld [vmem:[#allocation22 + $0x88] sm:$0xff]
    %v6226 = vld [vmem:[#allocation22 + $0x90] sm:$0xff]
    %v6227 = vld [vmem:[#allocation22 + $0x98] sm:$0xff]
    %v6228 = vld [vmem:[#allocation22 + $0xa0] sm:$0xff]
    %v6229 = vld [vmem:[#allocation22 + $0xa8] sm:$0xff]
    %v6230 = vld [vmem:[#allocation22 + $0xb0] sm:$0xff]
    %v6231 = vld [vmem:[#allocation22 + $0xb8] sm:$0xff]
    %v6232 = vld [vmem:[#allocation22 + $0xc0] sm:$0xff]
    %v6233 = vld [vmem:[#allocation22 + $0xc8] sm:$0xff]
    %v6234 = vld [vmem:[#allocation22 + $0xd0] sm:$0xff]
    %v6235 = vld [vmem:[#allocation22 + $0xd8] sm:$0xff]
    %v6236 = vld [vmem:[#allocation22 + $0xe0] sm:$0xff]
    %v6237 = vld [vmem:[#allocation22 + $0xe8] sm:$0xff]
    %v6238 = vld [vmem:[#allocation22 + $0xf0] sm:$0xff]
    %v6239 = vld [vmem:[#allocation22 + $0xf8] sm:$0xff]
    %v6240 = vld [vmem:[#allocation22 + $0x100] sm:$0xff]
    %v6241 = vld [vmem:[#allocation22 + $0x108] sm:$0xff]
    %v6242 = vld [vmem:[#allocation22 + $0x110] sm:$0xff]
    %v6243 = vld [vmem:[#allocation22 + $0x118] sm:$0xff]
    %v6244 = vld [vmem:[#allocation22 + $0x120] sm:$0xff]
    %v6245 = vld [vmem:[#allocation22 + $0x128] sm:$0xff]
    %v6246 = vld [vmem:[#allocation22 + $0x130] sm:$0xff]
    %v6247 = vld [vmem:[#allocation22 + $0x138] sm:$0xff]
    %v6248 = vld [vmem:[#allocation22 + $0x140] sm:$0xff]
    %v6249 = vld [vmem:[#allocation22 + $0x148] sm:$0xff]
    %v6250 = vld [vmem:[#allocation22 + $0x150] sm:$0xff]
    %v6251 = vld [vmem:[#allocation22 + $0x158] sm:$0xff]
    %v6252 = vld [vmem:[#allocation22 + $0x160] sm:$0xff]
    %v6253 = vld [vmem:[#allocation22 + $0x168] sm:$0xff]
    %v6254 = vld [vmem:[#allocation22 + $0x170] sm:$0xff]
    %v6255 = vld [vmem:[#allocation22 + $0x178] sm:$0xff]
    %v6256 = vld [vmem:[#allocation22 + $0x180] sm:$0xff]
    %v6257 = vld [vmem:[#allocation22 + $0x188] sm:$0xff]
    %v6258 = vld [vmem:[#allocation22 + $0x190] sm:$0xff]
    %v6259 = vld [vmem:[#allocation22 + $0x198] sm:$0xff]
    %v6260 = vld [vmem:[#allocation22 + $0x1a0] sm:$0xff]
    %v6261 = vld [vmem:[#allocation22 + $0x1a8] sm:$0xff]
    %v6262 = vld [vmem:[#allocation22 + $0x1b0] sm:$0xff]
    %v6263 = vld [vmem:[#allocation22 + $0x1b8] sm:$0xff]
    %v6264 = vld [vmem:[#allocation22 + $0x1c0] sm:$0xff]
    %v6265 = vld [vmem:[#allocation22 + $0x1c8] sm:$0xff]
    %v6266 = vld [vmem:[#allocation22 + $0x1d0] sm:$0xff]
    %v6267 = vld [vmem:[#allocation22 + $0x1d8] sm:$0xff]
    %v6268 = vld [vmem:[#allocation22 + $0x1e0] sm:$0xff]
    %v6269 = vld [vmem:[#allocation22 + $0x1e8] sm:$0xff]
    %v6270 = vld [vmem:[#allocation22 + $0x1f0] sm:$0xff]
    %v6271 = vld [vmem:[#allocation22 + $0x1f8] sm:$0xff]
    %v6272 = vld [vmem:[#allocation23] sm:$0x3]
    %v6274 = vlaneseq
    %v6275 = vshrl.u32 %v6274, 7
    %v6276 = vsub.s32 0, %v6275
    %v6277 = vrot.slane %v6272, %v6276
    %v6278 = vlaneseq
    %v6279 = vshrl.u32 %v6278, 7
    %v6280 = vsub.s32 1, %v6279
    %v6281 = vrot.slane %v6272, %v6280
    %v6348 = vunpack.c.l.b16 %v6208
    %v6349 = vunpack.c.h.b16 %v6208
    %v6350 = vunpack.c.l.b16 %v6209
    %v6351 = vunpack.c.h.b16 %v6209
    %v6352 = vunpack.c.l.b16 %v6210
    %v6353 = vunpack.c.h.b16 %v6210
    %v6354 = vunpack.c.l.b16 %v6211
    %v6355 = vunpack.c.h.b16 %v6211
    %v6356 = vunpack.c.l.b16 %v6212
    %v6357 = vunpack.c.h.b16 %v6212
    %v6358 = vunpack.c.l.b16 %v6213
    %v6359 = vunpack.c.h.b16 %v6213
    %v6360 = vunpack.c.l.b16 %v6214
    %v6361 = vunpack.c.h.b16 %v6214
    %v6362 = vunpack.c.l.b16 %v6215
    %v6363 = vunpack.c.h.b16 %v6215
    %v6364 = vunpack.c.l.b16 %v6216
    %v6365 = vunpack.c.h.b16 %v6216
    %v6366 = vunpack.c.l.b16 %v6217
    %v6367 = vunpack.c.h.b16 %v6217
    %v6368 = vunpack.c.l.b16 %v6218
    %v6369 = vunpack.c.h.b16 %v6218
    %v6370 = vunpack.c.l.b16 %v6219
    %v6371 = vunpack.c.h.b16 %v6219
    %v6372 = vunpack.c.l.b16 %v6220
    %v6373 = vunpack.c.h.b16 %v6220
    %v6374 = vunpack.c.l.b16 %v6221
    %v6375 = vunpack.c.h.b16 %v6221
    %v6376 = vunpack.c.l.b16 %v6222
    %v6377 = vunpack.c.h.b16 %v6222
    %v6378 = vunpack.c.l.b16 %v6223
    %v6379 = vunpack.c.h.b16 %v6223
    %v6380 = vunpack.c.l.b16 %v6224
    %v6381 = vunpack.c.h.b16 %v6224
    %v6382 = vunpack.c.l.b16 %v6225
    %v6383 = vunpack.c.h.b16 %v6225
    %v6384 = vunpack.c.l.b16 %v6226
    %v6385 = vunpack.c.h.b16 %v6226
    %v6386 = vunpack.c.l.b16 %v6227
    %v6387 = vunpack.c.h.b16 %v6227
    %v6388 = vunpack.c.l.b16 %v6228
    %v6389 = vunpack.c.h.b16 %v6228
    %v6390 = vunpack.c.l.b16 %v6229
    %v6391 = vunpack.c.h.b16 %v6229
    %v6392 = vunpack.c.l.b16 %v6230
    %v6393 = vunpack.c.h.b16 %v6230
    %v6394 = vunpack.c.l.b16 %v6231
    %v6395 = vunpack.c.h.b16 %v6231
    %v6396 = vunpack.c.l.b16 %v6232
    %v6397 = vunpack.c.h.b16 %v6232
    %v6398 = vunpack.c.l.b16 %v6233
    %v6399 = vunpack.c.h.b16 %v6233
    %v6400 = vunpack.c.l.b16 %v6234
    %v6401 = vunpack.c.h.b16 %v6234
    %v6402 = vunpack.c.l.b16 %v6235
    %v6403 = vunpack.c.h.b16 %v6235
    %v6404 = vunpack.c.l.b16 %v6236
    %v6405 = vunpack.c.h.b16 %v6236
    %v6406 = vunpack.c.l.b16 %v6237
    %v6407 = vunpack.c.h.b16 %v6237
    %v6408 = vunpack.c.l.b16 %v6238
    %v6409 = vunpack.c.h.b16 %v6238
    %v6410 = vunpack.c.l.b16 %v6239
    %v6411 = vunpack.c.h.b16 %v6239
    %v6412 = vunpack.c.l.b16 %v6240
    %v6413 = vunpack.c.h.b16 %v6240
    %v6414 = vunpack.c.l.b16 %v6241
    %v6415 = vunpack.c.h.b16 %v6241
    %v6416 = vunpack.c.l.b16 %v6242
    %v6417 = vunpack.c.h.b16 %v6242
    %v6418 = vunpack.c.l.b16 %v6243
    %v6419 = vunpack.c.h.b16 %v6243
    %v6420 = vunpack.c.l.b16 %v6244
    %v6421 = vunpack.c.h.b16 %v6244
    %v6422 = vunpack.c.l.b16 %v6245
    %v6423 = vunpack.c.h.b16 %v6245
    %v6424 = vunpack.c.l.b16 %v6246
    %v6425 = vunpack.c.h.b16 %v6246
    %v6426 = vunpack.c.l.b16 %v6247
    %v6427 = vunpack.c.h.b16 %v6247
    %v6428 = vunpack.c.l.b16 %v6248
    %v6429 = vunpack.c.h.b16 %v6248
    %v6430 = vunpack.c.l.b16 %v6249
    %v6431 = vunpack.c.h.b16 %v6249
    %v6432 = vunpack.c.l.b16 %v6250
    %v6433 = vunpack.c.h.b16 %v6250
    %v6434 = vunpack.c.l.b16 %v6251
    %v6435 = vunpack.c.h.b16 %v6251
    %v6436 = vunpack.c.l.b16 %v6252
    %v6437 = vunpack.c.h.b16 %v6252
    %v6438 = vunpack.c.l.b16 %v6253
    %v6439 = vunpack.c.h.b16 %v6253
    %v6440 = vunpack.c.l.b16 %v6254
    %v6441 = vunpack.c.h.b16 %v6254
    %v6442 = vunpack.c.l.b16 %v6255
    %v6443 = vunpack.c.h.b16 %v6255
    %v6444 = vunpack.c.l.b16 %v6256
    %v6445 = vunpack.c.h.b16 %v6256
    %v6446 = vunpack.c.l.b16 %v6257
    %v6447 = vunpack.c.h.b16 %v6257
    %v6448 = vunpack.c.l.b16 %v6258
    %v6449 = vunpack.c.h.b16 %v6258
    %v6450 = vunpack.c.l.b16 %v6259
    %v6451 = vunpack.c.h.b16 %v6259
    %v6452 = vunpack.c.l.b16 %v6260
    %v6453 = vunpack.c.h.b16 %v6260
    %v6454 = vunpack.c.l.b16 %v6261
    %v6455 = vunpack.c.h.b16 %v6261
    %v6456 = vunpack.c.l.b16 %v6262
    %v6457 = vunpack.c.h.b16 %v6262
    %v6458 = vunpack.c.l.b16 %v6263
    %v6459 = vunpack.c.h.b16 %v6263
    %v6460 = vunpack.c.l.b16 %v6264
    %v6461 = vunpack.c.h.b16 %v6264
    %v6462 = vunpack.c.l.b16 %v6265
    %v6463 = vunpack.c.h.b16 %v6265
    %v6464 = vunpack.c.l.b16 %v6266
    %v6465 = vunpack.c.h.b16 %v6266
    %v6466 = vunpack.c.l.b16 %v6267
    %v6467 = vunpack.c.h.b16 %v6267
    %v6468 = vunpack.c.l.b16 %v6268
    %v6469 = vunpack.c.h.b16 %v6268
    %v6470 = vunpack.c.l.b16 %v6269
    %v6471 = vunpack.c.h.b16 %v6269
    %v6472 = vunpack.c.l.b16 %v6270
    %v6473 = vunpack.c.h.b16 %v6270
    %v6474 = vunpack.c.l.b16 %v6271
    %v6475 = vunpack.c.h.b16 %v6271
    %v6476 = vpack.c.b16 %v6350, %v6348
    %v6477 = vpack.c.b16 %v6351, %v6349
    %v6478 = vpack.c.b16 %v6354, %v6352
    %v6479 = vpack.c.b16 %v6355, %v6353
    %v6480 = vpack.c.b16 %v6358, %v6356
    %v6481 = vpack.c.b16 %v6359, %v6357
    %v6482 = vpack.c.b16 %v6362, %v6360
    %v6483 = vpack.c.b16 %v6363, %v6361
    %v6484 = vpack.c.b16 %v6366, %v6364
    %v6485 = vpack.c.b16 %v6367, %v6365
    %v6486 = vpack.c.b16 %v6370, %v6368
    %v6487 = vpack.c.b16 %v6371, %v6369
    %v6488 = vpack.c.b16 %v6374, %v6372
    %v6489 = vpack.c.b16 %v6375, %v6373
    %v6490 = vpack.c.b16 %v6378, %v6376
    %v6491 = vpack.c.b16 %v6379, %v6377
    %v6492 = vpack.c.b16 %v6382, %v6380
    %v6493 = vpack.c.b16 %v6383, %v6381
    %v6494 = vpack.c.b16 %v6386, %v6384
    %v6495 = vpack.c.b16 %v6387, %v6385
    %v6496 = vpack.c.b16 %v6390, %v6388
    %v6497 = vpack.c.b16 %v6391, %v6389
    %v6498 = vpack.c.b16 %v6394, %v6392
    %v6499 = vpack.c.b16 %v6395, %v6393
    %v6500 = vpack.c.b16 %v6398, %v6396
    %v6501 = vpack.c.b16 %v6399, %v6397
    %v6502 = vpack.c.b16 %v6402, %v6400
    %v6503 = vpack.c.b16 %v6403, %v6401
    %v6504 = vpack.c.b16 %v6406, %v6404
    %v6505 = vpack.c.b16 %v6407, %v6405
    %v6506 = vpack.c.b16 %v6410, %v6408
    %v6507 = vpack.c.b16 %v6411, %v6409
    %v6508 = vpack.c.b16 %v6414, %v6412
    %v6509 = vpack.c.b16 %v6415, %v6413
    %v6510 = vpack.c.b16 %v6418, %v6416
    %v6511 = vpack.c.b16 %v6419, %v6417
    %v6512 = vpack.c.b16 %v6422, %v6420
    %v6513 = vpack.c.b16 %v6423, %v6421
    %v6514 = vpack.c.b16 %v6426, %v6424
    %v6515 = vpack.c.b16 %v6427, %v6425
    %v6516 = vpack.c.b16 %v6430, %v6428
    %v6517 = vpack.c.b16 %v6431, %v6429
    %v6518 = vpack.c.b16 %v6434, %v6432
    %v6519 = vpack.c.b16 %v6435, %v6433
    %v6520 = vpack.c.b16 %v6438, %v6436
    %v6521 = vpack.c.b16 %v6439, %v6437
    %v6522 = vpack.c.b16 %v6442, %v6440
    %v6523 = vpack.c.b16 %v6443, %v6441
    %v6524 = vpack.c.b16 %v6446, %v6444
    %v6525 = vpack.c.b16 %v6447, %v6445
    %v6526 = vpack.c.b16 %v6450, %v6448
    %v6527 = vpack.c.b16 %v6451, %v6449
    %v6528 = vpack.c.b16 %v6454, %v6452
    %v6529 = vpack.c.b16 %v6455, %v6453
    %v6530 = vpack.c.b16 %v6458, %v6456
    %v6531 = vpack.c.b16 %v6459, %v6457
    %v6532 = vpack.c.b16 %v6462, %v6460
    %v6533 = vpack.c.b16 %v6463, %v6461
    %v6534 = vpack.c.b16 %v6466, %v6464
    %v6535 = vpack.c.b16 %v6467, %v6465
    %v6536 = vpack.c.b16 %v6470, %v6468
    %v6537 = vpack.c.b16 %v6471, %v6469
    %v6538 = vpack.c.b16 %v6474, %v6472
    %v6539 = vpack.c.b16 %v6475, %v6473
    %6604 = vmatprep.subr.bf16.mxu0 %v6477
    %6605 = vmatpush1.bf16.msra.mxu0 %v6476
    %6606 = vmatprep.subr.bf16.mxu0 %v6479
    %6607 = vmatpush1.bf16.msra.mxu0 %v6478
    %6608 = vmatprep.subr.bf16.mxu0 %v6481
    %6609 = vmatpush1.bf16.msra.mxu0 %v6480
    %6610 = vmatprep.subr.bf16.mxu0 %v6483
    %6611 = vmatpush1.bf16.msra.mxu0 %v6482
    %6612 = vmatprep.subr.bf16.mxu0 %v6485
    %6613 = vmatpush1.bf16.msra.mxu0 %v6484
    %6614 = vmatprep.subr.bf16.mxu0 %v6487
    %6615 = vmatpush1.bf16.msra.mxu0 %v6486
    %6616 = vmatprep.subr.bf16.mxu0 %v6489
    %6617 = vmatpush1.bf16.msra.mxu0 %v6488
    %6618 = vmatprep.subr.bf16.mxu0 %v6491
    %6619 = vmatpush1.bf16.msra.mxu0 %v6490
    %6620 = vmatprep.subr.bf16.mxu0 %v6493
    %6621 = vmatpush1.bf16.msra.mxu0 %v6492
    %6622 = vmatprep.subr.bf16.mxu0 %v6495
    %6623 = vmatpush1.bf16.msra.mxu0 %v6494
    %6624 = vmatprep.subr.bf16.mxu0 %v6497
    %6625 = vmatpush1.bf16.msra.mxu0 %v6496
    %6626 = vmatprep.subr.bf16.mxu0 %v6499
    %6627 = vmatpush1.bf16.msra.mxu0 %v6498
    %6628 = vmatprep.subr.bf16.mxu0 %v6501
    %6629 = vmatpush1.bf16.msra.mxu0 %v6500
    %6630 = vmatprep.subr.bf16.mxu0 %v6503
    %6631 = vmatpush1.bf16.msra.mxu0 %v6502
    %6632 = vmatprep.subr.bf16.mxu0 %v6505
    %6633 = vmatpush1.bf16.msra.mxu0 %v6504
    %6634 = vmatprep.subr.bf16.mxu0 %v6507
    %6635 = vmatpush1.bf16.msra.mxu0 %v6506
    %6636 = vmatprep.mubr.bf16.mxu0 %v6145
    %6637 = vmatmul.mubr.bf16.gmra.mrb[0].mxu0 %v6144
    %v6638 = vpop.f32.mrb[0].mxu0
    %v6639 = vadd.f32 %v6277, %v6638
    %v6640 = vpop.f32.mrb[0].mxu0
    %v6641 = vadd.f32 %v6281, %v6640
    %v6642 = vpop.f32.mrb[0].mxu0
    %v6643 = vadd.f32 %v6277, %v6642
    %v6644 = vpop.f32.mrb[0].mxu0
    %v6645 = vadd.f32 %v6281, %v6644
    %6646 = vmatprep.mubr.bf16.mxu0 %v6149
    %6647 = vmatmul.mubr.bf16.gmra.mrb[0].mxu0 %v6148
    %v6648 = vpop.f32.mrb[0].mxu0
    %v6649 = vadd.f32 %v6277, %v6648
    %v6650 = vpop.f32.mrb[0].mxu0
    %v6651 = vadd.f32 %v6281, %v6650
    %v6652 = vpop.f32.mrb[0].mxu0
    %v6653 = vadd.f32 %v6277, %v6652
    %v6654 = vpop.f32.mrb[0].mxu0
    %v6655 = vadd.f32 %v6281, %v6654
    %6656 = vmatprep.mubr.bf16.mxu0 %v6153
    %6657 = vmatmul.mubr.bf16.gmra.mrb[0].mxu0 %v6152
    %v6658 = vpop.f32.mrb[0].mxu0
    %v6659 = vadd.f32 %v6277, %v6658
    %v6660 = vpop.f32.mrb[0].mxu0
    %v6661 = vadd.f32 %v6281, %v6660
    %v6662 = vpop.f32.mrb[0].mxu0
    %v6663 = vadd.f32 %v6277, %v6662
    %v6664 = vpop.f32.mrb[0].mxu0
    %v6665 = vadd.f32 %v6281, %v6664
    %6666 = vmatprep.mubr.bf16.mxu0 %v6157
    %6667 = vmatmul.mubr.bf16.gmra.mrb[0].mxu0 %v6156
    %v6668 = vpop.f32.mrb[0].mxu0
    %v6669 = vadd.f32 %v6277, %v6668
    %v6670 = vpop.f32.mrb[0].mxu0
    %v6671 = vadd.f32 %v6281, %v6670
    %v6672 = vpop.f32.mrb[0].mxu0
    %v6673 = vadd.f32 %v6277, %v6672
    %v6674 = vpop.f32.mrb[0].mxu0
    %v6675 = vadd.f32 %v6281, %v6674
    %6676 = vmatprep.mubr.bf16.mxu0 %v6161
    %6677 = vmatmul.mubr.bf16.gmra.mrb[0].mxu0 %v6160
    %v6678 = vpop.f32.mrb[0].mxu0
    %v6679 = vadd.f32 %v6277, %v6678
    %v6680 = vpop.f32.mrb[0].mxu0
    %v6681 = vadd.f32 %v6281, %v6680
    %v6682 = vpop.f32.mrb[0].mxu0
    %v6683 = vadd.f32 %v6277, %v6682
    %v6684 = vpop.f32.mrb[0].mxu0
    %v6685 = vadd.f32 %v6281, %v6684
    %6686 = vmatprep.mubr.bf16.mxu0 %v6165
    %6687 = vmatmul.mubr.bf16.gmra.mrb[0].mxu0 %v6164
    %v6688 = vpop.f32.mrb[0].mxu0
    %v6689 = vadd.f32 %v6277, %v6688
    %v6690 = vpop.f32.mrb[0].mxu0
    %v6691 = vadd.f32 %v6281, %v6690
    %v6692 = vpop.f32.mrb[0].mxu0
    %v6693 = vadd.f32 %v6277, %v6692
    %v6694 = vpop.f32.mrb[0].mxu0
    %v6695 = vadd.f32 %v6281, %v6694
    %6696 = vmatprep.mubr.bf16.mxu0 %v6169
    %6697 = vmatmul.mubr.bf16.gmra.mrb[0].mxu0 %v6168
    %v6698 = vpop.f32.mrb[0].mxu0
    %v6699 = vadd.f32 %v6277, %v6698
    %v6700 = vpop.f32.mrb[0].mxu0
    %v6701 = vadd.f32 %v6281, %v6700
    %v6702 = vpop.f32.mrb[0].mxu0
    %v6703 = vadd.f32 %v6277, %v6702
    %v6704 = vpop.f32.mrb[0].mxu0
    %v6705 = vadd.f32 %v6281, %v6704
    %6706 = vmatprep.mubr.bf16.mxu0 %v6173
    %6707 = vmatmul.mubr.bf16.gmra.mrb[0].mxu0 %v6172
    %v6708 = vpop.f32.mrb[0].mxu0
    %v6709 = vadd.f32 %v6277, %v6708
    %v6710 = vpop.f32.mrb[0].mxu0
    %v6711 = vadd.f32 %v6281, %v6710
    %v6712 = vpop.f32.mrb[0].mxu0
    %v6713 = vadd.f32 %v6277, %v6712
    %v6714 = vpop.f32.mrb[0].mxu0
    %v6715 = vadd.f32 %v6281, %v6714
    %6716 = vmatprep.mubr.bf16.mxu0 %v6177
    %6717 = vmatmul.mubr.bf16.gmra.mrb[0].mxu0 %v6176
    %v6718 = vpop.f32.mrb[0].mxu0
    %v6719 = vadd.f32 %v6277, %v6718
    %v6720 = vpop.f32.mrb[0].mxu0
    %v6721 = vadd.f32 %v6281, %v6720
    %v6722 = vpop.f32.mrb[0].mxu0
    %v6723 = vadd.f32 %v6277, %v6722
    %v6724 = vpop.f32.mrb[0].mxu0
    %v6725 = vadd.f32 %v6281, %v6724
    %6726 = vmatprep.mubr.bf16.mxu0 %v6181
    %6727 = vmatmul.mubr.bf16.gmra.mrb[0].mxu0 %v6180
    %v6728 = vpop.f32.mrb[0].mxu0
    %v6729 = vadd.f32 %v6277, %v6728
    %v6730 = vpop.f32.mrb[0].mxu0
    %v6731 = vadd.f32 %v6281, %v6730
    %v6732 = vpop.f32.mrb[0].mxu0
    %v6733 = vadd.f32 %v6277, %v6732
    %v6734 = vpop.f32.mrb[0].mxu0
    %v6735 = vadd.f32 %v6281, %v6734
    %6736 = vmatprep.mubr.bf16.mxu0 %v6185
    %6737 = vmatmul.mubr.bf16.gmra.mrb[0].mxu0 %v6184
    %v6738 = vpop.f32.mrb[0].mxu0
    %v6739 = vadd.f32 %v6277, %v6738
    %v6740 = vpop.f32.mrb[0].mxu0
    %v6741 = vadd.f32 %v6281, %v6740
    %v6742 = vpop.f32.mrb[0].mxu0
    %v6743 = vadd.f32 %v6277, %v6742
    %v6744 = vpop.f32.mrb[0].mxu0
    %v6745 = vadd.f32 %v6281, %v6744
    %6746 = vmatprep.mubr.bf16.mxu0 %v6189
    %6747 = vmatmul.mubr.bf16.gmra.mrb[0].mxu0 %v6188
    %v6748 = vpop.f32.mrb[0].mxu0
    %v6749 = vadd.f32 %v6277, %v6748
    %v6750 = vpop.f32.mrb[0].mxu0
    %v6751 = vadd.f32 %v6281, %v6750
    %v6752 = vpop.f32.mrb[0].mxu0
    %v6753 = vadd.f32 %v6277, %v6752
    %v6754 = vpop.f32.mrb[0].mxu0
    %v6755 = vadd.f32 %v6281, %v6754
    %6756 = vmatprep.mubr.bf16.mxu0 %v6193
    %6757 = vmatmul.mubr.bf16.gmra.mrb[0].mxu0 %v6192
    %v6758 = vpop.f32.mrb[0].mxu0
    %v6759 = vadd.f32 %v6277, %v6758
    %v6760 = vpop.f32.mrb[0].mxu0
    %v6761 = vadd.f32 %v6281, %v6760
    %v6762 = vpop.f32.mrb[0].mxu0
    %v6763 = vadd.f32 %v6277, %v6762
    %v6764 = vpop.f32.mrb[0].mxu0
    %v6765 = vadd.f32 %v6281, %v6764
    %6766 = vmatprep.mubr.bf16.mxu0 %v6197
    %6767 = vmatmul.mubr.bf16.gmra.mrb[0].mxu0 %v6196
    %v6768 = vpop.f32.mrb[0].mxu0
    %v6769 = vadd.f32 %v6277, %v6768
    %v6770 = vpop.f32.mrb[0].mxu0
    %v6771 = vadd.f32 %v6281, %v6770
    %v6772 = vpop.f32.mrb[0].mxu0
    %v6773 = vadd.f32 %v6277, %v6772
    %v6774 = vpop.f32.mrb[0].mxu0
    %v6775 = vadd.f32 %v6281, %v6774
    %6776 = vmatprep.mubr.bf16.mxu0 %v6201
    %6777 = vmatmul.mubr.bf16.gmra.mrb[0].mxu0 %v6200
    %v6778 = vpop.f32.mrb[0].mxu0
    %v6779 = vadd.f32 %v6277, %v6778
    %v6780 = vpop.f32.mrb[0].mxu0
    %v6781 = vadd.f32 %v6281, %v6780
    %v6782 = vpop.f32.mrb[0].mxu0
    %v6783 = vadd.f32 %v6277, %v6782
    %v6784 = vpop.f32.mrb[0].mxu0
    %v6785 = vadd.f32 %v6281, %v6784
    %6786 = vmatprep.mubr.bf16.mxu0 %v6205
    %6787 = vmatmul.mubr.bf16.gmra.mrb[0].mxu0 %v6204
    %v6788 = vpop.f32.mrb[0].mxu0
    %v6789 = vadd.f32 %v6277, %v6788
    %v6790 = vpop.f32.mrb[0].mxu0
    %v6791 = vadd.f32 %v6281, %v6790
    %v6792 = vpop.f32.mrb[0].mxu0
    %v6793 = vadd.f32 %v6277, %v6792
    %v6794 = vpop.f32.mrb[0].mxu0
    %v6795 = vadd.f32 %v6281, %v6794
    %6796 = vdwg.mxu0
    %6797 = vmatprep.subr.bf16.mxu0 %v6509
    %6798 = vmatpush1.bf16.msra.mxu0 %v6508
    %6799 = vmatprep.subr.bf16.mxu0 %v6511
    %6800 = vmatpush1.bf16.msra.mxu0 %v6510
    %6801 = vmatprep.subr.bf16.mxu0 %v6513
    %6802 = vmatpush1.bf16.msra.mxu0 %v6512
    %6803 = vmatprep.subr.bf16.mxu0 %v6515
    %6804 = vmatpush1.bf16.msra.mxu0 %v6514
    %6805 = vmatprep.subr.bf16.mxu0 %v6517
    %6806 = vmatpush1.bf16.msra.mxu0 %v6516
    %6807 = vmatprep.subr.bf16.mxu0 %v6519
    %6808 = vmatpush1.bf16.msra.mxu0 %v6518
    %6809 = vmatprep.subr.bf16.mxu0 %v6521
    %6810 = vmatpush1.bf16.msra.mxu0 %v6520
    %6811 = vmatprep.subr.bf16.mxu0 %v6523
    %6812 = vmatpush1.bf16.msra.mxu0 %v6522
    %6813 = vmatprep.subr.bf16.mxu0 %v6525
    %6814 = vmatpush1.bf16.msra.mxu0 %v6524
    %6815 = vmatprep.subr.bf16.mxu0 %v6527
    %6816 = vmatpush1.bf16.msra.mxu0 %v6526
    %6817 = vmatprep.subr.bf16.mxu0 %v6529
    %6818 = vmatpush1.bf16.msra.mxu0 %v6528
    %6819 = vmatprep.subr.bf16.mxu0 %v6531
    %6820 = vmatpush1.bf16.msra.mxu0 %v6530
    %6821 = vmatprep.subr.bf16.mxu0 %v6533
    %6822 = vmatpush1.bf16.msra.mxu0 %v6532
    %6823 = vmatprep.subr.bf16.mxu0 %v6535
    %6824 = vmatpush1.bf16.msra.mxu0 %v6534
    %6825 = vmatprep.subr.bf16.mxu0 %v6537
    %6826 = vmatpush1.bf16.msra.mxu0 %v6536
    %6827 = vmatprep.subr.bf16.mxu0 %v6539
    %6828 = vmatpush1.bf16.msra.mxu0 %v6538
    %6829 = vmatprep.mubr.bf16.mxu0 %v6147
    %6830 = vmatmul.mubr.bf16.gmra.mrb[0].mxu0 %v6146
    %v6831 = vpop.f32.mrb[0].mxu0
    %v6832 = vadd.f32 %v6639, %v6831
    %v6833 = vpop.f32.mrb[0].mxu0
    %v6834 = vadd.f32 %v6641, %v6833
    %v6835 = vpop.f32.mrb[0].mxu0
    %v6836 = vadd.f32 %v6643, %v6835
    %v6837 = vpop.f32.mrb[0].mxu0
    %v6838 = vadd.f32 %v6645, %v6837
    %6839 = vmatprep.mubr.bf16.mxu0 %v6151
    %6840 = vmatmul.mubr.bf16.gmra.mrb[0].mxu0 %v6150
    %v6841 = vpop.f32.mrb[0].mxu0
    %v6842 = vadd.f32 %v6649, %v6841
    %v6843 = vpop.f32.mrb[0].mxu0
    %v6844 = vadd.f32 %v6651, %v6843
    %v6845 = vpop.f32.mrb[0].mxu0
    %v6846 = vadd.f32 %v6653, %v6845
    %v6847 = vpop.f32.mrb[0].mxu0
    %v6848 = vadd.f32 %v6655, %v6847
    %6849 = vmatprep.mubr.bf16.mxu0 %v6155
    %6850 = vmatmul.mubr.bf16.gmra.mrb[0].mxu0 %v6154
    %v6851 = vpop.f32.mrb[0].mxu0
    %v6852 = vadd.f32 %v6659, %v6851
    %v6853 = vpop.f32.mrb[0].mxu0
    %v6854 = vadd.f32 %v6661, %v6853
    %v6855 = vpop.f32.mrb[0].mxu0
    %v6856 = vadd.f32 %v6663, %v6855
    %v6857 = vpop.f32.mrb[0].mxu0
    %v6858 = vadd.f32 %v6665, %v6857
    %6859 = vmatprep.mubr.bf16.mxu0 %v6159
    %6860 = vmatmul.mubr.bf16.gmra.mrb[0].mxu0 %v6158
    %v6861 = vpop.f32.mrb[0].mxu0
    %v6862 = vadd.f32 %v6669, %v6861
    %v6863 = vpop.f32.mrb[0].mxu0
    %v6864 = vadd.f32 %v6671, %v6863
    %v6865 = vpop.f32.mrb[0].mxu0
    %v6866 = vadd.f32 %v6673, %v6865
    %v6867 = vpop.f32.mrb[0].mxu0
    %v6868 = vadd.f32 %v6675, %v6867
    %6869 = vmatprep.mubr.bf16.mxu0 %v6163
    %6870 = vmatmul.mubr.bf16.gmra.mrb[0].mxu0 %v6162
    %v6871 = vpop.f32.mrb[0].mxu0
    %v6872 = vadd.f32 %v6679, %v6871
    %v6873 = vpop.f32.mrb[0].mxu0
    %v6874 = vadd.f32 %v6681, %v6873
    %v6875 = vpop.f32.mrb[0].mxu0
    %v6876 = vadd.f32 %v6683, %v6875
    %v6877 = vpop.f32.mrb[0].mxu0
    %v6878 = vadd.f32 %v6685, %v6877
    %6879 = vmatprep.mubr.bf16.mxu0 %v6167
    %6880 = vmatmul.mubr.bf16.gmra.mrb[0].mxu0 %v6166
    %v6881 = vpop.f32.mrb[0].mxu0
    %v6882 = vadd.f32 %v6689, %v6881
    %v6883 = vpop.f32.mrb[0].mxu0
    %v6884 = vadd.f32 %v6691, %v6883
    %v6885 = vpop.f32.mrb[0].mxu0
    %v6886 = vadd.f32 %v6693, %v6885
    %v6887 = vpop.f32.mrb[0].mxu0
    %v6888 = vadd.f32 %v6695, %v6887
    %6889 = vmatprep.mubr.bf16.mxu0 %v6171
    %6890 = vmatmul.mubr.bf16.gmra.mrb[0].mxu0 %v6170
    %v6891 = vpop.f32.mrb[0].mxu0
    %v6892 = vadd.f32 %v6699, %v6891
    %v6893 = vpop.f32.mrb[0].mxu0
    %v6894 = vadd.f32 %v6701, %v6893
    %v6895 = vpop.f32.mrb[0].mxu0
    %v6896 = vadd.f32 %v6703, %v6895
    %v6897 = vpop.f32.mrb[0].mxu0
    %v6898 = vadd.f32 %v6705, %v6897
    %6899 = vmatprep.mubr.bf16.mxu0 %v6175
    %6900 = vmatmul.mubr.bf16.gmra.mrb[0].mxu0 %v6174
    %v6901 = vpop.f32.mrb[0].mxu0
    %v6902 = vadd.f32 %v6709, %v6901
    %v6903 = vpop.f32.mrb[0].mxu0
    %v6904 = vadd.f32 %v6711, %v6903
    %v6905 = vpop.f32.mrb[0].mxu0
    %v6906 = vadd.f32 %v6713, %v6905
    %v6907 = vpop.f32.mrb[0].mxu0
    %v6908 = vadd.f32 %v6715, %v6907
    %6909 = vmatprep.mubr.bf16.mxu0 %v6179
    %6910 = vmatmul.mubr.bf16.gmra.mrb[0].mxu0 %v6178
    %v6911 = vpop.f32.mrb[0].mxu0
    %v6912 = vadd.f32 %v6719, %v6911
    %v6913 = vpop.f32.mrb[0].mxu0
    %v6914 = vadd.f32 %v6721, %v6913
    %v6915 = vpop.f32.mrb[0].mxu0
    %v6916 = vadd.f32 %v6723, %v6915
    %v6917 = vpop.f32.mrb[0].mxu0
    %v6918 = vadd.f32 %v6725, %v6917
    %6919 = vmatprep.mubr.bf16.mxu0 %v6183
    %6920 = vmatmul.mubr.bf16.gmra.mrb[0].mxu0 %v6182
    %v6921 = vpop.f32.mrb[0].mxu0
    %v6922 = vadd.f32 %v6729, %v6921
    %v6923 = vpop.f32.mrb[0].mxu0
    %v6924 = vadd.f32 %v6731, %v6923
    %v6925 = vpop.f32.mrb[0].mxu0
    %v6926 = vadd.f32 %v6733, %v6925
    %v6927 = vpop.f32.mrb[0].mxu0
    %v6928 = vadd.f32 %v6735, %v6927
    %6929 = vmatprep.mubr.bf16.mxu0 %v6187
    %6930 = vmatmul.mubr.bf16.gmra.mrb[0].mxu0 %v6186
    %v6931 = vpop.f32.mrb[0].mxu0
    %v6932 = vadd.f32 %v6739, %v6931
    %v6933 = vpop.f32.mrb[0].mxu0
    %v6934 = vadd.f32 %v6741, %v6933
    %v6935 = vpop.f32.mrb[0].mxu0
    %v6936 = vadd.f32 %v6743, %v6935
    %v6937 = vpop.f32.mrb[0].mxu0
    %v6938 = vadd.f32 %v6745, %v6937
    %6939 = vmatprep.mubr.bf16.mxu0 %v6191
    %6940 = vmatmul.mubr.bf16.gmra.mrb[0].mxu0 %v6190
    %v6941 = vpop.f32.mrb[0].mxu0
    %v6942 = vadd.f32 %v6749, %v6941
    %v6943 = vpop.f32.mrb[0].mxu0
    %v6944 = vadd.f32 %v6751, %v6943
    %v6945 = vpop.f32.mrb[0].mxu0
    %v6946 = vadd.f32 %v6753, %v6945
    %v6947 = vpop.f32.mrb[0].mxu0
    %v6948 = vadd.f32 %v6755, %v6947
    %6949 = vmatprep.mubr.bf16.mxu0 %v6195
    %6950 = vmatmul.mubr.bf16.gmra.mrb[0].mxu0 %v6194
    %v6951 = vpop.f32.mrb[0].mxu0
    %v6952 = vadd.f32 %v6759, %v6951
    %v6953 = vpop.f32.mrb[0].mxu0
    %v6954 = vadd.f32 %v6761, %v6953
    %v6955 = vpop.f32.mrb[0].mxu0
    %v6956 = vadd.f32 %v6763, %v6955
    %v6957 = vpop.f32.mrb[0].mxu0
    %v6958 = vadd.f32 %v6765, %v6957
    %6959 = vmatprep.mubr.bf16.mxu0 %v6199
    %6960 = vmatmul.mubr.bf16.gmra.mrb[0].mxu0 %v6198
    %v6961 = vpop.f32.mrb[0].mxu0
    %v6962 = vadd.f32 %v6769, %v6961
    %v6963 = vpop.f32.mrb[0].mxu0
    %v6964 = vadd.f32 %v6771, %v6963
    %v6965 = vpop.f32.mrb[0].mxu0
    %v6966 = vadd.f32 %v6773, %v6965
    %v6967 = vpop.f32.mrb[0].mxu0
    %v6968 = vadd.f32 %v6775, %v6967
    %6969 = vmatprep.mubr.bf16.mxu0 %v6203
    %6970 = vmatmul.mubr.bf16.gmra.mrb[0].mxu0 %v6202
    %v6971 = vpop.f32.mrb[0].mxu0
    %v6972 = vadd.f32 %v6779, %v6971
    %v6973 = vpop.f32.mrb[0].mxu0
    %v6974 = vadd.f32 %v6781, %v6973
    %v6975 = vpop.f32.mrb[0].mxu0
    %v6976 = vadd.f32 %v6783, %v6975
    %v6977 = vpop.f32.mrb[0].mxu0
    %v6978 = vadd.f32 %v6785, %v6977
    %6979 = vmatprep.mubr.bf16.mxu0 %v6207
    %6980 = vmatmul.mubr.bf16.gmra.mrb[0].mxu0 %v6206
    %v6981 = vpop.f32.mrb[0].mxu0
    %v6982 = vadd.f32 %v6789, %v6981
    %v6983 = vpop.f32.mrb[0].mxu0
    %v6984 = vadd.f32 %v6791, %v6983
    %v6985 = vpop.f32.mrb[0].mxu0
    %v6986 = vadd.f32 %v6793, %v6985
    %v6987 = vpop.f32.mrb[0].mxu0
    %v6988 = vadd.f32 %v6795, %v6987
    %6989 = vdwg.mxu0
    %v6990 = vmax.f32 %v6832, 0.0
    %v6991 = vmax.f32 %v6834, 0.0
    %v6992 = vmax.f32 %v6836, 0.0
    %v6993 = vmax.f32 %v6838, 0.0
    %v6994 = vmax.f32 %v6842, 0.0
    %v6995 = vmax.f32 %v6844, 0.0
    %v6996 = vmax.f32 %v6846, 0.0
    %v6997 = vmax.f32 %v6848, 0.0
    %v6998 = vmax.f32 %v6852, 0.0
    %v6999 = vmax.f32 %v6854, 0.0
    %v7000 = vmax.f32 %v6856, 0.0
    %v7001 = vmax.f32 %v6858, 0.0
    %v7002 = vmax.f32 %v6862, 0.0
    %v7003 = vmax.f32 %v6864, 0.0
    %v7004 = vmax.f32 %v6866, 0.0
    %v7005 = vmax.f32 %v6868, 0.0
    %v7006 = vmax.f32 %v6872, 0.0
    %v7007 = vmax.f32 %v6874, 0.0
    %v7008 = vmax.f32 %v6876, 0.0
    %v7009 = vmax.f32 %v6878, 0.0
    %v7010 = vmax.f32 %v6882, 0.0
    %v7011 = vmax.f32 %v6884, 0.0
    %v7012 = vmax.f32 %v6886, 0.0
    %v7013 = vmax.f32 %v6888, 0.0
    %v7014 = vmax.f32 %v6892, 0.0
    %v7015 = vmax.f32 %v6894, 0.0
    %v7016 = vmax.f32 %v6896, 0.0
    %v7017 = vmax.f32 %v6898, 0.0
    %v7018 = vmax.f32 %v6902, 0.0
    %v7019 = vmax.f32 %v6904, 0.0
    %v7020 = vmax.f32 %v6906, 0.0
    %v7021 = vmax.f32 %v6908, 0.0
    %v7022 = vmax.f32 %v6912, 0.0
    %v7023 = vmax.f32 %v6914, 0.0
    %v7024 = vmax.f32 %v6916, 0.0
    %v7025 = vmax.f32 %v6918, 0.0
    %v7026 = vmax.f32 %v6922, 0.0
    %v7027 = vmax.f32 %v6924, 0.0
    %v7028 = vmax.f32 %v6926, 0.0
    %v7029 = vmax.f32 %v6928, 0.0
    %v7030 = vmax.f32 %v6932, 0.0
    %v7031 = vmax.f32 %v6934, 0.0
    %v7032 = vmax.f32 %v6936, 0.0
    %v7033 = vmax.f32 %v6938, 0.0
    %v7034 = vmax.f32 %v6942, 0.0
    %v7035 = vmax.f32 %v6944, 0.0
    %v7036 = vmax.f32 %v6946, 0.0
    %v7037 = vmax.f32 %v6948, 0.0
    %v7038 = vmax.f32 %v6952, 0.0
    %v7039 = vmax.f32 %v6954, 0.0
    %v7040 = vmax.f32 %v6956, 0.0
    %v7041 = vmax.f32 %v6958, 0.0
    %v7042 = vmax.f32 %v6962, 0.0
    %v7043 = vmax.f32 %v6964, 0.0
    %v7044 = vmax.f32 %v6966, 0.0
    %v7045 = vmax.f32 %v6968, 0.0
    %v7046 = vmax.f32 %v6972, 0.0
    %v7047 = vmax.f32 %v6974, 0.0
    %v7048 = vmax.f32 %v6976, 0.0
    %v7049 = vmax.f32 %v6978, 0.0
    %v7050 = vmax.f32 %v6982, 0.0
    %v7051 = vmax.f32 %v6984, 0.0
    %v7052 = vmax.f32 %v6986, 0.0
    %v7053 = vmax.f32 %v6988, 0.0
    %v7054 = vpack.c.bf16 %v6992, %v6990
    %v7055 = vpack.c.bf16 %v6993, %v6991
    %v7056 = vpack.c.bf16 %v6996, %v6994
    %v7057 = vpack.c.bf16 %v6997, %v6995
    %v7058 = vpack.c.bf16 %v7000, %v6998
    %v7059 = vpack.c.bf16 %v7001, %v6999
    %v7060 = vpack.c.bf16 %v7004, %v7002
    %v7061 = vpack.c.bf16 %v7005, %v7003
    %v7062 = vpack.c.bf16 %v7008, %v7006
    %v7063 = vpack.c.bf16 %v7009, %v7007
    %v7064 = vpack.c.bf16 %v7012, %v7010
    %v7065 = vpack.c.bf16 %v7013, %v7011
    %v7066 = vpack.c.bf16 %v7016, %v7014
    %v7067 = vpack.c.bf16 %v7017, %v7015
    %v7068 = vpack.c.bf16 %v7020, %v7018
    %v7069 = vpack.c.bf16 %v7021, %v7019
    %v7070 = vpack.c.bf16 %v7024, %v7022
    %v7071 = vpack.c.bf16 %v7025, %v7023
    %v7072 = vpack.c.bf16 %v7028, %v7026
    %v7073 = vpack.c.bf16 %v7029, %v7027
    %v7074 = vpack.c.bf16 %v7032, %v7030
    %v7075 = vpack.c.bf16 %v7033, %v7031
    %v7076 = vpack.c.bf16 %v7036, %v7034
    %v7077 = vpack.c.bf16 %v7037, %v7035
    %v7078 = vpack.c.bf16 %v7040, %v7038
    %v7079 = vpack.c.bf16 %v7041, %v7039
    %v7080 = vpack.c.bf16 %v7044, %v7042
    %v7081 = vpack.c.bf16 %v7045, %v7043
    %v7082 = vpack.c.bf16 %v7048, %v7046
    %v7083 = vpack.c.bf16 %v7049, %v7047
    %v7084 = vpack.c.bf16 %v7052, %v7050
    %v7085 = vpack.c.bf16 %v7053, %v7051
    %v7086 = vld [vmem:[#allocation25] sm:$0xf]
    %v7087 = vld [vmem:[#allocation25 + $0x4] sm:$0xf]
    %v7088 = vld [vmem:[#allocation25 + $0x8] sm:$0xf]
    %v7089 = vld [vmem:[#allocation25 + $0xc] sm:$0xf]
    %v7090 = vld [vmem:[#allocation25 + $0x10] sm:$0xf]
    %v7091 = vld [vmem:[#allocation25 + $0x14] sm:$0xf]
    %v7092 = vld [vmem:[#allocation25 + $0x18] sm:$0xf]
    %v7093 = vld [vmem:[#allocation25 + $0x1c] sm:$0xf]
    %v7094 = vld [vmem:[#allocation25 + $0x20] sm:$0xf]
    %v7095 = vld [vmem:[#allocation25 + $0x24] sm:$0xf]
    %v7096 = vld [vmem:[#allocation25 + $0x28] sm:$0xf]
    %v7097 = vld [vmem:[#allocation25 + $0x2c] sm:$0xf]
    %v7098 = vld [vmem:[#allocation25 + $0x30] sm:$0xf]
    %v7099 = vld [vmem:[#allocation25 + $0x34] sm:$0xf]
    %v7100 = vld [vmem:[#allocation25 + $0x38] sm:$0xf]
    %v7101 = vld [vmem:[#allocation25 + $0x3c] sm:$0xf]
    %v7102 = vld [vmem:[#allocation25 + $0x40] sm:$0xf]
    %v7103 = vld [vmem:[#allocation25 + $0x44] sm:$0xf]
    %v7104 = vld [vmem:[#allocation25 + $0x48] sm:$0xf]
    %v7105 = vld [vmem:[#allocation25 + $0x4c] sm:$0xf]
    %v7106 = vld [vmem:[#allocation25 + $0x50] sm:$0xf]
    %v7107 = vld [vmem:[#allocation25 + $0x54] sm:$0xf]
    %v7108 = vld [vmem:[#allocation25 + $0x58] sm:$0xf]
    %v7109 = vld [vmem:[#allocation25 + $0x5c] sm:$0xf]
    %v7110 = vld [vmem:[#allocation25 + $0x60] sm:$0xf]
    %v7111 = vld [vmem:[#allocation25 + $0x64] sm:$0xf]
    %v7112 = vld [vmem:[#allocation25 + $0x68] sm:$0xf]
    %v7113 = vld [vmem:[#allocation25 + $0x6c] sm:$0xf]
    %v7114 = vld [vmem:[#allocation25 + $0x70] sm:$0xf]
    %v7115 = vld [vmem:[#allocation25 + $0x74] sm:$0xf]
    %v7116 = vld [vmem:[#allocation25 + $0x78] sm:$0xf]
    %v7117 = vld [vmem:[#allocation25 + $0x7c] sm:$0xf]
    %v7118 = vld [vmem:[%s17] sm:$0x1]
    %v7120 = vlaneseq
    %v7121 = vshrl.u32 %v7120, 7
    %v7122 = vsub.s32 0, %v7121
    %v7123 = vrot.slane %v7118, %v7122
    %v7157 = vunpack.c.l.b16 %v7086
    %v7158 = vunpack.c.l.b16 %v7087
    %v7159 = vunpack.c.l.b16 %v7088
    %v7160 = vunpack.c.l.b16 %v7089
    %v7161 = vunpack.c.l.b16 %v7090
    %v7162 = vunpack.c.l.b16 %v7091
    %v7163 = vunpack.c.l.b16 %v7092
    %v7164 = vunpack.c.l.b16 %v7093
    %v7165 = vunpack.c.l.b16 %v7094
    %v7166 = vunpack.c.l.b16 %v7095
    %v7167 = vunpack.c.l.b16 %v7096
    %v7168 = vunpack.c.l.b16 %v7097
    %v7169 = vunpack.c.l.b16 %v7098
    %v7170 = vunpack.c.l.b16 %v7099
    %v7171 = vunpack.c.l.b16 %v7100
    %v7172 = vunpack.c.l.b16 %v7101
    %v7173 = vunpack.c.l.b16 %v7102
    %v7174 = vunpack.c.l.b16 %v7103
    %v7175 = vunpack.c.l.b16 %v7104
    %v7176 = vunpack.c.l.b16 %v7105
    %v7177 = vunpack.c.l.b16 %v7106
    %v7178 = vunpack.c.l.b16 %v7107
    %v7179 = vunpack.c.l.b16 %v7108
    %v7180 = vunpack.c.l.b16 %v7109
    %v7181 = vunpack.c.l.b16 %v7110
    %v7182 = vunpack.c.l.b16 %v7111
    %v7183 = vunpack.c.l.b16 %v7112
    %v7184 = vunpack.c.l.b16 %v7113
    %v7185 = vunpack.c.l.b16 %v7114
    %v7186 = vunpack.c.l.b16 %v7115
    %v7187 = vunpack.c.l.b16 %v7116
    %v7188 = vunpack.c.l.b16 %v7117
    %v7189 = vpack.c.b16 %v7158, %v7157
    %v7190 = vpack.c.b16 %v7160, %v7159
    %v7191 = vpack.c.b16 %v7162, %v7161
    %v7192 = vpack.c.b16 %v7164, %v7163
    %v7193 = vpack.c.b16 %v7166, %v7165
    %v7194 = vpack.c.b16 %v7168, %v7167
    %v7195 = vpack.c.b16 %v7170, %v7169
    %v7196 = vpack.c.b16 %v7172, %v7171
    %v7197 = vpack.c.b16 %v7174, %v7173
    %v7198 = vpack.c.b16 %v7176, %v7175
    %v7199 = vpack.c.b16 %v7178, %v7177
    %v7200 = vpack.c.b16 %v7180, %v7179
    %v7201 = vpack.c.b16 %v7182, %v7181
    %v7202 = vpack.c.b16 %v7184, %v7183
    %v7203 = vpack.c.b16 %v7186, %v7185
    %v7204 = vpack.c.b16 %v7188, %v7187
    %7221 = vmatprep.subr.bf16.mxu0 0
    %7222 = vmatpush1.bf16.msra.mxu0 %v7189
    %7223 = vmatprep.subr.bf16.mxu0 0
    %7224 = vmatpush1.bf16.msra.mxu0 %v7190
    %7225 = vmatprep.subr.bf16.mxu0 0
    %7226 = vmatpush1.bf16.msra.mxu0 %v7191
    %7227 = vmatprep.subr.bf16.mxu0 0
    %7228 = vmatpush1.bf16.msra.mxu0 %v7192
    %7229 = vmatprep.subr.bf16.mxu0 0
    %7230 = vmatpush1.bf16.msra.mxu0 %v7193
    %7231 = vmatprep.subr.bf16.mxu0 0
    %7232 = vmatpush1.bf16.msra.mxu0 %v7194
    %7233 = vmatprep.subr.bf16.mxu0 0
    %7234 = vmatpush1.bf16.msra.mxu0 %v7195
    %7235 = vmatprep.subr.bf16.mxu0 0
    %7236 = vmatpush1.bf16.msra.mxu0 %v7196
    %7237 = vmatprep.subr.bf16.mxu0 0
    %7238 = vmatpush1.bf16.msra.mxu0 %v7197
    %7239 = vmatprep.subr.bf16.mxu0 0
    %7240 = vmatpush1.bf16.msra.mxu0 %v7198
    %7241 = vmatprep.subr.bf16.mxu0 0
    %7242 = vmatpush1.bf16.msra.mxu0 %v7199
    %7243 = vmatprep.subr.bf16.mxu0 0
    %7244 = vmatpush1.bf16.msra.mxu0 %v7200
    %7245 = vmatprep.subr.bf16.mxu0 0
    %7246 = vmatpush1.bf16.msra.mxu0 %v7201
    %7247 = vmatprep.subr.bf16.mxu0 0
    %7248 = vmatpush1.bf16.msra.mxu0 %v7202
    %7249 = vmatprep.subr.bf16.mxu0 0
    %7250 = vmatpush1.bf16.msra.mxu0 %v7203
    %7251 = vmatprep.subr.bf16.mxu0 0
    %7252 = vmatpush1.bf16.msra.mxu0 %v7204
    %7253 = vmatprep.mubr.bf16.mxu0 %v7055
    %7254 = vmatmul.mubr.bf16.gmra.mrb[0].mxu0 %v7054
    %v7255 = vpop.f32.mrb[0].mxu0
    %v7256 = vadd.f32 %v7123, %v7255
    %v7257 = vpop.f32.mrb[0].mxu0
    %v7258 = vpop.f32.mrb[0].mxu0
    %v7259 = vadd.f32 %v7123, %v7258
    %v7260 = vpop.f32.mrb[0].mxu0
    %7261 = vmatprep.mubr.bf16.mxu0 %v7057
    %7262 = vmatmul.mubr.bf16.gmra.mrb[0].mxu0 %v7056
    %v7263 = vpop.f32.mrb[0].mxu0
    %v7264 = vadd.f32 %v7123, %v7263
    %v7265 = vpop.f32.mrb[0].mxu0
    %v7266 = vpop.f32.mrb[0].mxu0
    %v7267 = vadd.f32 %v7123, %v7266
    %v7268 = vpop.f32.mrb[0].mxu0
    %7269 = vmatprep.mubr.bf16.mxu0 %v7059
    %7270 = vmatmul.mubr.bf16.gmra.mrb[0].mxu0 %v7058
    %v7271 = vpop.f32.mrb[0].mxu0
    %v7272 = vadd.f32 %v7123, %v7271
    %v7273 = vpop.f32.mrb[0].mxu0
    %v7274 = vpop.f32.mrb[0].mxu0
    %v7275 = vadd.f32 %v7123, %v7274
    %v7276 = vpop.f32.mrb[0].mxu0
    %7277 = vmatprep.mubr.bf16.mxu0 %v7061
    %7278 = vmatmul.mubr.bf16.gmra.mrb[0].mxu0 %v7060
    %v7279 = vpop.f32.mrb[0].mxu0
    %v7280 = vadd.f32 %v7123, %v7279
    %v7281 = vpop.f32.mrb[0].mxu0
    %v7282 = vpop.f32.mrb[0].mxu0
    %v7283 = vadd.f32 %v7123, %v7282
    %v7284 = vpop.f32.mrb[0].mxu0
    %7285 = vmatprep.mubr.bf16.mxu0 %v7063
    %7286 = vmatmul.mubr.bf16.gmra.mrb[0].mxu0 %v7062
    %v7287 = vpop.f32.mrb[0].mxu0
    %v7288 = vadd.f32 %v7123, %v7287
    %v7289 = vpop.f32.mrb[0].mxu0
    %v7290 = vpop.f32.mrb[0].mxu0
    %v7291 = vadd.f32 %v7123, %v7290
    %v7292 = vpop.f32.mrb[0].mxu0
    %7293 = vmatprep.mubr.bf16.mxu0 %v7065
    %7294 = vmatmul.mubr.bf16.gmra.mrb[0].mxu0 %v7064
    %v7295 = vpop.f32.mrb[0].mxu0
    %v7296 = vadd.f32 %v7123, %v7295
    %v7297 = vpop.f32.mrb[0].mxu0
    %v7298 = vpop.f32.mrb[0].mxu0
    %v7299 = vadd.f32 %v7123, %v7298
    %v7300 = vpop.f32.mrb[0].mxu0
    %7301 = vmatprep.mubr.bf16.mxu0 %v7067
    %7302 = vmatmul.mubr.bf16.gmra.mrb[0].mxu0 %v7066
    %v7303 = vpop.f32.mrb[0].mxu0
    %v7304 = vadd.f32 %v7123, %v7303
    %v7305 = vpop.f32.mrb[0].mxu0
    %v7306 = vpop.f32.mrb[0].mxu0
    %v7307 = vadd.f32 %v7123, %v7306
    %v7308 = vpop.f32.mrb[0].mxu0
    %7309 = vmatprep.mubr.bf16.mxu0 %v7069
    %7310 = vmatmul.mubr.bf16.gmra.mrb[0].mxu0 %v7068
    %v7311 = vpop.f32.mrb[0].mxu0
    %v7312 = vadd.f32 %v7123, %v7311
    %v7313 = vpop.f32.mrb[0].mxu0
    %v7314 = vpop.f32.mrb[0].mxu0
    %v7315 = vadd.f32 %v7123, %v7314
    %v7316 = vpop.f32.mrb[0].mxu0
    %7317 = vmatprep.mubr.bf16.mxu0 %v7071
    %7318 = vmatmul.mubr.bf16.gmra.mrb[0].mxu0 %v7070
    %v7319 = vpop.f32.mrb[0].mxu0
    %v7320 = vadd.f32 %v7123, %v7319
    %v7321 = vpop.f32.mrb[0].mxu0
    %v7322 = vpop.f32.mrb[0].mxu0
    %v7323 = vadd.f32 %v7123, %v7322
    %v7324 = vpop.f32.mrb[0].mxu0
    %7325 = vmatprep.mubr.bf16.mxu0 %v7073
    %7326 = vmatmul.mubr.bf16.gmra.mrb[0].mxu0 %v7072
    %v7327 = vpop.f32.mrb[0].mxu0
    %v7328 = vadd.f32 %v7123, %v7327
    %v7329 = vpop.f32.mrb[0].mxu0
    %v7330 = vpop.f32.mrb[0].mxu0
    %v7331 = vadd.f32 %v7123, %v7330
    %v7332 = vpop.f32.mrb[0].mxu0
    %7333 = vmatprep.mubr.bf16.mxu0 %v7075
    %7334 = vmatmul.mubr.bf16.gmra.mrb[0].mxu0 %v7074
    %v7335 = vpop.f32.mrb[0].mxu0
    %v7336 = vadd.f32 %v7123, %v7335
    %v7337 = vpop.f32.mrb[0].mxu0
    %v7338 = vpop.f32.mrb[0].mxu0
    %v7339 = vadd.f32 %v7123, %v7338
    %v7340 = vpop.f32.mrb[0].mxu0
    %7341 = vmatprep.mubr.bf16.mxu0 %v7077
    %7342 = vmatmul.mubr.bf16.gmra.mrb[0].mxu0 %v7076
    %v7343 = vpop.f32.mrb[0].mxu0
    %v7344 = vadd.f32 %v7123, %v7343
    %v7345 = vpop.f32.mrb[0].mxu0
    %v7346 = vpop.f32.mrb[0].mxu0
    %v7347 = vadd.f32 %v7123, %v7346
    %v7348 = vpop.f32.mrb[0].mxu0
    %7349 = vmatprep.mubr.bf16.mxu0 %v7079
    %7350 = vmatmul.mubr.bf16.gmra.mrb[0].mxu0 %v7078
    %v7351 = vpop.f32.mrb[0].mxu0
    %v7352 = vadd.f32 %v7123, %v7351
    %v7353 = vpop.f32.mrb[0].mxu0
    %v7354 = vpop.f32.mrb[0].mxu0
    %v7355 = vadd.f32 %v7123, %v7354
    %v7356 = vpop.f32.mrb[0].mxu0
    %7357 = vmatprep.mubr.bf16.mxu0 %v7081
    %7358 = vmatmul.mubr.bf16.gmra.mrb[0].mxu0 %v7080
    %v7359 = vpop.f32.mrb[0].mxu0
    %v7360 = vadd.f32 %v7123, %v7359
    %v7361 = vpop.f32.mrb[0].mxu0
    %v7362 = vpop.f32.mrb[0].mxu0
    %v7363 = vadd.f32 %v7123, %v7362
    %v7364 = vpop.f32.mrb[0].mxu0
    %7365 = vmatprep.mubr.bf16.mxu0 %v7083
    %7366 = vmatmul.mubr.bf16.gmra.mrb[0].mxu0 %v7082
    %v7367 = vpop.f32.mrb[0].mxu0
    %v7368 = vadd.f32 %v7123, %v7367
    %v7369 = vpop.f32.mrb[0].mxu0
    %v7370 = vpop.f32.mrb[0].mxu0
    %v7371 = vadd.f32 %v7123, %v7370
    %v7372 = vpop.f32.mrb[0].mxu0
    %7373 = vmatprep.mubr.bf16.mxu0 %v7085
    %7374 = vmatmul.mubr.bf16.gmra.mrb[0].mxu0 %v7084
    %v7375 = vpop.f32.mrb[0].mxu0
    %v7376 = vadd.f32 %v7123, %v7375
    %v7377 = vpop.f32.mrb[0].mxu0
    %v7378 = vpop.f32.mrb[0].mxu0
    %v7379 = vadd.f32 %v7123, %v7378
    %v7380 = vpop.f32.mrb[0].mxu0
    %7381 = vdwg.mxu0
    %v7382 = vmax.f32 %v7256, 0.0
    %v7383 = vmax.f32 %v7259, 0.0
    %v7384 = vmax.f32 %v7264, 0.0
    %v7385 = vmax.f32 %v7267, 0.0
    %v7386 = vmax.f32 %v7272, 0.0
    %v7387 = vmax.f32 %v7275, 0.0
    %v7388 = vmax.f32 %v7280, 0.0
    %v7389 = vmax.f32 %v7283, 0.0
    %v7390 = vmax.f32 %v7288, 0.0
    %v7391 = vmax.f32 %v7291, 0.0
    %v7392 = vmax.f32 %v7296, 0.0
    %v7393 = vmax.f32 %v7299, 0.0
    %v7394 = vmax.f32 %v7304, 0.0
    %v7395 = vmax.f32 %v7307, 0.0
    %v7396 = vmax.f32 %v7312, 0.0
    %v7397 = vmax.f32 %v7315, 0.0
    %v7398 = vmax.f32 %v7320, 0.0
    %v7399 = vmax.f32 %v7323, 0.0
    %v7400 = vmax.f32 %v7328, 0.0
    %v7401 = vmax.f32 %v7331, 0.0
    %v7402 = vmax.f32 %v7336, 0.0
    %v7403 = vmax.f32 %v7339, 0.0
    %v7404 = vmax.f32 %v7344, 0.0
    %v7405 = vmax.f32 %v7347, 0.0
    %v7406 = vmax.f32 %v7352, 0.0
    %v7407 = vmax.f32 %v7355, 0.0
    %v7408 = vmax.f32 %v7360, 0.0
    %v7409 = vmax.f32 %v7363, 0.0
    %v7410 = vmax.f32 %v7368, 0.0
    %v7411 = vmax.f32 %v7371, 0.0
    %v7412 = vmax.f32 %v7376, 0.0
    %v7413 = vmax.f32 %v7379, 0.0
    %v7414 = vpack.c.bf16 %v7383, %v7382
    %v7415 = vpack.c.bf16 %v7385, %v7384
    %v7416 = vpack.c.bf16 %v7387, %v7386
    %v7417 = vpack.c.bf16 %v7389, %v7388
    %v7418 = vpack.c.bf16 %v7391, %v7390
    %v7419 = vpack.c.bf16 %v7393, %v7392
    %v7420 = vpack.c.bf16 %v7395, %v7394
    %v7421 = vpack.c.bf16 %v7397, %v7396
    %v7422 = vpack.c.bf16 %v7399, %v7398
    %v7423 = vpack.c.bf16 %v7401, %v7400
    %v7424 = vpack.c.bf16 %v7403, %v7402
    %v7425 = vpack.c.bf16 %v7405, %v7404
    %v7426 = vpack.c.bf16 %v7407, %v7406
    %v7427 = vpack.c.bf16 %v7409, %v7408
    %v7428 = vpack.c.bf16 %v7411, %v7410
    %v7429 = vpack.c.bf16 %v7413, %v7412
    %v7430 = vld [vmem:[%s18] sm:$0xf]
    %v7431 = vld [vmem:[%s18 + $0x4] sm:$0xf]
    %v7432 = vld [vmem:[%s18 + $0x8] sm:$0xf]
    %v7433 = vld [vmem:[%s18 + $0xc] sm:$0xf]
    %v7434 = vld [vmem:[%s18 + $0x10] sm:$0xf]
    %v7435 = vld [vmem:[%s18 + $0x14] sm:$0xf]
    %v7436 = vld [vmem:[%s18 + $0x18] sm:$0xf]
    %v7437 = vld [vmem:[%s18 + $0x1c] sm:$0xf]
    %v7438 = vld [vmem:[%s18 + $0x20] sm:$0xf]
    %v7439 = vld [vmem:[%s18 + $0x24] sm:$0xf]
    %v7440 = vld [vmem:[%s18 + $0x28] sm:$0xf]
    %v7441 = vld [vmem:[%s18 + $0x2c] sm:$0xf]
    %v7442 = vld [vmem:[%s18 + $0x30] sm:$0xf]
    %v7443 = vld [vmem:[%s18 + $0x34] sm:$0xf]
    %v7444 = vld [vmem:[%s18 + $0x38] sm:$0xf]
    %v7445 = vld [vmem:[%s18 + $0x3c] sm:$0xf]
    %v7446 = vld [vmem:[%s19] sm:$0x1]
    %v7448 = vlaneseq
    %v7449 = vshrl.u32 %v7448, 7
    %v7450 = vsub.s32 0, %v7449
    %v7451 = vrot.slane %v7446, %v7450
    %v7469 = vunpack.c.l.b16 %v7430
    %v7470 = vunpack.c.l.b16 %v7431
    %v7471 = vunpack.c.l.b16 %v7432
    %v7472 = vunpack.c.l.b16 %v7433
    %v7473 = vunpack.c.l.b16 %v7434
    %v7474 = vunpack.c.l.b16 %v7435
    %v7475 = vunpack.c.l.b16 %v7436
    %v7476 = vunpack.c.l.b16 %v7437
    %v7477 = vunpack.c.l.b16 %v7438
    %v7478 = vunpack.c.l.b16 %v7439
    %v7479 = vunpack.c.l.b16 %v7440
    %v7480 = vunpack.c.l.b16 %v7441
    %v7481 = vunpack.c.l.b16 %v7442
    %v7482 = vunpack.c.l.b16 %v7443
    %v7483 = vunpack.c.l.b16 %v7444
    %v7484 = vunpack.c.l.b16 %v7445
    %v7485 = vpack.c.b16 %v7470, %v7469
    %v7486 = vpack.c.b16 %v7472, %v7471
    %v7487 = vpack.c.b16 %v7474, %v7473
    %v7488 = vpack.c.b16 %v7476, %v7475
    %v7489 = vpack.c.b16 %v7478, %v7477
    %v7490 = vpack.c.b16 %v7480, %v7479
    %v7491 = vpack.c.b16 %v7482, %v7481
    %v7492 = vpack.c.b16 %v7484, %v7483
    %7501 = vmatprep.subr.bf16.mxu0 0
    %7502 = vmatpush1.bf16.msra.mxu0 %v7485
    %7503 = vmatprep.subr.bf16.mxu0 0
    %7504 = vmatpush1.bf16.msra.mxu0 %v7486
    %7505 = vmatprep.subr.bf16.mxu0 0
    %7506 = vmatpush1.bf16.msra.mxu0 %v7487
    %7507 = vmatprep.subr.bf16.mxu0 0
    %7508 = vmatpush1.bf16.msra.mxu0 %v7488
    %7509 = vmatprep.subr.bf16.mxu0 0
    %7510 = vmatpush1.bf16.msra.mxu0 %v7489
    %7511 = vmatprep.subr.bf16.mxu0 0
    %7512 = vmatpush1.bf16.msra.mxu0 %v7490
    %7513 = vmatprep.subr.bf16.mxu0 0
    %7514 = vmatpush1.bf16.msra.mxu0 %v7491
    %7515 = vmatprep.subr.bf16.mxu0 0
    %7516 = vmatpush1.bf16.msra.mxu0 %v7492
    %7517 = vmatprep.subr.bf16.mxu0 0
    %7518 = vmatpush1.bf16.msra.mxu0 0
    %7519 = vmatprep.subr.bf16.mxu0 0
    %7520 = vmatpush1.bf16.msra.mxu0 0
    %7521 = vmatprep.subr.bf16.mxu0 0
    %7522 = vmatpush1.bf16.msra.mxu0 0
    %7523 = vmatprep.subr.bf16.mxu0 0
    %7524 = vmatpush1.bf16.msra.mxu0 0
    %7525 = vmatprep.subr.bf16.mxu0 0
    %7526 = vmatpush1.bf16.msra.mxu0 0
    %7527 = vmatprep.subr.bf16.mxu0 0
    %7528 = vmatpush1.bf16.msra.mxu0 0
    %7529 = vmatprep.subr.bf16.mxu0 0
    %7530 = vmatpush1.bf16.msra.mxu0 0
    %7531 = vmatprep.subr.bf16.mxu0 0
    %7532 = vmatpush1.bf16.msra.mxu0 0
    %7533 = vmatprep.mubr.bf16.mxu0 0
    %7534 = vmatmul.mubr.bf16.gmra.mrb[0].mxu0 %v7414
    %v7535 = vpop.f32.mrb[0].mxu0
    %v7536 = vadd.f32 %v7451, %v7535
    %v7537 = vpop.f32.mrb[0].mxu0
    %v7538 = vpop.f32.mrb[0].mxu0
    %v7539 = vadd.f32 %v7451, %v7538
    %v7540 = vpop.f32.mrb[0].mxu0
    %7541 = vmatprep.mubr.bf16.mxu0 0
    %7542 = vmatmul.mubr.bf16.gmra.mrb[0].mxu0 %v7415
    %v7543 = vpop.f32.mrb[0].mxu0
    %v7544 = vadd.f32 %v7451, %v7543
    %v7545 = vpop.f32.mrb[0].mxu0
    %v7546 = vpop.f32.mrb[0].mxu0
    %v7547 = vadd.f32 %v7451, %v7546
    %v7548 = vpop.f32.mrb[0].mxu0
    %7549 = vmatprep.mubr.bf16.mxu0 0
    %7550 = vmatmul.mubr.bf16.gmra.mrb[0].mxu0 %v7416
    %v7551 = vpop.f32.mrb[0].mxu0
    %v7552 = vadd.f32 %v7451, %v7551
    %v7553 = vpop.f32.mrb[0].mxu0
    %v7554 = vpop.f32.mrb[0].mxu0
    %v7555 = vadd.f32 %v7451, %v7554
    %v7556 = vpop.f32.mrb[0].mxu0
    %7557 = vmatprep.mubr.bf16.mxu0 0
    %7558 = vmatmul.mubr.bf16.gmra.mrb[0].mxu0 %v7417
    %v7559 = vpop.f32.mrb[0].mxu0
    %v7560 = vadd.f32 %v7451, %v7559
    %v7561 = vpop.f32.mrb[0].mxu0
    %v7562 = vpop.f32.mrb[0].mxu0
    %v7563 = vadd.f32 %v7451, %v7562
    %v7564 = vpop.f32.mrb[0].mxu0
    %7565 = vmatprep.mubr.bf16.mxu0 0
    %7566 = vmatmul.mubr.bf16.gmra.mrb[0].mxu0 %v7418
    %v7567 = vpop.f32.mrb[0].mxu0
    %v7568 = vadd.f32 %v7451, %v7567
    %v7569 = vpop.f32.mrb[0].mxu0
    %v7570 = vpop.f32.mrb[0].mxu0
    %v7571 = vadd.f32 %v7451, %v7570
    %v7572 = vpop.f32.mrb[0].mxu0
    %7573 = vmatprep.mubr.bf16.mxu0 0
    %7574 = vmatmul.mubr.bf16.gmra.mrb[0].mxu0 %v7419
    %v7575 = vpop.f32.mrb[0].mxu0
    %v7576 = vadd.f32 %v7451, %v7575
    %v7577 = vpop.f32.mrb[0].mxu0
    %v7578 = vpop.f32.mrb[0].mxu0
    %v7579 = vadd.f32 %v7451, %v7578
    %v7580 = vpop.f32.mrb[0].mxu0
    %7581 = vmatprep.mubr.bf16.mxu0 0
    %7582 = vmatmul.mubr.bf16.gmra.mrb[0].mxu0 %v7420
    %v7583 = vpop.f32.mrb[0].mxu0
    %v7584 = vadd.f32 %v7451, %v7583
    %v7585 = vpop.f32.mrb[0].mxu0
    %v7586 = vpop.f32.mrb[0].mxu0
    %v7587 = vadd.f32 %v7451, %v7586
    %v7588 = vpop.f32.mrb[0].mxu0
    %7589 = vmatprep.mubr.bf16.mxu0 0
    %7590 = vmatmul.mubr.bf16.gmra.mrb[0].mxu0 %v7421
    %v7591 = vpop.f32.mrb[0].mxu0
    %v7592 = vadd.f32 %v7451, %v7591
    %v7593 = vpop.f32.mrb[0].mxu0
    %v7594 = vpop.f32.mrb[0].mxu0
    %v7595 = vadd.f32 %v7451, %v7594
    %v7596 = vpop.f32.mrb[0].mxu0
    %7597 = vmatprep.mubr.bf16.mxu0 0
    %7598 = vmatmul.mubr.bf16.gmra.mrb[0].mxu0 %v7422
    %v7599 = vpop.f32.mrb[0].mxu0
    %v7600 = vadd.f32 %v7451, %v7599
    %v7601 = vpop.f32.mrb[0].mxu0
    %v7602 = vpop.f32.mrb[0].mxu0
    %v7603 = vadd.f32 %v7451, %v7602
    %v7604 = vpop.f32.mrb[0].mxu0
    %7605 = vmatprep.mubr.bf16.mxu0 0
    %7606 = vmatmul.mubr.bf16.gmra.mrb[0].mxu0 %v7423
    %v7607 = vpop.f32.mrb[0].mxu0
    %v7608 = vadd.f32 %v7451, %v7607
    %v7609 = vpop.f32.mrb[0].mxu0
    %v7610 = vpop.f32.mrb[0].mxu0
    %v7611 = vadd.f32 %v7451, %v7610
    %v7612 = vpop.f32.mrb[0].mxu0
    %7613 = vmatprep.mubr.bf16.mxu0 0
    %7614 = vmatmul.mubr.bf16.gmra.mrb[0].mxu0 %v7424
    %v7615 = vpop.f32.mrb[0].mxu0
    %v7616 = vadd.f32 %v7451, %v7615
    %v7617 = vpop.f32.mrb[0].mxu0
    %v7618 = vpop.f32.mrb[0].mxu0
    %v7619 = vadd.f32 %v7451, %v7618
    %v7620 = vpop.f32.mrb[0].mxu0
    %7621 = vmatprep.mubr.bf16.mxu0 0
    %7622 = vmatmul.mubr.bf16.gmra.mrb[0].mxu0 %v7425
    %v7623 = vpop.f32.mrb[0].mxu0
    %v7624 = vadd.f32 %v7451, %v7623
    %v7625 = vpop.f32.mrb[0].mxu0
    %v7626 = vpop.f32.mrb[0].mxu0
    %v7627 = vadd.f32 %v7451, %v7626
    %v7628 = vpop.f32.mrb[0].mxu0
    %7629 = vmatprep.mubr.bf16.mxu0 0
    %7630 = vmatmul.mubr.bf16.gmra.mrb[0].mxu0 %v7426
    %v7631 = vpop.f32.mrb[0].mxu0
    %v7632 = vadd.f32 %v7451, %v7631
    %v7633 = vpop.f32.mrb[0].mxu0
    %v7634 = vpop.f32.mrb[0].mxu0
    %v7635 = vadd.f32 %v7451, %v7634
    %v7636 = vpop.f32.mrb[0].mxu0
    %7637 = vmatprep.mubr.bf16.mxu0 0
    %7638 = vmatmul.mubr.bf16.gmra.mrb[0].mxu0 %v7427
    %v7639 = vpop.f32.mrb[0].mxu0
    %v7640 = vadd.f32 %v7451, %v7639
    %v7641 = vpop.f32.mrb[0].mxu0
    %v7642 = vpop.f32.mrb[0].mxu0
    %v7643 = vadd.f32 %v7451, %v7642
    %v7644 = vpop.f32.mrb[0].mxu0
    %7645 = vmatprep.mubr.bf16.mxu0 0
    %7646 = vmatmul.mubr.bf16.gmra.mrb[0].mxu0 %v7428
    %v7647 = vpop.f32.mrb[0].mxu0
    %v7648 = vadd.f32 %v7451, %v7647
    %v7649 = vpop.f32.mrb[0].mxu0
    %v7650 = vpop.f32.mrb[0].mxu0
    %v7651 = vadd.f32 %v7451, %v7650
    %v7652 = vpop.f32.mrb[0].mxu0
    %7653 = vmatprep.mubr.bf16.mxu0 0
    %7654 = vmatmul.mubr.bf16.gmra.mrb[0].mxu0 %v7429
    %v7655 = vpop.f32.mrb[0].mxu0
    %v7656 = vadd.f32 %v7451, %v7655
    %v7657 = vpop.f32.mrb[0].mxu0
    %v7658 = vpop.f32.mrb[0].mxu0
    %v7659 = vadd.f32 %v7451, %v7658
    %v7660 = vpop.f32.mrb[0].mxu0
    %7661 = vdwg.mxu0
    %v7662 = vmax.f32 %v7536, 0.0
    %v7663 = vmax.f32 %v7539, 0.0
    %v7664 = vmax.f32 %v7544, 0.0
    %v7665 = vmax.f32 %v7547, 0.0
    %v7666 = vmax.f32 %v7552, 0.0
    %v7667 = vmax.f32 %v7555, 0.0
    %v7668 = vmax.f32 %v7560, 0.0
    %v7669 = vmax.f32 %v7563, 0.0
    %v7670 = vmax.f32 %v7568, 0.0
    %v7671 = vmax.f32 %v7571, 0.0
    %v7672 = vmax.f32 %v7576, 0.0
    %v7673 = vmax.f32 %v7579, 0.0
    %v7674 = vmax.f32 %v7584, 0.0
    %v7675 = vmax.f32 %v7587, 0.0
    %v7676 = vmax.f32 %v7592, 0.0
    %v7677 = vmax.f32 %v7595, 0.0
    %v7678 = vmax.f32 %v7600, 0.0
    %v7679 = vmax.f32 %v7603, 0.0
    %v7680 = vmax.f32 %v7608, 0.0
    %v7681 = vmax.f32 %v7611, 0.0
    %v7682 = vmax.f32 %v7616, 0.0
    %v7683 = vmax.f32 %v7619, 0.0
    %v7684 = vmax.f32 %v7624, 0.0
    %v7685 = vmax.f32 %v7627, 0.0
    %v7686 = vmax.f32 %v7632, 0.0
    %v7687 = vmax.f32 %v7635, 0.0
    %v7688 = vmax.f32 %v7640, 0.0
    %v7689 = vmax.f32 %v7643, 0.0
    %v7690 = vmax.f32 %v7648, 0.0
    %v7691 = vmax.f32 %v7651, 0.0
    %v7692 = vmax.f32 %v7656, 0.0
    %v7693 = vmax.f32 %v7659, 0.0
    %v7694 = vpack.c.bf16 %v7663, %v7662
    %v7695 = vpack.c.bf16 %v7665, %v7664
    %v7696 = vpack.c.bf16 %v7667, %v7666
    %v7697 = vpack.c.bf16 %v7669, %v7668
    %v7698 = vpack.c.bf16 %v7671, %v7670
    %v7699 = vpack.c.bf16 %v7673, %v7672
    %v7700 = vpack.c.bf16 %v7675, %v7674
    %v7701 = vpack.c.bf16 %v7677, %v7676
    %v7702 = vpack.c.bf16 %v7679, %v7678
    %v7703 = vpack.c.bf16 %v7681, %v7680
    %v7704 = vpack.c.bf16 %v7683, %v7682
    %v7705 = vpack.c.bf16 %v7685, %v7684
    %v7706 = vpack.c.bf16 %v7687, %v7686
    %v7707 = vpack.c.bf16 %v7689, %v7688
    %v7708 = vpack.c.bf16 %v7691, %v7690
    %v7709 = vpack.c.bf16 %v7693, %v7692
    %v7710 = vld [vmem:[#allocation26] sm:$0xf]
    %v7711 = vld [vmem:[#allocation26 + $0x4] sm:$0xf]
    %v7712 = vld [vmem:[#allocation26 + $0x8] sm:$0xf]
    %v7713 = vld [vmem:[#allocation26 + $0xc] sm:$0xf]
    %v7714 = vld [vmem:[#allocation26 + $0x10] sm:$0xf]
    %v7715 = vld [vmem:[#allocation26 + $0x14] sm:$0xf]
    %v7716 = vld [vmem:[#allocation26 + $0x18] sm:$0xf]
    %v7717 = vld [vmem:[#allocation26 + $0x1c] sm:$0xf]
    %v7718 = vld [vmem:[#allocation26 + $0x20] sm:$0xf]
    %v7719 = vld [vmem:[#allocation26 + $0x24] sm:$0xf]
    %v7720 = vld [vmem:[#allocation26 + $0x28] sm:$0xf]
    %v7721 = vld [vmem:[#allocation26 + $0x2c] sm:$0xf]
    %v7722 = vld [vmem:[#allocation26 + $0x30] sm:$0xf]
    %v7723 = vld [vmem:[#allocation26 + $0x34] sm:$0xf]
    %v7724 = vld [vmem:[#allocation26 + $0x38] sm:$0xf]
    %v7725 = vld [vmem:[#allocation26 + $0x3c] sm:$0xf]
    %v7726 = vld [vmem:[%s21] sm:$0x1]
    %v7728 = vlaneseq
    %v7729 = vshrl.u32 %v7728, 7
    %v7730 = vsub.s32 0, %v7729
    %v7731 = vrot.slane %v7726, %v7730
    %v7749 = vunpack.c.l.b16 %v7710
    %v7750 = vunpack.c.l.b16 %v7711
    %v7751 = vunpack.c.l.b16 %v7712
    %v7752 = vunpack.c.l.b16 %v7713
    %v7753 = vunpack.c.l.b16 %v7714
    %v7754 = vunpack.c.l.b16 %v7715
    %v7755 = vunpack.c.l.b16 %v7716
    %v7756 = vunpack.c.l.b16 %v7717
    %v7757 = vunpack.c.l.b16 %v7718
    %v7758 = vunpack.c.l.b16 %v7719
    %v7759 = vunpack.c.l.b16 %v7720
    %v7760 = vunpack.c.l.b16 %v7721
    %v7761 = vunpack.c.l.b16 %v7722
    %v7762 = vunpack.c.l.b16 %v7723
    %v7763 = vunpack.c.l.b16 %v7724
    %v7764 = vunpack.c.l.b16 %v7725
    %v7765 = vpack.c.b16 %v7750, %v7749
    %v7766 = vpack.c.b16 %v7752, %v7751
    %v7767 = vpack.c.b16 %v7754, %v7753
    %v7768 = vpack.c.b16 %v7756, %v7755
    %v7769 = vpack.c.b16 %v7758, %v7757
    %v7770 = vpack.c.b16 %v7760, %v7759
    %v7771 = vpack.c.b16 %v7762, %v7761
    %v7772 = vpack.c.b16 %v7764, %v7763
    %7781 = vmatprep.subr.bf16.mxu0 0
    %7782 = vmatpush1.bf16.msra.mxu0 %v7765
    %7783 = vmatprep.subr.bf16.mxu0 0
    %7784 = vmatpush1.bf16.msra.mxu0 %v7766
    %7785 = vmatprep.subr.bf16.mxu0 0
    %7786 = vmatpush1.bf16.msra.mxu0 %v7767
    %7787 = vmatprep.subr.bf16.mxu0 0
    %7788 = vmatpush1.bf16.msra.mxu0 %v7768
    %7789 = vmatprep.subr.bf16.mxu0 0
    %7790 = vmatpush1.bf16.msra.mxu0 %v7769
    %7791 = vmatprep.subr.bf16.mxu0 0
    %7792 = vmatpush1.bf16.msra.mxu0 %v7770
    %7793 = vmatprep.subr.bf16.mxu0 0
    %7794 = vmatpush1.bf16.msra.mxu0 %v7771
    %7795 = vmatprep.subr.bf16.mxu0 0
    %7796 = vmatpush1.bf16.msra.mxu0 %v7772
    %7797 = vmatprep.subr.bf16.mxu0 0
    %7798 = vmatpush1.bf16.msra.mxu0 0
    %7799 = vmatprep.subr.bf16.mxu0 0
    %7800 = vmatpush1.bf16.msra.mxu0 0
    %7801 = vmatprep.subr.bf16.mxu0 0
    %7802 = vmatpush1.bf16.msra.mxu0 0
    %7803 = vmatprep.subr.bf16.mxu0 0
    %7804 = vmatpush1.bf16.msra.mxu0 0
    %7805 = vmatprep.subr.bf16.mxu0 0
    %7806 = vmatpush1.bf16.msra.mxu0 0
    %7807 = vmatprep.subr.bf16.mxu0 0
    %7808 = vmatpush1.bf16.msra.mxu0 0
    %7809 = vmatprep.subr.bf16.mxu0 0
    %7810 = vmatpush1.bf16.msra.mxu0 0
    %7811 = vmatprep.subr.bf16.mxu0 0
    %7812 = vmatpush1.bf16.msra.mxu0 0
    %7813 = vmatprep.mubr.bf16.mxu0 0
    %7814 = vmatmul.mubr.bf16.gmra.mrb[0].mxu0 %v7694
    %v7815 = vpop.f32.mrb[0].mxu0
    %v7816 = vadd.f32 %v7731, %v7815
    %v7817 = vpop.f32.mrb[0].mxu0
    %v7818 = vpop.f32.mrb[0].mxu0
    %v7819 = vadd.f32 %v7731, %v7818
    %v7820 = vpop.f32.mrb[0].mxu0
    %7821 = vmatprep.mubr.bf16.mxu0 0
    %7822 = vmatmul.mubr.bf16.gmra.mrb[0].mxu0 %v7695
    %v7823 = vpop.f32.mrb[0].mxu0
    %v7824 = vadd.f32 %v7731, %v7823
    %v7825 = vpop.f32.mrb[0].mxu0
    %v7826 = vpop.f32.mrb[0].mxu0
    %v7827 = vadd.f32 %v7731, %v7826
    %v7828 = vpop.f32.mrb[0].mxu0
    %7829 = vmatprep.mubr.bf16.mxu0 0
    %7830 = vmatmul.mubr.bf16.gmra.mrb[0].mxu0 %v7696
    %v7831 = vpop.f32.mrb[0].mxu0
    %v7832 = vadd.f32 %v7731, %v7831
    %v7833 = vpop.f32.mrb[0].mxu0
    %v7834 = vpop.f32.mrb[0].mxu0
    %v7835 = vadd.f32 %v7731, %v7834
    %v7836 = vpop.f32.mrb[0].mxu0
    %7837 = vmatprep.mubr.bf16.mxu0 0
    %7838 = vmatmul.mubr.bf16.gmra.mrb[0].mxu0 %v7697
    %v7839 = vpop.f32.mrb[0].mxu0
    %v7840 = vadd.f32 %v7731, %v7839
    %v7841 = vpop.f32.mrb[0].mxu0
    %v7842 = vpop.f32.mrb[0].mxu0
    %v7843 = vadd.f32 %v7731, %v7842
    %v7844 = vpop.f32.mrb[0].mxu0
    %7845 = vmatprep.mubr.bf16.mxu0 0
    %7846 = vmatmul.mubr.bf16.gmra.mrb[0].mxu0 %v7698
    %v7847 = vpop.f32.mrb[0].mxu0
    %v7848 = vadd.f32 %v7731, %v7847
    %v7849 = vpop.f32.mrb[0].mxu0
    %v7850 = vpop.f32.mrb[0].mxu0
    %v7851 = vadd.f32 %v7731, %v7850
    %v7852 = vpop.f32.mrb[0].mxu0
    %7853 = vmatprep.mubr.bf16.mxu0 0
    %7854 = vmatmul.mubr.bf16.gmra.mrb[0].mxu0 %v7699
    %v7855 = vpop.f32.mrb[0].mxu0
    %v7856 = vadd.f32 %v7731, %v7855
    %v7857 = vpop.f32.mrb[0].mxu0
    %v7858 = vpop.f32.mrb[0].mxu0
    %v7859 = vadd.f32 %v7731, %v7858
    %v7860 = vpop.f32.mrb[0].mxu0
    %7861 = vmatprep.mubr.bf16.mxu0 0
    %7862 = vmatmul.mubr.bf16.gmra.mrb[0].mxu0 %v7700
    %v7863 = vpop.f32.mrb[0].mxu0
    %v7864 = vadd.f32 %v7731, %v7863
    %v7865 = vpop.f32.mrb[0].mxu0
    %v7866 = vpop.f32.mrb[0].mxu0
    %v7867 = vadd.f32 %v7731, %v7866
    %v7868 = vpop.f32.mrb[0].mxu0
    %7869 = vmatprep.mubr.bf16.mxu0 0
    %7870 = vmatmul.mubr.bf16.gmra.mrb[0].mxu0 %v7701
    %v7871 = vpop.f32.mrb[0].mxu0
    %v7872 = vadd.f32 %v7731, %v7871
    %v7873 = vpop.f32.mrb[0].mxu0
    %v7874 = vpop.f32.mrb[0].mxu0
    %v7875 = vadd.f32 %v7731, %v7874
    %v7876 = vpop.f32.mrb[0].mxu0
    %7877 = vmatprep.mubr.bf16.mxu0 0
    %7878 = vmatmul.mubr.bf16.gmra.mrb[0].mxu0 %v7702
    %v7879 = vpop.f32.mrb[0].mxu0
    %v7880 = vadd.f32 %v7731, %v7879
    %v7881 = vpop.f32.mrb[0].mxu0
    %v7882 = vpop.f32.mrb[0].mxu0
    %v7883 = vadd.f32 %v7731, %v7882
    %v7884 = vpop.f32.mrb[0].mxu0
    %7885 = vmatprep.mubr.bf16.mxu0 0
    %7886 = vmatmul.mubr.bf16.gmra.mrb[0].mxu0 %v7703
    %v7887 = vpop.f32.mrb[0].mxu0
    %v7888 = vadd.f32 %v7731, %v7887
    %v7889 = vpop.f32.mrb[0].mxu0
    %v7890 = vpop.f32.mrb[0].mxu0
    %v7891 = vadd.f32 %v7731, %v7890
    %v7892 = vpop.f32.mrb[0].mxu0
    %7893 = vmatprep.mubr.bf16.mxu0 0
    %7894 = vmatmul.mubr.bf16.gmra.mrb[0].mxu0 %v7704
    %v7895 = vpop.f32.mrb[0].mxu0
    %v7896 = vadd.f32 %v7731, %v7895
    %v7897 = vpop.f32.mrb[0].mxu0
    %v7898 = vpop.f32.mrb[0].mxu0
    %v7899 = vadd.f32 %v7731, %v7898
    %v7900 = vpop.f32.mrb[0].mxu0
    %7901 = vmatprep.mubr.bf16.mxu0 0
    %7902 = vmatmul.mubr.bf16.gmra.mrb[0].mxu0 %v7705
    %v7903 = vpop.f32.mrb[0].mxu0
    %v7904 = vadd.f32 %v7731, %v7903
    %v7905 = vpop.f32.mrb[0].mxu0
    %v7906 = vpop.f32.mrb[0].mxu0
    %v7907 = vadd.f32 %v7731, %v7906
    %v7908 = vpop.f32.mrb[0].mxu0
    %7909 = vmatprep.mubr.bf16.mxu0 0
    %7910 = vmatmul.mubr.bf16.gmra.mrb[0].mxu0 %v7706
    %v7911 = vpop.f32.mrb[0].mxu0
    %v7912 = vadd.f32 %v7731, %v7911
    %v7913 = vpop.f32.mrb[0].mxu0
    %v7914 = vpop.f32.mrb[0].mxu0
    %v7915 = vadd.f32 %v7731, %v7914
    %v7916 = vpop.f32.mrb[0].mxu0
    %7917 = vmatprep.mubr.bf16.mxu0 0
    %7918 = vmatmul.mubr.bf16.gmra.mrb[0].mxu0 %v7707
    %v7919 = vpop.f32.mrb[0].mxu0
    %v7920 = vadd.f32 %v7731, %v7919
    %v7921 = vpop.f32.mrb[0].mxu0
    %v7922 = vpop.f32.mrb[0].mxu0
    %v7923 = vadd.f32 %v7731, %v7922
    %v7924 = vpop.f32.mrb[0].mxu0
    %7925 = vmatprep.mubr.bf16.mxu0 0
    %7926 = vmatmul.mubr.bf16.gmra.mrb[0].mxu0 %v7708
    %v7927 = vpop.f32.mrb[0].mxu0
    %v7928 = vadd.f32 %v7731, %v7927
    %v7929 = vpop.f32.mrb[0].mxu0
    %v7930 = vpop.f32.mrb[0].mxu0
    %v7931 = vadd.f32 %v7731, %v7930
    %v7932 = vpop.f32.mrb[0].mxu0
    %7933 = vmatprep.mubr.bf16.mxu0 0
    %7934 = vmatmul.mubr.bf16.gmra.mrb[0].mxu0 %v7709
    %v7935 = vpop.f32.mrb[0].mxu0
    %v7936 = vadd.f32 %v7731, %v7935
    %v7937 = vpop.f32.mrb[0].mxu0
    %v7938 = vpop.f32.mrb[0].mxu0
    %v7939 = vadd.f32 %v7731, %v7938
    %v7940 = vpop.f32.mrb[0].mxu0
    %7941 = vdwg.mxu0
    %7942 = vst [vmem:[#allocation28] sm:$0xff] %v7816
    %7943 = vst [vmem:[#allocation28 + $0x8] sm:$0xff] %v7819
    %7944 = vst [vmem:[#allocation28 + $0x10] sm:$0xff] %v7824
    %7945 = vst [vmem:[#allocation28 + $0x18] sm:$0xff] %v7827
    %7946 = vst [vmem:[#allocation28 + $0x20] sm:$0xff] %v7832
    %7947 = vst [vmem:[#allocation28 + $0x28] sm:$0xff] %v7835
    %7948 = vst [vmem:[#allocation28 + $0x30] sm:$0xff] %v7840
    %7949 = vst [vmem:[#allocation28 + $0x38] sm:$0xff] %v7843
    %7950 = vst [vmem:[#allocation28 + $0x40] sm:$0xff] %v7848
    %7951 = vst [vmem:[#allocation28 + $0x48] sm:$0xff] %v7851
    %7952 = vst [vmem:[#allocation28 + $0x50] sm:$0xff] %v7856
    %7953 = vst [vmem:[#allocation28 + $0x58] sm:$0xff] %v7859
    %7954 = vst [vmem:[#allocation28 + $0x60] sm:$0xff] %v7864
    %7955 = vst [vmem:[#allocation28 + $0x68] sm:$0xff] %v7867
    %7956 = vst [vmem:[#allocation28 + $0x70] sm:$0xff] %v7872
    %7957 = vst [vmem:[#allocation28 + $0x78] sm:$0xff] %v7875
    %7958 = vst [vmem:[#allocation28 + $0x80] sm:$0xff] %v7880
    %7959 = vst [vmem:[#allocation28 + $0x88] sm:$0xff] %v7883
    %7960 = vst [vmem:[#allocation28 + $0x90] sm:$0xff] %v7888
    %7961 = vst [vmem:[#allocation28 + $0x98] sm:$0xff] %v7891
    %7962 = vst [vmem:[#allocation28 + $0xa0] sm:$0xff] %v7896
    %7963 = vst [vmem:[#allocation28 + $0xa8] sm:$0xff] %v7899
    %7964 = vst [vmem:[#allocation28 + $0xb0] sm:$0xff] %v7904
    %7965 = vst [vmem:[#allocation28 + $0xb8] sm:$0xff] %v7907
    %7966 = vst [vmem:[#allocation28 + $0xc0] sm:$0xff] %v7912
    %7967 = vst [vmem:[#allocation28 + $0xc8] sm:$0xff] %v7915
    %7968 = vst [vmem:[#allocation28 + $0xd0] sm:$0xff] %v7920
    %7969 = vst [vmem:[#allocation28 + $0xd8] sm:$0xff] %v7923
    %7970 = vst [vmem:[#allocation28 + $0xe0] sm:$0xff] %v7928
    %7971 = vst [vmem:[#allocation28 + $0xe8] sm:$0xff] %v7931
    %7972 = vst [vmem:[#allocation28 + $0xf0] sm:$0xff] %v7936
    %7973 = vst [vmem:[#allocation28 + $0xf8] sm:$0xff] %v7939
    // Predicated region
    $region154: #{tpu_custom_call.1} parent=1 // pred_check
      _
    $region155: #{tpu_custom_call.1} parent=1 // pred_check_branch
      %7975 = sbr.rel (0) target = $region157
    $region156: #{tpu_custom_call.1} parent=1 // pred_region
      %s7977 = ssub.s32 4096, 4096
      %7978 = vsyncadd [#allocation4], %s7977
      %s7979 = sshll.u32 [#allocation28], 4
      %s7980 = int_to_ptr.vmem [resolvable:$true] %s7979
      %7985 = dma.vmem_to_hbm [thread:$0]  %s7980, 4096, %s22, [#allocation4], 128, 128, 8
    $region157: #{tpu_custom_call.1} parent=1 // pred_fallthru
      _
    // Predicated region
    $region158: #{tpu_custom_call.1} parent=1 // pred_check
      _
    $region159: #{tpu_custom_call.1} parent=1 // pred_check_branch
      %7987 = sbr.rel (0) target = $region161
    $region160: #{tpu_custom_call.1} parent=1 // pred_region
      %7988 = dma.done [#allocation4], 4096
    $region161: #{tpu_custom_call.1} parent=1 // pred_fallthru
      _
    %7989 = vsyncpa [#allocation3], 1
    %7990 = vsyncpa [#allocation6], 1
    %7991 = vsyncpa [#allocation9], 1
    %7992 = vsyncpa [#allocation12], 1
    %7993 = vsyncpa [#allocation15], 1
    %7994 = vsyncpa [#allocation18], 1
    %7995 = vsyncpa [#allocation21], 1
    %7996 = vsyncpa [#allocation24], 1
    %7997 = vsyncpa [#allocation27], 1
    %7998 = vsyncpa [#allocation4], 1

</llo_original>
